<compile_context>
chip_gen: v6e
topology: v6e:2x2x1
jax: 0.10.0
libtpu: 0.0.40
codegen_flags: <defaults>
</compile_context>

<pallas_src>
import functools

import jax
import jax.numpy as jnp
from jax.experimental import pallas as pl
from jax.experimental.pallas import tpu as pltpu

nc = 3
ndf = 64
BN_EPS = 1e-5
CIN_PAD = 8                       # conv1 input channels padded 3 -> 8 (=> K = 16*8 = 128)
VMEM_LIMIT = 48 * 1024 * 1024     # explicit scoped-VMEM budget (defaults are 16-32 MiB)


# ----------------------------------------------------------------------------
# Pallas kernels
# ----------------------------------------------------------------------------
def _matmul_act_kernel(x_ref, w_ref, o_ref, *, act):
    """out = act(x @ w); bf16 operands, f32 accumulate."""
    y = jnp.dot(x_ref[...], w_ref[...], preferred_element_type=jnp.float32)
    if act == "relu6":
        y = jnp.clip(y, 0.0, 6.0)
    elif act == "sigmoid":
        y = jax.nn.sigmoid(y)
    o_ref[...] = y.astype(o_ref.dtype)


def _matmul_bn_relu6_kernel(x_ref, w_ref, g_ref, b_ref, o_ref, acc_ref):
    """K-tiled matmul with fused training-mode BatchNorm (full-row stats) + ReLU6.

    Grid = (cout_tiles [parallel], k_tiles [arbitrary]).  The M (row) axis is
    NOT tiled so the per-channel batch statistics are exact.
    """
    kk = pl.program_id(1)

    @pl.when(kk == 0)
    def _():
        acc_ref[...] = jnp.zeros_like(acc_ref)

    acc_ref[...] += jnp.dot(x_ref[...], w_ref[...],
                            preferred_element_type=jnp.float32)

    @pl.when(kk == pl.num_programs(1) - 1)
    def _():
        y = acc_ref[...]                                   # (M, Ct) f32
        inv_m = 1.0 / y.shape[0]
        mean = jnp.sum(y, axis=0, keepdims=True) * inv_m   # one-pass stats:
        ex2 = jnp.sum(y * y, axis=0, keepdims=True) * inv_m
        var = jnp.maximum(ex2 - mean * mean, 0.0)          # biased var (training BN)
        yhat = (y - mean) * jax.lax.rsqrt(var + BN_EPS)
        out = yhat * g_ref[...] + b_ref[...]
        o_ref[...] = jnp.clip(out, 0.0, 6.0).astype(o_ref.dtype)


def _conv45_kernel(p_ref, w4_ref, w5_ref, o_ref, acc_ref):
    """Fused conv4 (matmul, K-tiled) + ReLU6 + conv5 (full reduce) + Sigmoid.

    Grid = (batch [parallel], k_tiles [arbitrary]).  Each batch element owns a
    (16, 512) conv4 activation tile that never leaves VMEM.
    """
    kk = pl.program_id(1)

    @pl.when(kk == 0)
    def _():
        acc_ref[...] = jnp.zeros_like(acc_ref)

    acc_ref[...] += jnp.dot(p_ref[...], w4_ref[...],
                            preferred_element_type=jnp.float32)

    @pl.when(kk == pl.num_programs(1) - 1)
    def _():
        y4 = jnp.clip(acc_ref[...], 0.0, 6.0)              # relu6(conv4), (16, 512) f32
        # conv5 = full dot over (spatial positions x channels), then sigmoid.
        s = jnp.sum(y4 * w5_ref[...], axis=1, keepdims=True)   # (16, 1)
        tot = jnp.sum(s, axis=0, keepdims=True)                # (1, 1)
        val = jax.nn.sigmoid(tot)
        o_ref[...] = jnp.broadcast_to(val, o_ref.shape).astype(o_ref.dtype)


# ----------------------------------------------------------------------------
# Kernel wrappers
# ----------------------------------------------------------------------------
def _pick_row_tile(m, target=512):
    """Largest multiple-of-8 divisor of m that is <= target; full m if none."""
    if m <= target:
        return m
    t = (target // 8) * 8
    while t >= 8:
        if m % t == 0:
            return t
        t -= 8
    return m


def matmul_act(x, w, act="none", out_dtype=jnp.bfloat16, tm_target=512):
    """Row-tiled bf16 matmul with fused activation (used for conv1)."""
    M, K = x.shape
    _, Cout = w.shape
    tm = _pick_row_tile(M, tm_target)
    grid = (M // tm,)
    return pl.pallas_call(
        functools.partial(_matmul_act_kernel, act=act),
        out_shape=jax.ShapeDtypeStruct((M, Cout), out_dtype),
        grid_spec=pltpu.PrefetchScalarGridSpec(
            num_scalar_prefetch=0,
            grid=grid,
            in_specs=[
                pl.BlockSpec((tm, K), lambda i: (i, 0)),
                pl.BlockSpec((K, Cout), lambda i: (0, 0)),
            ],
            out_specs=pl.BlockSpec((tm, Cout), lambda i: (i, 0)),
        ),
        compiler_params=pltpu.CompilerParams(
            dimension_semantics=("parallel",),
            vmem_limit_bytes=VMEM_LIMIT),
    )(x, w)


def matmul_bn_relu6(x, w, gamma, beta, out_dtype=jnp.bfloat16, ct=128, kt=256):
    """Channel/K-tiled bf16 matmul with fused training-mode BN + ReLU6."""
    M, K = x.shape
    _, Cout = w.shape
    ct = min(ct, Cout)
    kt = min(kt, K)
    assert Cout % ct == 0 and K % kt == 0
    grid = (Cout // ct, K // kt)
    g2 = gamma.reshape(1, Cout).astype(jnp.float32)
    b2 = beta.reshape(1, Cout).astype(jnp.float32)
    return pl.pallas_call(
        _matmul_bn_relu6_kernel,
        out_shape=jax.ShapeDtypeStruct((M, Cout), out_dtype),
        grid_spec=pltpu.PrefetchScalarGridSpec(
            num_scalar_prefetch=0,
            grid=grid,
            in_specs=[
                pl.BlockSpec((M, kt), lambda j, k: (0, k)),
                pl.BlockSpec((kt, ct), lambda j, k: (k, j)),
                pl.BlockSpec((1, ct), lambda j, k: (0, j)),
                pl.BlockSpec((1, ct), lambda j, k: (0, j)),
            ],
            out_specs=pl.BlockSpec((M, ct), lambda j, k: (0, j)),
            scratch_shapes=[pltpu.VMEM((M, ct), jnp.float32)],
        ),
        compiler_params=pltpu.CompilerParams(
            dimension_semantics=("parallel", "arbitrary"),
            vmem_limit_bytes=VMEM_LIMIT),
    )(x, w, g2, b2)


def conv45_fused(p4, w4m, w5f, n_batch, kt=1024):
    """Fused conv4 + ReLU6 + conv5 + Sigmoid.  Returns (n_batch*8, 128) slab whose
    [n*8, 0] entry holds the scalar for batch element n (lane-dense store)."""
    M, K = p4.shape
    _, Cout = w4m.shape
    assert M % n_batch == 0
    rows = M // n_batch                      # = 16 spatial positions of conv4
    kt = min(kt, K)
    assert K % kt == 0
    grid = (n_batch, K // kt)
    return pl.pallas_call(
        _conv45_kernel,
        out_shape=jax.ShapeDtypeStruct((n_batch * 8, 128), jnp.float32),
        grid_spec=pltpu.PrefetchScalarGridSpec(
            num_scalar_prefetch=0,
            grid=grid,
            in_specs=[
                pl.BlockSpec((rows, kt), lambda n, k: (n, k)),
                pl.BlockSpec((kt, Cout), lambda n, k: (k, 0)),
                pl.BlockSpec((rows, Cout), lambda n, k: (0, 0)),
            ],
            out_specs=pl.BlockSpec((8, 128), lambda n, k: (n, 0)),
            scratch_shapes=[pltpu.VMEM((rows, Cout), jnp.float32)],
        ),
        compiler_params=pltpu.CompilerParams(
            dimension_semantics=("parallel", "arbitrary"),
            vmem_limit_bytes=VMEM_LIMIT),
    )(p4, w4m, w5f)


# ----------------------------------------------------------------------------
# Plain-JAX glue: NHWC im2col, spectral norm, weight layout prep
# ----------------------------------------------------------------------------
def im2col_nhwc(x, k, stride, pad):
    """x: (N, H, W, C) -> (N*Ho*Wo, k*k*C), rows ordered (n, oh, ow), cols (tap, c)."""
    N, H, W, C = x.shape
    Ho = (H + 2 * pad - k) // stride + 1
    Wo = (W + 2 * pad - k) // stride + 1
    xp = jnp.pad(x, ((0, 0), (pad, pad), (pad, pad), (0, 0)))
    taps = []
    for ki in range(k):
        for kj in range(k):
            taps.append(xp[:, ki:ki + stride * Ho:stride, kj:kj + stride * Wo:stride, :])
    pat = jnp.stack(taps, axis=3)            # (N, Ho, Wo, k*k, C) -- stays channel-minor
    return pat.reshape(N * Ho * Wo, k * k * C), Ho, Wo


def spectral_normalize(w, key, n_iter=1, eps=1e-12):
    """PyTorch-style spectral_norm on a conv weight (Cout, Cin, K, K), dim=0."""
    wm = w.reshape(w.shape[0], -1)
    u = jax.random.normal(key, (wm.shape[0],), dtype=jnp.float32)
    u = u / (jnp.linalg.norm(u) + eps)
    v = None
    for _ in range(n_iter):
        v = wm.T @ u
        v = v / (jnp.linalg.norm(v) + eps)
        u = wm @ v
        u = u / (jnp.linalg.norm(u) + eps)
    sigma = u @ (wm @ v)
    return w / sigma


def _conv_weight_to_matmul(w):
    """(Cout, Cin, k, k) -> (k*k*Cin, Cout), matching im2col column order."""
    Cout, Cin, k, _ = w.shape
    return jnp.transpose(w, (2, 3, 1, 0)).reshape(k * k * Cin, Cout)


def init_params(key):
    ks = jax.random.split(key, 10)
    scale = 0.05
    w1 = scale * jax.random.normal(ks[0], (ndf, nc, 4, 4), jnp.float32)
    w2 = scale * jax.random.normal(ks[1], (ndf * 2, ndf, 4, 4), jnp.float32)
    w3 = scale * jax.random.normal(ks[2], (ndf * 4, ndf * 2, 4, 4), jnp.float32)
    w4 = scale * jax.random.normal(ks[3], (ndf * 8, ndf * 4, 4, 4), jnp.float32)
    w5 = scale * jax.random.normal(ks[4], (1, ndf * 8, 4, 4), jnp.float32)
    # spectral norm on convs 1-4 (not the last conv), as in the module
    w1 = spectral_normalize(w1, ks[5])
    w2 = spectral_normalize(w2, ks[6])
    w3 = spectral_normalize(w3, ks[7])
    w4 = spectral_normalize(w4, ks[8])
    # pad conv1 Cin 3 -> 8 with zeros (matches zero-padded input channels; K = 128)
    w1p = jnp.pad(w1, ((0, 0), (0, CIN_PAD - nc), (0, 0), (0, 0)))
    # one-time conversion to matmul-ready layouts, bf16 for the MXU
    w1m = _conv_weight_to_matmul(w1p).astype(jnp.bfloat16)      # (128,   64)
    w2m = _conv_weight_to_matmul(w2).astype(jnp.bfloat16)       # (1024, 128)
    w3m = _conv_weight_to_matmul(w3).astype(jnp.bfloat16)       # (2048, 256)
    w4m = _conv_weight_to_matmul(w4).astype(jnp.bfloat16)       # (4096, 512)
    # conv5 weight flattened for the fused reduce epilogue: (16 positions, 512 ch)
    w5f = jnp.transpose(w5[0], (1, 2, 0)).reshape(16, ndf * 8).astype(jnp.float32)
    g2 = jnp.ones((ndf * 2,), jnp.float32)
    b2 = jnp.zeros((ndf * 2,), jnp.float32)
    g3 = jnp.ones((ndf * 4,), jnp.float32)
    b3 = jnp.zeros((ndf * 4,), jnp.float32)
    return dict(w1m=w1m, w2m=w2m, w3m=w3m, w4m=w4m, w5f=w5f,
                g2=g2, b2=b2, g3=g3, b3=b3)


def discriminator_forward(params, x):
    """x: (N, 3, 64, 64) NCHW f32 -> (N,) sigmoid scores."""
    N = x.shape[0]
    # Single layout conversion at the boundary; everything downstream is NHWC bf16.
    xh = jnp.transpose(x, (0, 2, 3, 1))
    xh = jnp.pad(xh, ((0, 0), (0, 0), (0, 0), (0, CIN_PAD - nc))).astype(jnp.bfloat16)

    # conv1 + ReLU6                                   (N, 32, 32, 64)
    p1, Ho, Wo = im2col_nhwc(xh, 4, 2, 1)
    h = matmul_act(p1, params["w1m"], act="relu6").reshape(N, Ho, Wo, ndf)

    # conv2 + BN + ReLU6                              (N, 16, 16, 128)
    p2, Ho, Wo = im2col_nhwc(h, 4, 2, 1)
    h = matmul_bn_relu6(p2, params["w2m"], params["g2"], params["b2"]).reshape(N, Ho, Wo, ndf * 2)

    # conv3 + BN + ReLU6                              (N, 8, 8, 256)
    p3, Ho, Wo = im2col_nhwc(h, 4, 2, 1)
    h = matmul_bn_relu6(p3, params["w3m"], params["g3"], params["b3"]).reshape(N, Ho, Wo, ndf * 4)

    # conv4 + ReLU6 + conv5 + Sigmoid (fused)         (N,)
    p4, _, _ = im2col_nhwc(h, 4, 2, 1)
    out = conv45_fused(p4, params["w4m"], params["w5f"], N)
    return out.reshape(N, 8, 128)[:, 0, 0]


if __name__ == "__main__":
    key = jax.random.PRNGKey(0)
    pkey, xkey = jax.random.split(key)
    params = init_params(pkey)
    # DCGAN discriminator requires 64x64 inputs (4,2,1 convs down to 1x1); batch=2.
    x = jax.random.normal(xkey, (2, nc, 64, 64), jnp.float32)

    out = jax.jit(discriminator_forward)(params, x)
    out = jax.block_until_ready(out)

    assert out.shape == (2,), out.shape
    assert bool(jnp.all(jnp.isfinite(out)))
    assert bool(jnp.all((out >= 0.0) & (out <= 1.0)))  # sigmoid output
    print("KERNEL_OK")
</pallas_src>

<mosaic_0001>
module attributes {stable_mosaic.version = 11 : i64} {
  func.func @_matmul_act_kernel(%arg0: i32, %arg1: memref<512x128xbf16, #tpu.memory_space<vmem>>, %arg2: memref<128x64xbf16, #tpu.memory_space<vmem>>, %arg3: memref<512x64xbf16, #tpu.memory_space<vmem>>) attributes {dimension_semantics = [#tpu.dimension_semantics<parallel>], iteration_bounds = array<i64: 4>, scalar_prefetch = 0 : i64, scratch_operands = 0 : i64, tpu.core_type = #tpu.core_type<tc>, window_params = [{transform_indices = @transform_0, window_bounds = array<i64: 512, 128>}, {pipeline_mode = #tpu.pipeline_mode<synchronous>, transform_indices = @transform_1, window_bounds = array<i64: 128, 64>}, {transform_indices = @transform_2, window_bounds = array<i64: 512, 64>}]} {
    %c0 = arith.constant 0 : index
    %c0_0 = arith.constant 0 : index
    %0 = vector.load %arg1[%c0, %c0_0] : memref<512x128xbf16, #tpu.memory_space<vmem>>, vector<512x128xbf16>
    %c0_1 = arith.constant 0 : index
    %c0_2 = arith.constant 0 : index
    %1 = vector.load %arg2[%c0_1, %c0_2] : memref<128x64xbf16, #tpu.memory_space<vmem>>, vector<128x64xbf16>
    %cst = arith.constant dense<0.000000e+00> : vector<512x64xf32>
    %2 = tpu.matmul %0, %1, %cst {dimension_numbers = #tpu.dot_dimension_numbers<[1], [0], [0], [1], [0, 0, 1, 1], [], []>} : vector<512x128xbf16>, vector<128x64xbf16>, vector<512x64xf32> -> vector<512x64xf32>
    %cst_3 = arith.constant 0.000000e+00 : f32
    %cst_4 = arith.constant 6.000000e+00 : f32
    %3 = vector.broadcast %cst_3 : f32 to vector<512x64xf32>
    %4 = arith.maximumf %3, %2 : vector<512x64xf32>
    %5 = vector.broadcast %cst_4 : f32 to vector<512x64xf32>
    %6 = arith.minimumf %5, %4 : vector<512x64xf32>
    %7 = arith.truncf %6 : vector<512x64xf32> to vector<512x64xbf16>
    %c0_5 = arith.constant 0 : index
    %c0_6 = arith.constant 0 : index
    %8 = vector.load %arg3[%c0_5, %c0_6] : memref<512x64xbf16, #tpu.memory_space<vmem>>, vector<512x64xbf16>
    tpu.vector_store %arg3[%c0_5, %c0_6], %7 {strides = array<i32>} : memref<512x64xbf16, #tpu.memory_space<vmem>>, vector<512x64xbf16>,
    return
  }
  func.func @transform_0(%arg0: i32) -> (i32, i32) {
    %c0_i32 = arith.constant 0 : i32
    %c0_i32_0 = arith.constant 0 : i32
    return %arg0, %c0_i32 : i32, i32
  }
  func.func @transform_1(%arg0: i32) -> (i32, i32) {
    %c0_i32 = arith.constant 0 : i32
    %c0_i32_0 = arith.constant 0 : i32
    %c0_i32_1 = arith.constant 0 : i32
    return %c0_i32, %c0_i32_0 : i32, i32
  }
  func.func @transform_2(%arg0: i32) -> (i32, i32) {
    %c0_i32 = arith.constant 0 : i32
    %c0_i32_0 = arith.constant 0 : i32
    return %arg0, %c0_i32 : i32, i32
  }
}

module attributes {stable_mosaic.version = 11 : i64} {
  func.func @_matmul_bn_relu6_kernel(%arg0: i32, %arg1: i32, %arg2: memref<512x256xbf16, #tpu.memory_space<vmem>>, %arg3: memref<256x128xbf16, #tpu.memory_space<vmem>>, %arg4: memref<1x128xf32, #tpu.memory_space<vmem>>, %arg5: memref<1x128xf32, #tpu.memory_space<vmem>>, %arg6: memref<512x128xbf16, #tpu.memory_space<vmem>>, %arg7: memref<512x128xf32, #tpu.memory_space<vmem>>) attributes {dimension_semantics = [#tpu.dimension_semantics<parallel>, #tpu.dimension_semantics<arbitrary>], iteration_bounds = array<i64: 1, 4>, scalar_prefetch = 0 : i64, scratch_operands = 1 : i64, tpu.core_type = #tpu.core_type<tc>, window_params = [{transform_indices = @transform_0, window_bounds = array<i64: 512, 256>}, {transform_indices = @transform_1, window_bounds = array<i64: 256, 128>}, {transform_indices = @transform_2, window_bounds = array<i64: 1, 128>}, {transform_indices = @transform_3, window_bounds = array<i64: 1, 128>}, {transform_indices = @transform_4, window_bounds = array<i64: 512, 128>}]} {
    %c0_i32 = arith.constant 0 : i32
    %0 = arith.cmpi eq, %arg1, %c0_i32 : i32
    %1 = arith.extui %0 : i1 to i32
    %c0_i32_0 = arith.constant 0 : i32
    %2 = arith.cmpi ne, %1, %c0_i32_0 : i32
    scf.if %2 {
      %cst_9 = arith.constant 0.000000e+00 : f32
      %12 = vector.broadcast %cst_9 : f32 to vector<512x128xf32>
      %c0_10 = arith.constant 0 : index
      %c0_11 = arith.constant 0 : index
      %13 = vector.load %arg7[%c0_10, %c0_11] : memref<512x128xf32, #tpu.memory_space<vmem>>, vector<512x128xf32>
      tpu.vector_store %arg7[%c0_10, %c0_11], %12 {strides = array<i32>} : memref<512x128xf32, #tpu.memory_space<vmem>>, vector<512x128xf32>,
    } else {
    }
    %c0 = arith.constant 0 : index
    %c0_1 = arith.constant 0 : index
    %3 = vector.load %arg7[%c0, %c0_1] : memref<512x128xf32, #tpu.memory_space<vmem>>, vector<512x128xf32>
    %c0_2 = arith.constant 0 : index
    %c0_3 = arith.constant 0 : index
    %4 = vector.load %arg2[%c0_2, %c0_3] : memref<512x256xbf16, #tpu.memory_space<vmem>>, vector<512x256xbf16>
    %c0_4 = arith.constant 0 : index
    %c0_5 = arith.constant 0 : index
    %5 = vector.load %arg3[%c0_4, %c0_5] : memref<256x128xbf16, #tpu.memory_space<vmem>>, vector<256x128xbf16>
    %cst = arith.constant dense<0.000000e+00> : vector<512x128xf32>
    %6 = tpu.matmul %4, %5, %cst {dimension_numbers = #tpu.dot_dimension_numbers<[1], [0], [0], [1], [0, 0, 1, 1], [], []>} : vector<512x256xbf16>, vector<256x128xbf16>, vector<512x128xf32> -> vector<512x128xf32>
    %7 = arith.addf %3, %6 : vector<512x128xf32>
    %c0_6 = arith.constant 0 : index
    %c0_7 = arith.constant 0 : index
    %8 = vector.load %arg7[%c0_6, %c0_7] : memref<512x128xf32, #tpu.memory_space<vmem>>, vector<512x128xf32>
    tpu.vector_store %arg7[%c0_6, %c0_7], %7 {strides = array<i32>} : memref<512x128xf32, #tpu.memory_space<vmem>>, vector<512x128xf32>,
    %c3_i32 = arith.constant 3 : i32
    %9 = arith.cmpi eq, %arg1, %c3_i32 : i32
    %10 = arith.extui %9 : i1 to i32
    %c0_i32_8 = arith.constant 0 : i32
    %11 = arith.cmpi ne, %10, %c0_i32_8 : i32
    scf.if %11 {
      %c0_9 = arith.constant 0 : index
      %c0_10 = arith.constant 0 : index
      %12 = vector.load %arg7[%c0_9, %c0_10] : memref<512x128xf32, #tpu.memory_space<vmem>>, vector<512x128xf32>
      %cst_11 = arith.constant dense<0.000000e+00> : vector<128xf32>
      %13 = vector.multi_reduction <add>, %12, %cst_11 [0] : vector<512x128xf32> to vector<128xf32>
      %14 = vector.shape_cast %13 : vector<128xf32> to vector<1x128xf32>
      %cst_12 = arith.constant 0.001953125 : f32
      %15 = vector.broadcast %cst_12 : f32 to vector<1x128xf32>
      %16 = arith.mulf %14, %15 : vector<1x128xf32>
      %17 = arith.mulf %12, %12 : vector<512x128xf32>
      %cst_13 = arith.constant dense<0.000000e+00> : vector<128xf32>
      %18 = vector.multi_reduction <add>, %17, %cst_13 [0] : vector<512x128xf32> to vector<128xf32>
      %19 = vector.shape_cast %18 : vector<128xf32> to vector<1x128xf32>
      %cst_14 = arith.constant 0.001953125 : f32
      %20 = vector.broadcast %cst_14 : f32 to vector<1x128xf32>
      %21 = arith.mulf %19, %20 : vector<1x128xf32>
      %22 = arith.mulf %16, %16 : vector<1x128xf32>
      %23 = arith.subf %21, %22 : vector<1x128xf32>
      %cst_15 = arith.constant 0.000000e+00 : f32
      %24 = vector.broadcast %cst_15 : f32 to vector<1x128xf32>
      %25 = arith.maximumf %23, %24 : vector<1x128xf32>
      %26 = vector.broadcast %16 : vector<1x128xf32> to vector<512x128xf32>
      %27 = arith.subf %12, %26 : vector<512x128xf32>
      %cst_16 = arith.constant 9.99999974E-6 : f32
      %28 = vector.broadcast %cst_16 : f32 to vector<1x128xf32>
      %29 = arith.addf %25, %28 : vector<1x128xf32>
      %30 = math.rsqrt %29 : vector<1x128xf32>
      %31 = vector.broadcast %30 : vector<1x128xf32> to vector<512x128xf32>
      %32 = arith.mulf %27, %31 : vector<512x128xf32>
      %c0_17 = arith.constant 0 : index
      %c0_18 = arith.constant 0 : index
      %33 = vector.load %arg4[%c0_17, %c0_18] : memref<1x128xf32, #tpu.memory_space<vmem>>, vector<1x128xf32>
      %34 = vector.broadcast %33 : vector<1x128xf32> to vector<512x128xf32>
      %35 = arith.mulf %32, %34 : vector<512x128xf32>
      %c0_19 = arith.constant 0 : index
      %c0_20 = arith.constant 0 : index
      %36 = vector.load %arg5[%c0_19, %c0_20] : memref<1x128xf32, #tpu.memory_space<vmem>>, vector<1x128xf32>
      %37 = vector.broadcast %36 : vector<1x128xf32> to vector<512x128xf32>
      %38 = arith.addf %35, %37 : vector<512x128xf32>
      %cst_21 = arith.constant 0.000000e+00 : f32
      %cst_22 = arith.constant 6.000000e+00 : f32
      %39 = vector.broadcast %cst_21 : f32 to vector<512x128xf32>
      %40 = arith.maximumf %39, %38 : vector<512x128xf32>
      %41 = vector.broadcast %cst_22 : f32 to vector<512x128xf32>
      %42 = arith.minimumf %41, %40 : vector<512x128xf32>
      %43 = arith.truncf %42 : vector<512x128xf32> to vector<512x128xbf16>
      %c0_23 = arith.constant 0 : index
      %c0_24 = arith.constant 0 : index
      %44 = vector.load %arg6[%c0_23, %c0_24] : memref<512x128xbf16, #tpu.memory_space<vmem>>, vector<512x128xbf16>
      tpu.vector_store %arg6[%c0_23, %c0_24], %43 {strides = array<i32>} : memref<512x128xbf16, #tpu.memory_space<vmem>>, vector<512x128xbf16>,
    } else {
    }
    return
  }
  func.func @transform_0(%arg0: i32, %arg1: i32) -> (i32, i32) {
    %c0_i32 = arith.constant 0 : i32
    %c0_i32_0 = arith.constant 0 : i32
    return %c0_i32, %arg1 : i32, i32
  }
  func.func @transform_1(%arg0: i32, %arg1: i32) -> (i32, i32) {
    %c0_i32 = arith.constant 0 : i32
    return %arg1, %arg0 : i32, i32
  }
  func.func @transform_2(%arg0: i32, %arg1: i32) -> (i32, i32) {
    %c0_i32 = arith.constant 0 : i32
    %c0_i32_0 = arith.constant 0 : i32
    return %c0_i32, %arg0 : i32, i32
  }
  func.func @transform_3(%arg0: i32, %arg1: i32) -> (i32, i32) {
    %c0_i32 = arith.constant 0 : i32
    %c0_i32_0 = arith.constant 0 : i32
    return %c0_i32, %arg0 : i32, i32
  }
  func.func @transform_4(%arg0: i32, %arg1: i32) -> (i32, i32) {
    %c0_i32 = arith.constant 0 : i32
    %c0_i32_0 = arith.constant 0 : i32
    return %c0_i32, %arg0 : i32, i32
  }
}

module attributes {stable_mosaic.version = 11 : i64} {
  func.func @_matmul_bn_relu6_kernel(%arg0: i32, %arg1: i32, %arg2: memref<128x256xbf16, #tpu.memory_space<vmem>>, %arg3: memref<256x128xbf16, #tpu.memory_space<vmem>>, %arg4: memref<1x128xf32, #tpu.memory_space<vmem>>, %arg5: memref<1x128xf32, #tpu.memory_space<vmem>>, %arg6: memref<128x128xbf16, #tpu.memory_space<vmem>>, %arg7: memref<128x128xf32, #tpu.memory_space<vmem>>) attributes {dimension_semantics = [#tpu.dimension_semantics<parallel>, #tpu.dimension_semantics<arbitrary>], iteration_bounds = array<i64: 2, 8>, scalar_prefetch = 0 : i64, scratch_operands = 1 : i64, tpu.core_type = #tpu.core_type<tc>, window_params = [{transform_indices = @transform_0, window_bounds = array<i64: 128, 256>}, {transform_indices = @transform_1, window_bounds = array<i64: 256, 128>}, {transform_indices = @transform_2, window_bounds = array<i64: 1, 128>}, {transform_indices = @transform_3, window_bounds = array<i64: 1, 128>}, {transform_indices = @transform_4, window_bounds = array<i64: 128, 128>}]} {
    %c0_i32 = arith.constant 0 : i32
    %0 = arith.cmpi eq, %arg1, %c0_i32 : i32
    %1 = arith.extui %0 : i1 to i32
    %c0_i32_0 = arith.constant 0 : i32
    %2 = arith.cmpi ne, %1, %c0_i32_0 : i32
    scf.if %2 {
      %cst_9 = arith.constant 0.000000e+00 : f32
      %12 = vector.broadcast %cst_9 : f32 to vector<128x128xf32>
      %c0_10 = arith.constant 0 : index
      %c0_11 = arith.constant 0 : index
      %13 = vector.load %arg7[%c0_10, %c0_11] : memref<128x128xf32, #tpu.memory_space<vmem>>, vector<128x128xf32>
      tpu.vector_store %arg7[%c0_10, %c0_11], %12 {strides = array<i32>} : memref<128x128xf32, #tpu.memory_space<vmem>>, vector<128x128xf32>,
    } else {
    }
    %c0 = arith.constant 0 : index
    %c0_1 = arith.constant 0 : index
    %3 = vector.load %arg7[%c0, %c0_1] : memref<128x128xf32, #tpu.memory_space<vmem>>, vector<128x128xf32>
    %c0_2 = arith.constant 0 : index
    %c0_3 = arith.constant 0 : index
    %4 = vector.load %arg2[%c0_2, %c0_3] : memref<128x256xbf16, #tpu.memory_space<vmem>>, vector<128x256xbf16>
    %c0_4 = arith.constant 0 : index
    %c0_5 = arith.constant 0 : index
    %5 = vector.load %arg3[%c0_4, %c0_5] : memref<256x128xbf16, #tpu.memory_space<vmem>>, vector<256x128xbf16>
    %cst = arith.constant dense<0.000000e+00> : vector<128x128xf32>
    %6 = tpu.matmul %4, %5, %cst {dimension_numbers = #tpu.dot_dimension_numbers<[1], [0], [0], [1], [0, 0, 1, 1], [], []>} : vector<128x256xbf16>, vector<256x128xbf16>, vector<128x128xf32> -> vector<128x128xf32>
    %7 = arith.addf %3, %6 : vector<128x128xf32>
    %c0_6 = arith.constant 0 : index
    %c0_7 = arith.constant 0 : index
    %8 = vector.load %arg7[%c0_6, %c0_7] : memref<128x128xf32, #tpu.memory_space<vmem>>, vector<128x128xf32>
    tpu.vector_store %arg7[%c0_6, %c0_7], %7 {strides = array<i32>} : memref<128x128xf32, #tpu.memory_space<vmem>>, vector<128x128xf32>,
    %c7_i32 = arith.constant 7 : i32
    %9 = arith.cmpi eq, %arg1, %c7_i32 : i32
    %10 = arith.extui %9 : i1 to i32
    %c0_i32_8 = arith.constant 0 : i32
    %11 = arith.cmpi ne, %10, %c0_i32_8 : i32
    scf.if %11 {
      %c0_9 = arith.constant 0 : index
      %c0_10 = arith.constant 0 : index
      %12 = vector.load %arg7[%c0_9, %c0_10] : memref<128x128xf32, #tpu.memory_space<vmem>>, vector<128x128xf32>
      %cst_11 = arith.constant dense<0.000000e+00> : vector<128xf32>
      %13 = vector.multi_reduction <add>, %12, %cst_11 [0] : vector<128x128xf32> to vector<128xf32>
      %14 = vector.shape_cast %13 : vector<128xf32> to vector<1x128xf32>
      %cst_12 = arith.constant 7.812500e-03 : f32
      %15 = vector.broadcast %cst_12 : f32 to vector<1x128xf32>
      %16 = arith.mulf %14, %15 : vector<1x128xf32>
      %17 = arith.mulf %12, %12 : vector<128x128xf32>
      %cst_13 = arith.constant dense<0.000000e+00> : vector<128xf32>
      %18 = vector.multi_reduction <add>, %17, %cst_13 [0] : vector<128x128xf32> to vector<128xf32>
      %19 = vector.shape_cast %18 : vector<128xf32> to vector<1x128xf32>
      %cst_14 = arith.constant 7.812500e-03 : f32
      %20 = vector.broadcast %cst_14 : f32 to vector<1x128xf32>
      %21 = arith.mulf %19, %20 : vector<1x128xf32>
      %22 = arith.mulf %16, %16 : vector<1x128xf32>
      %23 = arith.subf %21, %22 : vector<1x128xf32>
      %cst_15 = arith.constant 0.000000e+00 : f32
      %24 = vector.broadcast %cst_15 : f32 to vector<1x128xf32>
      %25 = arith.maximumf %23, %24 : vector<1x128xf32>
      %26 = vector.broadcast %16 : vector<1x128xf32> to vector<128x128xf32>
      %27 = arith.subf %12, %26 : vector<128x128xf32>
      %cst_16 = arith.constant 9.99999974E-6 : f32
      %28 = vector.broadcast %cst_16 : f32 to vector<1x128xf32>
      %29 = arith.addf %25, %28 : vector<1x128xf32>
      %30 = math.rsqrt %29 : vector<1x128xf32>
      %31 = vector.broadcast %30 : vector<1x128xf32> to vector<128x128xf32>
      %32 = arith.mulf %27, %31 : vector<128x128xf32>
      %c0_17 = arith.constant 0 : index
      %c0_18 = arith.constant 0 : index
      %33 = vector.load %arg4[%c0_17, %c0_18] : memref<1x128xf32, #tpu.memory_space<vmem>>, vector<1x128xf32>
      %34 = vector.broadcast %33 : vector<1x128xf32> to vector<128x128xf32>
      %35 = arith.mulf %32, %34 : vector<128x128xf32>
      %c0_19 = arith.constant 0 : index
      %c0_20 = arith.constant 0 : index
      %36 = vector.load %arg5[%c0_19, %c0_20] : memref<1x128xf32, #tpu.memory_space<vmem>>, vector<1x128xf32>
      %37 = vector.broadcast %36 : vector<1x128xf32> to vector<128x128xf32>
      %38 = arith.addf %35, %37 : vector<128x128xf32>
      %cst_21 = arith.constant 0.000000e+00 : f32
      %cst_22 = arith.constant 6.000000e+00 : f32
      %39 = vector.broadcast %cst_21 : f32 to vector<128x128xf32>
      %40 = arith.maximumf %39, %38 : vector<128x128xf32>
      %41 = vector.broadcast %cst_22 : f32 to vector<128x128xf32>
      %42 = arith.minimumf %41, %40 : vector<128x128xf32>
      %43 = arith.truncf %42 : vector<128x128xf32> to vector<128x128xbf16>
      %c0_23 = arith.constant 0 : index
      %c0_24 = arith.constant 0 : index
      %44 = vector.load %arg6[%c0_23, %c0_24] : memref<128x128xbf16, #tpu.memory_space<vmem>>, vector<128x128xbf16>
      tpu.vector_store %arg6[%c0_23, %c0_24], %43 {strides = array<i32>} : memref<128x128xbf16, #tpu.memory_space<vmem>>, vector<128x128xbf16>,
    } else {
    }
    return
  }
  func.func @transform_0(%arg0: i32, %arg1: i32) -> (i32, i32) {
    %c0_i32 = arith.constant 0 : i32
    %c0_i32_0 = arith.constant 0 : i32
    return %c0_i32, %arg1 : i32, i32
  }
  func.func @transform_1(%arg0: i32, %arg1: i32) -> (i32, i32) {
    %c0_i32 = arith.constant 0 : i32
    return %arg1, %arg0 : i32, i32
  }
  func.func @transform_2(%arg0: i32, %arg1: i32) -> (i32, i32) {
    %c0_i32 = arith.constant 0 : i32
    %c0_i32_0 = arith.constant 0 : i32
    return %c0_i32, %arg0 : i32, i32
  }
  func.func @transform_3(%arg0: i32, %arg1: i32) -> (i32, i32) {
    %c0_i32 = arith.constant 0 : i32
    %c0_i32_0 = arith.constant 0 : i32
    return %c0_i32, %arg0 : i32, i32
  }
  func.func @transform_4(%arg0: i32, %arg1: i32) -> (i32, i32) {
    %c0_i32 = arith.constant 0 : i32
    %c0_i32_0 = arith.constant 0 : i32
    return %c0_i32, %arg0 : i32, i32
  }
}

module attributes {stable_mosaic.version = 11 : i64} {
  func.func @_conv45_kernel(%arg0: i32, %arg1: i32, %arg2: memref<16x1024xbf16, #tpu.memory_space<vmem>>, %arg3: memref<1024x512xbf16, #tpu.memory_space<vmem>>, %arg4: memref<16x512xf32, #tpu.memory_space<vmem>>, %arg5: memref<8x128xf32, #tpu.memory_space<vmem>>, %arg6: memref<16x512xf32, #tpu.memory_space<vmem>>) attributes {dimension_semantics = [#tpu.dimension_semantics<parallel>, #tpu.dimension_semantics<arbitrary>], iteration_bounds = array<i64: 2, 4>, scalar_prefetch = 0 : i64, scratch_operands = 1 : i64, tpu.core_type = #tpu.core_type<tc>, window_params = [{transform_indices = @transform_0, window_bounds = array<i64: 16, 1024>}, {transform_indices = @transform_1, window_bounds = array<i64: 1024, 512>}, {pipeline_mode = #tpu.pipeline_mode<synchronous>, transform_indices = @transform_2, window_bounds = array<i64: 16, 512>}, {transform_indices = @transform_3, window_bounds = array<i64: 8, 128>}]} {
    %c0_i32 = arith.constant 0 : i32
    %0 = arith.cmpi eq, %arg1, %c0_i32 : i32
    %1 = arith.extui %0 : i1 to i32
    %c0_i32_0 = arith.constant 0 : i32
    %2 = arith.cmpi ne, %1, %c0_i32_0 : i32
    scf.if %2 {
      %cst_9 = arith.constant 0.000000e+00 : f32
      %12 = vector.broadcast %cst_9 : f32 to vector<16x512xf32>
      %c0_10 = arith.constant 0 : index
      %c0_11 = arith.constant 0 : index
      %13 = vector.load %arg6[%c0_10, %c0_11] : memref<16x512xf32, #tpu.memory_space<vmem>>, vector<16x512xf32>
      tpu.vector_store %arg6[%c0_10, %c0_11], %12 {strides = array<i32>} : memref<16x512xf32, #tpu.memory_space<vmem>>, vector<16x512xf32>,
    } else {
    }
    %c0 = arith.constant 0 : index
    %c0_1 = arith.constant 0 : index
    %3 = vector.load %arg6[%c0, %c0_1] : memref<16x512xf32, #tpu.memory_space<vmem>>, vector<16x512xf32>
    %c0_2 = arith.constant 0 : index
    %c0_3 = arith.constant 0 : index
    %4 = vector.load %arg2[%c0_2, %c0_3] : memref<16x1024xbf16, #tpu.memory_space<vmem>>, vector<16x1024xbf16>
    %c0_4 = arith.constant 0 : index
    %c0_5 = arith.constant 0 : index
    %5 = vector.load %arg3[%c0_4, %c0_5] : memref<1024x512xbf16, #tpu.memory_space<vmem>>, vector<1024x512xbf16>
    %cst = arith.constant dense<0.000000e+00> : vector<16x512xf32>
    %6 = tpu.matmul %4, %5, %cst {dimension_numbers = #tpu.dot_dimension_numbers<[1], [0], [0], [1], [0, 0, 1, 1], [], []>} : vector<16x1024xbf16>, vector<1024x512xbf16>, vector<16x512xf32> -> vector<16x512xf32>
    %7 = arith.addf %3, %6 : vector<16x512xf32>
    %c0_6 = arith.constant 0 : index
    %c0_7 = arith.constant 0 : index
    %8 = vector.load %arg6[%c0_6, %c0_7] : memref<16x512xf32, #tpu.memory_space<vmem>>, vector<16x512xf32>
    tpu.vector_store %arg6[%c0_6, %c0_7], %7 {strides = array<i32>} : memref<16x512xf32, #tpu.memory_space<vmem>>, vector<16x512xf32>,
    %c3_i32 = arith.constant 3 : i32
    %9 = arith.cmpi eq, %arg1, %c3_i32 : i32
    %10 = arith.extui %9 : i1 to i32
    %c0_i32_8 = arith.constant 0 : i32
    %11 = arith.cmpi ne, %10, %c0_i32_8 : i32
    scf.if %11 {
      %c0_9 = arith.constant 0 : index
      %c0_10 = arith.constant 0 : index
      %12 = vector.load %arg6[%c0_9, %c0_10] : memref<16x512xf32, #tpu.memory_space<vmem>>, vector<16x512xf32>
      %cst_11 = arith.constant 0.000000e+00 : f32
      %cst_12 = arith.constant 6.000000e+00 : f32
      %13 = vector.broadcast %cst_11 : f32 to vector<16x512xf32>
      %14 = arith.maximumf %13, %12 : vector<16x512xf32>
      %15 = vector.broadcast %cst_12 : f32 to vector<16x512xf32>
      %16 = arith.minimumf %15, %14 : vector<16x512xf32>
      %c0_13 = arith.constant 0 : index
      %c0_14 = arith.constant 0 : index
      %17 = vector.load %arg4[%c0_13, %c0_14] : memref<16x512xf32, #tpu.memory_space<vmem>>, vector<16x512xf32>
      %18 = arith.mulf %16, %17 : vector<16x512xf32>
      %cst_15 = arith.constant dense<0.000000e+00> : vector<16xf32>
      %19 = vector.multi_reduction <add>, %18, %cst_15 [1] : vector<16x512xf32> to vector<16xf32>
      %20 = vector.shape_cast %19 : vector<16xf32> to vector<16x1xf32>
      %cst_16 = arith.constant dense<0.000000e+00> : vector<1xf32>
      %21 = vector.multi_reduction <add>, %20, %cst_16 [0] : vector<16x1xf32> to vector<1xf32>
      %22 = vector.shape_cast %21 : vector<1xf32> to vector<1x1xf32>
      %23 = arith.negf %22 : vector<1x1xf32>
      %24 = math.exp %23 : vector<1x1xf32>
      %cst_17 = arith.constant 1.000000e+00 : f32
      %25 = vector.broadcast %cst_17 : f32 to vector<1x1xf32>
      %26 = arith.addf %25, %24 : vector<1x1xf32>
      %27 = arith.divf %25, %26 : vector<1x1xf32>
      %28 = vector.shape_cast %27 : vector<1x1xf32> to vector<1x1xf32>
      %29 = vector.broadcast %28 : vector<1x1xf32> to vector<8x128xf32>
      %c0_18 = arith.constant 0 : index
      %c0_19 = arith.constant 0 : index
      %30 = vector.load %arg5[%c0_18, %c0_19] : memref<8x128xf32, #tpu.memory_space<vmem>>, vector<8x128xf32>
      tpu.vector_store %arg5[%c0_18, %c0_19], %29 {strides = array<i32>} : memref<8x128xf32, #tpu.memory_space<vmem>>, vector<8x128xf32>,
    } else {
    }
    return
  }
  func.func @transform_0(%arg0: i32, %arg1: i32) -> (i32, i32) {
    %c0_i32 = arith.constant 0 : i32
    return %arg0, %arg1 : i32, i32
  }
  func.func @transform_1(%arg0: i32, %arg1: i32) -> (i32, i32) {
    %c0_i32 = arith.constant 0 : i32
    %c0_i32_0 = arith.constant 0 : i32
    return %arg1, %c0_i32 : i32, i32
  }
  func.func @transform_2(%arg0: i32, %arg1: i32) -> (i32, i32) {
    %c0_i32 = arith.constant 0 : i32
    %c0_i32_0 = arith.constant 0 : i32
    %c0_i32_1 = arith.constant 0 : i32
    return %c0_i32, %c0_i32_0 : i32, i32
  }
  func.func @transform_3(%arg0: i32, %arg1: i32) -> (i32, i32) {
    %c0_i32 = arith.constant 0 : i32
    %c0_i32_0 = arith.constant 0 : i32
    return %arg0, %c0_i32 : i32, i32
  }
}

</mosaic_0001>

<llo_original>
// kernel: discriminator_forward.4
$region0: #{discriminator_forward.4}
  #allocation0 [shape = 'u32[]', space=smem, size = 0x4, offset = 0x4, fixed_abs, tag = 'smem constant byte address 0x4 - core index']
  #allocation1 [shape = 'u32[144,128]{1,0:T(1,128)}', space=vmem, size = 0x12000, scoped, tag = 'internal scratch']
  %s0 = inlined_call_operand.vmem [shape: bf16[2048,128], index: 0, kind: input, shape index: {}]
  %s1 = inlined_call_operand.vmem [shape: bf16[128,64], index: 1, kind: input, shape index: {}]
  %s2 = inlined_call_operand.vmem [shape: bf16[2048,64], index: 2, kind: output, shape index: {}]
  %s3 = sld [smem:[#allocation0]]
  $region41: #{discriminator_forward.4} parent=0
    _
  %s5 = ssub.s32 1, %s3
  %s6 = scalar_select 0, %s5, %s3
  loop: start=0, step=1, limit=6
  $region2: #{discriminator_forward.4} parent=0 // loop_pre_header
    _
  $region3: #{discriminator_forward.4} parent=0 // loop_header
    %s8 = sphi 0, %s12
    %p9 = scmp.ge.s32.totalorder %s8, 6
    %s18 = sphi 0, %s20
    %s21 = sphi 0, %s18
    %s22 = sphi 0, %s21
    %s38 = sphi 0, %s22
    %s42 = sphi 0, %s42
    %s44 = sphi 0, %s42
    %s45 = sphi 0, %s44
    %s59 = sphi 0, %s45
    %s65 = sphi 0, %s67
    %s68 = sphi 0, %s65
    %s69 = sphi 0, %s68
    %s85 = sphi 0, %s69
  $region4: #{discriminator_forward.4} parent=0 // loop_header_branch
    %11 = sbr.rel (%p9) target = $region8
  $region5: #{discriminator_forward.4} parent=0 // loop_body
    %s13 = ssub.s32 %s8, 1
    %s14 = ssub.s32 %s8, 2
    %s15 = sadd.s32 %s8, 1
    %s16 = ssub.s32 %s8, %s15
    %p17 = scmp.eq.s32.totalorder %s16, 0
    %s19 = sadd.s32 %s18, 1
    %s20 = scalar_select %p17, %s18, %s19
    %p23 = pneg %p17
    %p24 = scmp.eq.s32.totalorder %s8, 3
    %p25 = por %p23, %p24
    %p26 = scmp.ne.s32.totalorder %s18, %s21
    %p27 = scmp.eq.s32.totalorder %s8, 0
    %p28 = por %p26, %p27
    %p29 = scmp.ne.s32.totalorder %s18, %s21
    %p30 = scmp.eq.s32.totalorder %s13, 3
    %p31 = por %p29, %p30
    %p32 = scmp.ne.s32.totalorder %s21, %s22
    %p33 = scmp.eq.s32.totalorder %s13, 0
    %p34 = por %p32, %p33
    %p35 = scmp.ne.s32.totalorder %s21, %s22
    %p36 = scmp.eq.s32.totalorder %s14, 3
    %p37 = por %p35, %p36
    %p39 = scmp.ne.s32.totalorder %s22, %s38
    %p40 = scmp.eq.s32.totalorder %s14, 0
    %p41 = por %p39, %p40
    %s43 = sadd.s32 %s42, 1
    %p46 = scmp.eq.s32.totalorder %s8, 3
    %p47 = scmp.ne.s32.totalorder %s42, %s44
    %p48 = scmp.eq.s32.totalorder %s8, 0
    %p49 = por %p47, %p48
    %p50 = scmp.ne.s32.totalorder %s42, %s44
    %p51 = scmp.eq.s32.totalorder %s13, 3
    %p52 = por %p50, %p51
    %p53 = scmp.ne.s32.totalorder %s44, %s45
    %p54 = scmp.eq.s32.totalorder %s13, 0
    %p55 = por %p53, %p54
    %p56 = scmp.ne.s32.totalorder %s44, %s45
    %p57 = scmp.eq.s32.totalorder %s14, 3
    %p58 = por %p56, %p57
    %p60 = scmp.ne.s32.totalorder %s45, %s59
    %p61 = scmp.eq.s32.totalorder %s14, 0
    %p62 = por %p60, %p61
    %s63 = ssub.s32 %s8, %s15
    %p64 = scmp.eq.s32.totalorder %s63, 0
    %s66 = sadd.s32 %s65, 1
    %s67 = scalar_select %p64, %s65, %s66
    %p70 = pneg %p64
    %p71 = scmp.eq.s32.totalorder %s8, 3
    %p72 = por %p70, %p71
    %p73 = scmp.ne.s32.totalorder %s65, %s68
    %p74 = scmp.eq.s32.totalorder %s8, 0
    %p75 = por %p73, %p74
    %p76 = scmp.ne.s32.totalorder %s65, %s68
    %p77 = scmp.eq.s32.totalorder %s13, 3
    %p78 = por %p76, %p77
    %p79 = scmp.ne.s32.totalorder %s68, %s69
    %p80 = scmp.eq.s32.totalorder %s13, 0
    %p81 = por %p79, %p80
    %p82 = scmp.ne.s32.totalorder %s68, %s69
    %p83 = scmp.eq.s32.totalorder %s14, 3
    %p84 = por %p82, %p83
    %p86 = scmp.ne.s32.totalorder %s69, %s85
    %p87 = scmp.eq.s32.totalorder %s14, 0
    %p88 = por %p86, %p87
    %p89 = scmp.le.s32.totalorder 1, %s8
    %p90 = scmp.lt.s32.totalorder %s8, 5
    %p91 = pnand %p89, %p90
    %p92 = pneg %p91
    // Predicated region
    $region9: #{discriminator_forward.4} parent=5 // pred_check
      _
    $region10: #{discriminator_forward.4} parent=5 // pred_check_branch
      %94 = sbr.rel (%p91) target = $region12
    $region11: #{discriminator_forward.4} parent=5 // pred_region
      %s95 = ssub.s32 %s8, 1
      // Predicated region
      $region13: #{discriminator_forward.4} parent=11 // pred_check
        %p96 = pneg %p55
      $region14: #{discriminator_forward.4} parent=11 // pred_check_branch
        %98 = sbr.rel (%p96) target = $region16
      $region15: #{discriminator_forward.4} parent=11 // pred_region
        _
      $region16: #{discriminator_forward.4} parent=11 // pred_fallthru
        _
    $region12: #{discriminator_forward.4} parent=5 // pred_fallthru
      _
    %p99 = scmp.lt.s32.totalorder %s8, 4
    // Predicated region
    $region17: #{discriminator_forward.4} parent=5 // pred_check
      %p100 = pneg %p99
    $region18: #{discriminator_forward.4} parent=5 // pred_check_branch
      %102 = sbr.rel (%p100) target = $region20
    $region19: #{discriminator_forward.4} parent=5 // pred_region
      // Predicated region
      $region21: #{discriminator_forward.4} parent=19 // pred_check
        %p103 = pneg %p28
      $region22: #{discriminator_forward.4} parent=19 // pred_check_branch
        %105 = sbr.rel (%p103) target = $region24
      $region23: #{discriminator_forward.4} parent=19 // pred_region
        %s106 = smul.u32 64, %s8
        %p107 = scmp.lt.s32.totalorder %s106, 255
        %s108 = scalar_select %p107, %s106, 255
        %s109 = smul.addr %s108, 4
        %s110 = scalar_lea.vmem %s0, %s109
        %s111 = smul.u32 64, %s8
      $region24: #{discriminator_forward.4} parent=19 // pred_fallthru
        _
    $region20: #{discriminator_forward.4} parent=5 // pred_fallthru
      _
    %p112 = scmp.le.s32.totalorder 1, %s8
    %p113 = scmp.lt.s32.totalorder %s8, 5
    %p114 = pnand %p112, %p113
    %p115 = pneg %p114
    // Predicated region
    $region25: #{discriminator_forward.4} parent=5 // pred_check
      _
    $region26: #{discriminator_forward.4} parent=5 // pred_check_branch
      %117 = sbr.rel (%p114) target = $region28
    $region27: #{discriminator_forward.4} parent=5 // pred_region
      %s118 = ssub.s32 %s8, 1
      %s119 = smul.u32 64, %s13
      %p120 = scmp.lt.s32.totalorder %s119, 255
      %s121 = scalar_select %p120, %s119, 255
      %s122 = smul.addr %s121, 4
      %s123 = scalar_lea.vmem %s0, %s122
      %p124 = pneg %p34
      %p125 = pneg %p31
      %p126 = pneg %p55
      %p127 = pneg %p52
      %p128 = pneg %p81
      %p129 = pneg %p78
      %s130 = smul.u32 64, %s13
      %p131 = scmp.lt.s32.totalorder %s130, 255
      %s132 = scalar_select %p131, %s130, 255
      %s133 = smul.addr %s132, 4
      %s134 = scalar_lea.vmem %s2, %s133
      %s135 = smul.u32 64, %s13
      %p136 = scmp.lt.s32.totalorder %s135, 255
      %s137 = scalar_select %p136, %s135, 255
      %s138 = smul.addr %s137, 4
      %s139 = scalar_lea.vmem %s0, %s138
      %s140 = smul.u32 64, %s13
      %s141 = smul.u32 64, %s13
      %p142 = scmp.lt.s32.totalorder %s141, 255
      %s143 = scalar_select %p142, %s141, 255
      %s144 = smul.addr %s143, 4
      %s145 = scalar_lea.vmem %s2, %s144
      %s146 = smul.u32 64, %s13
      %v148 = vld [vmem:[%s139] sm:$0xf]
      %v149 = vld [vmem:[%s139 + $0x4] sm:$0xf]
      %v150 = vld [vmem:[%s139 + $0x8] sm:$0xf]
      %v151 = vld [vmem:[%s139 + $0xc] sm:$0xf]
      %v152 = vld [vmem:[%s139 + $0x10] sm:$0xf]
      %v153 = vld [vmem:[%s139 + $0x14] sm:$0xf]
      %v154 = vld [vmem:[%s139 + $0x18] sm:$0xf]
      %v155 = vld [vmem:[%s139 + $0x1c] sm:$0xf]
      %v156 = vld [vmem:[%s139 + $0x20] sm:$0xf]
      %v157 = vld [vmem:[%s139 + $0x24] sm:$0xf]
      %v158 = vld [vmem:[%s139 + $0x28] sm:$0xf]
      %v159 = vld [vmem:[%s139 + $0x2c] sm:$0xf]
      %v160 = vld [vmem:[%s139 + $0x30] sm:$0xf]
      %v161 = vld [vmem:[%s139 + $0x34] sm:$0xf]
      %v162 = vld [vmem:[%s139 + $0x38] sm:$0xf]
      %v163 = vld [vmem:[%s139 + $0x3c] sm:$0xf]
      %v164 = vld [vmem:[%s139 + $0x40] sm:$0xf]
      %v165 = vld [vmem:[%s139 + $0x44] sm:$0xf]
      %v166 = vld [vmem:[%s139 + $0x48] sm:$0xf]
      %v167 = vld [vmem:[%s139 + $0x4c] sm:$0xf]
      %v168 = vld [vmem:[%s139 + $0x50] sm:$0xf]
      %v169 = vld [vmem:[%s139 + $0x54] sm:$0xf]
      %v170 = vld [vmem:[%s139 + $0x58] sm:$0xf]
      %v171 = vld [vmem:[%s139 + $0x5c] sm:$0xf]
      %v172 = vld [vmem:[%s139 + $0x60] sm:$0xf]
      %v173 = vld [vmem:[%s139 + $0x64] sm:$0xf]
      %v174 = vld [vmem:[%s139 + $0x68] sm:$0xf]
      %v175 = vld [vmem:[%s139 + $0x6c] sm:$0xf]
      %v176 = vld [vmem:[%s139 + $0x70] sm:$0xf]
      %v177 = vld [vmem:[%s139 + $0x74] sm:$0xf]
      %v178 = vld [vmem:[%s139 + $0x78] sm:$0xf]
      %v179 = vld [vmem:[%s139 + $0x7c] sm:$0xf]
      %v180 = vld [vmem:[%s139 + $0x80] sm:$0xf]
      %v181 = vld [vmem:[%s139 + $0x84] sm:$0xf]
      %v182 = vld [vmem:[%s139 + $0x88] sm:$0xf]
      %v183 = vld [vmem:[%s139 + $0x8c] sm:$0xf]
      %v184 = vld [vmem:[%s139 + $0x90] sm:$0xf]
      %v185 = vld [vmem:[%s139 + $0x94] sm:$0xf]
      %v186 = vld [vmem:[%s139 + $0x98] sm:$0xf]
      %v187 = vld [vmem:[%s139 + $0x9c] sm:$0xf]
      %v188 = vld [vmem:[%s139 + $0xa0] sm:$0xf]
      %v189 = vld [vmem:[%s139 + $0xa4] sm:$0xf]
      %v190 = vld [vmem:[%s139 + $0xa8] sm:$0xf]
      %v191 = vld [vmem:[%s139 + $0xac] sm:$0xf]
      %v192 = vld [vmem:[%s139 + $0xb0] sm:$0xf]
      %v193 = vld [vmem:[%s139 + $0xb4] sm:$0xf]
      %v194 = vld [vmem:[%s139 + $0xb8] sm:$0xf]
      %v195 = vld [vmem:[%s139 + $0xbc] sm:$0xf]
      %v196 = vld [vmem:[%s139 + $0xc0] sm:$0xf]
      %v197 = vld [vmem:[%s139 + $0xc4] sm:$0xf]
      %v198 = vld [vmem:[%s139 + $0xc8] sm:$0xf]
      %v199 = vld [vmem:[%s139 + $0xcc] sm:$0xf]
      %v200 = vld [vmem:[%s139 + $0xd0] sm:$0xf]
      %v201 = vld [vmem:[%s139 + $0xd4] sm:$0xf]
      %v202 = vld [vmem:[%s139 + $0xd8] sm:$0xf]
      %v203 = vld [vmem:[%s139 + $0xdc] sm:$0xf]
      %v204 = vld [vmem:[%s139 + $0xe0] sm:$0xf]
      %v205 = vld [vmem:[%s139 + $0xe4] sm:$0xf]
      %v206 = vld [vmem:[%s139 + $0xe8] sm:$0xf]
      %v207 = vld [vmem:[%s139 + $0xec] sm:$0xf]
      %v208 = vld [vmem:[%s139 + $0xf0] sm:$0xf]
      %v209 = vld [vmem:[%s139 + $0xf4] sm:$0xf]
      %v210 = vld [vmem:[%s139 + $0xf8] sm:$0xf]
      %v211 = vld [vmem:[%s139 + $0xfc] sm:$0xf]
      %v212 = vld [vmem:[%s1] sm:$0xf]
      %v213 = vld [vmem:[%s1 + $0x4] sm:$0xf]
      %v214 = vld [vmem:[%s1 + $0x8] sm:$0xf]
      %v215 = vld [vmem:[%s1 + $0xc] sm:$0xf]
      %v216 = vld [vmem:[%s1 + $0x10] sm:$0xf]
      %v217 = vld [vmem:[%s1 + $0x14] sm:$0xf]
      %v218 = vld [vmem:[%s1 + $0x18] sm:$0xf]
      %v219 = vld [vmem:[%s1 + $0x1c] sm:$0xf]
      %v220 = vld [vmem:[%s1 + $0x20] sm:$0xf]
      %v221 = vld [vmem:[%s1 + $0x24] sm:$0xf]
      %v222 = vld [vmem:[%s1 + $0x28] sm:$0xf]
      %v223 = vld [vmem:[%s1 + $0x2c] sm:$0xf]
      %v224 = vld [vmem:[%s1 + $0x30] sm:$0xf]
      %v225 = vld [vmem:[%s1 + $0x34] sm:$0xf]
      %v226 = vld [vmem:[%s1 + $0x38] sm:$0xf]
      %v227 = vld [vmem:[%s1 + $0x3c] sm:$0xf]
      %v292 = vunpack.c.l.b16 %v148
      %v293 = vunpack.c.l.b16 %v149
      %v294 = vunpack.c.l.b16 %v150
      %v295 = vunpack.c.l.b16 %v151
      %v296 = vunpack.c.l.b16 %v152
      %v297 = vunpack.c.l.b16 %v153
      %v298 = vunpack.c.l.b16 %v154
      %v299 = vunpack.c.l.b16 %v155
      %v300 = vunpack.c.l.b16 %v156
      %v301 = vunpack.c.l.b16 %v157
      %v302 = vunpack.c.l.b16 %v158
      %v303 = vunpack.c.l.b16 %v159
      %v304 = vunpack.c.l.b16 %v160
      %v305 = vunpack.c.l.b16 %v161
      %v306 = vunpack.c.l.b16 %v162
      %v307 = vunpack.c.l.b16 %v163
      %v308 = vunpack.c.l.b16 %v164
      %v309 = vunpack.c.l.b16 %v165
      %v310 = vunpack.c.l.b16 %v166
      %v311 = vunpack.c.l.b16 %v167
      %v312 = vunpack.c.l.b16 %v168
      %v313 = vunpack.c.l.b16 %v169
      %v314 = vunpack.c.l.b16 %v170
      %v315 = vunpack.c.l.b16 %v171
      %v316 = vunpack.c.l.b16 %v172
      %v317 = vunpack.c.l.b16 %v173
      %v318 = vunpack.c.l.b16 %v174
      %v319 = vunpack.c.l.b16 %v175
      %v320 = vunpack.c.l.b16 %v176
      %v321 = vunpack.c.l.b16 %v177
      %v322 = vunpack.c.l.b16 %v178
      %v323 = vunpack.c.l.b16 %v179
      %v324 = vunpack.c.l.b16 %v180
      %v325 = vunpack.c.l.b16 %v181
      %v326 = vunpack.c.l.b16 %v182
      %v327 = vunpack.c.l.b16 %v183
      %v328 = vunpack.c.l.b16 %v184
      %v329 = vunpack.c.l.b16 %v185
      %v330 = vunpack.c.l.b16 %v186
      %v331 = vunpack.c.l.b16 %v187
      %v332 = vunpack.c.l.b16 %v188
      %v333 = vunpack.c.l.b16 %v189
      %v334 = vunpack.c.l.b16 %v190
      %v335 = vunpack.c.l.b16 %v191
      %v336 = vunpack.c.l.b16 %v192
      %v337 = vunpack.c.l.b16 %v193
      %v338 = vunpack.c.l.b16 %v194
      %v339 = vunpack.c.l.b16 %v195
      %v340 = vunpack.c.l.b16 %v196
      %v341 = vunpack.c.l.b16 %v197
      %v342 = vunpack.c.l.b16 %v198
      %v343 = vunpack.c.l.b16 %v199
      %v344 = vunpack.c.l.b16 %v200
      %v345 = vunpack.c.l.b16 %v201
      %v346 = vunpack.c.l.b16 %v202
      %v347 = vunpack.c.l.b16 %v203
      %v348 = vunpack.c.l.b16 %v204
      %v349 = vunpack.c.l.b16 %v205
      %v350 = vunpack.c.l.b16 %v206
      %v351 = vunpack.c.l.b16 %v207
      %v352 = vunpack.c.l.b16 %v208
      %v353 = vunpack.c.l.b16 %v209
      %v354 = vunpack.c.l.b16 %v210
      %v355 = vunpack.c.l.b16 %v211
      %v356 = vpack.c.b16 %v293, %v292
      %v357 = vpack.c.b16 %v295, %v294
      %v358 = vpack.c.b16 %v297, %v296
      %v359 = vpack.c.b16 %v299, %v298
      %v360 = vpack.c.b16 %v301, %v300
      %v361 = vpack.c.b16 %v303, %v302
      %v362 = vpack.c.b16 %v305, %v304
      %v363 = vpack.c.b16 %v307, %v306
      %v364 = vpack.c.b16 %v309, %v308
      %v365 = vpack.c.b16 %v311, %v310
      %v366 = vpack.c.b16 %v313, %v312
      %v367 = vpack.c.b16 %v315, %v314
      %v368 = vpack.c.b16 %v317, %v316
      %v369 = vpack.c.b16 %v319, %v318
      %v370 = vpack.c.b16 %v321, %v320
      %v371 = vpack.c.b16 %v323, %v322
      %v372 = vpack.c.b16 %v325, %v324
      %v373 = vpack.c.b16 %v327, %v326
      %v374 = vpack.c.b16 %v329, %v328
      %v375 = vpack.c.b16 %v331, %v330
      %v376 = vpack.c.b16 %v333, %v332
      %v377 = vpack.c.b16 %v335, %v334
      %v378 = vpack.c.b16 %v337, %v336
      %v379 = vpack.c.b16 %v339, %v338
      %v380 = vpack.c.b16 %v341, %v340
      %v381 = vpack.c.b16 %v343, %v342
      %v382 = vpack.c.b16 %v345, %v344
      %v383 = vpack.c.b16 %v347, %v346
      %v384 = vpack.c.b16 %v349, %v348
      %v385 = vpack.c.b16 %v351, %v350
      %v386 = vpack.c.b16 %v353, %v352
      %v387 = vpack.c.b16 %v355, %v354
      %v436 = vunpack.c.l.b16 %v212
      %v437 = vunpack.c.l.b16 %v213
      %v438 = vunpack.c.l.b16 %v214
      %v439 = vunpack.c.l.b16 %v215
      %v440 = vunpack.c.l.b16 %v216
      %v441 = vunpack.c.l.b16 %v217
      %v442 = vunpack.c.l.b16 %v218
      %v443 = vunpack.c.l.b16 %v219
      %v444 = vunpack.c.l.b16 %v220
      %v445 = vunpack.c.l.b16 %v221
      %v446 = vunpack.c.l.b16 %v222
      %v447 = vunpack.c.l.b16 %v223
      %v448 = vunpack.c.l.b16 %v224
      %v449 = vunpack.c.l.b16 %v225
      %v450 = vunpack.c.l.b16 %v226
      %v451 = vunpack.c.l.b16 %v227
      %v452 = vpack.c.b16 %v437, %v436
      %v453 = vpack.c.b16 %v439, %v438
      %v454 = vpack.c.b16 %v441, %v440
      %v455 = vpack.c.b16 %v443, %v442
      %v456 = vpack.c.b16 %v445, %v444
      %v457 = vpack.c.b16 %v447, %v446
      %v458 = vpack.c.b16 %v449, %v448
      %v459 = vpack.c.b16 %v451, %v450
      %468 = vmatprep.subr.bf16.mxu0 0
      %469 = vmatpush1.bf16.msra.mxu0 %v459
      %470 = vmatprep.subr.bf16.mxu0 0
      %471 = vmatpush1.bf16.msra.mxu0 %v458
      %472 = vmatprep.subr.bf16.mxu0 0
      %473 = vmatpush1.bf16.msra.mxu0 %v457
      %474 = vmatprep.subr.bf16.mxu0 0
      %475 = vmatpush1.bf16.msra.mxu0 %v456
      %476 = vmatprep.subr.bf16.mxu0 0
      %477 = vmatpush1.bf16.msra.mxu0 %v455
      %478 = vmatprep.subr.bf16.mxu0 0
      %479 = vmatpush1.bf16.msra.mxu0 %v454
      %480 = vmatprep.subr.bf16.mxu0 0
      %481 = vmatpush1.bf16.msra.mxu0 %v453
      %482 = vmatprep.subr.bf16.mxu0 0
      %483 = vmatpush1.bf16.msra.mxu0 %v452
      %484 = vmatprep.subr.bf16.mxu0 0
      %485 = vmatpush2.bf16.msra.mxu0 0
      %486 = vmatprep.subr.bf16.mxu0 0
      %487 = vmatpush2.bf16.msra.mxu0 0
      %488 = vmatprep.subr.bf16.mxu0 0
      %489 = vmatpush2.bf16.msra.mxu0 0
      %490 = vmatprep.subr.bf16.mxu0 0
      %491 = vmatpush2.bf16.msra.mxu0 0
      %492 = vmatprep.subr.bf16.mxu0 0
      %493 = vmatpush2.bf16.msra.mxu0 0
      %494 = vmatprep.subr.bf16.mxu0 0
      %495 = vmatpush2.bf16.msra.mxu0 0
      %496 = vmatprep.subr.bf16.mxu0 0
      %497 = vmatpush2.bf16.msra.mxu0 0
      %498 = vmatprep.subr.bf16.mxu0 0
      %499 = vmatpush2.bf16.msra.mxu0 0
      %500 = vmatprep.mubr.bf16.mxu0 0
      %501 = vmatmul.mubr.bf16.gmra.mxu0 %v356
      %v502 = vpop.f32.mrf.mxu0
      %v503 = vadd.f32 0.0, %v502
      %v504 = vpop.f32.mrf.mxu0
      %v505 = vpop.f32.mrf.mxu0
      %v506 = vadd.f32 0.0, %v505
      %v507 = vpop.f32.mrf.mxu0
      %508 = vmatprep.mubr.bf16.mxu0 0
      %509 = vmatmul.mubr.bf16.gmra.mxu0 %v357
      %v510 = vpop.f32.mrf.mxu0
      %v511 = vadd.f32 0.0, %v510
      %v512 = vpop.f32.mrf.mxu0
      %v513 = vpop.f32.mrf.mxu0
      %v514 = vadd.f32 0.0, %v513
      %v515 = vpop.f32.mrf.mxu0
      %516 = vmatprep.mubr.bf16.mxu0 0
      %517 = vmatmul.mubr.bf16.gmra.mxu0 %v358
      %v518 = vpop.f32.mrf.mxu0
      %v519 = vadd.f32 0.0, %v518
      %v520 = vpop.f32.mrf.mxu0
      %v521 = vpop.f32.mrf.mxu0
      %v522 = vadd.f32 0.0, %v521
      %v523 = vpop.f32.mrf.mxu0
      %524 = vmatprep.mubr.bf16.mxu0 0
      %525 = vmatmul.mubr.bf16.gmra.mxu0 %v359
      %v526 = vpop.f32.mrf.mxu0
      %v527 = vadd.f32 0.0, %v526
      %v528 = vpop.f32.mrf.mxu0
      %v529 = vpop.f32.mrf.mxu0
      %v530 = vadd.f32 0.0, %v529
      %v531 = vpop.f32.mrf.mxu0
      %532 = vmatprep.mubr.bf16.mxu0 0
      %533 = vmatmul.mubr.bf16.gmra.mxu0 %v360
      %v534 = vpop.f32.mrf.mxu0
      %v535 = vadd.f32 0.0, %v534
      %v536 = vpop.f32.mrf.mxu0
      %v537 = vpop.f32.mrf.mxu0
      %v538 = vadd.f32 0.0, %v537
      %v539 = vpop.f32.mrf.mxu0
      %540 = vmatprep.mubr.bf16.mxu0 0
      %541 = vmatmul.mubr.bf16.gmra.mxu0 %v361
      %v542 = vpop.f32.mrf.mxu0
      %v543 = vadd.f32 0.0, %v542
      %v544 = vpop.f32.mrf.mxu0
      %v545 = vpop.f32.mrf.mxu0
      %v546 = vadd.f32 0.0, %v545
      %v547 = vpop.f32.mrf.mxu0
      %548 = vmatprep.mubr.bf16.mxu0 0
      %549 = vmatmul.mubr.bf16.gmra.mxu0 %v362
      %v550 = vpop.f32.mrf.mxu0
      %v551 = vadd.f32 0.0, %v550
      %v552 = vpop.f32.mrf.mxu0
      %v553 = vpop.f32.mrf.mxu0
      %v554 = vadd.f32 0.0, %v553
      %v555 = vpop.f32.mrf.mxu0
      %556 = vmatprep.mubr.bf16.mxu0 0
      %557 = vmatmul.mubr.bf16.gmra.mxu0 %v363
      %v558 = vpop.f32.mrf.mxu0
      %v559 = vadd.f32 0.0, %v558
      %v560 = vpop.f32.mrf.mxu0
      %v561 = vpop.f32.mrf.mxu0
      %v562 = vadd.f32 0.0, %v561
      %v563 = vpop.f32.mrf.mxu0
      %564 = vmatprep.mubr.bf16.mxu0 0
      %565 = vmatmul.mubr.bf16.gmra.mxu0 %v364
      %v566 = vpop.f32.mrf.mxu0
      %v567 = vadd.f32 0.0, %v566
      %v568 = vpop.f32.mrf.mxu0
      %v569 = vpop.f32.mrf.mxu0
      %v570 = vadd.f32 0.0, %v569
      %v571 = vpop.f32.mrf.mxu0
      %572 = vmatprep.mubr.bf16.mxu0 0
      %573 = vmatmul.mubr.bf16.gmra.mxu0 %v365
      %v574 = vpop.f32.mrf.mxu0
      %v575 = vadd.f32 0.0, %v574
      %v576 = vpop.f32.mrf.mxu0
      %v577 = vpop.f32.mrf.mxu0
      %v578 = vadd.f32 0.0, %v577
      %v579 = vpop.f32.mrf.mxu0
      %580 = vmatprep.mubr.bf16.mxu0 0
      %581 = vmatmul.mubr.bf16.gmra.mxu0 %v366
      %v582 = vpop.f32.mrf.mxu0
      %v583 = vadd.f32 0.0, %v582
      %v584 = vpop.f32.mrf.mxu0
      %v585 = vpop.f32.mrf.mxu0
      %v586 = vadd.f32 0.0, %v585
      %v587 = vpop.f32.mrf.mxu0
      %588 = vmatprep.mubr.bf16.mxu0 0
      %589 = vmatmul.mubr.bf16.gmra.mxu0 %v367
      %v590 = vpop.f32.mrf.mxu0
      %v591 = vadd.f32 0.0, %v590
      %v592 = vpop.f32.mrf.mxu0
      %v593 = vpop.f32.mrf.mxu0
      %v594 = vadd.f32 0.0, %v593
      %v595 = vpop.f32.mrf.mxu0
      %596 = vmatprep.mubr.bf16.mxu0 0
      %597 = vmatmul.mubr.bf16.gmra.mxu0 %v368
      %v598 = vpop.f32.mrf.mxu0
      %v599 = vadd.f32 0.0, %v598
      %v600 = vpop.f32.mrf.mxu0
      %v601 = vpop.f32.mrf.mxu0
      %v602 = vadd.f32 0.0, %v601
      %v603 = vpop.f32.mrf.mxu0
      %604 = vmatprep.mubr.bf16.mxu0 0
      %605 = vmatmul.mubr.bf16.gmra.mxu0 %v369
      %v606 = vpop.f32.mrf.mxu0
      %v607 = vadd.f32 0.0, %v606
      %v608 = vpop.f32.mrf.mxu0
      %v609 = vpop.f32.mrf.mxu0
      %v610 = vadd.f32 0.0, %v609
      %v611 = vpop.f32.mrf.mxu0
      %612 = vmatprep.mubr.bf16.mxu0 0
      %613 = vmatmul.mubr.bf16.gmra.mxu0 %v370
      %v614 = vpop.f32.mrf.mxu0
      %v615 = vadd.f32 0.0, %v614
      %v616 = vpop.f32.mrf.mxu0
      %v617 = vpop.f32.mrf.mxu0
      %v618 = vadd.f32 0.0, %v617
      %v619 = vpop.f32.mrf.mxu0
      %620 = vmatprep.mubr.bf16.mxu0 0
      %621 = vmatmul.mubr.bf16.gmra.mxu0 %v371
      %v622 = vpop.f32.mrf.mxu0
      %v623 = vadd.f32 0.0, %v622
      %v624 = vpop.f32.mrf.mxu0
      %v625 = vpop.f32.mrf.mxu0
      %v626 = vadd.f32 0.0, %v625
      %v627 = vpop.f32.mrf.mxu0
      %628 = vmatprep.mubr.bf16.mxu0 0
      %629 = vmatmul.mubr.bf16.gmra.mxu0 %v372
      %v630 = vpop.f32.mrf.mxu0
      %v631 = vadd.f32 0.0, %v630
      %v632 = vpop.f32.mrf.mxu0
      %v633 = vpop.f32.mrf.mxu0
      %v634 = vadd.f32 0.0, %v633
      %v635 = vpop.f32.mrf.mxu0
      %636 = vmatprep.mubr.bf16.mxu0 0
      %637 = vmatmul.mubr.bf16.gmra.mxu0 %v373
      %v638 = vpop.f32.mrf.mxu0
      %v639 = vadd.f32 0.0, %v638
      %v640 = vpop.f32.mrf.mxu0
      %v641 = vpop.f32.mrf.mxu0
      %v642 = vadd.f32 0.0, %v641
      %v643 = vpop.f32.mrf.mxu0
      %644 = vmatprep.mubr.bf16.mxu0 0
      %645 = vmatmul.mubr.bf16.gmra.mxu0 %v374
      %v646 = vpop.f32.mrf.mxu0
      %v647 = vadd.f32 0.0, %v646
      %v648 = vpop.f32.mrf.mxu0
      %v649 = vpop.f32.mrf.mxu0
      %v650 = vadd.f32 0.0, %v649
      %v651 = vpop.f32.mrf.mxu0
      %652 = vmatprep.mubr.bf16.mxu0 0
      %653 = vmatmul.mubr.bf16.gmra.mxu0 %v375
      %v654 = vpop.f32.mrf.mxu0
      %v655 = vadd.f32 0.0, %v654
      %v656 = vpop.f32.mrf.mxu0
      %v657 = vpop.f32.mrf.mxu0
      %v658 = vadd.f32 0.0, %v657
      %v659 = vpop.f32.mrf.mxu0
      %660 = vmatprep.mubr.bf16.mxu0 0
      %661 = vmatmul.mubr.bf16.gmra.mxu0 %v376
      %v662 = vpop.f32.mrf.mxu0
      %v663 = vadd.f32 0.0, %v662
      %v664 = vpop.f32.mrf.mxu0
      %v665 = vpop.f32.mrf.mxu0
      %v666 = vadd.f32 0.0, %v665
      %v667 = vpop.f32.mrf.mxu0
      %668 = vmatprep.mubr.bf16.mxu0 0
      %669 = vmatmul.mubr.bf16.gmra.mxu0 %v377
      %v670 = vpop.f32.mrf.mxu0
      %v671 = vadd.f32 0.0, %v670
      %v672 = vpop.f32.mrf.mxu0
      %v673 = vpop.f32.mrf.mxu0
      %v674 = vadd.f32 0.0, %v673
      %v675 = vpop.f32.mrf.mxu0
      %676 = vmatprep.mubr.bf16.mxu0 0
      %677 = vmatmul.mubr.bf16.gmra.mxu0 %v378
      %v678 = vpop.f32.mrf.mxu0
      %v679 = vadd.f32 0.0, %v678
      %v680 = vpop.f32.mrf.mxu0
      %v681 = vpop.f32.mrf.mxu0
      %v682 = vadd.f32 0.0, %v681
      %v683 = vpop.f32.mrf.mxu0
      %684 = vmatprep.mubr.bf16.mxu0 0
      %685 = vmatmul.mubr.bf16.gmra.mxu0 %v379
      %v686 = vpop.f32.mrf.mxu0
      %v687 = vadd.f32 0.0, %v686
      %v688 = vpop.f32.mrf.mxu0
      %v689 = vpop.f32.mrf.mxu0
      %v690 = vadd.f32 0.0, %v689
      %v691 = vpop.f32.mrf.mxu0
      %692 = vmatprep.mubr.bf16.mxu0 0
      %693 = vmatmul.mubr.bf16.gmra.mxu0 %v380
      %v694 = vpop.f32.mrf.mxu0
      %v695 = vadd.f32 0.0, %v694
      %v696 = vpop.f32.mrf.mxu0
      %v697 = vpop.f32.mrf.mxu0
      %v698 = vadd.f32 0.0, %v697
      %v699 = vpop.f32.mrf.mxu0
      %700 = vmatprep.mubr.bf16.mxu0 0
      %701 = vmatmul.mubr.bf16.gmra.mxu0 %v381
      %v702 = vpop.f32.mrf.mxu0
      %v703 = vadd.f32 0.0, %v702
      %v704 = vpop.f32.mrf.mxu0
      %v705 = vpop.f32.mrf.mxu0
      %v706 = vadd.f32 0.0, %v705
      %v707 = vpop.f32.mrf.mxu0
      %708 = vmatprep.mubr.bf16.mxu0 0
      %709 = vmatmul.mubr.bf16.gmra.mxu0 %v382
      %v710 = vpop.f32.mrf.mxu0
      %v711 = vadd.f32 0.0, %v710
      %v712 = vpop.f32.mrf.mxu0
      %v713 = vpop.f32.mrf.mxu0
      %v714 = vadd.f32 0.0, %v713
      %v715 = vpop.f32.mrf.mxu0
      %716 = vmatprep.mubr.bf16.mxu0 0
      %717 = vmatmul.mubr.bf16.gmra.mxu0 %v383
      %v718 = vpop.f32.mrf.mxu0
      %v719 = vadd.f32 0.0, %v718
      %v720 = vpop.f32.mrf.mxu0
      %v721 = vpop.f32.mrf.mxu0
      %v722 = vadd.f32 0.0, %v721
      %v723 = vpop.f32.mrf.mxu0
      %724 = vmatprep.mubr.bf16.mxu0 0
      %725 = vmatmul.mubr.bf16.gmra.mxu0 %v384
      %v726 = vpop.f32.mrf.mxu0
      %v727 = vadd.f32 0.0, %v726
      %v728 = vpop.f32.mrf.mxu0
      %v729 = vpop.f32.mrf.mxu0
      %v730 = vadd.f32 0.0, %v729
      %v731 = vpop.f32.mrf.mxu0
      %732 = vmatprep.mubr.bf16.mxu0 0
      %733 = vmatmul.mubr.bf16.gmra.mxu0 %v385
      %v734 = vpop.f32.mrf.mxu0
      %v735 = vadd.f32 0.0, %v734
      %v736 = vpop.f32.mrf.mxu0
      %v737 = vpop.f32.mrf.mxu0
      %v738 = vadd.f32 0.0, %v737
      %v739 = vpop.f32.mrf.mxu0
      %740 = vmatprep.mubr.bf16.mxu0 0
      %741 = vmatmul.mubr.bf16.gmra.mxu0 %v386
      %v742 = vpop.f32.mrf.mxu0
      %v743 = vadd.f32 0.0, %v742
      %v744 = vpop.f32.mrf.mxu0
      %v745 = vpop.f32.mrf.mxu0
      %v746 = vadd.f32 0.0, %v745
      %v747 = vpop.f32.mrf.mxu0
      %748 = vmatprep.mubr.bf16.mxu0 0
      %749 = vmatmul.mubr.bf16.gmra.mxu0 %v387
      %v750 = vpop.f32.mrf.mxu0
      %v751 = vadd.f32 0.0, %v750
      %v752 = vpop.f32.mrf.mxu0
      %v753 = vpop.f32.mrf.mxu0
      %v754 = vadd.f32 0.0, %v753
      %v755 = vpop.f32.mrf.mxu0
      %756 = vdwg.mxu0
      %v757 = vmax.f32 %v503, 0.0
      %v758 = vmax.f32 %v506, 0.0
      %v759 = vmax.f32 %v511, 0.0
      %v760 = vmax.f32 %v514, 0.0
      %v761 = vmax.f32 %v519, 0.0
      %v762 = vmax.f32 %v522, 0.0
      %v763 = vmax.f32 %v527, 0.0
      %v764 = vmax.f32 %v530, 0.0
      %v765 = vmax.f32 %v535, 0.0
      %v766 = vmax.f32 %v538, 0.0
      %v767 = vmax.f32 %v543, 0.0
      %v768 = vmax.f32 %v546, 0.0
      %v769 = vmax.f32 %v551, 0.0
      %v770 = vmax.f32 %v554, 0.0
      %v771 = vmax.f32 %v559, 0.0
      %v772 = vmax.f32 %v562, 0.0
      %v773 = vmax.f32 %v567, 0.0
      %v774 = vmax.f32 %v570, 0.0
      %v775 = vmax.f32 %v575, 0.0
      %v776 = vmax.f32 %v578, 0.0
      %v777 = vmax.f32 %v583, 0.0
      %v778 = vmax.f32 %v586, 0.0
      %v779 = vmax.f32 %v591, 0.0
      %v780 = vmax.f32 %v594, 0.0
      %v781 = vmax.f32 %v599, 0.0
      %v782 = vmax.f32 %v602, 0.0
      %v783 = vmax.f32 %v607, 0.0
      %v784 = vmax.f32 %v610, 0.0
      %v785 = vmax.f32 %v615, 0.0
      %v786 = vmax.f32 %v618, 0.0
      %v787 = vmax.f32 %v623, 0.0
      %v788 = vmax.f32 %v626, 0.0
      %v789 = vmax.f32 %v631, 0.0
      %v790 = vmax.f32 %v634, 0.0
      %v791 = vmax.f32 %v639, 0.0
      %v792 = vmax.f32 %v642, 0.0
      %v793 = vmax.f32 %v647, 0.0
      %v794 = vmax.f32 %v650, 0.0
      %v795 = vmax.f32 %v655, 0.0
      %v796 = vmax.f32 %v658, 0.0
      %v797 = vmax.f32 %v663, 0.0
      %v798 = vmax.f32 %v666, 0.0
      %v799 = vmax.f32 %v671, 0.0
      %v800 = vmax.f32 %v674, 0.0
      %v801 = vmax.f32 %v679, 0.0
      %v802 = vmax.f32 %v682, 0.0
      %v803 = vmax.f32 %v687, 0.0
      %v804 = vmax.f32 %v690, 0.0
      %v805 = vmax.f32 %v695, 0.0
      %v806 = vmax.f32 %v698, 0.0
      %v807 = vmax.f32 %v703, 0.0
      %v808 = vmax.f32 %v706, 0.0
      %v809 = vmax.f32 %v711, 0.0
      %v810 = vmax.f32 %v714, 0.0
      %v811 = vmax.f32 %v719, 0.0
      %v812 = vmax.f32 %v722, 0.0
      %v813 = vmax.f32 %v727, 0.0
      %v814 = vmax.f32 %v730, 0.0
      %v815 = vmax.f32 %v735, 0.0
      %v816 = vmax.f32 %v738, 0.0
      %v817 = vmax.f32 %v743, 0.0
      %v818 = vmax.f32 %v746, 0.0
      %v819 = vmax.f32 %v751, 0.0
      %v820 = vmax.f32 %v754, 0.0
      %v821 = vmin.f32 %v757, 6.0
      %v822 = vmin.f32 %v758, 6.0
      %v823 = vmin.f32 %v759, 6.0
      %v824 = vmin.f32 %v760, 6.0
      %v825 = vmin.f32 %v761, 6.0
      %v826 = vmin.f32 %v762, 6.0
      %v827 = vmin.f32 %v763, 6.0
      %v828 = vmin.f32 %v764, 6.0
      %v829 = vmin.f32 %v765, 6.0
      %v830 = vmin.f32 %v766, 6.0
      %v831 = vmin.f32 %v767, 6.0
      %v832 = vmin.f32 %v768, 6.0
      %v833 = vmin.f32 %v769, 6.0
      %v834 = vmin.f32 %v770, 6.0
      %v835 = vmin.f32 %v771, 6.0
      %v836 = vmin.f32 %v772, 6.0
      %v837 = vmin.f32 %v773, 6.0
      %v838 = vmin.f32 %v774, 6.0
      %v839 = vmin.f32 %v775, 6.0
      %v840 = vmin.f32 %v776, 6.0
      %v841 = vmin.f32 %v777, 6.0
      %v842 = vmin.f32 %v778, 6.0
      %v843 = vmin.f32 %v779, 6.0
      %v844 = vmin.f32 %v780, 6.0
      %v845 = vmin.f32 %v781, 6.0
      %v846 = vmin.f32 %v782, 6.0
      %v847 = vmin.f32 %v783, 6.0
      %v848 = vmin.f32 %v784, 6.0
      %v849 = vmin.f32 %v785, 6.0
      %v850 = vmin.f32 %v786, 6.0
      %v851 = vmin.f32 %v787, 6.0
      %v852 = vmin.f32 %v788, 6.0
      %v853 = vmin.f32 %v789, 6.0
      %v854 = vmin.f32 %v790, 6.0
      %v855 = vmin.f32 %v791, 6.0
      %v856 = vmin.f32 %v792, 6.0
      %v857 = vmin.f32 %v793, 6.0
      %v858 = vmin.f32 %v794, 6.0
      %v859 = vmin.f32 %v795, 6.0
      %v860 = vmin.f32 %v796, 6.0
      %v861 = vmin.f32 %v797, 6.0
      %v862 = vmin.f32 %v798, 6.0
      %v863 = vmin.f32 %v799, 6.0
      %v864 = vmin.f32 %v800, 6.0
      %v865 = vmin.f32 %v801, 6.0
      %v866 = vmin.f32 %v802, 6.0
      %v867 = vmin.f32 %v803, 6.0
      %v868 = vmin.f32 %v804, 6.0
      %v869 = vmin.f32 %v805, 6.0
      %v870 = vmin.f32 %v806, 6.0
      %v871 = vmin.f32 %v807, 6.0
      %v872 = vmin.f32 %v808, 6.0
      %v873 = vmin.f32 %v809, 6.0
      %v874 = vmin.f32 %v810, 6.0
      %v875 = vmin.f32 %v811, 6.0
      %v876 = vmin.f32 %v812, 6.0
      %v877 = vmin.f32 %v813, 6.0
      %v878 = vmin.f32 %v814, 6.0
      %v879 = vmin.f32 %v815, 6.0
      %v880 = vmin.f32 %v816, 6.0
      %v881 = vmin.f32 %v817, 6.0
      %v882 = vmin.f32 %v818, 6.0
      %v883 = vmin.f32 %v819, 6.0
      %v884 = vmin.f32 %v820, 6.0
      %v885 = vpack.c.bf16 %v822, %v821
      %v886 = vpack.c.bf16 %v824, %v823
      %v887 = vpack.c.bf16 %v826, %v825
      %v888 = vpack.c.bf16 %v828, %v827
      %v889 = vpack.c.bf16 %v830, %v829
      %v890 = vpack.c.bf16 %v832, %v831
      %v891 = vpack.c.bf16 %v834, %v833
      %v892 = vpack.c.bf16 %v836, %v835
      %v893 = vpack.c.bf16 %v838, %v837
      %v894 = vpack.c.bf16 %v840, %v839
      %v895 = vpack.c.bf16 %v842, %v841
      %v896 = vpack.c.bf16 %v844, %v843
      %v897 = vpack.c.bf16 %v846, %v845
      %v898 = vpack.c.bf16 %v848, %v847
      %v899 = vpack.c.bf16 %v850, %v849
      %v900 = vpack.c.bf16 %v852, %v851
      %v901 = vpack.c.bf16 %v854, %v853
      %v902 = vpack.c.bf16 %v856, %v855
      %v903 = vpack.c.bf16 %v858, %v857
      %v904 = vpack.c.bf16 %v860, %v859
      %v905 = vpack.c.bf16 %v862, %v861
      %v906 = vpack.c.bf16 %v864, %v863
      %v907 = vpack.c.bf16 %v866, %v865
      %v908 = vpack.c.bf16 %v868, %v867
      %v909 = vpack.c.bf16 %v870, %v869
      %v910 = vpack.c.bf16 %v872, %v871
      %v911 = vpack.c.bf16 %v874, %v873
      %v912 = vpack.c.bf16 %v876, %v875
      %v913 = vpack.c.bf16 %v878, %v877
      %v914 = vpack.c.bf16 %v880, %v879
      %v915 = vpack.c.bf16 %v882, %v881
      %v916 = vpack.c.bf16 %v884, %v883
      %v949 = vunpack.c.l.b16 %v885
      %v950 = vunpack.c.h.b16 %v885
      %v951 = vunpack.c.l.b16 %v886
      %v952 = vunpack.c.h.b16 %v886
      %v953 = vunpack.c.l.b16 %v887
      %v954 = vunpack.c.h.b16 %v887
      %v955 = vunpack.c.l.b16 %v888
      %v956 = vunpack.c.h.b16 %v888
      %v957 = vunpack.c.l.b16 %v889
      %v958 = vunpack.c.h.b16 %v889
      %v959 = vunpack.c.l.b16 %v890
      %v960 = vunpack.c.h.b16 %v890
      %v961 = vunpack.c.l.b16 %v891
      %v962 = vunpack.c.h.b16 %v891
      %v963 = vunpack.c.l.b16 %v892
      %v964 = vunpack.c.h.b16 %v892
      %v965 = vunpack.c.l.b16 %v893
      %v966 = vunpack.c.h.b16 %v893
      %v967 = vunpack.c.l.b16 %v894
      %v968 = vunpack.c.h.b16 %v894
      %v969 = vunpack.c.l.b16 %v895
      %v970 = vunpack.c.h.b16 %v895
      %v971 = vunpack.c.l.b16 %v896
      %v972 = vunpack.c.h.b16 %v896
      %v973 = vunpack.c.l.b16 %v897
      %v974 = vunpack.c.h.b16 %v897
      %v975 = vunpack.c.l.b16 %v898
      %v976 = vunpack.c.h.b16 %v898
      %v977 = vunpack.c.l.b16 %v899
      %v978 = vunpack.c.h.b16 %v899
      %v979 = vunpack.c.l.b16 %v900
      %v980 = vunpack.c.h.b16 %v900
      %v981 = vunpack.c.l.b16 %v901
      %v982 = vunpack.c.h.b16 %v901
      %v983 = vunpack.c.l.b16 %v902
      %v984 = vunpack.c.h.b16 %v902
      %v985 = vunpack.c.l.b16 %v903
      %v986 = vunpack.c.h.b16 %v903
      %v987 = vunpack.c.l.b16 %v904
      %v988 = vunpack.c.h.b16 %v904
      %v989 = vunpack.c.l.b16 %v905
      %v990 = vunpack.c.h.b16 %v905
      %v991 = vunpack.c.l.b16 %v906
      %v992 = vunpack.c.h.b16 %v906
      %v993 = vunpack.c.l.b16 %v907
      %v994 = vunpack.c.h.b16 %v907
      %v995 = vunpack.c.l.b16 %v908
      %v996 = vunpack.c.h.b16 %v908
      %v997 = vunpack.c.l.b16 %v909
      %v998 = vunpack.c.h.b16 %v909
      %v999 = vunpack.c.l.b16 %v910
      %v1000 = vunpack.c.h.b16 %v910
      %v1001 = vunpack.c.l.b16 %v911
      %v1002 = vunpack.c.h.b16 %v911
      %v1003 = vunpack.c.l.b16 %v912
      %v1004 = vunpack.c.h.b16 %v912
      %v1005 = vunpack.c.l.b16 %v913
      %v1006 = vunpack.c.h.b16 %v913
      %v1007 = vunpack.c.l.b16 %v914
      %v1008 = vunpack.c.h.b16 %v914
      %v1009 = vunpack.c.l.b16 %v915
      %v1010 = vunpack.c.h.b16 %v915
      %v1011 = vunpack.c.l.b16 %v916
      %v1012 = vunpack.c.h.b16 %v916
      %v1013 = vpack.c.b16 %v949, %v949
      %v1014 = vpack.c.b16 %v950, %v950
      %v1015 = vpack.c.b16 %v951, %v951
      %v1016 = vpack.c.b16 %v952, %v952
      %v1017 = vpack.c.b16 %v953, %v953
      %v1018 = vpack.c.b16 %v954, %v954
      %v1019 = vpack.c.b16 %v955, %v955
      %v1020 = vpack.c.b16 %v956, %v956
      %v1021 = vpack.c.b16 %v957, %v957
      %v1022 = vpack.c.b16 %v958, %v958
      %v1023 = vpack.c.b16 %v959, %v959
      %v1024 = vpack.c.b16 %v960, %v960
      %v1025 = vpack.c.b16 %v961, %v961
      %v1026 = vpack.c.b16 %v962, %v962
      %v1027 = vpack.c.b16 %v963, %v963
      %v1028 = vpack.c.b16 %v964, %v964
      %v1029 = vpack.c.b16 %v965, %v965
      %v1030 = vpack.c.b16 %v966, %v966
      %v1031 = vpack.c.b16 %v967, %v967
      %v1032 = vpack.c.b16 %v968, %v968
      %v1033 = vpack.c.b16 %v969, %v969
      %v1034 = vpack.c.b16 %v970, %v970
      %v1035 = vpack.c.b16 %v971, %v971
      %v1036 = vpack.c.b16 %v972, %v972
      %v1037 = vpack.c.b16 %v973, %v973
      %v1038 = vpack.c.b16 %v974, %v974
      %v1039 = vpack.c.b16 %v975, %v975
      %v1040 = vpack.c.b16 %v976, %v976
      %v1041 = vpack.c.b16 %v977, %v977
      %v1042 = vpack.c.b16 %v978, %v978
      %v1043 = vpack.c.b16 %v979, %v979
      %v1044 = vpack.c.b16 %v980, %v980
      %v1045 = vpack.c.b16 %v981, %v981
      %v1046 = vpack.c.b16 %v982, %v982
      %v1047 = vpack.c.b16 %v983, %v983
      %v1048 = vpack.c.b16 %v984, %v984
      %v1049 = vpack.c.b16 %v985, %v985
      %v1050 = vpack.c.b16 %v986, %v986
      %v1051 = vpack.c.b16 %v987, %v987
      %v1052 = vpack.c.b16 %v988, %v988
      %v1053 = vpack.c.b16 %v989, %v989
      %v1054 = vpack.c.b16 %v990, %v990
      %v1055 = vpack.c.b16 %v991, %v991
      %v1056 = vpack.c.b16 %v992, %v992
      %v1057 = vpack.c.b16 %v993, %v993
      %v1058 = vpack.c.b16 %v994, %v994
      %v1059 = vpack.c.b16 %v995, %v995
      %v1060 = vpack.c.b16 %v996, %v996
      %v1061 = vpack.c.b16 %v997, %v997
      %v1062 = vpack.c.b16 %v998, %v998
      %v1063 = vpack.c.b16 %v999, %v999
      %v1064 = vpack.c.b16 %v1000, %v1000
      %v1065 = vpack.c.b16 %v1001, %v1001
      %v1066 = vpack.c.b16 %v1002, %v1002
      %v1067 = vpack.c.b16 %v1003, %v1003
      %v1068 = vpack.c.b16 %v1004, %v1004
      %v1069 = vpack.c.b16 %v1005, %v1005
      %v1070 = vpack.c.b16 %v1006, %v1006
      %v1071 = vpack.c.b16 %v1007, %v1007
      %v1072 = vpack.c.b16 %v1008, %v1008
      %v1073 = vpack.c.b16 %v1009, %v1009
      %v1074 = vpack.c.b16 %v1010, %v1010
      %v1075 = vpack.c.b16 %v1011, %v1011
      %v1076 = vpack.c.b16 %v1012, %v1012
      %vm1141 = vcmask 519168
      %1142 = vst.msk [vmem:[%s145] sm:$0xf] %vm1141, %v1013
      %1143 = vst.msk [vmem:[%s145 + $0x4] sm:$0xf] %vm1141, %v1014
      %1144 = vst.msk [vmem:[%s145 + $0x8] sm:$0xf] %vm1141, %v1015
      %1145 = vst.msk [vmem:[%s145 + $0xc] sm:$0xf] %vm1141, %v1016
      %1146 = vst.msk [vmem:[%s145 + $0x10] sm:$0xf] %vm1141, %v1017
      %1147 = vst.msk [vmem:[%s145 + $0x14] sm:$0xf] %vm1141, %v1018
      %1148 = vst.msk [vmem:[%s145 + $0x18] sm:$0xf] %vm1141, %v1019
      %1149 = vst.msk [vmem:[%s145 + $0x1c] sm:$0xf] %vm1141, %v1020
      %1150 = vst.msk [vmem:[%s145 + $0x20] sm:$0xf] %vm1141, %v1021
      %1151 = vst.msk [vmem:[%s145 + $0x24] sm:$0xf] %vm1141, %v1022
      %1152 = vst.msk [vmem:[%s145 + $0x28] sm:$0xf] %vm1141, %v1023
      %1153 = vst.msk [vmem:[%s145 + $0x2c] sm:$0xf] %vm1141, %v1024
      %1154 = vst.msk [vmem:[%s145 + $0x30] sm:$0xf] %vm1141, %v1025
      %1155 = vst.msk [vmem:[%s145 + $0x34] sm:$0xf] %vm1141, %v1026
      %1156 = vst.msk [vmem:[%s145 + $0x38] sm:$0xf] %vm1141, %v1027
      %1157 = vst.msk [vmem:[%s145 + $0x3c] sm:$0xf] %vm1141, %v1028
      %1158 = vst.msk [vmem:[%s145 + $0x40] sm:$0xf] %vm1141, %v1029
      %1159 = vst.msk [vmem:[%s145 + $0x44] sm:$0xf] %vm1141, %v1030
      %1160 = vst.msk [vmem:[%s145 + $0x48] sm:$0xf] %vm1141, %v1031
      %1161 = vst.msk [vmem:[%s145 + $0x4c] sm:$0xf] %vm1141, %v1032
      %1162 = vst.msk [vmem:[%s145 + $0x50] sm:$0xf] %vm1141, %v1033
      %1163 = vst.msk [vmem:[%s145 + $0x54] sm:$0xf] %vm1141, %v1034
      %1164 = vst.msk [vmem:[%s145 + $0x58] sm:$0xf] %vm1141, %v1035
      %1165 = vst.msk [vmem:[%s145 + $0x5c] sm:$0xf] %vm1141, %v1036
      %1166 = vst.msk [vmem:[%s145 + $0x60] sm:$0xf] %vm1141, %v1037
      %1167 = vst.msk [vmem:[%s145 + $0x64] sm:$0xf] %vm1141, %v1038
      %1168 = vst.msk [vmem:[%s145 + $0x68] sm:$0xf] %vm1141, %v1039
      %1169 = vst.msk [vmem:[%s145 + $0x6c] sm:$0xf] %vm1141, %v1040
      %1170 = vst.msk [vmem:[%s145 + $0x70] sm:$0xf] %vm1141, %v1041
      %1171 = vst.msk [vmem:[%s145 + $0x74] sm:$0xf] %vm1141, %v1042
      %1172 = vst.msk [vmem:[%s145 + $0x78] sm:$0xf] %vm1141, %v1043
      %1173 = vst.msk [vmem:[%s145 + $0x7c] sm:$0xf] %vm1141, %v1044
      %1174 = vst.msk [vmem:[%s145 + $0x80] sm:$0xf] %vm1141, %v1045
      %1175 = vst.msk [vmem:[%s145 + $0x84] sm:$0xf] %vm1141, %v1046
      %1176 = vst.msk [vmem:[%s145 + $0x88] sm:$0xf] %vm1141, %v1047
      %1177 = vst.msk [vmem:[%s145 + $0x8c] sm:$0xf] %vm1141, %v1048
      %1178 = vst.msk [vmem:[%s145 + $0x90] sm:$0xf] %vm1141, %v1049
      %1179 = vst.msk [vmem:[%s145 + $0x94] sm:$0xf] %vm1141, %v1050
      %1180 = vst.msk [vmem:[%s145 + $0x98] sm:$0xf] %vm1141, %v1051
      %1181 = vst.msk [vmem:[%s145 + $0x9c] sm:$0xf] %vm1141, %v1052
      %1182 = vst.msk [vmem:[%s145 + $0xa0] sm:$0xf] %vm1141, %v1053
      %1183 = vst.msk [vmem:[%s145 + $0xa4] sm:$0xf] %vm1141, %v1054
      %1184 = vst.msk [vmem:[%s145 + $0xa8] sm:$0xf] %vm1141, %v1055
      %1185 = vst.msk [vmem:[%s145 + $0xac] sm:$0xf] %vm1141, %v1056
      %1186 = vst.msk [vmem:[%s145 + $0xb0] sm:$0xf] %vm1141, %v1057
      %1187 = vst.msk [vmem:[%s145 + $0xb4] sm:$0xf] %vm1141, %v1058
      %1188 = vst.msk [vmem:[%s145 + $0xb8] sm:$0xf] %vm1141, %v1059
      %1189 = vst.msk [vmem:[%s145 + $0xbc] sm:$0xf] %vm1141, %v1060
      %1190 = vst.msk [vmem:[%s145 + $0xc0] sm:$0xf] %vm1141, %v1061
      %1191 = vst.msk [vmem:[%s145 + $0xc4] sm:$0xf] %vm1141, %v1062
      %1192 = vst.msk [vmem:[%s145 + $0xc8] sm:$0xf] %vm1141, %v1063
      %1193 = vst.msk [vmem:[%s145 + $0xcc] sm:$0xf] %vm1141, %v1064
      %1194 = vst.msk [vmem:[%s145 + $0xd0] sm:$0xf] %vm1141, %v1065
      %1195 = vst.msk [vmem:[%s145 + $0xd4] sm:$0xf] %vm1141, %v1066
      %1196 = vst.msk [vmem:[%s145 + $0xd8] sm:$0xf] %vm1141, %v1067
      %1197 = vst.msk [vmem:[%s145 + $0xdc] sm:$0xf] %vm1141, %v1068
      %1198 = vst.msk [vmem:[%s145 + $0xe0] sm:$0xf] %vm1141, %v1069
      %1199 = vst.msk [vmem:[%s145 + $0xe4] sm:$0xf] %vm1141, %v1070
      %1200 = vst.msk [vmem:[%s145 + $0xe8] sm:$0xf] %vm1141, %v1071
      %1201 = vst.msk [vmem:[%s145 + $0xec] sm:$0xf] %vm1141, %v1072
      %1202 = vst.msk [vmem:[%s145 + $0xf0] sm:$0xf] %vm1141, %v1073
      %1203 = vst.msk [vmem:[%s145 + $0xf4] sm:$0xf] %vm1141, %v1074
      %1204 = vst.msk [vmem:[%s145 + $0xf8] sm:$0xf] %vm1141, %v1075
      %1205 = vst.msk [vmem:[%s145 + $0xfc] sm:$0xf] %vm1141, %v1076
      %s1206 = smul.u32 64, %s13
      %p1207 = scmp.lt.s32.totalorder %s1206, 255
      %s1208 = scalar_select %p1207, %s1206, 255
      %s1209 = smul.addr %s1208, 4
      %s1210 = scalar_lea.vmem %s2, %s1209
      // Predicated region
      $region29: #{discriminator_forward.4} parent=27 // pred_check
        %p1211 = pneg %p78
      $region30: #{discriminator_forward.4} parent=27 // pred_check_branch
        %1213 = sbr.rel (%p1211) target = $region32
      $region31: #{discriminator_forward.4} parent=27 // pred_region
        %s1214 = smul.u32 64, %s13
      $region32: #{discriminator_forward.4} parent=27 // pred_fallthru
        _
    $region28: #{discriminator_forward.4} parent=5 // pred_fallthru
      _
    %p1215 = scmp.le.s32.totalorder 2, %s8
    // Predicated region
    $region33: #{discriminator_forward.4} parent=5 // pred_check
      %p1216 = pneg %p1215
    $region34: #{discriminator_forward.4} parent=5 // pred_check_branch
      %1218 = sbr.rel (%p1216) target = $region36
    $region35: #{discriminator_forward.4} parent=5 // pred_region
      %s1219 = ssub.s32 %s8, 2
      // Predicated region
      $region37: #{discriminator_forward.4} parent=35 // pred_check
        %p1220 = pneg %p84
      $region38: #{discriminator_forward.4} parent=35 // pred_check_branch
        %1222 = sbr.rel (%p1220) target = $region40
      $region39: #{discriminator_forward.4} parent=35 // pred_region
        %s1223 = smul.u32 64, %s14
        %p1224 = scmp.lt.s32.totalorder %s1223, 255
        %s1225 = scalar_select %p1224, %s1223, 255
        %s1226 = smul.addr %s1225, 4
        %s1227 = scalar_lea.vmem %s2, %s1226
      $region40: #{discriminator_forward.4} parent=35 // pred_fallthru
        _
    $region36: #{discriminator_forward.4} parent=5 // pred_fallthru
      _
  $region6: #{discriminator_forward.4} parent=0 // loop_footer
    %s12 = sadd.s32 1, %s8
  $region7: #{discriminator_forward.4} parent=0 // loop_footer_branch
    %7 = sbr.rel target = $region3
  $region8: #{discriminator_forward.4} parent=0 // loop_exit
    _

// kernel: discriminator_forward.5
$region0: #{discriminator_forward.5}
  #allocation0 [shape = 'u32[]', space=smem, size = 0x4, offset = 0x4, fixed_abs, tag = 'smem constant byte address 0x4 - core index']
  #allocation1 [shape = 'u32[144,128]{1,0:T(1,128)}', space=vmem, size = 0x12000, scoped, tag = 'internal scratch']
  #allocation2 [shape = 'f32[512,128]{1,0:T(8,128)}', space=vmem, size = 0x40000, scoped, tag = 'scratch operand']
  %s0 = inlined_call_operand.vmem [shape: bf16[512,1024], index: 0, kind: input, shape index: {}]
  %s1 = inlined_call_operand.vmem [shape: bf16[1024,128], index: 1, kind: input, shape index: {}]
  %s2 = inlined_call_operand.vmem [shape: f32[1,128], index: 2, kind: input, shape index: {}]
  %s3 = inlined_call_operand.vmem [shape: f32[1,128], index: 3, kind: input, shape index: {}]
  %s4 = inlined_call_operand.vmem [shape: bf16[512,128], index: 4, kind: output, shape index: {}]
  %s5 = sld [smem:[#allocation0]]
  $region95: #{discriminator_forward.5} parent=0
    _
  %s7 = ssub.s32 1, %s5
  %s8 = scalar_select 0, %s7, %s5
  $region1: #{discriminator_forward.5} parent=0
    #allocation3 [shape = 'u8[524288]{0}', space=vmem, size = 0x80000, scoped, tag = 'input window, operand 0']
    loop: start=0, step=1, limit=6
    $region2: #{discriminator_forward.5} parent=1 // loop_pre_header
      _
    $region3: #{discriminator_forward.5} parent=1 // loop_header
      %s10 = sphi 0, %s14
      %p11 = scmp.ge.s32.totalorder %s10, 6
      %s17 = sphi 0, %s29
      %s18 = sphi 0, %s25
      %s19 = sphi 0, %s17
      %s20 = sphi 0, %s18
      %s21 = sphi 0, %s19
      %s22 = sphi 0, %s20
      %s32 = sphi 0, %s34
      %s35 = sphi 0, %s32
      %s36 = sphi 0, %s35
      %s52 = sphi 0, %s36
      %s60 = sphi 0, %s62
      %s63 = sphi 0, %s60
      %s64 = sphi 0, %s63
      %s80 = sphi 0, %s64
      %s86 = sphi 0, %s88
      %s89 = sphi 0, %s86
      %s90 = sphi 0, %s89
      %s106 = sphi 0, %s90
      %s112 = sphi 0, %s114
      %s115 = sphi 0, %s112
      %s116 = sphi 0, %s115
      %s132 = sphi 0, %s116
      %s138 = sphi 0, %s140
      %s141 = sphi 0, %s138
      %s142 = sphi 0, %s141
      %s158 = sphi 0, %s142
    $region4: #{discriminator_forward.5} parent=1 // loop_header_branch
      %13 = sbr.rel (%p11) target = $region8
    $region5: #{discriminator_forward.5} parent=1 // loop_body
      %s15 = ssub.s32 %s10, 1
      %s16 = ssub.s32 %s10, 2
      %s23 = sadd.s32 1, %s18
      %p24 = scmp.ge.s32.totalorder %s23, 4
      %s25 = scalar_select %p24, 0, %s23
      %s26 = sadd.s32 1, %s17
      %s27 = scalar_select %p24, %s26, %s17
      %p28 = scmp.ge.s32.totalorder %s27, 1
      %s29 = scalar_select %p28, 0, %s27
      %s30 = ssub.s32 %s18, %s25
      %p31 = scmp.eq.s32.totalorder %s30, 0
      %s33 = sadd.s32 %s32, 1
      %s34 = scalar_select %p31, %s32, %s33
      %p37 = pneg %p31
      %p38 = scmp.eq.s32.totalorder %s10, 3
      %p39 = por %p37, %p38
      %p40 = scmp.ne.s32.totalorder %s32, %s35
      %p41 = scmp.eq.s32.totalorder %s10, 0
      %p42 = por %p40, %p41
      %p43 = scmp.ne.s32.totalorder %s32, %s35
      %p44 = scmp.eq.s32.totalorder %s15, 3
      %p45 = por %p43, %p44
      %p46 = scmp.ne.s32.totalorder %s35, %s36
      %p47 = scmp.eq.s32.totalorder %s15, 0
      %p48 = por %p46, %p47
      %p49 = scmp.ne.s32.totalorder %s35, %s36
      %p50 = scmp.eq.s32.totalorder %s16, 3
      %p51 = por %p49, %p50
      %p53 = scmp.ne.s32.totalorder %s36, %s52
      %p54 = scmp.eq.s32.totalorder %s16, 0
      %p55 = por %p53, %p54
      %s56 = ssub.s32 %s18, %s25
      %s57 = ssub.s32 %s17, %s29
      %s58 = sor.u32 %s56, %s57
      %p59 = scmp.eq.s32.totalorder %s58, 0
      %s61 = sadd.s32 %s60, 1
      %s62 = scalar_select %p59, %s60, %s61
      %p65 = pneg %p59
      %p66 = scmp.eq.s32.totalorder %s10, 3
      %p67 = por %p65, %p66
      %p68 = scmp.ne.s32.totalorder %s60, %s63
      %p69 = scmp.eq.s32.totalorder %s10, 0
      %p70 = por %p68, %p69
      %p71 = scmp.ne.s32.totalorder %s60, %s63
      %p72 = scmp.eq.s32.totalorder %s15, 3
      %p73 = por %p71, %p72
      %p74 = scmp.ne.s32.totalorder %s63, %s64
      %p75 = scmp.eq.s32.totalorder %s15, 0
      %p76 = por %p74, %p75
      %p77 = scmp.ne.s32.totalorder %s63, %s64
      %p78 = scmp.eq.s32.totalorder %s16, 3
      %p79 = por %p77, %p78
      %p81 = scmp.ne.s32.totalorder %s64, %s80
      %p82 = scmp.eq.s32.totalorder %s16, 0
      %p83 = por %p81, %p82
      %s84 = ssub.s32 %s17, %s29
      %p85 = scmp.eq.s32.totalorder %s84, 0
      %s87 = sadd.s32 %s86, 1
      %s88 = scalar_select %p85, %s86, %s87
      %p91 = pneg %p85
      %p92 = scmp.eq.s32.totalorder %s10, 3
      %p93 = por %p91, %p92
      %p94 = scmp.ne.s32.totalorder %s86, %s89
      %p95 = scmp.eq.s32.totalorder %s10, 0
      %p96 = por %p94, %p95
      %p97 = scmp.ne.s32.totalorder %s86, %s89
      %p98 = scmp.eq.s32.totalorder %s15, 3
      %p99 = por %p97, %p98
      %p100 = scmp.ne.s32.totalorder %s89, %s90
      %p101 = scmp.eq.s32.totalorder %s15, 0
      %p102 = por %p100, %p101
      %p103 = scmp.ne.s32.totalorder %s89, %s90
      %p104 = scmp.eq.s32.totalorder %s16, 3
      %p105 = por %p103, %p104
      %p107 = scmp.ne.s32.totalorder %s90, %s106
      %p108 = scmp.eq.s32.totalorder %s16, 0
      %p109 = por %p107, %p108
      %s110 = ssub.s32 %s17, %s29
      %p111 = scmp.eq.s32.totalorder %s110, 0
      %s113 = sadd.s32 %s112, 1
      %s114 = scalar_select %p111, %s112, %s113
      %p117 = pneg %p111
      %p118 = scmp.eq.s32.totalorder %s10, 3
      %p119 = por %p117, %p118
      %p120 = scmp.ne.s32.totalorder %s112, %s115
      %p121 = scmp.eq.s32.totalorder %s10, 0
      %p122 = por %p120, %p121
      %p123 = scmp.ne.s32.totalorder %s112, %s115
      %p124 = scmp.eq.s32.totalorder %s15, 3
      %p125 = por %p123, %p124
      %p126 = scmp.ne.s32.totalorder %s115, %s116
      %p127 = scmp.eq.s32.totalorder %s15, 0
      %p128 = por %p126, %p127
      %p129 = scmp.ne.s32.totalorder %s115, %s116
      %p130 = scmp.eq.s32.totalorder %s16, 3
      %p131 = por %p129, %p130
      %p133 = scmp.ne.s32.totalorder %s116, %s132
      %p134 = scmp.eq.s32.totalorder %s16, 0
      %p135 = por %p133, %p134
      %s136 = ssub.s32 %s17, %s29
      %p137 = scmp.eq.s32.totalorder %s136, 0
      %s139 = sadd.s32 %s138, 1
      %s140 = scalar_select %p137, %s138, %s139
      %p143 = pneg %p137
      %p144 = scmp.eq.s32.totalorder %s10, 3
      %p145 = por %p143, %p144
      %p146 = scmp.ne.s32.totalorder %s138, %s141
      %p147 = scmp.eq.s32.totalorder %s10, 0
      %p148 = por %p146, %p147
      %p149 = scmp.ne.s32.totalorder %s138, %s141
      %p150 = scmp.eq.s32.totalorder %s15, 3
      %p151 = por %p149, %p150
      %p152 = scmp.ne.s32.totalorder %s141, %s142
      %p153 = scmp.eq.s32.totalorder %s15, 0
      %p154 = por %p152, %p153
      %p155 = scmp.ne.s32.totalorder %s141, %s142
      %p156 = scmp.eq.s32.totalorder %s16, 3
      %p157 = por %p155, %p156
      %p159 = scmp.ne.s32.totalorder %s142, %s158
      %p160 = scmp.eq.s32.totalorder %s16, 0
      %p161 = por %p159, %p160
      %p162 = scmp.le.s32.totalorder 1, %s10
      %p163 = scmp.lt.s32.totalorder %s10, 5
      %p164 = pnand %p162, %p163
      %p165 = pneg %p164
      // Predicated region
      $region9: #{discriminator_forward.5} parent=5 // pred_check
        _
      $region10: #{discriminator_forward.5} parent=5 // pred_check_branch
        %167 = sbr.rel (%p164) target = $region12
      $region11: #{discriminator_forward.5} parent=5 // pred_region
        %s168 = ssub.s32 %s10, 1
        // Predicated region
        $region13: #{discriminator_forward.5} parent=11 // pred_check
          %p169 = pneg %p102
        $region14: #{discriminator_forward.5} parent=11 // pred_check_branch
          %171 = sbr.rel (%p169) target = $region16
        $region15: #{discriminator_forward.5} parent=11 // pred_region
          %p172 = scmp.lt.s32.totalorder %s19, 0
          %s173 = scalar_select %p172, %s19, 0
          %s174 = scalar_lea.vmem %s2, %s173
        $region16: #{discriminator_forward.5} parent=11 // pred_fallthru
          _
        // Predicated region
        $region17: #{discriminator_forward.5} parent=11 // pred_check
          %p175 = pneg %p128
        $region18: #{discriminator_forward.5} parent=11 // pred_check_branch
          %177 = sbr.rel (%p175) target = $region20
        $region19: #{discriminator_forward.5} parent=11 // pred_region
          %p178 = scmp.lt.s32.totalorder %s19, 0
          %s179 = scalar_select %p178, %s19, 0
          %s180 = scalar_lea.vmem %s3, %s179
        $region20: #{discriminator_forward.5} parent=11 // pred_fallthru
          _
      $region12: #{discriminator_forward.5} parent=5 // pred_fallthru
        _
      %p181 = scmp.lt.s32.totalorder %s10, 4
      // Predicated region
      $region21: #{discriminator_forward.5} parent=5 // pred_check
        %p182 = pneg %p181
      $region22: #{discriminator_forward.5} parent=5 // pred_check_branch
        %184 = sbr.rel (%p182) target = $region24
      $region23: #{discriminator_forward.5} parent=5 // pred_region
        // Predicated region
        $region25: #{discriminator_forward.5} parent=23 // pred_check
          %p185 = pneg %p42
        $region26: #{discriminator_forward.5} parent=23 // pred_check_branch
          %187 = sbr.rel (%p185) target = $region28
        $region27: #{discriminator_forward.5} parent=23 // pred_region
          %s188 = sand.u32 %s32, 1
          %s189 = sand.u32 %s32, 1
          %s190 = smul.addr %s189, 512
          %s191 = scalar_lea.vmem [#allocation3], %s190
          %s192 = smul.u32 2, %s18
          %s193 = smul.addr %s192, 4
          %s194 = scalar_lea.vmem %s0, %s193
          // Predicated region
          $region29: #{discriminator_forward.5} parent=27 // pred_check
            _
          $region30: #{discriminator_forward.5} parent=27 // pred_check_branch
            %196 = sbr.rel (0) target = $region32
          $region31: #{discriminator_forward.5} parent=27 // pred_region
            // Predicated region
            $region33: #{discriminator_forward.5} parent=31 // pred_check
              _
            $region34: #{discriminator_forward.5} parent=31 // pred_check_branch
              %198 = sbr.rel (0) target = $region36
            $region35: #{discriminator_forward.5} parent=31 // pred_region
              // Predicated region
              $region48: #{discriminator_forward.5} parent=35 // pred_check
                _
              $region49: #{discriminator_forward.5} parent=35 // pred_check_branch
                %340 = sbr.rel (0) target = $region51
              $region50: #{discriminator_forward.5} parent=35 // pred_region
                loop: start=0, step=1, limit=1
                $region52: #{discriminator_forward.5} parent=50 // loop_pre_header
                  _
                $region53: #{discriminator_forward.5} parent=50 // loop_header
                  %s342 = sphi 0, %s346
                  %p343 = scmp.ge.s32.totalorder %s342, 1
                  %s347 = sphi %s194, %s194
                  %s348 = sphi %s191, %s191
                $region54: #{discriminator_forward.5} parent=50 // loop_header_branch
                  %345 = sbr.rel (%p343) target = $region58
                $region55: #{discriminator_forward.5} parent=50 // loop_body
                  %v349 = vld [vmem:[%s347] sm:$0xff]
                  %350 = vst [vmem:[%s348] sm:$0xff] %v349
                  %v351 = vld [vmem:[%s347 + $0x20] sm:$0xff]
                  %352 = vst [vmem:[%s348 + $0x8] sm:$0xff] %v351
                  %v353 = vld [vmem:[%s347 + $0x40] sm:$0xff]
                  %354 = vst [vmem:[%s348 + $0x10] sm:$0xff] %v353
                  %v355 = vld [vmem:[%s347 + $0x60] sm:$0xff]
                  %356 = vst [vmem:[%s348 + $0x18] sm:$0xff] %v355
                  %v357 = vld [vmem:[%s347 + $0x80] sm:$0xff]
                  %358 = vst [vmem:[%s348 + $0x20] sm:$0xff] %v357
                  %v359 = vld [vmem:[%s347 + $0xa0] sm:$0xff]
                  %360 = vst [vmem:[%s348 + $0x28] sm:$0xff] %v359
                  %v361 = vld [vmem:[%s347 + $0xc0] sm:$0xff]
                  %362 = vst [vmem:[%s348 + $0x30] sm:$0xff] %v361
                  %v363 = vld [vmem:[%s347 + $0xe0] sm:$0xff]
                  %364 = vst [vmem:[%s348 + $0x38] sm:$0xff] %v363
                  %v365 = vld [vmem:[%s347 + $0x100] sm:$0xff]
                  %366 = vst [vmem:[%s348 + $0x40] sm:$0xff] %v365
                  %v367 = vld [vmem:[%s347 + $0x120] sm:$0xff]
                  %368 = vst [vmem:[%s348 + $0x48] sm:$0xff] %v367
                  %v369 = vld [vmem:[%s347 + $0x140] sm:$0xff]
                  %370 = vst [vmem:[%s348 + $0x50] sm:$0xff] %v369
                  %v371 = vld [vmem:[%s347 + $0x160] sm:$0xff]
                  %372 = vst [vmem:[%s348 + $0x58] sm:$0xff] %v371
                  %v373 = vld [vmem:[%s347 + $0x180] sm:$0xff]
                  %374 = vst [vmem:[%s348 + $0x60] sm:$0xff] %v373
                  %v375 = vld [vmem:[%s347 + $0x1a0] sm:$0xff]
                  %376 = vst [vmem:[%s348 + $0x68] sm:$0xff] %v375
                  %v377 = vld [vmem:[%s347 + $0x1c0] sm:$0xff]
                  %378 = vst [vmem:[%s348 + $0x70] sm:$0xff] %v377
                  %v379 = vld [vmem:[%s347 + $0x1e0] sm:$0xff]
                  %380 = vst [vmem:[%s348 + $0x78] sm:$0xff] %v379
                  %v381 = vld [vmem:[%s347 + $0x200] sm:$0xff]
                  %382 = vst [vmem:[%s348 + $0x80] sm:$0xff] %v381
                  %v383 = vld [vmem:[%s347 + $0x220] sm:$0xff]
                  %384 = vst [vmem:[%s348 + $0x88] sm:$0xff] %v383
                  %v385 = vld [vmem:[%s347 + $0x240] sm:$0xff]
                  %386 = vst [vmem:[%s348 + $0x90] sm:$0xff] %v385
                  %v387 = vld [vmem:[%s347 + $0x260] sm:$0xff]
                  %388 = vst [vmem:[%s348 + $0x98] sm:$0xff] %v387
                  %v389 = vld [vmem:[%s347 + $0x280] sm:$0xff]
                  %390 = vst [vmem:[%s348 + $0xa0] sm:$0xff] %v389
                  %v391 = vld [vmem:[%s347 + $0x2a0] sm:$0xff]
                  %392 = vst [vmem:[%s348 + $0xa8] sm:$0xff] %v391
                  %v393 = vld [vmem:[%s347 + $0x2c0] sm:$0xff]
                  %394 = vst [vmem:[%s348 + $0xb0] sm:$0xff] %v393
                  %v395 = vld [vmem:[%s347 + $0x2e0] sm:$0xff]
                  %396 = vst [vmem:[%s348 + $0xb8] sm:$0xff] %v395
                  %v397 = vld [vmem:[%s347 + $0x300] sm:$0xff]
                  %398 = vst [vmem:[%s348 + $0xc0] sm:$0xff] %v397
                  %v399 = vld [vmem:[%s347 + $0x320] sm:$0xff]
                  %400 = vst [vmem:[%s348 + $0xc8] sm:$0xff] %v399
                  %v401 = vld [vmem:[%s347 + $0x340] sm:$0xff]
                  %402 = vst [vmem:[%s348 + $0xd0] sm:$0xff] %v401
                  %v403 = vld [vmem:[%s347 + $0x360] sm:$0xff]
                  %404 = vst [vmem:[%s348 + $0xd8] sm:$0xff] %v403
                  %v405 = vld [vmem:[%s347 + $0x380] sm:$0xff]
                  %406 = vst [vmem:[%s348 + $0xe0] sm:$0xff] %v405
                  %v407 = vld [vmem:[%s347 + $0x3a0] sm:$0xff]
                  %408 = vst [vmem:[%s348 + $0xe8] sm:$0xff] %v407
                  %v409 = vld [vmem:[%s347 + $0x3c0] sm:$0xff]
                  %410 = vst [vmem:[%s348 + $0xf0] sm:$0xff] %v409
                  %v411 = vld [vmem:[%s347 + $0x3e0] sm:$0xff]
                  %412 = vst [vmem:[%s348 + $0xf8] sm:$0xff] %v411
                  %v413 = vld [vmem:[%s347 + $0x400] sm:$0xff]
                  %414 = vst [vmem:[%s348 + $0x100] sm:$0xff] %v413
                  %v415 = vld [vmem:[%s347 + $0x420] sm:$0xff]
                  %416 = vst [vmem:[%s348 + $0x108] sm:$0xff] %v415
                  %v417 = vld [vmem:[%s347 + $0x440] sm:$0xff]
                  %418 = vst [vmem:[%s348 + $0x110] sm:$0xff] %v417
                  %v419 = vld [vmem:[%s347 + $0x460] sm:$0xff]
                  %420 = vst [vmem:[%s348 + $0x118] sm:$0xff] %v419
                  %v421 = vld [vmem:[%s347 + $0x480] sm:$0xff]
                  %422 = vst [vmem:[%s348 + $0x120] sm:$0xff] %v421
                  %v423 = vld [vmem:[%s347 + $0x4a0] sm:$0xff]
                  %424 = vst [vmem:[%s348 + $0x128] sm:$0xff] %v423
                  %v425 = vld [vmem:[%s347 + $0x4c0] sm:$0xff]
                  %426 = vst [vmem:[%s348 + $0x130] sm:$0xff] %v425
                  %v427 = vld [vmem:[%s347 + $0x4e0] sm:$0xff]
                  %428 = vst [vmem:[%s348 + $0x138] sm:$0xff] %v427
                  %v429 = vld [vmem:[%s347 + $0x500] sm:$0xff]
                  %430 = vst [vmem:[%s348 + $0x140] sm:$0xff] %v429
                  %v431 = vld [vmem:[%s347 + $0x520] sm:$0xff]
                  %432 = vst [vmem:[%s348 + $0x148] sm:$0xff] %v431
                  %v433 = vld [vmem:[%s347 + $0x540] sm:$0xff]
                  %434 = vst [vmem:[%s348 + $0x150] sm:$0xff] %v433
                  %v435 = vld [vmem:[%s347 + $0x560] sm:$0xff]
                  %436 = vst [vmem:[%s348 + $0x158] sm:$0xff] %v435
                  %v437 = vld [vmem:[%s347 + $0x580] sm:$0xff]
                  %438 = vst [vmem:[%s348 + $0x160] sm:$0xff] %v437
                  %v439 = vld [vmem:[%s347 + $0x5a0] sm:$0xff]
                  %440 = vst [vmem:[%s348 + $0x168] sm:$0xff] %v439
                  %v441 = vld [vmem:[%s347 + $0x5c0] sm:$0xff]
                  %442 = vst [vmem:[%s348 + $0x170] sm:$0xff] %v441
                  %v443 = vld [vmem:[%s347 + $0x5e0] sm:$0xff]
                  %444 = vst [vmem:[%s348 + $0x178] sm:$0xff] %v443
                  %v445 = vld [vmem:[%s347 + $0x600] sm:$0xff]
                  %446 = vst [vmem:[%s348 + $0x180] sm:$0xff] %v445
                  %v447 = vld [vmem:[%s347 + $0x620] sm:$0xff]
                  %448 = vst [vmem:[%s348 + $0x188] sm:$0xff] %v447
                  %v449 = vld [vmem:[%s347 + $0x640] sm:$0xff]
                  %450 = vst [vmem:[%s348 + $0x190] sm:$0xff] %v449
                  %v451 = vld [vmem:[%s347 + $0x660] sm:$0xff]
                  %452 = vst [vmem:[%s348 + $0x198] sm:$0xff] %v451
                  %v453 = vld [vmem:[%s347 + $0x680] sm:$0xff]
                  %454 = vst [vmem:[%s348 + $0x1a0] sm:$0xff] %v453
                  %v455 = vld [vmem:[%s347 + $0x6a0] sm:$0xff]
                  %456 = vst [vmem:[%s348 + $0x1a8] sm:$0xff] %v455
                  %v457 = vld [vmem:[%s347 + $0x6c0] sm:$0xff]
                  %458 = vst [vmem:[%s348 + $0x1b0] sm:$0xff] %v457
                  %v459 = vld [vmem:[%s347 + $0x6e0] sm:$0xff]
                  %460 = vst [vmem:[%s348 + $0x1b8] sm:$0xff] %v459
                  %v461 = vld [vmem:[%s347 + $0x700] sm:$0xff]
                  %462 = vst [vmem:[%s348 + $0x1c0] sm:$0xff] %v461
                  %v463 = vld [vmem:[%s347 + $0x720] sm:$0xff]
                  %464 = vst [vmem:[%s348 + $0x1c8] sm:$0xff] %v463
                  %v465 = vld [vmem:[%s347 + $0x740] sm:$0xff]
                  %466 = vst [vmem:[%s348 + $0x1d0] sm:$0xff] %v465
                  %v467 = vld [vmem:[%s347 + $0x760] sm:$0xff]
                  %468 = vst [vmem:[%s348 + $0x1d8] sm:$0xff] %v467
                  %v469 = vld [vmem:[%s347 + $0x780] sm:$0xff]
                  %470 = vst [vmem:[%s348 + $0x1e0] sm:$0xff] %v469
                  %v471 = vld [vmem:[%s347 + $0x7a0] sm:$0xff]
                  %472 = vst [vmem:[%s348 + $0x1e8] sm:$0xff] %v471
                  %v473 = vld [vmem:[%s347 + $0x7c0] sm:$0xff]
                  %474 = vst [vmem:[%s348 + $0x1f0] sm:$0xff] %v473
                  %v475 = vld [vmem:[%s347 + $0x7e0] sm:$0xff]
                  %476 = vst [vmem:[%s348 + $0x1f8] sm:$0xff] %v475
                $region56: #{discriminator_forward.5} parent=50 // loop_footer
                  %s346 = sadd.s32 1, %s342
                $region57: #{discriminator_forward.5} parent=50 // loop_footer_branch
                  %341 = sbr.rel target = $region53
                $region58: #{discriminator_forward.5} parent=50 // loop_exit
                  _
              $region51: #{discriminator_forward.5} parent=35 // pred_fallthru
                _
              // Predicated region
              $region59: #{discriminator_forward.5} parent=35 // pred_check
                _
              $region60: #{discriminator_forward.5} parent=35 // pred_check_branch
                %478 = sbr.rel target = $region62
              $region61: #{discriminator_forward.5} parent=35 // pred_region
                _
              $region62: #{discriminator_forward.5} parent=35 // pred_fallthru
                _
            $region36: #{discriminator_forward.5} parent=31 // pred_fallthru
              _
            // Predicated region
            $region37: #{discriminator_forward.5} parent=31 // pred_check
              _
            $region38: #{discriminator_forward.5} parent=31 // pred_check_branch
              %200 = sbr.rel target = $region40
            $region39: #{discriminator_forward.5} parent=31 // pred_region
              %s202 = ssub.s32 256, 1
              loop: start=0, step=1, limit=1
              $region41: #{discriminator_forward.5} parent=39 // loop_pre_header
                _
              $region42: #{discriminator_forward.5} parent=39 // loop_header
                %s204 = sphi 0, %s208
                %p205 = scmp.ge.s32.totalorder %s204, 1
                %s209 = sphi %s194, %s194
                %s210 = sphi %s191, %s191
              $region43: #{discriminator_forward.5} parent=39 // loop_header_branch
                %207 = sbr.rel (%p205) target = $region47
              $region44: #{discriminator_forward.5} parent=39 // loop_body
                %v211 = vld [vmem:[%s209] sm:%s202]
                %212 = vst [vmem:[%s210] sm:%s202] %v211
                %v213 = vld [vmem:[%s209 + $0x20] sm:%s202]
                %214 = vst [vmem:[%s210 + $0x8] sm:%s202] %v213
                %v215 = vld [vmem:[%s209 + $0x40] sm:%s202]
                %216 = vst [vmem:[%s210 + $0x10] sm:%s202] %v215
                %v217 = vld [vmem:[%s209 + $0x60] sm:%s202]
                %218 = vst [vmem:[%s210 + $0x18] sm:%s202] %v217
                %v219 = vld [vmem:[%s209 + $0x80] sm:%s202]
                %220 = vst [vmem:[%s210 + $0x20] sm:%s202] %v219
                %v221 = vld [vmem:[%s209 + $0xa0] sm:%s202]
                %222 = vst [vmem:[%s210 + $0x28] sm:%s202] %v221
                %v223 = vld [vmem:[%s209 + $0xc0] sm:%s202]
                %224 = vst [vmem:[%s210 + $0x30] sm:%s202] %v223
                %v225 = vld [vmem:[%s209 + $0xe0] sm:%s202]
                %226 = vst [vmem:[%s210 + $0x38] sm:%s202] %v225
                %v227 = vld [vmem:[%s209 + $0x100] sm:%s202]
                %228 = vst [vmem:[%s210 + $0x40] sm:%s202] %v227
                %v229 = vld [vmem:[%s209 + $0x120] sm:%s202]
                %230 = vst [vmem:[%s210 + $0x48] sm:%s202] %v229
                %v231 = vld [vmem:[%s209 + $0x140] sm:%s202]
                %232 = vst [vmem:[%s210 + $0x50] sm:%s202] %v231
                %v233 = vld [vmem:[%s209 + $0x160] sm:%s202]
                %234 = vst [vmem:[%s210 + $0x58] sm:%s202] %v233
                %v235 = vld [vmem:[%s209 + $0x180] sm:%s202]
                %236 = vst [vmem:[%s210 + $0x60] sm:%s202] %v235
                %v237 = vld [vmem:[%s209 + $0x1a0] sm:%s202]
                %238 = vst [vmem:[%s210 + $0x68] sm:%s202] %v237
                %v239 = vld [vmem:[%s209 + $0x1c0] sm:%s202]
                %240 = vst [vmem:[%s210 + $0x70] sm:%s202] %v239
                %v241 = vld [vmem:[%s209 + $0x1e0] sm:%s202]
                %242 = vst [vmem:[%s210 + $0x78] sm:%s202] %v241
                %v243 = vld [vmem:[%s209 + $0x200] sm:%s202]
                %244 = vst [vmem:[%s210 + $0x80] sm:%s202] %v243
                %v245 = vld [vmem:[%s209 + $0x220] sm:%s202]
                %246 = vst [vmem:[%s210 + $0x88] sm:%s202] %v245
                %v247 = vld [vmem:[%s209 + $0x240] sm:%s202]
                %248 = vst [vmem:[%s210 + $0x90] sm:%s202] %v247
                %v249 = vld [vmem:[%s209 + $0x260] sm:%s202]
                %250 = vst [vmem:[%s210 + $0x98] sm:%s202] %v249
                %v251 = vld [vmem:[%s209 + $0x280] sm:%s202]
                %252 = vst [vmem:[%s210 + $0xa0] sm:%s202] %v251
                %v253 = vld [vmem:[%s209 + $0x2a0] sm:%s202]
                %254 = vst [vmem:[%s210 + $0xa8] sm:%s202] %v253
                %v255 = vld [vmem:[%s209 + $0x2c0] sm:%s202]
                %256 = vst [vmem:[%s210 + $0xb0] sm:%s202] %v255
                %v257 = vld [vmem:[%s209 + $0x2e0] sm:%s202]
                %258 = vst [vmem:[%s210 + $0xb8] sm:%s202] %v257
                %v259 = vld [vmem:[%s209 + $0x300] sm:%s202]
                %260 = vst [vmem:[%s210 + $0xc0] sm:%s202] %v259
                %v261 = vld [vmem:[%s209 + $0x320] sm:%s202]
                %262 = vst [vmem:[%s210 + $0xc8] sm:%s202] %v261
                %v263 = vld [vmem:[%s209 + $0x340] sm:%s202]
                %264 = vst [vmem:[%s210 + $0xd0] sm:%s202] %v263
                %v265 = vld [vmem:[%s209 + $0x360] sm:%s202]
                %266 = vst [vmem:[%s210 + $0xd8] sm:%s202] %v265
                %v267 = vld [vmem:[%s209 + $0x380] sm:%s202]
                %268 = vst [vmem:[%s210 + $0xe0] sm:%s202] %v267
                %v269 = vld [vmem:[%s209 + $0x3a0] sm:%s202]
                %270 = vst [vmem:[%s210 + $0xe8] sm:%s202] %v269
                %v271 = vld [vmem:[%s209 + $0x3c0] sm:%s202]
                %272 = vst [vmem:[%s210 + $0xf0] sm:%s202] %v271
                %v273 = vld [vmem:[%s209 + $0x3e0] sm:%s202]
                %274 = vst [vmem:[%s210 + $0xf8] sm:%s202] %v273
                %v275 = vld [vmem:[%s209 + $0x400] sm:%s202]
                %276 = vst [vmem:[%s210 + $0x100] sm:%s202] %v275
                %v277 = vld [vmem:[%s209 + $0x420] sm:%s202]
                %278 = vst [vmem:[%s210 + $0x108] sm:%s202] %v277
                %v279 = vld [vmem:[%s209 + $0x440] sm:%s202]
                %280 = vst [vmem:[%s210 + $0x110] sm:%s202] %v279
                %v281 = vld [vmem:[%s209 + $0x460] sm:%s202]
                %282 = vst [vmem:[%s210 + $0x118] sm:%s202] %v281
                %v283 = vld [vmem:[%s209 + $0x480] sm:%s202]
                %284 = vst [vmem:[%s210 + $0x120] sm:%s202] %v283
                %v285 = vld [vmem:[%s209 + $0x4a0] sm:%s202]
                %286 = vst [vmem:[%s210 + $0x128] sm:%s202] %v285
                %v287 = vld [vmem:[%s209 + $0x4c0] sm:%s202]
                %288 = vst [vmem:[%s210 + $0x130] sm:%s202] %v287
                %v289 = vld [vmem:[%s209 + $0x4e0] sm:%s202]
                %290 = vst [vmem:[%s210 + $0x138] sm:%s202] %v289
                %v291 = vld [vmem:[%s209 + $0x500] sm:%s202]
                %292 = vst [vmem:[%s210 + $0x140] sm:%s202] %v291
                %v293 = vld [vmem:[%s209 + $0x520] sm:%s202]
                %294 = vst [vmem:[%s210 + $0x148] sm:%s202] %v293
                %v295 = vld [vmem:[%s209 + $0x540] sm:%s202]
                %296 = vst [vmem:[%s210 + $0x150] sm:%s202] %v295
                %v297 = vld [vmem:[%s209 + $0x560] sm:%s202]
                %298 = vst [vmem:[%s210 + $0x158] sm:%s202] %v297
                %v299 = vld [vmem:[%s209 + $0x580] sm:%s202]
                %300 = vst [vmem:[%s210 + $0x160] sm:%s202] %v299
                %v301 = vld [vmem:[%s209 + $0x5a0] sm:%s202]
                %302 = vst [vmem:[%s210 + $0x168] sm:%s202] %v301
                %v303 = vld [vmem:[%s209 + $0x5c0] sm:%s202]
                %304 = vst [vmem:[%s210 + $0x170] sm:%s202] %v303
                %v305 = vld [vmem:[%s209 + $0x5e0] sm:%s202]
                %306 = vst [vmem:[%s210 + $0x178] sm:%s202] %v305
                %v307 = vld [vmem:[%s209 + $0x600] sm:%s202]
                %308 = vst [vmem:[%s210 + $0x180] sm:%s202] %v307
                %v309 = vld [vmem:[%s209 + $0x620] sm:%s202]
                %310 = vst [vmem:[%s210 + $0x188] sm:%s202] %v309
                %v311 = vld [vmem:[%s209 + $0x640] sm:%s202]
                %312 = vst [vmem:[%s210 + $0x190] sm:%s202] %v311
                %v313 = vld [vmem:[%s209 + $0x660] sm:%s202]
                %314 = vst [vmem:[%s210 + $0x198] sm:%s202] %v313
                %v315 = vld [vmem:[%s209 + $0x680] sm:%s202]
                %316 = vst [vmem:[%s210 + $0x1a0] sm:%s202] %v315
                %v317 = vld [vmem:[%s209 + $0x6a0] sm:%s202]
                %318 = vst [vmem:[%s210 + $0x1a8] sm:%s202] %v317
                %v319 = vld [vmem:[%s209 + $0x6c0] sm:%s202]
                %320 = vst [vmem:[%s210 + $0x1b0] sm:%s202] %v319
                %v321 = vld [vmem:[%s209 + $0x6e0] sm:%s202]
                %322 = vst [vmem:[%s210 + $0x1b8] sm:%s202] %v321
                %v323 = vld [vmem:[%s209 + $0x700] sm:%s202]
                %324 = vst [vmem:[%s210 + $0x1c0] sm:%s202] %v323
                %v325 = vld [vmem:[%s209 + $0x720] sm:%s202]
                %326 = vst [vmem:[%s210 + $0x1c8] sm:%s202] %v325
                %v327 = vld [vmem:[%s209 + $0x740] sm:%s202]
                %328 = vst [vmem:[%s210 + $0x1d0] sm:%s202] %v327
                %v329 = vld [vmem:[%s209 + $0x760] sm:%s202]
                %330 = vst [vmem:[%s210 + $0x1d8] sm:%s202] %v329
                %v331 = vld [vmem:[%s209 + $0x780] sm:%s202]
                %332 = vst [vmem:[%s210 + $0x1e0] sm:%s202] %v331
                %v333 = vld [vmem:[%s209 + $0x7a0] sm:%s202]
                %334 = vst [vmem:[%s210 + $0x1e8] sm:%s202] %v333
                %v335 = vld [vmem:[%s209 + $0x7c0] sm:%s202]
                %336 = vst [vmem:[%s210 + $0x1f0] sm:%s202] %v335
                %v337 = vld [vmem:[%s209 + $0x7e0] sm:%s202]
                %338 = vst [vmem:[%s210 + $0x1f8] sm:%s202] %v337
              $region45: #{discriminator_forward.5} parent=39 // loop_footer
                %s208 = sadd.s32 1, %s204
              $region46: #{discriminator_forward.5} parent=39 // loop_footer_branch
                %203 = sbr.rel target = $region42
              $region47: #{discriminator_forward.5} parent=39 // loop_exit
                _
            $region40: #{discriminator_forward.5} parent=31 // pred_fallthru
              _
          $region32: #{discriminator_forward.5} parent=27 // pred_fallthru
            _
          %479 = vnop
        $region28: #{discriminator_forward.5} parent=23 // pred_fallthru
          _
        // Predicated region
        $region63: #{discriminator_forward.5} parent=23 // pred_check
          %p480 = pneg %p70
        $region64: #{discriminator_forward.5} parent=23 // pred_check_branch
          %482 = sbr.rel (%p480) target = $region66
        $region65: #{discriminator_forward.5} parent=23 // pred_region
          %s483 = smul.u32 32, %s18
          %p484 = scmp.lt.s32.totalorder %s483, 127
          %s485 = scalar_select %p484, %s483, 127
          %p486 = scmp.lt.s32.totalorder %s17, 0
          %s487 = scalar_select %p486, %s17, 0
          %s488 = sadd.s32 %s487, %s485
          %s489 = smul.addr %s488, 4
          %s490 = scalar_lea.vmem %s1, %s489
          %s491 = smul.u32 32, %s18
        $region66: #{discriminator_forward.5} parent=23 // pred_fallthru
          _
      $region24: #{discriminator_forward.5} parent=5 // pred_fallthru
        _
      %p492 = scmp.le.s32.totalorder 1, %s10
      %p493 = scmp.lt.s32.totalorder %s10, 5
      %p494 = pnand %p492, %p493
      %p495 = pneg %p494
      // Predicated region
      $region67: #{discriminator_forward.5} parent=5 // pred_check
        _
      $region68: #{discriminator_forward.5} parent=5 // pred_check_branch
        %497 = sbr.rel (%p494) target = $region70
      $region69: #{discriminator_forward.5} parent=5 // pred_region
        %s498 = ssub.s32 %s10, 1
        %s499 = sand.u32 %s35, 1
        %s500 = sand.u32 %s35, 1
        %s501 = smul.addr %s500, 512
        %s502 = scalar_lea.vmem [#allocation3], %s501
        // Predicated region
        $region71: #{discriminator_forward.5} parent=69 // pred_check
          %p503 = pneg %p48
        $region72: #{discriminator_forward.5} parent=69 // pred_check_branch
          %505 = sbr.rel (%p503) target = $region74
        $region73: #{discriminator_forward.5} parent=69 // pred_region
          _
        $region74: #{discriminator_forward.5} parent=69 // pred_fallthru
          _
        %s506 = sand.u32 %s35, 1
        %s507 = sand.u32 %s35, 1
        %s508 = smul.addr %s507, 512
        %s509 = scalar_lea.vmem [#allocation3], %s508
        %p510 = pneg %p48
        %p511 = pneg %p45
        %s512 = smul.u32 32, %s20
        %p513 = scmp.lt.s32.totalorder %s512, 127
        %s514 = scalar_select %p513, %s512, 127
        %p515 = scmp.lt.s32.totalorder %s19, 0
        %s516 = scalar_select %p515, %s19, 0
        %s517 = sadd.s32 %s516, %s514
        %s518 = smul.addr %s517, 4
        %s519 = scalar_lea.vmem %s1, %s518
        %p520 = pneg %p76
        %p521 = pneg %p73
        %p522 = scmp.lt.s32.totalorder %s19, 0
        %s523 = scalar_select %p522, %s19, 0
        %s524 = scalar_lea.vmem %s2, %s523
        %p525 = pneg %p102
        %p526 = pneg %p99
        %p527 = scmp.lt.s32.totalorder %s19, 0
        %s528 = scalar_select %p527, %s19, 0
        %s529 = scalar_lea.vmem %s3, %s528
        %p530 = pneg %p128
        %p531 = pneg %p125
        %p532 = pneg %p154
        %p533 = pneg %p151
        %p534 = scmp.lt.s32.totalorder %s19, 0
        %s535 = scalar_select %p534, %s19, 0
        %s536 = smul.addr %s535, 4
        %s537 = scalar_lea.vmem %s4, %s536
        %s538 = smul.u32 2, %s20
        %s539 = smul.u32 32, %s20
        %p540 = scmp.lt.s32.totalorder %s539, 127
        %s541 = scalar_select %p540, %s539, 127
        %p542 = scmp.lt.s32.totalorder %s19, 0
        %s543 = scalar_select %p542, %s19, 0
        %s544 = sadd.s32 %s543, %s541
        %s545 = smul.addr %s544, 4
        %s546 = scalar_lea.vmem %s1, %s545
        %s547 = smul.u32 32, %s20
        %p548 = scmp.lt.s32.totalorder %s19, 0
        %s549 = scalar_select %p548, %s19, 0
        %s550 = scalar_lea.vmem %s2, %s549
        %p551 = scmp.lt.s32.totalorder %s19, 0
        %s552 = scalar_select %p551, %s19, 0
        %s553 = scalar_lea.vmem %s3, %s552
        %p554 = scmp.lt.s32.totalorder %s19, 0
        %s555 = scalar_select %p554, %s19, 0
        %s556 = smul.addr %s555, 4
        %s557 = scalar_lea.vmem %s4, %s556
        %p559 = scmp.eq.s32.totalorder %s20, 0
        // Predicated region
        $region75: #{discriminator_forward.5} parent=69 // pred_check
          %p560 = pneg %p559
        $region76: #{discriminator_forward.5} parent=69 // pred_check_branch
          %562 = sbr.rel (%p560) target = $region78
        $region77: #{discriminator_forward.5} parent=69 // pred_region
          %563 = vst [vmem:[#allocation2] sm:$0xff] 0.0
          %564 = vst [vmem:[#allocation2 + $0x8] sm:$0xff] 0.0
          %565 = vst [vmem:[#allocation2 + $0x10] sm:$0xff] 0.0
          %566 = vst [vmem:[#allocation2 + $0x18] sm:$0xff] 0.0
          %567 = vst [vmem:[#allocation2 + $0x20] sm:$0xff] 0.0
          %568 = vst [vmem:[#allocation2 + $0x28] sm:$0xff] 0.0
          %569 = vst [vmem:[#allocation2 + $0x30] sm:$0xff] 0.0
          %570 = vst [vmem:[#allocation2 + $0x38] sm:$0xff] 0.0
          %571 = vst [vmem:[#allocation2 + $0x40] sm:$0xff] 0.0
          %572 = vst [vmem:[#allocation2 + $0x48] sm:$0xff] 0.0
          %573 = vst [vmem:[#allocation2 + $0x50] sm:$0xff] 0.0
          %574 = vst [vmem:[#allocation2 + $0x58] sm:$0xff] 0.0
          %575 = vst [vmem:[#allocation2 + $0x60] sm:$0xff] 0.0
          %576 = vst [vmem:[#allocation2 + $0x68] sm:$0xff] 0.0
          %577 = vst [vmem:[#allocation2 + $0x70] sm:$0xff] 0.0
          %578 = vst [vmem:[#allocation2 + $0x78] sm:$0xff] 0.0
          %579 = vst [vmem:[#allocation2 + $0x80] sm:$0xff] 0.0
          %580 = vst [vmem:[#allocation2 + $0x88] sm:$0xff] 0.0
          %581 = vst [vmem:[#allocation2 + $0x90] sm:$0xff] 0.0
          %582 = vst [vmem:[#allocation2 + $0x98] sm:$0xff] 0.0
          %583 = vst [vmem:[#allocation2 + $0xa0] sm:$0xff] 0.0
          %584 = vst [vmem:[#allocation2 + $0xa8] sm:$0xff] 0.0
          %585 = vst [vmem:[#allocation2 + $0xb0] sm:$0xff] 0.0
          %586 = vst [vmem:[#allocation2 + $0xb8] sm:$0xff] 0.0
          %587 = vst [vmem:[#allocation2 + $0xc0] sm:$0xff] 0.0
          %588 = vst [vmem:[#allocation2 + $0xc8] sm:$0xff] 0.0
          %589 = vst [vmem:[#allocation2 + $0xd0] sm:$0xff] 0.0
          %590 = vst [vmem:[#allocation2 + $0xd8] sm:$0xff] 0.0
          %591 = vst [vmem:[#allocation2 + $0xe0] sm:$0xff] 0.0
          %592 = vst [vmem:[#allocation2 + $0xe8] sm:$0xff] 0.0
          %593 = vst [vmem:[#allocation2 + $0xf0] sm:$0xff] 0.0
          %594 = vst [vmem:[#allocation2 + $0xf8] sm:$0xff] 0.0
          %595 = vst [vmem:[#allocation2 + $0x100] sm:$0xff] 0.0
          %596 = vst [vmem:[#allocation2 + $0x108] sm:$0xff] 0.0
          %597 = vst [vmem:[#allocation2 + $0x110] sm:$0xff] 0.0
          %598 = vst [vmem:[#allocation2 + $0x118] sm:$0xff] 0.0
          %599 = vst [vmem:[#allocation2 + $0x120] sm:$0xff] 0.0
          %600 = vst [vmem:[#allocation2 + $0x128] sm:$0xff] 0.0
          %601 = vst [vmem:[#allocation2 + $0x130] sm:$0xff] 0.0
          %602 = vst [vmem:[#allocation2 + $0x138] sm:$0xff] 0.0
          %603 = vst [vmem:[#allocation2 + $0x140] sm:$0xff] 0.0
          %604 = vst [vmem:[#allocation2 + $0x148] sm:$0xff] 0.0
          %605 = vst [vmem:[#allocation2 + $0x150] sm:$0xff] 0.0
          %606 = vst [vmem:[#allocation2 + $0x158] sm:$0xff] 0.0
          %607 = vst [vmem:[#allocation2 + $0x160] sm:$0xff] 0.0
          %608 = vst [vmem:[#allocation2 + $0x168] sm:$0xff] 0.0
          %609 = vst [vmem:[#allocation2 + $0x170] sm:$0xff] 0.0
          %610 = vst [vmem:[#allocation2 + $0x178] sm:$0xff] 0.0
          %611 = vst [vmem:[#allocation2 + $0x180] sm:$0xff] 0.0
          %612 = vst [vmem:[#allocation2 + $0x188] sm:$0xff] 0.0
          %613 = vst [vmem:[#allocation2 + $0x190] sm:$0xff] 0.0
          %614 = vst [vmem:[#allocation2 + $0x198] sm:$0xff] 0.0
          %615 = vst [vmem:[#allocation2 + $0x1a0] sm:$0xff] 0.0
          %616 = vst [vmem:[#allocation2 + $0x1a8] sm:$0xff] 0.0
          %617 = vst [vmem:[#allocation2 + $0x1b0] sm:$0xff] 0.0
          %618 = vst [vmem:[#allocation2 + $0x1b8] sm:$0xff] 0.0
          %619 = vst [vmem:[#allocation2 + $0x1c0] sm:$0xff] 0.0
          %620 = vst [vmem:[#allocation2 + $0x1c8] sm:$0xff] 0.0
          %621 = vst [vmem:[#allocation2 + $0x1d0] sm:$0xff] 0.0
          %622 = vst [vmem:[#allocation2 + $0x1d8] sm:$0xff] 0.0
          %623 = vst [vmem:[#allocation2 + $0x1e0] sm:$0xff] 0.0
          %624 = vst [vmem:[#allocation2 + $0x1e8] sm:$0xff] 0.0
          %625 = vst [vmem:[#allocation2 + $0x1f0] sm:$0xff] 0.0
          %626 = vst [vmem:[#allocation2 + $0x1f8] sm:$0xff] 0.0
        $region78: #{discriminator_forward.5} parent=69 // pred_fallthru
          _
        %v627 = vld [vmem:[#allocation2] sm:$0xff]
        %v628 = vld [vmem:[#allocation2 + $0x8] sm:$0xff]
        %v629 = vld [vmem:[#allocation2 + $0x10] sm:$0xff]
        %v630 = vld [vmem:[#allocation2 + $0x18] sm:$0xff]
        %v631 = vld [vmem:[#allocation2 + $0x20] sm:$0xff]
        %v632 = vld [vmem:[#allocation2 + $0x28] sm:$0xff]
        %v633 = vld [vmem:[#allocation2 + $0x30] sm:$0xff]
        %v634 = vld [vmem:[#allocation2 + $0x38] sm:$0xff]
        %v635 = vld [vmem:[#allocation2 + $0x40] sm:$0xff]
        %v636 = vld [vmem:[#allocation2 + $0x48] sm:$0xff]
        %v637 = vld [vmem:[#allocation2 + $0x50] sm:$0xff]
        %v638 = vld [vmem:[#allocation2 + $0x58] sm:$0xff]
        %v639 = vld [vmem:[#allocation2 + $0x60] sm:$0xff]
        %v640 = vld [vmem:[#allocation2 + $0x68] sm:$0xff]
        %v641 = vld [vmem:[#allocation2 + $0x70] sm:$0xff]
        %v642 = vld [vmem:[#allocation2 + $0x78] sm:$0xff]
        %v643 = vld [vmem:[#allocation2 + $0x80] sm:$0xff]
        %v644 = vld [vmem:[#allocation2 + $0x88] sm:$0xff]
        %v645 = vld [vmem:[#allocation2 + $0x90] sm:$0xff]
        %v646 = vld [vmem:[#allocation2 + $0x98] sm:$0xff]
        %v647 = vld [vmem:[#allocation2 + $0xa0] sm:$0xff]
        %v648 = vld [vmem:[#allocation2 + $0xa8] sm:$0xff]
        %v649 = vld [vmem:[#allocation2 + $0xb0] sm:$0xff]
        %v650 = vld [vmem:[#allocation2 + $0xb8] sm:$0xff]
        %v651 = vld [vmem:[#allocation2 + $0xc0] sm:$0xff]
        %v652 = vld [vmem:[#allocation2 + $0xc8] sm:$0xff]
        %v653 = vld [vmem:[#allocation2 + $0xd0] sm:$0xff]
        %v654 = vld [vmem:[#allocation2 + $0xd8] sm:$0xff]
        %v655 = vld [vmem:[#allocation2 + $0xe0] sm:$0xff]
        %v656 = vld [vmem:[#allocation2 + $0xe8] sm:$0xff]
        %v657 = vld [vmem:[#allocation2 + $0xf0] sm:$0xff]
        %v658 = vld [vmem:[#allocation2 + $0xf8] sm:$0xff]
        %v659 = vld [vmem:[#allocation2 + $0x100] sm:$0xff]
        %v660 = vld [vmem:[#allocation2 + $0x108] sm:$0xff]
        %v661 = vld [vmem:[#allocation2 + $0x110] sm:$0xff]
        %v662 = vld [vmem:[#allocation2 + $0x118] sm:$0xff]
        %v663 = vld [vmem:[#allocation2 + $0x120] sm:$0xff]
        %v664 = vld [vmem:[#allocation2 + $0x128] sm:$0xff]
        %v665 = vld [vmem:[#allocation2 + $0x130] sm:$0xff]
        %v666 = vld [vmem:[#allocation2 + $0x138] sm:$0xff]
        %v667 = vld [vmem:[#allocation2 + $0x140] sm:$0xff]
        %v668 = vld [vmem:[#allocation2 + $0x148] sm:$0xff]
        %v669 = vld [vmem:[#allocation2 + $0x150] sm:$0xff]
        %v670 = vld [vmem:[#allocation2 + $0x158] sm:$0xff]
        %v671 = vld [vmem:[#allocation2 + $0x160] sm:$0xff]
        %v672 = vld [vmem:[#allocation2 + $0x168] sm:$0xff]
        %v673 = vld [vmem:[#allocation2 + $0x170] sm:$0xff]
        %v674 = vld [vmem:[#allocation2 + $0x178] sm:$0xff]
        %v675 = vld [vmem:[#allocation2 + $0x180] sm:$0xff]
        %v676 = vld [vmem:[#allocation2 + $0x188] sm:$0xff]
        %v677 = vld [vmem:[#allocation2 + $0x190] sm:$0xff]
        %v678 = vld [vmem:[#allocation2 + $0x198] sm:$0xff]
        %v679 = vld [vmem:[#allocation2 + $0x1a0] sm:$0xff]
        %v680 = vld [vmem:[#allocation2 + $0x1a8] sm:$0xff]
        %v681 = vld [vmem:[#allocation2 + $0x1b0] sm:$0xff]
        %v682 = vld [vmem:[#allocation2 + $0x1b8] sm:$0xff]
        %v683 = vld [vmem:[#allocation2 + $0x1c0] sm:$0xff]
        %v684 = vld [vmem:[#allocation2 + $0x1c8] sm:$0xff]
        %v685 = vld [vmem:[#allocation2 + $0x1d0] sm:$0xff]
        %v686 = vld [vmem:[#allocation2 + $0x1d8] sm:$0xff]
        %v687 = vld [vmem:[#allocation2 + $0x1e0] sm:$0xff]
        %v688 = vld [vmem:[#allocation2 + $0x1e8] sm:$0xff]
        %v689 = vld [vmem:[#allocation2 + $0x1f0] sm:$0xff]
        %v690 = vld [vmem:[#allocation2 + $0x1f8] sm:$0xff]
        %v691 = vld [vmem:[%s502] sm:$0xff]
        %v692 = vld [vmem:[%s502 + $0x8] sm:$0xff]
        %v693 = vld [vmem:[%s502 + $0x10] sm:$0xff]
        %v694 = vld [vmem:[%s502 + $0x18] sm:$0xff]
        %v695 = vld [vmem:[%s502 + $0x20] sm:$0xff]
        %v696 = vld [vmem:[%s502 + $0x28] sm:$0xff]
        %v697 = vld [vmem:[%s502 + $0x30] sm:$0xff]
        %v698 = vld [vmem:[%s502 + $0x38] sm:$0xff]
        %v699 = vld [vmem:[%s502 + $0x40] sm:$0xff]
        %v700 = vld [vmem:[%s502 + $0x48] sm:$0xff]
        %v701 = vld [vmem:[%s502 + $0x50] sm:$0xff]
        %v702 = vld [vmem:[%s502 + $0x58] sm:$0xff]
        %v703 = vld [vmem:[%s502 + $0x60] sm:$0xff]
        %v704 = vld [vmem:[%s502 + $0x68] sm:$0xff]
        %v705 = vld [vmem:[%s502 + $0x70] sm:$0xff]
        %v706 = vld [vmem:[%s502 + $0x78] sm:$0xff]
        %v707 = vld [vmem:[%s502 + $0x80] sm:$0xff]
        %v708 = vld [vmem:[%s502 + $0x88] sm:$0xff]
        %v709 = vld [vmem:[%s502 + $0x90] sm:$0xff]
        %v710 = vld [vmem:[%s502 + $0x98] sm:$0xff]
        %v711 = vld [vmem:[%s502 + $0xa0] sm:$0xff]
        %v712 = vld [vmem:[%s502 + $0xa8] sm:$0xff]
        %v713 = vld [vmem:[%s502 + $0xb0] sm:$0xff]
        %v714 = vld [vmem:[%s502 + $0xb8] sm:$0xff]
        %v715 = vld [vmem:[%s502 + $0xc0] sm:$0xff]
        %v716 = vld [vmem:[%s502 + $0xc8] sm:$0xff]
        %v717 = vld [vmem:[%s502 + $0xd0] sm:$0xff]
        %v718 = vld [vmem:[%s502 + $0xd8] sm:$0xff]
        %v719 = vld [vmem:[%s502 + $0xe0] sm:$0xff]
        %v720 = vld [vmem:[%s502 + $0xe8] sm:$0xff]
        %v721 = vld [vmem:[%s502 + $0xf0] sm:$0xff]
        %v722 = vld [vmem:[%s502 + $0xf8] sm:$0xff]
        %v723 = vld [vmem:[%s502 + $0x100] sm:$0xff]
        %v724 = vld [vmem:[%s502 + $0x108] sm:$0xff]
        %v725 = vld [vmem:[%s502 + $0x110] sm:$0xff]
        %v726 = vld [vmem:[%s502 + $0x118] sm:$0xff]
        %v727 = vld [vmem:[%s502 + $0x120] sm:$0xff]
        %v728 = vld [vmem:[%s502 + $0x128] sm:$0xff]
        %v729 = vld [vmem:[%s502 + $0x130] sm:$0xff]
        %v730 = vld [vmem:[%s502 + $0x138] sm:$0xff]
        %v731 = vld [vmem:[%s502 + $0x140] sm:$0xff]
        %v732 = vld [vmem:[%s502 + $0x148] sm:$0xff]
        %v733 = vld [vmem:[%s502 + $0x150] sm:$0xff]
        %v734 = vld [vmem:[%s502 + $0x158] sm:$0xff]
        %v735 = vld [vmem:[%s502 + $0x160] sm:$0xff]
        %v736 = vld [vmem:[%s502 + $0x168] sm:$0xff]
        %v737 = vld [vmem:[%s502 + $0x170] sm:$0xff]
        %v738 = vld [vmem:[%s502 + $0x178] sm:$0xff]
        %v739 = vld [vmem:[%s502 + $0x180] sm:$0xff]
        %v740 = vld [vmem:[%s502 + $0x188] sm:$0xff]
        %v741 = vld [vmem:[%s502 + $0x190] sm:$0xff]
        %v742 = vld [vmem:[%s502 + $0x198] sm:$0xff]
        %v743 = vld [vmem:[%s502 + $0x1a0] sm:$0xff]
        %v744 = vld [vmem:[%s502 + $0x1a8] sm:$0xff]
        %v745 = vld [vmem:[%s502 + $0x1b0] sm:$0xff]
        %v746 = vld [vmem:[%s502 + $0x1b8] sm:$0xff]
        %v747 = vld [vmem:[%s502 + $0x1c0] sm:$0xff]
        %v748 = vld [vmem:[%s502 + $0x1c8] sm:$0xff]
        %v749 = vld [vmem:[%s502 + $0x1d0] sm:$0xff]
        %v750 = vld [vmem:[%s502 + $0x1d8] sm:$0xff]
        %v751 = vld [vmem:[%s502 + $0x1e0] sm:$0xff]
        %v752 = vld [vmem:[%s502 + $0x1e8] sm:$0xff]
        %v753 = vld [vmem:[%s502 + $0x1f0] sm:$0xff]
        %v754 = vld [vmem:[%s502 + $0x1f8] sm:$0xff]
        %v755 = vld [vmem:[%s546] sm:$0xf]
        %v756 = vld [vmem:[%s546 + $0x4] sm:$0xf]
        %v757 = vld [vmem:[%s546 + $0x8] sm:$0xf]
        %v758 = vld [vmem:[%s546 + $0xc] sm:$0xf]
        %v759 = vld [vmem:[%s546 + $0x10] sm:$0xf]
        %v760 = vld [vmem:[%s546 + $0x14] sm:$0xf]
        %v761 = vld [vmem:[%s546 + $0x18] sm:$0xf]
        %v762 = vld [vmem:[%s546 + $0x1c] sm:$0xf]
        %v763 = vld [vmem:[%s546 + $0x20] sm:$0xf]
        %v764 = vld [vmem:[%s546 + $0x24] sm:$0xf]
        %v765 = vld [vmem:[%s546 + $0x28] sm:$0xf]
        %v766 = vld [vmem:[%s546 + $0x2c] sm:$0xf]
        %v767 = vld [vmem:[%s546 + $0x30] sm:$0xf]
        %v768 = vld [vmem:[%s546 + $0x34] sm:$0xf]
        %v769 = vld [vmem:[%s546 + $0x38] sm:$0xf]
        %v770 = vld [vmem:[%s546 + $0x3c] sm:$0xf]
        %v771 = vld [vmem:[%s546 + $0x40] sm:$0xf]
        %v772 = vld [vmem:[%s546 + $0x44] sm:$0xf]
        %v773 = vld [vmem:[%s546 + $0x48] sm:$0xf]
        %v774 = vld [vmem:[%s546 + $0x4c] sm:$0xf]
        %v775 = vld [vmem:[%s546 + $0x50] sm:$0xf]
        %v776 = vld [vmem:[%s546 + $0x54] sm:$0xf]
        %v777 = vld [vmem:[%s546 + $0x58] sm:$0xf]
        %v778 = vld [vmem:[%s546 + $0x5c] sm:$0xf]
        %v779 = vld [vmem:[%s546 + $0x60] sm:$0xf]
        %v780 = vld [vmem:[%s546 + $0x64] sm:$0xf]
        %v781 = vld [vmem:[%s546 + $0x68] sm:$0xf]
        %v782 = vld [vmem:[%s546 + $0x6c] sm:$0xf]
        %v783 = vld [vmem:[%s546 + $0x70] sm:$0xf]
        %v784 = vld [vmem:[%s546 + $0x74] sm:$0xf]
        %v785 = vld [vmem:[%s546 + $0x78] sm:$0xf]
        %v786 = vld [vmem:[%s546 + $0x7c] sm:$0xf]
        %v851 = vunpack.c.l.b16 %v691
        %v852 = vunpack.c.h.b16 %v691
        %v853 = vunpack.c.l.b16 %v692
        %v854 = vunpack.c.h.b16 %v692
        %v855 = vunpack.c.l.b16 %v693
        %v856 = vunpack.c.h.b16 %v693
        %v857 = vunpack.c.l.b16 %v694
        %v858 = vunpack.c.h.b16 %v694
        %v859 = vunpack.c.l.b16 %v695
        %v860 = vunpack.c.h.b16 %v695
        %v861 = vunpack.c.l.b16 %v696
        %v862 = vunpack.c.h.b16 %v696
        %v863 = vunpack.c.l.b16 %v697
        %v864 = vunpack.c.h.b16 %v697
        %v865 = vunpack.c.l.b16 %v698
        %v866 = vunpack.c.h.b16 %v698
        %v867 = vunpack.c.l.b16 %v699
        %v868 = vunpack.c.h.b16 %v699
        %v869 = vunpack.c.l.b16 %v700
        %v870 = vunpack.c.h.b16 %v700
        %v871 = vunpack.c.l.b16 %v701
        %v872 = vunpack.c.h.b16 %v701
        %v873 = vunpack.c.l.b16 %v702
        %v874 = vunpack.c.h.b16 %v702
        %v875 = vunpack.c.l.b16 %v703
        %v876 = vunpack.c.h.b16 %v703
        %v877 = vunpack.c.l.b16 %v704
        %v878 = vunpack.c.h.b16 %v704
        %v879 = vunpack.c.l.b16 %v705
        %v880 = vunpack.c.h.b16 %v705
        %v881 = vunpack.c.l.b16 %v706
        %v882 = vunpack.c.h.b16 %v706
        %v883 = vunpack.c.l.b16 %v707
        %v884 = vunpack.c.h.b16 %v707
        %v885 = vunpack.c.l.b16 %v708
        %v886 = vunpack.c.h.b16 %v708
        %v887 = vunpack.c.l.b16 %v709
        %v888 = vunpack.c.h.b16 %v709
        %v889 = vunpack.c.l.b16 %v710
        %v890 = vunpack.c.h.b16 %v710
        %v891 = vunpack.c.l.b16 %v711
        %v892 = vunpack.c.h.b16 %v711
        %v893 = vunpack.c.l.b16 %v712
        %v894 = vunpack.c.h.b16 %v712
        %v895 = vunpack.c.l.b16 %v713
        %v896 = vunpack.c.h.b16 %v713
        %v897 = vunpack.c.l.b16 %v714
        %v898 = vunpack.c.h.b16 %v714
        %v899 = vunpack.c.l.b16 %v715
        %v900 = vunpack.c.h.b16 %v715
        %v901 = vunpack.c.l.b16 %v716
        %v902 = vunpack.c.h.b16 %v716
        %v903 = vunpack.c.l.b16 %v717
        %v904 = vunpack.c.h.b16 %v717
        %v905 = vunpack.c.l.b16 %v718
        %v906 = vunpack.c.h.b16 %v718
        %v907 = vunpack.c.l.b16 %v719
        %v908 = vunpack.c.h.b16 %v719
        %v909 = vunpack.c.l.b16 %v720
        %v910 = vunpack.c.h.b16 %v720
        %v911 = vunpack.c.l.b16 %v721
        %v912 = vunpack.c.h.b16 %v721
        %v913 = vunpack.c.l.b16 %v722
        %v914 = vunpack.c.h.b16 %v722
        %v915 = vunpack.c.l.b16 %v723
        %v916 = vunpack.c.h.b16 %v723
        %v917 = vunpack.c.l.b16 %v724
        %v918 = vunpack.c.h.b16 %v724
        %v919 = vunpack.c.l.b16 %v725
        %v920 = vunpack.c.h.b16 %v725
        %v921 = vunpack.c.l.b16 %v726
        %v922 = vunpack.c.h.b16 %v726
        %v923 = vunpack.c.l.b16 %v727
        %v924 = vunpack.c.h.b16 %v727
        %v925 = vunpack.c.l.b16 %v728
        %v926 = vunpack.c.h.b16 %v728
        %v927 = vunpack.c.l.b16 %v729
        %v928 = vunpack.c.h.b16 %v729
        %v929 = vunpack.c.l.b16 %v730
        %v930 = vunpack.c.h.b16 %v730
        %v931 = vunpack.c.l.b16 %v731
        %v932 = vunpack.c.h.b16 %v731
        %v933 = vunpack.c.l.b16 %v732
        %v934 = vunpack.c.h.b16 %v732
        %v935 = vunpack.c.l.b16 %v733
        %v936 = vunpack.c.h.b16 %v733
        %v937 = vunpack.c.l.b16 %v734
        %v938 = vunpack.c.h.b16 %v734
        %v939 = vunpack.c.l.b16 %v735
        %v940 = vunpack.c.h.b16 %v735
        %v941 = vunpack.c.l.b16 %v736
        %v942 = vunpack.c.h.b16 %v736
        %v943 = vunpack.c.l.b16 %v737
        %v944 = vunpack.c.h.b16 %v737
        %v945 = vunpack.c.l.b16 %v738
        %v946 = vunpack.c.h.b16 %v738
        %v947 = vunpack.c.l.b16 %v739
        %v948 = vunpack.c.h.b16 %v739
        %v949 = vunpack.c.l.b16 %v740
        %v950 = vunpack.c.h.b16 %v740
        %v951 = vunpack.c.l.b16 %v741
        %v952 = vunpack.c.h.b16 %v741
        %v953 = vunpack.c.l.b16 %v742
        %v954 = vunpack.c.h.b16 %v742
        %v955 = vunpack.c.l.b16 %v743
        %v956 = vunpack.c.h.b16 %v743
        %v957 = vunpack.c.l.b16 %v744
        %v958 = vunpack.c.h.b16 %v744
        %v959 = vunpack.c.l.b16 %v745
        %v960 = vunpack.c.h.b16 %v745
        %v961 = vunpack.c.l.b16 %v746
        %v962 = vunpack.c.h.b16 %v746
        %v963 = vunpack.c.l.b16 %v747
        %v964 = vunpack.c.h.b16 %v747
        %v965 = vunpack.c.l.b16 %v748
        %v966 = vunpack.c.h.b16 %v748
        %v967 = vunpack.c.l.b16 %v749
        %v968 = vunpack.c.h.b16 %v749
        %v969 = vunpack.c.l.b16 %v750
        %v970 = vunpack.c.h.b16 %v750
        %v971 = vunpack.c.l.b16 %v751
        %v972 = vunpack.c.h.b16 %v751
        %v973 = vunpack.c.l.b16 %v752
        %v974 = vunpack.c.h.b16 %v752
        %v975 = vunpack.c.l.b16 %v753
        %v976 = vunpack.c.h.b16 %v753
        %v977 = vunpack.c.l.b16 %v754
        %v978 = vunpack.c.h.b16 %v754
        %v979 = vpack.c.b16 %v853, %v851
        %v980 = vpack.c.b16 %v854, %v852
        %v981 = vpack.c.b16 %v857, %v855
        %v982 = vpack.c.b16 %v858, %v856
        %v983 = vpack.c.b16 %v861, %v859
        %v984 = vpack.c.b16 %v862, %v860
        %v985 = vpack.c.b16 %v865, %v863
        %v986 = vpack.c.b16 %v866, %v864
        %v987 = vpack.c.b16 %v869, %v867
        %v988 = vpack.c.b16 %v870, %v868
        %v989 = vpack.c.b16 %v873, %v871
        %v990 = vpack.c.b16 %v874, %v872
        %v991 = vpack.c.b16 %v877, %v875
        %v992 = vpack.c.b16 %v878, %v876
        %v993 = vpack.c.b16 %v881, %v879
        %v994 = vpack.c.b16 %v882, %v880
        %v995 = vpack.c.b16 %v885, %v883
        %v996 = vpack.c.b16 %v886, %v884
        %v997 = vpack.c.b16 %v889, %v887
        %v998 = vpack.c.b16 %v890, %v888
        %v999 = vpack.c.b16 %v893, %v891
        %v1000 = vpack.c.b16 %v894, %v892
        %v1001 = vpack.c.b16 %v897, %v895
        %v1002 = vpack.c.b16 %v898, %v896
        %v1003 = vpack.c.b16 %v901, %v899
        %v1004 = vpack.c.b16 %v902, %v900
        %v1005 = vpack.c.b16 %v905, %v903
        %v1006 = vpack.c.b16 %v906, %v904
        %v1007 = vpack.c.b16 %v909, %v907
        %v1008 = vpack.c.b16 %v910, %v908
        %v1009 = vpack.c.b16 %v913, %v911
        %v1010 = vpack.c.b16 %v914, %v912
        %v1011 = vpack.c.b16 %v917, %v915
        %v1012 = vpack.c.b16 %v918, %v916
        %v1013 = vpack.c.b16 %v921, %v919
        %v1014 = vpack.c.b16 %v922, %v920
        %v1015 = vpack.c.b16 %v925, %v923
        %v1016 = vpack.c.b16 %v926, %v924
        %v1017 = vpack.c.b16 %v929, %v927
        %v1018 = vpack.c.b16 %v930, %v928
        %v1019 = vpack.c.b16 %v933, %v931
        %v1020 = vpack.c.b16 %v934, %v932
        %v1021 = vpack.c.b16 %v937, %v935
        %v1022 = vpack.c.b16 %v938, %v936
        %v1023 = vpack.c.b16 %v941, %v939
        %v1024 = vpack.c.b16 %v942, %v940
        %v1025 = vpack.c.b16 %v945, %v943
        %v1026 = vpack.c.b16 %v946, %v944
        %v1027 = vpack.c.b16 %v949, %v947
        %v1028 = vpack.c.b16 %v950, %v948
        %v1029 = vpack.c.b16 %v953, %v951
        %v1030 = vpack.c.b16 %v954, %v952
        %v1031 = vpack.c.b16 %v957, %v955
        %v1032 = vpack.c.b16 %v958, %v956
        %v1033 = vpack.c.b16 %v961, %v959
        %v1034 = vpack.c.b16 %v962, %v960
        %v1035 = vpack.c.b16 %v965, %v963
        %v1036 = vpack.c.b16 %v966, %v964
        %v1037 = vpack.c.b16 %v969, %v967
        %v1038 = vpack.c.b16 %v970, %v968
        %v1039 = vpack.c.b16 %v973, %v971
        %v1040 = vpack.c.b16 %v974, %v972
        %v1041 = vpack.c.b16 %v977, %v975
        %v1042 = vpack.c.b16 %v978, %v976
        %v1139 = vunpack.c.l.b16 %v755
        %v1140 = vunpack.c.l.b16 %v756
        %v1141 = vunpack.c.l.b16 %v757
        %v1142 = vunpack.c.l.b16 %v758
        %v1143 = vunpack.c.l.b16 %v759
        %v1144 = vunpack.c.l.b16 %v760
        %v1145 = vunpack.c.l.b16 %v761
        %v1146 = vunpack.c.l.b16 %v762
        %v1147 = vunpack.c.l.b16 %v763
        %v1148 = vunpack.c.l.b16 %v764
        %v1149 = vunpack.c.l.b16 %v765
        %v1150 = vunpack.c.l.b16 %v766
        %v1151 = vunpack.c.l.b16 %v767
        %v1152 = vunpack.c.l.b16 %v768
        %v1153 = vunpack.c.l.b16 %v769
        %v1154 = vunpack.c.l.b16 %v770
        %v1155 = vunpack.c.l.b16 %v771
        %v1156 = vunpack.c.l.b16 %v772
        %v1157 = vunpack.c.l.b16 %v773
        %v1158 = vunpack.c.l.b16 %v774
        %v1159 = vunpack.c.l.b16 %v775
        %v1160 = vunpack.c.l.b16 %v776
        %v1161 = vunpack.c.l.b16 %v777
        %v1162 = vunpack.c.l.b16 %v778
        %v1163 = vunpack.c.l.b16 %v779
        %v1164 = vunpack.c.l.b16 %v780
        %v1165 = vunpack.c.l.b16 %v781
        %v1166 = vunpack.c.l.b16 %v782
        %v1167 = vunpack.c.l.b16 %v783
        %v1168 = vunpack.c.l.b16 %v784
        %v1169 = vunpack.c.l.b16 %v785
        %v1170 = vunpack.c.l.b16 %v786
        %v1171 = vpack.c.b16 %v1140, %v1139
        %v1172 = vpack.c.b16 %v1142, %v1141
        %v1173 = vpack.c.b16 %v1144, %v1143
        %v1174 = vpack.c.b16 %v1146, %v1145
        %v1175 = vpack.c.b16 %v1148, %v1147
        %v1176 = vpack.c.b16 %v1150, %v1149
        %v1177 = vpack.c.b16 %v1152, %v1151
        %v1178 = vpack.c.b16 %v1154, %v1153
        %v1179 = vpack.c.b16 %v1156, %v1155
        %v1180 = vpack.c.b16 %v1158, %v1157
        %v1181 = vpack.c.b16 %v1160, %v1159
        %v1182 = vpack.c.b16 %v1162, %v1161
        %v1183 = vpack.c.b16 %v1164, %v1163
        %v1184 = vpack.c.b16 %v1166, %v1165
        %v1185 = vpack.c.b16 %v1168, %v1167
        %v1186 = vpack.c.b16 %v1170, %v1169
        %1203 = vmatprep.subr.bf16.mxu0 0
        %1204 = vmatpush1.bf16.msra.mxu0 %v1178
        %1205 = vmatprep.subr.bf16.mxu0 0
        %1206 = vmatpush1.bf16.msra.mxu0 %v1177
        %1207 = vmatprep.subr.bf16.mxu0 0
        %1208 = vmatpush1.bf16.msra.mxu0 %v1176
        %1209 = vmatprep.subr.bf16.mxu0 0
        %1210 = vmatpush1.bf16.msra.mxu0 %v1175
        %1211 = vmatprep.subr.bf16.mxu0 0
        %1212 = vmatpush1.bf16.msra.mxu0 %v1174
        %1213 = vmatprep.subr.bf16.mxu0 0
        %1214 = vmatpush1.bf16.msra.mxu0 %v1173
        %1215 = vmatprep.subr.bf16.mxu0 0
        %1216 = vmatpush1.bf16.msra.mxu0 %v1172
        %1217 = vmatprep.subr.bf16.mxu0 0
        %1218 = vmatpush1.bf16.msra.mxu0 %v1171
        %1219 = vmatprep.subr.bf16.mxu0 0
        %1220 = vmatpush2.bf16.msra.mxu0 %v1186
        %1221 = vmatprep.subr.bf16.mxu0 0
        %1222 = vmatpush2.bf16.msra.mxu0 %v1185
        %1223 = vmatprep.subr.bf16.mxu0 0
        %1224 = vmatpush2.bf16.msra.mxu0 %v1184
        %1225 = vmatprep.subr.bf16.mxu0 0
        %1226 = vmatpush2.bf16.msra.mxu0 %v1183
        %1227 = vmatprep.subr.bf16.mxu0 0
        %1228 = vmatpush2.bf16.msra.mxu0 %v1182
        %1229 = vmatprep.subr.bf16.mxu0 0
        %1230 = vmatpush2.bf16.msra.mxu0 %v1181
        %1231 = vmatprep.subr.bf16.mxu0 0
        %1232 = vmatpush2.bf16.msra.mxu0 %v1180
        %1233 = vmatprep.subr.bf16.mxu0 0
        %1234 = vmatpush2.bf16.msra.mxu0 %v1179
        %1235 = vmatprep.mubr.bf16.mxu0 %v980
        %1236 = vmatmul.mubr.bf16.gmra.mxu0 %v979
        %v1237 = vpop.f32.mrf.mxu0
        %v1238 = vadd.f32 0.0, %v1237
        %v1239 = vpop.f32.mrf.mxu0
        %v1240 = vpop.f32.mrf.mxu0
        %v1241 = vadd.f32 0.0, %v1240
        %v1242 = vpop.f32.mrf.mxu0
        %1243 = vmatprep.mubr.bf16.mxu0 %v982
        %1244 = vmatmul.mubr.bf16.gmra.mxu0 %v981
        %v1245 = vpop.f32.mrf.mxu0
        %v1246 = vadd.f32 0.0, %v1245
        %v1247 = vpop.f32.mrf.mxu0
        %v1248 = vpop.f32.mrf.mxu0
        %v1249 = vadd.f32 0.0, %v1248
        %v1250 = vpop.f32.mrf.mxu0
        %1251 = vmatprep.mubr.bf16.mxu0 %v984
        %1252 = vmatmul.mubr.bf16.gmra.mxu0 %v983
        %v1253 = vpop.f32.mrf.mxu0
        %v1254 = vadd.f32 0.0, %v1253
        %v1255 = vpop.f32.mrf.mxu0
        %v1256 = vpop.f32.mrf.mxu0
        %v1257 = vadd.f32 0.0, %v1256
        %v1258 = vpop.f32.mrf.mxu0
        %1259 = vmatprep.mubr.bf16.mxu0 %v986
        %1260 = vmatmul.mubr.bf16.gmra.mxu0 %v985
        %v1261 = vpop.f32.mrf.mxu0
        %v1262 = vadd.f32 0.0, %v1261
        %v1263 = vpop.f32.mrf.mxu0
        %v1264 = vpop.f32.mrf.mxu0
        %v1265 = vadd.f32 0.0, %v1264
        %v1266 = vpop.f32.mrf.mxu0
        %1267 = vmatprep.mubr.bf16.mxu0 %v988
        %1268 = vmatmul.mubr.bf16.gmra.mxu0 %v987
        %v1269 = vpop.f32.mrf.mxu0
        %v1270 = vadd.f32 0.0, %v1269
        %v1271 = vpop.f32.mrf.mxu0
        %v1272 = vpop.f32.mrf.mxu0
        %v1273 = vadd.f32 0.0, %v1272
        %v1274 = vpop.f32.mrf.mxu0
        %1275 = vmatprep.mubr.bf16.mxu0 %v990
        %1276 = vmatmul.mubr.bf16.gmra.mxu0 %v989
        %v1277 = vpop.f32.mrf.mxu0
        %v1278 = vadd.f32 0.0, %v1277
        %v1279 = vpop.f32.mrf.mxu0
        %v1280 = vpop.f32.mrf.mxu0
        %v1281 = vadd.f32 0.0, %v1280
        %v1282 = vpop.f32.mrf.mxu0
        %1283 = vmatprep.mubr.bf16.mxu0 %v992
        %1284 = vmatmul.mubr.bf16.gmra.mxu0 %v991
        %v1285 = vpop.f32.mrf.mxu0
        %v1286 = vadd.f32 0.0, %v1285
        %v1287 = vpop.f32.mrf.mxu0
        %v1288 = vpop.f32.mrf.mxu0
        %v1289 = vadd.f32 0.0, %v1288
        %v1290 = vpop.f32.mrf.mxu0
        %1291 = vmatprep.mubr.bf16.mxu0 %v994
        %1292 = vmatmul.mubr.bf16.gmra.mxu0 %v993
        %v1293 = vpop.f32.mrf.mxu0
        %v1294 = vadd.f32 0.0, %v1293
        %v1295 = vpop.f32.mrf.mxu0
        %v1296 = vpop.f32.mrf.mxu0
        %v1297 = vadd.f32 0.0, %v1296
        %v1298 = vpop.f32.mrf.mxu0
        %1299 = vmatprep.mubr.bf16.mxu0 %v996
        %1300 = vmatmul.mubr.bf16.gmra.mxu0 %v995
        %v1301 = vpop.f32.mrf.mxu0
        %v1302 = vadd.f32 0.0, %v1301
        %v1303 = vpop.f32.mrf.mxu0
        %v1304 = vpop.f32.mrf.mxu0
        %v1305 = vadd.f32 0.0, %v1304
        %v1306 = vpop.f32.mrf.mxu0
        %1307 = vmatprep.mubr.bf16.mxu0 %v998
        %1308 = vmatmul.mubr.bf16.gmra.mxu0 %v997
        %v1309 = vpop.f32.mrf.mxu0
        %v1310 = vadd.f32 0.0, %v1309
        %v1311 = vpop.f32.mrf.mxu0
        %v1312 = vpop.f32.mrf.mxu0
        %v1313 = vadd.f32 0.0, %v1312
        %v1314 = vpop.f32.mrf.mxu0
        %1315 = vmatprep.mubr.bf16.mxu0 %v1000
        %1316 = vmatmul.mubr.bf16.gmra.mxu0 %v999
        %v1317 = vpop.f32.mrf.mxu0
        %v1318 = vadd.f32 0.0, %v1317
        %v1319 = vpop.f32.mrf.mxu0
        %v1320 = vpop.f32.mrf.mxu0
        %v1321 = vadd.f32 0.0, %v1320
        %v1322 = vpop.f32.mrf.mxu0
        %1323 = vmatprep.mubr.bf16.mxu0 %v1002
        %1324 = vmatmul.mubr.bf16.gmra.mxu0 %v1001
        %v1325 = vpop.f32.mrf.mxu0
        %v1326 = vadd.f32 0.0, %v1325
        %v1327 = vpop.f32.mrf.mxu0
        %v1328 = vpop.f32.mrf.mxu0
        %v1329 = vadd.f32 0.0, %v1328
        %v1330 = vpop.f32.mrf.mxu0
        %1331 = vmatprep.mubr.bf16.mxu0 %v1004
        %1332 = vmatmul.mubr.bf16.gmra.mxu0 %v1003
        %v1333 = vpop.f32.mrf.mxu0
        %v1334 = vadd.f32 0.0, %v1333
        %v1335 = vpop.f32.mrf.mxu0
        %v1336 = vpop.f32.mrf.mxu0
        %v1337 = vadd.f32 0.0, %v1336
        %v1338 = vpop.f32.mrf.mxu0
        %1339 = vmatprep.mubr.bf16.mxu0 %v1006
        %1340 = vmatmul.mubr.bf16.gmra.mxu0 %v1005
        %v1341 = vpop.f32.mrf.mxu0
        %v1342 = vadd.f32 0.0, %v1341
        %v1343 = vpop.f32.mrf.mxu0
        %v1344 = vpop.f32.mrf.mxu0
        %v1345 = vadd.f32 0.0, %v1344
        %v1346 = vpop.f32.mrf.mxu0
        %1347 = vmatprep.mubr.bf16.mxu0 %v1008
        %1348 = vmatmul.mubr.bf16.gmra.mxu0 %v1007
        %v1349 = vpop.f32.mrf.mxu0
        %v1350 = vadd.f32 0.0, %v1349
        %v1351 = vpop.f32.mrf.mxu0
        %v1352 = vpop.f32.mrf.mxu0
        %v1353 = vadd.f32 0.0, %v1352
        %v1354 = vpop.f32.mrf.mxu0
        %1355 = vmatprep.mubr.bf16.mxu0 %v1010
        %1356 = vmatmul.mubr.bf16.gmra.mxu0 %v1009
        %v1357 = vpop.f32.mrf.mxu0
        %v1358 = vadd.f32 0.0, %v1357
        %v1359 = vpop.f32.mrf.mxu0
        %v1360 = vpop.f32.mrf.mxu0
        %v1361 = vadd.f32 0.0, %v1360
        %v1362 = vpop.f32.mrf.mxu0
        %1363 = vmatprep.mubr.bf16.mxu0 %v1012
        %1364 = vmatmul.mubr.bf16.gmra.mxu0 %v1011
        %v1365 = vpop.f32.mrf.mxu0
        %v1366 = vadd.f32 0.0, %v1365
        %v1367 = vpop.f32.mrf.mxu0
        %v1368 = vpop.f32.mrf.mxu0
        %v1369 = vadd.f32 0.0, %v1368
        %v1370 = vpop.f32.mrf.mxu0
        %1371 = vmatprep.mubr.bf16.mxu0 %v1014
        %1372 = vmatmul.mubr.bf16.gmra.mxu0 %v1013
        %v1373 = vpop.f32.mrf.mxu0
        %v1374 = vadd.f32 0.0, %v1373
        %v1375 = vpop.f32.mrf.mxu0
        %v1376 = vpop.f32.mrf.mxu0
        %v1377 = vadd.f32 0.0, %v1376
        %v1378 = vpop.f32.mrf.mxu0
        %1379 = vmatprep.mubr.bf16.mxu0 %v1016
        %1380 = vmatmul.mubr.bf16.gmra.mxu0 %v1015
        %v1381 = vpop.f32.mrf.mxu0
        %v1382 = vadd.f32 0.0, %v1381
        %v1383 = vpop.f32.mrf.mxu0
        %v1384 = vpop.f32.mrf.mxu0
        %v1385 = vadd.f32 0.0, %v1384
        %v1386 = vpop.f32.mrf.mxu0
        %1387 = vmatprep.mubr.bf16.mxu0 %v1018
        %1388 = vmatmul.mubr.bf16.gmra.mxu0 %v1017
        %v1389 = vpop.f32.mrf.mxu0
        %v1390 = vadd.f32 0.0, %v1389
        %v1391 = vpop.f32.mrf.mxu0
        %v1392 = vpop.f32.mrf.mxu0
        %v1393 = vadd.f32 0.0, %v1392
        %v1394 = vpop.f32.mrf.mxu0
        %1395 = vmatprep.mubr.bf16.mxu0 %v1020
        %1396 = vmatmul.mubr.bf16.gmra.mxu0 %v1019
        %v1397 = vpop.f32.mrf.mxu0
        %v1398 = vadd.f32 0.0, %v1397
        %v1399 = vpop.f32.mrf.mxu0
        %v1400 = vpop.f32.mrf.mxu0
        %v1401 = vadd.f32 0.0, %v1400
        %v1402 = vpop.f32.mrf.mxu0
        %1403 = vmatprep.mubr.bf16.mxu0 %v1022
        %1404 = vmatmul.mubr.bf16.gmra.mxu0 %v1021
        %v1405 = vpop.f32.mrf.mxu0
        %v1406 = vadd.f32 0.0, %v1405
        %v1407 = vpop.f32.mrf.mxu0
        %v1408 = vpop.f32.mrf.mxu0
        %v1409 = vadd.f32 0.0, %v1408
        %v1410 = vpop.f32.mrf.mxu0
        %1411 = vmatprep.mubr.bf16.mxu0 %v1024
        %1412 = vmatmul.mubr.bf16.gmra.mxu0 %v1023
        %v1413 = vpop.f32.mrf.mxu0
        %v1414 = vadd.f32 0.0, %v1413
        %v1415 = vpop.f32.mrf.mxu0
        %v1416 = vpop.f32.mrf.mxu0
        %v1417 = vadd.f32 0.0, %v1416
        %v1418 = vpop.f32.mrf.mxu0
        %1419 = vmatprep.mubr.bf16.mxu0 %v1026
        %1420 = vmatmul.mubr.bf16.gmra.mxu0 %v1025
        %v1421 = vpop.f32.mrf.mxu0
        %v1422 = vadd.f32 0.0, %v1421
        %v1423 = vpop.f32.mrf.mxu0
        %v1424 = vpop.f32.mrf.mxu0
        %v1425 = vadd.f32 0.0, %v1424
        %v1426 = vpop.f32.mrf.mxu0
        %1427 = vmatprep.mubr.bf16.mxu0 %v1028
        %1428 = vmatmul.mubr.bf16.gmra.mxu0 %v1027
        %v1429 = vpop.f32.mrf.mxu0
        %v1430 = vadd.f32 0.0, %v1429
        %v1431 = vpop.f32.mrf.mxu0
        %v1432 = vpop.f32.mrf.mxu0
        %v1433 = vadd.f32 0.0, %v1432
        %v1434 = vpop.f32.mrf.mxu0
        %1435 = vmatprep.mubr.bf16.mxu0 %v1030
        %1436 = vmatmul.mubr.bf16.gmra.mxu0 %v1029
        %v1437 = vpop.f32.mrf.mxu0
        %v1438 = vadd.f32 0.0, %v1437
        %v1439 = vpop.f32.mrf.mxu0
        %v1440 = vpop.f32.mrf.mxu0
        %v1441 = vadd.f32 0.0, %v1440
        %v1442 = vpop.f32.mrf.mxu0
        %1443 = vmatprep.mubr.bf16.mxu0 %v1032
        %1444 = vmatmul.mubr.bf16.gmra.mxu0 %v1031
        %v1445 = vpop.f32.mrf.mxu0
        %v1446 = vadd.f32 0.0, %v1445
        %v1447 = vpop.f32.mrf.mxu0
        %v1448 = vpop.f32.mrf.mxu0
        %v1449 = vadd.f32 0.0, %v1448
        %v1450 = vpop.f32.mrf.mxu0
        %1451 = vmatprep.mubr.bf16.mxu0 %v1034
        %1452 = vmatmul.mubr.bf16.gmra.mxu0 %v1033
        %v1453 = vpop.f32.mrf.mxu0
        %v1454 = vadd.f32 0.0, %v1453
        %v1455 = vpop.f32.mrf.mxu0
        %v1456 = vpop.f32.mrf.mxu0
        %v1457 = vadd.f32 0.0, %v1456
        %v1458 = vpop.f32.mrf.mxu0
        %1459 = vmatprep.mubr.bf16.mxu0 %v1036
        %1460 = vmatmul.mubr.bf16.gmra.mxu0 %v1035
        %v1461 = vpop.f32.mrf.mxu0
        %v1462 = vadd.f32 0.0, %v1461
        %v1463 = vpop.f32.mrf.mxu0
        %v1464 = vpop.f32.mrf.mxu0
        %v1465 = vadd.f32 0.0, %v1464
        %v1466 = vpop.f32.mrf.mxu0
        %1467 = vmatprep.mubr.bf16.mxu0 %v1038
        %1468 = vmatmul.mubr.bf16.gmra.mxu0 %v1037
        %v1469 = vpop.f32.mrf.mxu0
        %v1470 = vadd.f32 0.0, %v1469
        %v1471 = vpop.f32.mrf.mxu0
        %v1472 = vpop.f32.mrf.mxu0
        %v1473 = vadd.f32 0.0, %v1472
        %v1474 = vpop.f32.mrf.mxu0
        %1475 = vmatprep.mubr.bf16.mxu0 %v1040
        %1476 = vmatmul.mubr.bf16.gmra.mxu0 %v1039
        %v1477 = vpop.f32.mrf.mxu0
        %v1478 = vadd.f32 0.0, %v1477
        %v1479 = vpop.f32.mrf.mxu0
        %v1480 = vpop.f32.mrf.mxu0
        %v1481 = vadd.f32 0.0, %v1480
        %v1482 = vpop.f32.mrf.mxu0
        %1483 = vmatprep.mubr.bf16.mxu0 %v1042
        %1484 = vmatmul.mubr.bf16.gmra.mxu0 %v1041
        %v1485 = vpop.f32.mrf.mxu0
        %v1486 = vadd.f32 0.0, %v1485
        %v1487 = vpop.f32.mrf.mxu0
        %v1488 = vpop.f32.mrf.mxu0
        %v1489 = vadd.f32 0.0, %v1488
        %v1490 = vpop.f32.mrf.mxu0
        %1491 = vdwg.mxu0
        %v1492 = vadd.f32 %v627, %v1238
        %v1493 = vadd.f32 %v628, %v1241
        %v1494 = vadd.f32 %v629, %v1246
        %v1495 = vadd.f32 %v630, %v1249
        %v1496 = vadd.f32 %v631, %v1254
        %v1497 = vadd.f32 %v632, %v1257
        %v1498 = vadd.f32 %v633, %v1262
        %v1499 = vadd.f32 %v634, %v1265
        %v1500 = vadd.f32 %v635, %v1270
        %v1501 = vadd.f32 %v636, %v1273
        %v1502 = vadd.f32 %v637, %v1278
        %v1503 = vadd.f32 %v638, %v1281
        %v1504 = vadd.f32 %v639, %v1286
        %v1505 = vadd.f32 %v640, %v1289
        %v1506 = vadd.f32 %v641, %v1294
        %v1507 = vadd.f32 %v642, %v1297
        %v1508 = vadd.f32 %v643, %v1302
        %v1509 = vadd.f32 %v644, %v1305
        %v1510 = vadd.f32 %v645, %v1310
        %v1511 = vadd.f32 %v646, %v1313
        %v1512 = vadd.f32 %v647, %v1318
        %v1513 = vadd.f32 %v648, %v1321
        %v1514 = vadd.f32 %v649, %v1326
        %v1515 = vadd.f32 %v650, %v1329
        %v1516 = vadd.f32 %v651, %v1334
        %v1517 = vadd.f32 %v652, %v1337
        %v1518 = vadd.f32 %v653, %v1342
        %v1519 = vadd.f32 %v654, %v1345
        %v1520 = vadd.f32 %v655, %v1350
        %v1521 = vadd.f32 %v656, %v1353
        %v1522 = vadd.f32 %v657, %v1358
        %v1523 = vadd.f32 %v658, %v1361
        %v1524 = vadd.f32 %v659, %v1366
        %v1525 = vadd.f32 %v660, %v1369
        %v1526 = vadd.f32 %v661, %v1374
        %v1527 = vadd.f32 %v662, %v1377
        %v1528 = vadd.f32 %v663, %v1382
        %v1529 = vadd.f32 %v664, %v1385
        %v1530 = vadd.f32 %v665, %v1390
        %v1531 = vadd.f32 %v666, %v1393
        %v1532 = vadd.f32 %v667, %v1398
        %v1533 = vadd.f32 %v668, %v1401
        %v1534 = vadd.f32 %v669, %v1406
        %v1535 = vadd.f32 %v670, %v1409
        %v1536 = vadd.f32 %v671, %v1414
        %v1537 = vadd.f32 %v672, %v1417
        %v1538 = vadd.f32 %v673, %v1422
        %v1539 = vadd.f32 %v674, %v1425
        %v1540 = vadd.f32 %v675, %v1430
        %v1541 = vadd.f32 %v676, %v1433
        %v1542 = vadd.f32 %v677, %v1438
        %v1543 = vadd.f32 %v678, %v1441
        %v1544 = vadd.f32 %v679, %v1446
        %v1545 = vadd.f32 %v680, %v1449
        %v1546 = vadd.f32 %v681, %v1454
        %v1547 = vadd.f32 %v682, %v1457
        %v1548 = vadd.f32 %v683, %v1462
        %v1549 = vadd.f32 %v684, %v1465
        %v1550 = vadd.f32 %v685, %v1470
        %v1551 = vadd.f32 %v686, %v1473
        %v1552 = vadd.f32 %v687, %v1478
        %v1553 = vadd.f32 %v688, %v1481
        %v1554 = vadd.f32 %v689, %v1486
        %v1555 = vadd.f32 %v690, %v1489
        %1556 = vst [vmem:[#allocation2] sm:$0xff] %v1492
        %1557 = vst [vmem:[#allocation2 + $0x8] sm:$0xff] %v1493
        %1558 = vst [vmem:[#allocation2 + $0x10] sm:$0xff] %v1494
        %1559 = vst [vmem:[#allocation2 + $0x18] sm:$0xff] %v1495
        %1560 = vst [vmem:[#allocation2 + $0x20] sm:$0xff] %v1496
        %1561 = vst [vmem:[#allocation2 + $0x28] sm:$0xff] %v1497
        %1562 = vst [vmem:[#allocation2 + $0x30] sm:$0xff] %v1498
        %1563 = vst [vmem:[#allocation2 + $0x38] sm:$0xff] %v1499
        %1564 = vst [vmem:[#allocation2 + $0x40] sm:$0xff] %v1500
        %1565 = vst [vmem:[#allocation2 + $0x48] sm:$0xff] %v1501
        %1566 = vst [vmem:[#allocation2 + $0x50] sm:$0xff] %v1502
        %1567 = vst [vmem:[#allocation2 + $0x58] sm:$0xff] %v1503
        %1568 = vst [vmem:[#allocation2 + $0x60] sm:$0xff] %v1504
        %1569 = vst [vmem:[#allocation2 + $0x68] sm:$0xff] %v1505
        %1570 = vst [vmem:[#allocation2 + $0x70] sm:$0xff] %v1506
        %1571 = vst [vmem:[#allocation2 + $0x78] sm:$0xff] %v1507
        %1572 = vst [vmem:[#allocation2 + $0x80] sm:$0xff] %v1508
        %1573 = vst [vmem:[#allocation2 + $0x88] sm:$0xff] %v1509
        %1574 = vst [vmem:[#allocation2 + $0x90] sm:$0xff] %v1510
        %1575 = vst [vmem:[#allocation2 + $0x98] sm:$0xff] %v1511
        %1576 = vst [vmem:[#allocation2 + $0xa0] sm:$0xff] %v1512
        %1577 = vst [vmem:[#allocation2 + $0xa8] sm:$0xff] %v1513
        %1578 = vst [vmem:[#allocation2 + $0xb0] sm:$0xff] %v1514
        %1579 = vst [vmem:[#allocation2 + $0xb8] sm:$0xff] %v1515
        %1580 = vst [vmem:[#allocation2 + $0xc0] sm:$0xff] %v1516
        %1581 = vst [vmem:[#allocation2 + $0xc8] sm:$0xff] %v1517
        %1582 = vst [vmem:[#allocation2 + $0xd0] sm:$0xff] %v1518
        %1583 = vst [vmem:[#allocation2 + $0xd8] sm:$0xff] %v1519
        %1584 = vst [vmem:[#allocation2 + $0xe0] sm:$0xff] %v1520
        %1585 = vst [vmem:[#allocation2 + $0xe8] sm:$0xff] %v1521
        %1586 = vst [vmem:[#allocation2 + $0xf0] sm:$0xff] %v1522
        %1587 = vst [vmem:[#allocation2 + $0xf8] sm:$0xff] %v1523
        %1588 = vst [vmem:[#allocation2 + $0x100] sm:$0xff] %v1524
        %1589 = vst [vmem:[#allocation2 + $0x108] sm:$0xff] %v1525
        %1590 = vst [vmem:[#allocation2 + $0x110] sm:$0xff] %v1526
        %1591 = vst [vmem:[#allocation2 + $0x118] sm:$0xff] %v1527
        %1592 = vst [vmem:[#allocation2 + $0x120] sm:$0xff] %v1528
        %1593 = vst [vmem:[#allocation2 + $0x128] sm:$0xff] %v1529
        %1594 = vst [vmem:[#allocation2 + $0x130] sm:$0xff] %v1530
        %1595 = vst [vmem:[#allocation2 + $0x138] sm:$0xff] %v1531
        %1596 = vst [vmem:[#allocation2 + $0x140] sm:$0xff] %v1532
        %1597 = vst [vmem:[#allocation2 + $0x148] sm:$0xff] %v1533
        %1598 = vst [vmem:[#allocation2 + $0x150] sm:$0xff] %v1534
        %1599 = vst [vmem:[#allocation2 + $0x158] sm:$0xff] %v1535
        %1600 = vst [vmem:[#allocation2 + $0x160] sm:$0xff] %v1536
        %1601 = vst [vmem:[#allocation2 + $0x168] sm:$0xff] %v1537
        %1602 = vst [vmem:[#allocation2 + $0x170] sm:$0xff] %v1538
        %1603 = vst [vmem:[#allocation2 + $0x178] sm:$0xff] %v1539
        %1604 = vst [vmem:[#allocation2 + $0x180] sm:$0xff] %v1540
        %1605 = vst [vmem:[#allocation2 + $0x188] sm:$0xff] %v1541
        %1606 = vst [vmem:[#allocation2 + $0x190] sm:$0xff] %v1542
        %1607 = vst [vmem:[#allocation2 + $0x198] sm:$0xff] %v1543
        %1608 = vst [vmem:[#allocation2 + $0x1a0] sm:$0xff] %v1544
        %1609 = vst [vmem:[#allocation2 + $0x1a8] sm:$0xff] %v1545
        %1610 = vst [vmem:[#allocation2 + $0x1b0] sm:$0xff] %v1546
        %1611 = vst [vmem:[#allocation2 + $0x1b8] sm:$0xff] %v1547
        %1612 = vst [vmem:[#allocation2 + $0x1c0] sm:$0xff] %v1548
        %1613 = vst [vmem:[#allocation2 + $0x1c8] sm:$0xff] %v1549
        %1614 = vst [vmem:[#allocation2 + $0x1d0] sm:$0xff] %v1550
        %1615 = vst [vmem:[#allocation2 + $0x1d8] sm:$0xff] %v1551
        %1616 = vst [vmem:[#allocation2 + $0x1e0] sm:$0xff] %v1552
        %1617 = vst [vmem:[#allocation2 + $0x1e8] sm:$0xff] %v1553
        %1618 = vst [vmem:[#allocation2 + $0x1f0] sm:$0xff] %v1554
        %1619 = vst [vmem:[#allocation2 + $0x1f8] sm:$0xff] %v1555
        %p1620 = scmp.eq.s32.totalorder %s20, 3
        // Predicated region
        $region79: #{discriminator_forward.5} parent=69 // pred_check
          %p1621 = pneg %p1620
        $region80: #{discriminator_forward.5} parent=69 // pred_check_branch
          %1623 = sbr.rel (%p1621) target = $region82
        $region81: #{discriminator_forward.5} parent=69 // pred_region
          %v1624 = vld [vmem:[#allocation2] sm:$0xff]
          %v1625 = vld [vmem:[#allocation2 + $0x8] sm:$0xff]
          %v1626 = vld [vmem:[#allocation2 + $0x10] sm:$0xff]
          %v1627 = vld [vmem:[#allocation2 + $0x18] sm:$0xff]
          %v1628 = vld [vmem:[#allocation2 + $0x20] sm:$0xff]
          %v1629 = vld [vmem:[#allocation2 + $0x28] sm:$0xff]
          %v1630 = vld [vmem:[#allocation2 + $0x30] sm:$0xff]
          %v1631 = vld [vmem:[#allocation2 + $0x38] sm:$0xff]
          %v1632 = vld [vmem:[#allocation2 + $0x40] sm:$0xff]
          %v1633 = vld [vmem:[#allocation2 + $0x48] sm:$0xff]
          %v1634 = vld [vmem:[#allocation2 + $0x50] sm:$0xff]
          %v1635 = vld [vmem:[#allocation2 + $0x58] sm:$0xff]
          %v1636 = vld [vmem:[#allocation2 + $0x60] sm:$0xff]
          %v1637 = vld [vmem:[#allocation2 + $0x68] sm:$0xff]
          %v1638 = vld [vmem:[#allocation2 + $0x70] sm:$0xff]
          %v1639 = vld [vmem:[#allocation2 + $0x78] sm:$0xff]
          %v1640 = vld [vmem:[#allocation2 + $0x80] sm:$0xff]
          %v1641 = vld [vmem:[#allocation2 + $0x88] sm:$0xff]
          %v1642 = vld [vmem:[#allocation2 + $0x90] sm:$0xff]
          %v1643 = vld [vmem:[#allocation2 + $0x98] sm:$0xff]
          %v1644 = vld [vmem:[#allocation2 + $0xa0] sm:$0xff]
          %v1645 = vld [vmem:[#allocation2 + $0xa8] sm:$0xff]
          %v1646 = vld [vmem:[#allocation2 + $0xb0] sm:$0xff]
          %v1647 = vld [vmem:[#allocation2 + $0xb8] sm:$0xff]
          %v1648 = vld [vmem:[#allocation2 + $0xc0] sm:$0xff]
          %v1649 = vld [vmem:[#allocation2 + $0xc8] sm:$0xff]
          %v1650 = vld [vmem:[#allocation2 + $0xd0] sm:$0xff]
          %v1651 = vld [vmem:[#allocation2 + $0xd8] sm:$0xff]
          %v1652 = vld [vmem:[#allocation2 + $0xe0] sm:$0xff]
          %v1653 = vld [vmem:[#allocation2 + $0xe8] sm:$0xff]
          %v1654 = vld [vmem:[#allocation2 + $0xf0] sm:$0xff]
          %v1655 = vld [vmem:[#allocation2 + $0xf8] sm:$0xff]
          %v1656 = vld [vmem:[#allocation2 + $0x100] sm:$0xff]
          %v1657 = vld [vmem:[#allocation2 + $0x108] sm:$0xff]
          %v1658 = vld [vmem:[#allocation2 + $0x110] sm:$0xff]
          %v1659 = vld [vmem:[#allocation2 + $0x118] sm:$0xff]
          %v1660 = vld [vmem:[#allocation2 + $0x120] sm:$0xff]
          %v1661 = vld [vmem:[#allocation2 + $0x128] sm:$0xff]
          %v1662 = vld [vmem:[#allocation2 + $0x130] sm:$0xff]
          %v1663 = vld [vmem:[#allocation2 + $0x138] sm:$0xff]
          %v1664 = vld [vmem:[#allocation2 + $0x140] sm:$0xff]
          %v1665 = vld [vmem:[#allocation2 + $0x148] sm:$0xff]
          %v1666 = vld [vmem:[#allocation2 + $0x150] sm:$0xff]
          %v1667 = vld [vmem:[#allocation2 + $0x158] sm:$0xff]
          %v1668 = vld [vmem:[#allocation2 + $0x160] sm:$0xff]
          %v1669 = vld [vmem:[#allocation2 + $0x168] sm:$0xff]
          %v1670 = vld [vmem:[#allocation2 + $0x170] sm:$0xff]
          %v1671 = vld [vmem:[#allocation2 + $0x178] sm:$0xff]
          %v1672 = vld [vmem:[#allocation2 + $0x180] sm:$0xff]
          %v1673 = vld [vmem:[#allocation2 + $0x188] sm:$0xff]
          %v1674 = vld [vmem:[#allocation2 + $0x190] sm:$0xff]
          %v1675 = vld [vmem:[#allocation2 + $0x198] sm:$0xff]
          %v1676 = vld [vmem:[#allocation2 + $0x1a0] sm:$0xff]
          %v1677 = vld [vmem:[#allocation2 + $0x1a8] sm:$0xff]
          %v1678 = vld [vmem:[#allocation2 + $0x1b0] sm:$0xff]
          %v1679 = vld [vmem:[#allocation2 + $0x1b8] sm:$0xff]
          %v1680 = vld [vmem:[#allocation2 + $0x1c0] sm:$0xff]
          %v1681 = vld [vmem:[#allocation2 + $0x1c8] sm:$0xff]
          %v1682 = vld [vmem:[#allocation2 + $0x1d0] sm:$0xff]
          %v1683 = vld [vmem:[#allocation2 + $0x1d8] sm:$0xff]
          %v1684 = vld [vmem:[#allocation2 + $0x1e0] sm:$0xff]
          %v1685 = vld [vmem:[#allocation2 + $0x1e8] sm:$0xff]
          %v1686 = vld [vmem:[#allocation2 + $0x1f0] sm:$0xff]
          %v1687 = vld [vmem:[#allocation2 + $0x1f8] sm:$0xff]
          %v1688 = vadd.f32 %v1624, %v1625
          %v1689 = vadd.f32 %v1688, %v1626
          %v1690 = vadd.f32 %v1689, %v1627
          %v1691 = vadd.f32 %v1690, %v1628
          %v1692 = vadd.f32 %v1691, %v1629
          %v1693 = vadd.f32 %v1692, %v1630
          %v1694 = vadd.f32 %v1693, %v1631
          %v1695 = vadd.f32 %v1694, %v1632
          %v1696 = vadd.f32 %v1695, %v1633
          %v1697 = vadd.f32 %v1696, %v1634
          %v1698 = vadd.f32 %v1697, %v1635
          %v1699 = vadd.f32 %v1698, %v1636
          %v1700 = vadd.f32 %v1699, %v1637
          %v1701 = vadd.f32 %v1700, %v1638
          %v1702 = vadd.f32 %v1701, %v1639
          %v1703 = vadd.f32 %v1702, %v1640
          %v1704 = vadd.f32 %v1703, %v1641
          %v1705 = vadd.f32 %v1704, %v1642
          %v1706 = vadd.f32 %v1705, %v1643
          %v1707 = vadd.f32 %v1706, %v1644
          %v1708 = vadd.f32 %v1707, %v1645
          %v1709 = vadd.f32 %v1708, %v1646
          %v1710 = vadd.f32 %v1709, %v1647
          %v1711 = vadd.f32 %v1710, %v1648
          %v1712 = vadd.f32 %v1711, %v1649
          %v1713 = vadd.f32 %v1712, %v1650
          %v1714 = vadd.f32 %v1713, %v1651
          %v1715 = vadd.f32 %v1714, %v1652
          %v1716 = vadd.f32 %v1715, %v1653
          %v1717 = vadd.f32 %v1716, %v1654
          %v1718 = vadd.f32 %v1717, %v1655
          %v1719 = vadd.f32 %v1718, %v1656
          %v1720 = vadd.f32 %v1719, %v1657
          %v1721 = vadd.f32 %v1720, %v1658
          %v1722 = vadd.f32 %v1721, %v1659
          %v1723 = vadd.f32 %v1722, %v1660
          %v1724 = vadd.f32 %v1723, %v1661
          %v1725 = vadd.f32 %v1724, %v1662
          %v1726 = vadd.f32 %v1725, %v1663
          %v1727 = vadd.f32 %v1726, %v1664
          %v1728 = vadd.f32 %v1727, %v1665
          %v1729 = vadd.f32 %v1728, %v1666
          %v1730 = vadd.f32 %v1729, %v1667
          %v1731 = vadd.f32 %v1730, %v1668
          %v1732 = vadd.f32 %v1731, %v1669
          %v1733 = vadd.f32 %v1732, %v1670
          %v1734 = vadd.f32 %v1733, %v1671
          %v1735 = vadd.f32 %v1734, %v1672
          %v1736 = vadd.f32 %v1735, %v1673
          %v1737 = vadd.f32 %v1736, %v1674
          %v1738 = vadd.f32 %v1737, %v1675
          %v1739 = vadd.f32 %v1738, %v1676
          %v1740 = vadd.f32 %v1739, %v1677
          %v1741 = vadd.f32 %v1740, %v1678
          %v1742 = vadd.f32 %v1741, %v1679
          %v1743 = vadd.f32 %v1742, %v1680
          %v1744 = vadd.f32 %v1743, %v1681
          %v1745 = vadd.f32 %v1744, %v1682
          %v1746 = vadd.f32 %v1745, %v1683
          %v1747 = vadd.f32 %v1746, %v1684
          %v1748 = vadd.f32 %v1747, %v1685
          %v1749 = vadd.f32 %v1748, %v1686
          %v1750 = vadd.f32 %v1749, %v1687
          %v1751 = vrot.slane %v1750, 4
          %v1752 = vadd.f32 %v1750, %v1751
          %v1753 = vrot.slane %v1752, 2
          %v1754 = vadd.f32 %v1752, %v1753
          %v1755 = vrot.slane %v1754, 1
          %v1756 = vadd.f32 %v1754, %v1755
          %v1757 = vmul.f32 %v1756, 0.001953125
          %v1758 = vmul.f32 %v1624, %v1624
          %v1759 = vmul.f32 %v1625, %v1625
          %v1760 = vmul.f32 %v1626, %v1626
          %v1761 = vmul.f32 %v1627, %v1627
          %v1762 = vmul.f32 %v1628, %v1628
          %v1763 = vmul.f32 %v1629, %v1629
          %v1764 = vmul.f32 %v1630, %v1630
          %v1765 = vmul.f32 %v1631, %v1631
          %v1766 = vmul.f32 %v1632, %v1632
          %v1767 = vmul.f32 %v1633, %v1633
          %v1768 = vmul.f32 %v1634, %v1634
          %v1769 = vmul.f32 %v1635, %v1635
          %v1770 = vmul.f32 %v1636, %v1636
          %v1771 = vmul.f32 %v1637, %v1637
          %v1772 = vmul.f32 %v1638, %v1638
          %v1773 = vmul.f32 %v1639, %v1639
          %v1774 = vmul.f32 %v1640, %v1640
          %v1775 = vmul.f32 %v1641, %v1641
          %v1776 = vmul.f32 %v1642, %v1642
          %v1777 = vmul.f32 %v1643, %v1643
          %v1778 = vmul.f32 %v1644, %v1644
          %v1779 = vmul.f32 %v1645, %v1645
          %v1780 = vmul.f32 %v1646, %v1646
          %v1781 = vmul.f32 %v1647, %v1647
          %v1782 = vmul.f32 %v1648, %v1648
          %v1783 = vmul.f32 %v1649, %v1649
          %v1784 = vmul.f32 %v1650, %v1650
          %v1785 = vmul.f32 %v1651, %v1651
          %v1786 = vmul.f32 %v1652, %v1652
          %v1787 = vmul.f32 %v1653, %v1653
          %v1788 = vmul.f32 %v1654, %v1654
          %v1789 = vmul.f32 %v1655, %v1655
          %v1790 = vmul.f32 %v1656, %v1656
          %v1791 = vmul.f32 %v1657, %v1657
          %v1792 = vmul.f32 %v1658, %v1658
          %v1793 = vmul.f32 %v1659, %v1659
          %v1794 = vmul.f32 %v1660, %v1660
          %v1795 = vmul.f32 %v1661, %v1661
          %v1796 = vmul.f32 %v1662, %v1662
          %v1797 = vmul.f32 %v1663, %v1663
          %v1798 = vmul.f32 %v1664, %v1664
          %v1799 = vmul.f32 %v1665, %v1665
          %v1800 = vmul.f32 %v1666, %v1666
          %v1801 = vmul.f32 %v1667, %v1667
          %v1802 = vmul.f32 %v1668, %v1668
          %v1803 = vmul.f32 %v1669, %v1669
          %v1804 = vmul.f32 %v1670, %v1670
          %v1805 = vmul.f32 %v1671, %v1671
          %v1806 = vmul.f32 %v1672, %v1672
          %v1807 = vmul.f32 %v1673, %v1673
          %v1808 = vmul.f32 %v1674, %v1674
          %v1809 = vmul.f32 %v1675, %v1675
          %v1810 = vmul.f32 %v1676, %v1676
          %v1811 = vmul.f32 %v1677, %v1677
          %v1812 = vmul.f32 %v1678, %v1678
          %v1813 = vmul.f32 %v1679, %v1679
          %v1814 = vmul.f32 %v1680, %v1680
          %v1815 = vmul.f32 %v1681, %v1681
          %v1816 = vmul.f32 %v1682, %v1682
          %v1817 = vmul.f32 %v1683, %v1683
          %v1818 = vmul.f32 %v1684, %v1684
          %v1819 = vmul.f32 %v1685, %v1685
          %v1820 = vmul.f32 %v1686, %v1686
          %v1821 = vmul.f32 %v1687, %v1687
          %v1822 = vadd.f32 %v1758, %v1759
          %v1823 = vadd.f32 %v1822, %v1760
          %v1824 = vadd.f32 %v1823, %v1761
          %v1825 = vadd.f32 %v1824, %v1762
          %v1826 = vadd.f32 %v1825, %v1763
          %v1827 = vadd.f32 %v1826, %v1764
          %v1828 = vadd.f32 %v1827, %v1765
          %v1829 = vadd.f32 %v1828, %v1766
          %v1830 = vadd.f32 %v1829, %v1767
          %v1831 = vadd.f32 %v1830, %v1768
          %v1832 = vadd.f32 %v1831, %v1769
          %v1833 = vadd.f32 %v1832, %v1770
          %v1834 = vadd.f32 %v1833, %v1771
          %v1835 = vadd.f32 %v1834, %v1772
          %v1836 = vadd.f32 %v1835, %v1773
          %v1837 = vadd.f32 %v1836, %v1774
          %v1838 = vadd.f32 %v1837, %v1775
          %v1839 = vadd.f32 %v1838, %v1776
          %v1840 = vadd.f32 %v1839, %v1777
          %v1841 = vadd.f32 %v1840, %v1778
          %v1842 = vadd.f32 %v1841, %v1779
          %v1843 = vadd.f32 %v1842, %v1780
          %v1844 = vadd.f32 %v1843, %v1781
          %v1845 = vadd.f32 %v1844, %v1782
          %v1846 = vadd.f32 %v1845, %v1783
          %v1847 = vadd.f32 %v1846, %v1784
          %v1848 = vadd.f32 %v1847, %v1785
          %v1849 = vadd.f32 %v1848, %v1786
          %v1850 = vadd.f32 %v1849, %v1787
          %v1851 = vadd.f32 %v1850, %v1788
          %v1852 = vadd.f32 %v1851, %v1789
          %v1853 = vadd.f32 %v1852, %v1790
          %v1854 = vadd.f32 %v1853, %v1791
          %v1855 = vadd.f32 %v1854, %v1792
          %v1856 = vadd.f32 %v1855, %v1793
          %v1857 = vadd.f32 %v1856, %v1794
          %v1858 = vadd.f32 %v1857, %v1795
          %v1859 = vadd.f32 %v1858, %v1796
          %v1860 = vadd.f32 %v1859, %v1797
          %v1861 = vadd.f32 %v1860, %v1798
          %v1862 = vadd.f32 %v1861, %v1799
          %v1863 = vadd.f32 %v1862, %v1800
          %v1864 = vadd.f32 %v1863, %v1801
          %v1865 = vadd.f32 %v1864, %v1802
          %v1866 = vadd.f32 %v1865, %v1803
          %v1867 = vadd.f32 %v1866, %v1804
          %v1868 = vadd.f32 %v1867, %v1805
          %v1869 = vadd.f32 %v1868, %v1806
          %v1870 = vadd.f32 %v1869, %v1807
          %v1871 = vadd.f32 %v1870, %v1808
          %v1872 = vadd.f32 %v1871, %v1809
          %v1873 = vadd.f32 %v1872, %v1810
          %v1874 = vadd.f32 %v1873, %v1811
          %v1875 = vadd.f32 %v1874, %v1812
          %v1876 = vadd.f32 %v1875, %v1813
          %v1877 = vadd.f32 %v1876, %v1814
          %v1878 = vadd.f32 %v1877, %v1815
          %v1879 = vadd.f32 %v1878, %v1816
          %v1880 = vadd.f32 %v1879, %v1817
          %v1881 = vadd.f32 %v1880, %v1818
          %v1882 = vadd.f32 %v1881, %v1819
          %v1883 = vadd.f32 %v1882, %v1820
          %v1884 = vadd.f32 %v1883, %v1821
          %v1885 = vrot.slane %v1884, 4
          %v1886 = vadd.f32 %v1884, %v1885
          %v1887 = vrot.slane %v1886, 2
          %v1888 = vadd.f32 %v1886, %v1887
          %v1889 = vrot.slane %v1888, 1
          %v1890 = vadd.f32 %v1888, %v1889
          %v1891 = vmul.f32 %v1890, 0.001953125
          %v1892 = vmul.f32 %v1757, %v1757
          %v1893 = vsub.f32 %v1891, %v1892
          %v1894 = vmax.f32 %v1893, 0.0
          %v1895 = vsub.f32 %v1624, %v1757
          %v1896 = vsub.f32 %v1625, %v1757
          %v1897 = vsub.f32 %v1626, %v1757
          %v1898 = vsub.f32 %v1627, %v1757
          %v1899 = vsub.f32 %v1628, %v1757
          %v1900 = vsub.f32 %v1629, %v1757
          %v1901 = vsub.f32 %v1630, %v1757
          %v1902 = vsub.f32 %v1631, %v1757
          %v1903 = vsub.f32 %v1632, %v1757
          %v1904 = vsub.f32 %v1633, %v1757
          %v1905 = vsub.f32 %v1634, %v1757
          %v1906 = vsub.f32 %v1635, %v1757
          %v1907 = vsub.f32 %v1636, %v1757
          %v1908 = vsub.f32 %v1637, %v1757
          %v1909 = vsub.f32 %v1638, %v1757
          %v1910 = vsub.f32 %v1639, %v1757
          %v1911 = vsub.f32 %v1640, %v1757
          %v1912 = vsub.f32 %v1641, %v1757
          %v1913 = vsub.f32 %v1642, %v1757
          %v1914 = vsub.f32 %v1643, %v1757
          %v1915 = vsub.f32 %v1644, %v1757
          %v1916 = vsub.f32 %v1645, %v1757
          %v1917 = vsub.f32 %v1646, %v1757
          %v1918 = vsub.f32 %v1647, %v1757
          %v1919 = vsub.f32 %v1648, %v1757
          %v1920 = vsub.f32 %v1649, %v1757
          %v1921 = vsub.f32 %v1650, %v1757
          %v1922 = vsub.f32 %v1651, %v1757
          %v1923 = vsub.f32 %v1652, %v1757
          %v1924 = vsub.f32 %v1653, %v1757
          %v1925 = vsub.f32 %v1654, %v1757
          %v1926 = vsub.f32 %v1655, %v1757
          %v1927 = vsub.f32 %v1656, %v1757
          %v1928 = vsub.f32 %v1657, %v1757
          %v1929 = vsub.f32 %v1658, %v1757
          %v1930 = vsub.f32 %v1659, %v1757
          %v1931 = vsub.f32 %v1660, %v1757
          %v1932 = vsub.f32 %v1661, %v1757
          %v1933 = vsub.f32 %v1662, %v1757
          %v1934 = vsub.f32 %v1663, %v1757
          %v1935 = vsub.f32 %v1664, %v1757
          %v1936 = vsub.f32 %v1665, %v1757
          %v1937 = vsub.f32 %v1666, %v1757
          %v1938 = vsub.f32 %v1667, %v1757
          %v1939 = vsub.f32 %v1668, %v1757
          %v1940 = vsub.f32 %v1669, %v1757
          %v1941 = vsub.f32 %v1670, %v1757
          %v1942 = vsub.f32 %v1671, %v1757
          %v1943 = vsub.f32 %v1672, %v1757
          %v1944 = vsub.f32 %v1673, %v1757
          %v1945 = vsub.f32 %v1674, %v1757
          %v1946 = vsub.f32 %v1675, %v1757
          %v1947 = vsub.f32 %v1676, %v1757
          %v1948 = vsub.f32 %v1677, %v1757
          %v1949 = vsub.f32 %v1678, %v1757
          %v1950 = vsub.f32 %v1679, %v1757
          %v1951 = vsub.f32 %v1680, %v1757
          %v1952 = vsub.f32 %v1681, %v1757
          %v1953 = vsub.f32 %v1682, %v1757
          %v1954 = vsub.f32 %v1683, %v1757
          %v1955 = vsub.f32 %v1684, %v1757
          %v1956 = vsub.f32 %v1685, %v1757
          %v1957 = vsub.f32 %v1686, %v1757
          %v1958 = vsub.f32 %v1687, %v1757
          %v1959 = vadd.f32 %v1894, 1e-05
          %v1960 = vrsqrt.pop %v1959
          %v1961 = vmul.f32 %v1895, %v1960
          %v1962 = vmul.f32 %v1896, %v1960
          %v1963 = vmul.f32 %v1897, %v1960
          %v1964 = vmul.f32 %v1898, %v1960
          %v1965 = vmul.f32 %v1899, %v1960
          %v1966 = vmul.f32 %v1900, %v1960
          %v1967 = vmul.f32 %v1901, %v1960
          %v1968 = vmul.f32 %v1902, %v1960
          %v1969 = vmul.f32 %v1903, %v1960
          %v1970 = vmul.f32 %v1904, %v1960
          %v1971 = vmul.f32 %v1905, %v1960
          %v1972 = vmul.f32 %v1906, %v1960
          %v1973 = vmul.f32 %v1907, %v1960
          %v1974 = vmul.f32 %v1908, %v1960
          %v1975 = vmul.f32 %v1909, %v1960
          %v1976 = vmul.f32 %v1910, %v1960
          %v1977 = vmul.f32 %v1911, %v1960
          %v1978 = vmul.f32 %v1912, %v1960
          %v1979 = vmul.f32 %v1913, %v1960
          %v1980 = vmul.f32 %v1914, %v1960
          %v1981 = vmul.f32 %v1915, %v1960
          %v1982 = vmul.f32 %v1916, %v1960
          %v1983 = vmul.f32 %v1917, %v1960
          %v1984 = vmul.f32 %v1918, %v1960
          %v1985 = vmul.f32 %v1919, %v1960
          %v1986 = vmul.f32 %v1920, %v1960
          %v1987 = vmul.f32 %v1921, %v1960
          %v1988 = vmul.f32 %v1922, %v1960
          %v1989 = vmul.f32 %v1923, %v1960
          %v1990 = vmul.f32 %v1924, %v1960
          %v1991 = vmul.f32 %v1925, %v1960
          %v1992 = vmul.f32 %v1926, %v1960
          %v1993 = vmul.f32 %v1927, %v1960
          %v1994 = vmul.f32 %v1928, %v1960
          %v1995 = vmul.f32 %v1929, %v1960
          %v1996 = vmul.f32 %v1930, %v1960
          %v1997 = vmul.f32 %v1931, %v1960
          %v1998 = vmul.f32 %v1932, %v1960
          %v1999 = vmul.f32 %v1933, %v1960
          %v2000 = vmul.f32 %v1934, %v1960
          %v2001 = vmul.f32 %v1935, %v1960
          %v2002 = vmul.f32 %v1936, %v1960
          %v2003 = vmul.f32 %v1937, %v1960
          %v2004 = vmul.f32 %v1938, %v1960
          %v2005 = vmul.f32 %v1939, %v1960
          %v2006 = vmul.f32 %v1940, %v1960
          %v2007 = vmul.f32 %v1941, %v1960
          %v2008 = vmul.f32 %v1942, %v1960
          %v2009 = vmul.f32 %v1943, %v1960
          %v2010 = vmul.f32 %v1944, %v1960
          %v2011 = vmul.f32 %v1945, %v1960
          %v2012 = vmul.f32 %v1946, %v1960
          %v2013 = vmul.f32 %v1947, %v1960
          %v2014 = vmul.f32 %v1948, %v1960
          %v2015 = vmul.f32 %v1949, %v1960
          %v2016 = vmul.f32 %v1950, %v1960
          %v2017 = vmul.f32 %v1951, %v1960
          %v2018 = vmul.f32 %v1952, %v1960
          %v2019 = vmul.f32 %v1953, %v1960
          %v2020 = vmul.f32 %v1954, %v1960
          %v2021 = vmul.f32 %v1955, %v1960
          %v2022 = vmul.f32 %v1956, %v1960
          %v2023 = vmul.f32 %v1957, %v1960
          %v2024 = vmul.f32 %v1958, %v1960
          %v2025 = vld [vmem:[%s550] sm:$0x1]
          %v2027 = vlaneseq
          %v2028 = vshrl.u32 %v2027, 7
          %v2029 = vsub.s32 0, %v2028
          %v2030 = vrot.slane %v2025, %v2029
          %v2032 = vmul.f32 %v1961, %v2030
          %v2033 = vmul.f32 %v1962, %v2030
          %v2034 = vmul.f32 %v1963, %v2030
          %v2035 = vmul.f32 %v1964, %v2030
          %v2036 = vmul.f32 %v1965, %v2030
          %v2037 = vmul.f32 %v1966, %v2030
          %v2038 = vmul.f32 %v1967, %v2030
          %v2039 = vmul.f32 %v1968, %v2030
          %v2040 = vmul.f32 %v1969, %v2030
          %v2041 = vmul.f32 %v1970, %v2030
          %v2042 = vmul.f32 %v1971, %v2030
          %v2043 = vmul.f32 %v1972, %v2030
          %v2044 = vmul.f32 %v1973, %v2030
          %v2045 = vmul.f32 %v1974, %v2030
          %v2046 = vmul.f32 %v1975, %v2030
          %v2047 = vmul.f32 %v1976, %v2030
          %v2048 = vmul.f32 %v1977, %v2030
          %v2049 = vmul.f32 %v1978, %v2030
          %v2050 = vmul.f32 %v1979, %v2030
          %v2051 = vmul.f32 %v1980, %v2030
          %v2052 = vmul.f32 %v1981, %v2030
          %v2053 = vmul.f32 %v1982, %v2030
          %v2054 = vmul.f32 %v1983, %v2030
          %v2055 = vmul.f32 %v1984, %v2030
          %v2056 = vmul.f32 %v1985, %v2030
          %v2057 = vmul.f32 %v1986, %v2030
          %v2058 = vmul.f32 %v1987, %v2030
          %v2059 = vmul.f32 %v1988, %v2030
          %v2060 = vmul.f32 %v1989, %v2030
          %v2061 = vmul.f32 %v1990, %v2030
          %v2062 = vmul.f32 %v1991, %v2030
          %v2063 = vmul.f32 %v1992, %v2030
          %v2064 = vmul.f32 %v1993, %v2030
          %v2065 = vmul.f32 %v1994, %v2030
          %v2066 = vmul.f32 %v1995, %v2030
          %v2067 = vmul.f32 %v1996, %v2030
          %v2068 = vmul.f32 %v1997, %v2030
          %v2069 = vmul.f32 %v1998, %v2030
          %v2070 = vmul.f32 %v1999, %v2030
          %v2071 = vmul.f32 %v2000, %v2030
          %v2072 = vmul.f32 %v2001, %v2030
          %v2073 = vmul.f32 %v2002, %v2030
          %v2074 = vmul.f32 %v2003, %v2030
          %v2075 = vmul.f32 %v2004, %v2030
          %v2076 = vmul.f32 %v2005, %v2030
          %v2077 = vmul.f32 %v2006, %v2030
          %v2078 = vmul.f32 %v2007, %v2030
          %v2079 = vmul.f32 %v2008, %v2030
          %v2080 = vmul.f32 %v2009, %v2030
          %v2081 = vmul.f32 %v2010, %v2030
          %v2082 = vmul.f32 %v2011, %v2030
          %v2083 = vmul.f32 %v2012, %v2030
          %v2084 = vmul.f32 %v2013, %v2030
          %v2085 = vmul.f32 %v2014, %v2030
          %v2086 = vmul.f32 %v2015, %v2030
          %v2087 = vmul.f32 %v2016, %v2030
          %v2088 = vmul.f32 %v2017, %v2030
          %v2089 = vmul.f32 %v2018, %v2030
          %v2090 = vmul.f32 %v2019, %v2030
          %v2091 = vmul.f32 %v2020, %v2030
          %v2092 = vmul.f32 %v2021, %v2030
          %v2093 = vmul.f32 %v2022, %v2030
          %v2094 = vmul.f32 %v2023, %v2030
          %v2095 = vmul.f32 %v2024, %v2030
          %v2096 = vld [vmem:[%s553] sm:$0x1]
          %v2098 = vlaneseq
          %v2099 = vshrl.u32 %v2098, 7
          %v2100 = vsub.s32 0, %v2099
          %v2101 = vrot.slane %v2096, %v2100
          %v2103 = vadd.f32 %v2032, %v2101
          %v2104 = vadd.f32 %v2033, %v2101
          %v2105 = vadd.f32 %v2034, %v2101
          %v2106 = vadd.f32 %v2035, %v2101
          %v2107 = vadd.f32 %v2036, %v2101
          %v2108 = vadd.f32 %v2037, %v2101
          %v2109 = vadd.f32 %v2038, %v2101
          %v2110 = vadd.f32 %v2039, %v2101
          %v2111 = vadd.f32 %v2040, %v2101
          %v2112 = vadd.f32 %v2041, %v2101
          %v2113 = vadd.f32 %v2042, %v2101
          %v2114 = vadd.f32 %v2043, %v2101
          %v2115 = vadd.f32 %v2044, %v2101
          %v2116 = vadd.f32 %v2045, %v2101
          %v2117 = vadd.f32 %v2046, %v2101
          %v2118 = vadd.f32 %v2047, %v2101
          %v2119 = vadd.f32 %v2048, %v2101
          %v2120 = vadd.f32 %v2049, %v2101
          %v2121 = vadd.f32 %v2050, %v2101
          %v2122 = vadd.f32 %v2051, %v2101
          %v2123 = vadd.f32 %v2052, %v2101
          %v2124 = vadd.f32 %v2053, %v2101
          %v2125 = vadd.f32 %v2054, %v2101
          %v2126 = vadd.f32 %v2055, %v2101
          %v2127 = vadd.f32 %v2056, %v2101
          %v2128 = vadd.f32 %v2057, %v2101
          %v2129 = vadd.f32 %v2058, %v2101
          %v2130 = vadd.f32 %v2059, %v2101
          %v2131 = vadd.f32 %v2060, %v2101
          %v2132 = vadd.f32 %v2061, %v2101
          %v2133 = vadd.f32 %v2062, %v2101
          %v2134 = vadd.f32 %v2063, %v2101
          %v2135 = vadd.f32 %v2064, %v2101
          %v2136 = vadd.f32 %v2065, %v2101
          %v2137 = vadd.f32 %v2066, %v2101
          %v2138 = vadd.f32 %v2067, %v2101
          %v2139 = vadd.f32 %v2068, %v2101
          %v2140 = vadd.f32 %v2069, %v2101
          %v2141 = vadd.f32 %v2070, %v2101
          %v2142 = vadd.f32 %v2071, %v2101
          %v2143 = vadd.f32 %v2072, %v2101
          %v2144 = vadd.f32 %v2073, %v2101
          %v2145 = vadd.f32 %v2074, %v2101
          %v2146 = vadd.f32 %v2075, %v2101
          %v2147 = vadd.f32 %v2076, %v2101
          %v2148 = vadd.f32 %v2077, %v2101
          %v2149 = vadd.f32 %v2078, %v2101
          %v2150 = vadd.f32 %v2079, %v2101
          %v2151 = vadd.f32 %v2080, %v2101
          %v2152 = vadd.f32 %v2081, %v2101
          %v2153 = vadd.f32 %v2082, %v2101
          %v2154 = vadd.f32 %v2083, %v2101
          %v2155 = vadd.f32 %v2084, %v2101
          %v2156 = vadd.f32 %v2085, %v2101
          %v2157 = vadd.f32 %v2086, %v2101
          %v2158 = vadd.f32 %v2087, %v2101
          %v2159 = vadd.f32 %v2088, %v2101
          %v2160 = vadd.f32 %v2089, %v2101
          %v2161 = vadd.f32 %v2090, %v2101
          %v2162 = vadd.f32 %v2091, %v2101
          %v2163 = vadd.f32 %v2092, %v2101
          %v2164 = vadd.f32 %v2093, %v2101
          %v2165 = vadd.f32 %v2094, %v2101
          %v2166 = vadd.f32 %v2095, %v2101
          %v2167 = vmax.f32 %v2103, 0.0
          %v2168 = vmax.f32 %v2104, 0.0
          %v2169 = vmax.f32 %v2105, 0.0
          %v2170 = vmax.f32 %v2106, 0.0
          %v2171 = vmax.f32 %v2107, 0.0
          %v2172 = vmax.f32 %v2108, 0.0
          %v2173 = vmax.f32 %v2109, 0.0
          %v2174 = vmax.f32 %v2110, 0.0
          %v2175 = vmax.f32 %v2111, 0.0
          %v2176 = vmax.f32 %v2112, 0.0
          %v2177 = vmax.f32 %v2113, 0.0
          %v2178 = vmax.f32 %v2114, 0.0
          %v2179 = vmax.f32 %v2115, 0.0
          %v2180 = vmax.f32 %v2116, 0.0
          %v2181 = vmax.f32 %v2117, 0.0
          %v2182 = vmax.f32 %v2118, 0.0
          %v2183 = vmax.f32 %v2119, 0.0
          %v2184 = vmax.f32 %v2120, 0.0
          %v2185 = vmax.f32 %v2121, 0.0
          %v2186 = vmax.f32 %v2122, 0.0
          %v2187 = vmax.f32 %v2123, 0.0
          %v2188 = vmax.f32 %v2124, 0.0
          %v2189 = vmax.f32 %v2125, 0.0
          %v2190 = vmax.f32 %v2126, 0.0
          %v2191 = vmax.f32 %v2127, 0.0
          %v2192 = vmax.f32 %v2128, 0.0
          %v2193 = vmax.f32 %v2129, 0.0
          %v2194 = vmax.f32 %v2130, 0.0
          %v2195 = vmax.f32 %v2131, 0.0
          %v2196 = vmax.f32 %v2132, 0.0
          %v2197 = vmax.f32 %v2133, 0.0
          %v2198 = vmax.f32 %v2134, 0.0
          %v2199 = vmax.f32 %v2135, 0.0
          %v2200 = vmax.f32 %v2136, 0.0
          %v2201 = vmax.f32 %v2137, 0.0
          %v2202 = vmax.f32 %v2138, 0.0
          %v2203 = vmax.f32 %v2139, 0.0
          %v2204 = vmax.f32 %v2140, 0.0
          %v2205 = vmax.f32 %v2141, 0.0
          %v2206 = vmax.f32 %v2142, 0.0
          %v2207 = vmax.f32 %v2143, 0.0
          %v2208 = vmax.f32 %v2144, 0.0
          %v2209 = vmax.f32 %v2145, 0.0
          %v2210 = vmax.f32 %v2146, 0.0
          %v2211 = vmax.f32 %v2147, 0.0
          %v2212 = vmax.f32 %v2148, 0.0
          %v2213 = vmax.f32 %v2149, 0.0
          %v2214 = vmax.f32 %v2150, 0.0
          %v2215 = vmax.f32 %v2151, 0.0
          %v2216 = vmax.f32 %v2152, 0.0
          %v2217 = vmax.f32 %v2153, 0.0
          %v2218 = vmax.f32 %v2154, 0.0
          %v2219 = vmax.f32 %v2155, 0.0
          %v2220 = vmax.f32 %v2156, 0.0
          %v2221 = vmax.f32 %v2157, 0.0
          %v2222 = vmax.f32 %v2158, 0.0
          %v2223 = vmax.f32 %v2159, 0.0
          %v2224 = vmax.f32 %v2160, 0.0
          %v2225 = vmax.f32 %v2161, 0.0
          %v2226 = vmax.f32 %v2162, 0.0
          %v2227 = vmax.f32 %v2163, 0.0
          %v2228 = vmax.f32 %v2164, 0.0
          %v2229 = vmax.f32 %v2165, 0.0
          %v2230 = vmax.f32 %v2166, 0.0
          %v2231 = vmin.f32 %v2167, 6.0
          %v2232 = vmin.f32 %v2168, 6.0
          %v2233 = vmin.f32 %v2169, 6.0
          %v2234 = vmin.f32 %v2170, 6.0
          %v2235 = vmin.f32 %v2171, 6.0
          %v2236 = vmin.f32 %v2172, 6.0
          %v2237 = vmin.f32 %v2173, 6.0
          %v2238 = vmin.f32 %v2174, 6.0
          %v2239 = vmin.f32 %v2175, 6.0
          %v2240 = vmin.f32 %v2176, 6.0
          %v2241 = vmin.f32 %v2177, 6.0
          %v2242 = vmin.f32 %v2178, 6.0
          %v2243 = vmin.f32 %v2179, 6.0
          %v2244 = vmin.f32 %v2180, 6.0
          %v2245 = vmin.f32 %v2181, 6.0
          %v2246 = vmin.f32 %v2182, 6.0
          %v2247 = vmin.f32 %v2183, 6.0
          %v2248 = vmin.f32 %v2184, 6.0
          %v2249 = vmin.f32 %v2185, 6.0
          %v2250 = vmin.f32 %v2186, 6.0
          %v2251 = vmin.f32 %v2187, 6.0
          %v2252 = vmin.f32 %v2188, 6.0
          %v2253 = vmin.f32 %v2189, 6.0
          %v2254 = vmin.f32 %v2190, 6.0
          %v2255 = vmin.f32 %v2191, 6.0
          %v2256 = vmin.f32 %v2192, 6.0
          %v2257 = vmin.f32 %v2193, 6.0
          %v2258 = vmin.f32 %v2194, 6.0
          %v2259 = vmin.f32 %v2195, 6.0
          %v2260 = vmin.f32 %v2196, 6.0
          %v2261 = vmin.f32 %v2197, 6.0
          %v2262 = vmin.f32 %v2198, 6.0
          %v2263 = vmin.f32 %v2199, 6.0
          %v2264 = vmin.f32 %v2200, 6.0
          %v2265 = vmin.f32 %v2201, 6.0
          %v2266 = vmin.f32 %v2202, 6.0
          %v2267 = vmin.f32 %v2203, 6.0
          %v2268 = vmin.f32 %v2204, 6.0
          %v2269 = vmin.f32 %v2205, 6.0
          %v2270 = vmin.f32 %v2206, 6.0
          %v2271 = vmin.f32 %v2207, 6.0
          %v2272 = vmin.f32 %v2208, 6.0
          %v2273 = vmin.f32 %v2209, 6.0
          %v2274 = vmin.f32 %v2210, 6.0
          %v2275 = vmin.f32 %v2211, 6.0
          %v2276 = vmin.f32 %v2212, 6.0
          %v2277 = vmin.f32 %v2213, 6.0
          %v2278 = vmin.f32 %v2214, 6.0
          %v2279 = vmin.f32 %v2215, 6.0
          %v2280 = vmin.f32 %v2216, 6.0
          %v2281 = vmin.f32 %v2217, 6.0
          %v2282 = vmin.f32 %v2218, 6.0
          %v2283 = vmin.f32 %v2219, 6.0
          %v2284 = vmin.f32 %v2220, 6.0
          %v2285 = vmin.f32 %v2221, 6.0
          %v2286 = vmin.f32 %v2222, 6.0
          %v2287 = vmin.f32 %v2223, 6.0
          %v2288 = vmin.f32 %v2224, 6.0
          %v2289 = vmin.f32 %v2225, 6.0
          %v2290 = vmin.f32 %v2226, 6.0
          %v2291 = vmin.f32 %v2227, 6.0
          %v2292 = vmin.f32 %v2228, 6.0
          %v2293 = vmin.f32 %v2229, 6.0
          %v2294 = vmin.f32 %v2230, 6.0
          %v2295 = vpack.c.bf16 %v2232, %v2231
          %v2296 = vpack.c.bf16 %v2234, %v2233
          %v2297 = vpack.c.bf16 %v2236, %v2235
          %v2298 = vpack.c.bf16 %v2238, %v2237
          %v2299 = vpack.c.bf16 %v2240, %v2239
          %v2300 = vpack.c.bf16 %v2242, %v2241
          %v2301 = vpack.c.bf16 %v2244, %v2243
          %v2302 = vpack.c.bf16 %v2246, %v2245
          %v2303 = vpack.c.bf16 %v2248, %v2247
          %v2304 = vpack.c.bf16 %v2250, %v2249
          %v2305 = vpack.c.bf16 %v2252, %v2251
          %v2306 = vpack.c.bf16 %v2254, %v2253
          %v2307 = vpack.c.bf16 %v2256, %v2255
          %v2308 = vpack.c.bf16 %v2258, %v2257
          %v2309 = vpack.c.bf16 %v2260, %v2259
          %v2310 = vpack.c.bf16 %v2262, %v2261
          %v2311 = vpack.c.bf16 %v2264, %v2263
          %v2312 = vpack.c.bf16 %v2266, %v2265
          %v2313 = vpack.c.bf16 %v2268, %v2267
          %v2314 = vpack.c.bf16 %v2270, %v2269
          %v2315 = vpack.c.bf16 %v2272, %v2271
          %v2316 = vpack.c.bf16 %v2274, %v2273
          %v2317 = vpack.c.bf16 %v2276, %v2275
          %v2318 = vpack.c.bf16 %v2278, %v2277
          %v2319 = vpack.c.bf16 %v2280, %v2279
          %v2320 = vpack.c.bf16 %v2282, %v2281
          %v2321 = vpack.c.bf16 %v2284, %v2283
          %v2322 = vpack.c.bf16 %v2286, %v2285
          %v2323 = vpack.c.bf16 %v2288, %v2287
          %v2324 = vpack.c.bf16 %v2290, %v2289
          %v2325 = vpack.c.bf16 %v2292, %v2291
          %v2326 = vpack.c.bf16 %v2294, %v2293
          %v2359 = vunpack.c.l.b16 %v2295
          %v2360 = vunpack.c.h.b16 %v2295
          %v2361 = vunpack.c.l.b16 %v2296
          %v2362 = vunpack.c.h.b16 %v2296
          %v2363 = vunpack.c.l.b16 %v2297
          %v2364 = vunpack.c.h.b16 %v2297
          %v2365 = vunpack.c.l.b16 %v2298
          %v2366 = vunpack.c.h.b16 %v2298
          %v2367 = vunpack.c.l.b16 %v2299
          %v2368 = vunpack.c.h.b16 %v2299
          %v2369 = vunpack.c.l.b16 %v2300
          %v2370 = vunpack.c.h.b16 %v2300
          %v2371 = vunpack.c.l.b16 %v2301
          %v2372 = vunpack.c.h.b16 %v2301
          %v2373 = vunpack.c.l.b16 %v2302
          %v2374 = vunpack.c.h.b16 %v2302
          %v2375 = vunpack.c.l.b16 %v2303
          %v2376 = vunpack.c.h.b16 %v2303
          %v2377 = vunpack.c.l.b16 %v2304
          %v2378 = vunpack.c.h.b16 %v2304
          %v2379 = vunpack.c.l.b16 %v2305
          %v2380 = vunpack.c.h.b16 %v2305
          %v2381 = vunpack.c.l.b16 %v2306
          %v2382 = vunpack.c.h.b16 %v2306
          %v2383 = vunpack.c.l.b16 %v2307
          %v2384 = vunpack.c.h.b16 %v2307
          %v2385 = vunpack.c.l.b16 %v2308
          %v2386 = vunpack.c.h.b16 %v2308
          %v2387 = vunpack.c.l.b16 %v2309
          %v2388 = vunpack.c.h.b16 %v2309
          %v2389 = vunpack.c.l.b16 %v2310
          %v2390 = vunpack.c.h.b16 %v2310
          %v2391 = vunpack.c.l.b16 %v2311
          %v2392 = vunpack.c.h.b16 %v2311
          %v2393 = vunpack.c.l.b16 %v2312
          %v2394 = vunpack.c.h.b16 %v2312
          %v2395 = vunpack.c.l.b16 %v2313
          %v2396 = vunpack.c.h.b16 %v2313
          %v2397 = vunpack.c.l.b16 %v2314
          %v2398 = vunpack.c.h.b16 %v2314
          %v2399 = vunpack.c.l.b16 %v2315
          %v2400 = vunpack.c.h.b16 %v2315
          %v2401 = vunpack.c.l.b16 %v2316
          %v2402 = vunpack.c.h.b16 %v2316
          %v2403 = vunpack.c.l.b16 %v2317
          %v2404 = vunpack.c.h.b16 %v2317
          %v2405 = vunpack.c.l.b16 %v2318
          %v2406 = vunpack.c.h.b16 %v2318
          %v2407 = vunpack.c.l.b16 %v2319
          %v2408 = vunpack.c.h.b16 %v2319
          %v2409 = vunpack.c.l.b16 %v2320
          %v2410 = vunpack.c.h.b16 %v2320
          %v2411 = vunpack.c.l.b16 %v2321
          %v2412 = vunpack.c.h.b16 %v2321
          %v2413 = vunpack.c.l.b16 %v2322
          %v2414 = vunpack.c.h.b16 %v2322
          %v2415 = vunpack.c.l.b16 %v2323
          %v2416 = vunpack.c.h.b16 %v2323
          %v2417 = vunpack.c.l.b16 %v2324
          %v2418 = vunpack.c.h.b16 %v2324
          %v2419 = vunpack.c.l.b16 %v2325
          %v2420 = vunpack.c.h.b16 %v2325
          %v2421 = vunpack.c.l.b16 %v2326
          %v2422 = vunpack.c.h.b16 %v2326
          %v2423 = vpack.c.b16 %v2359, %v2359
          %v2424 = vpack.c.b16 %v2360, %v2360
          %v2425 = vpack.c.b16 %v2361, %v2361
          %v2426 = vpack.c.b16 %v2362, %v2362
          %v2427 = vpack.c.b16 %v2363, %v2363
          %v2428 = vpack.c.b16 %v2364, %v2364
          %v2429 = vpack.c.b16 %v2365, %v2365
          %v2430 = vpack.c.b16 %v2366, %v2366
          %v2431 = vpack.c.b16 %v2367, %v2367
          %v2432 = vpack.c.b16 %v2368, %v2368
          %v2433 = vpack.c.b16 %v2369, %v2369
          %v2434 = vpack.c.b16 %v2370, %v2370
          %v2435 = vpack.c.b16 %v2371, %v2371
          %v2436 = vpack.c.b16 %v2372, %v2372
          %v2437 = vpack.c.b16 %v2373, %v2373
          %v2438 = vpack.c.b16 %v2374, %v2374
          %v2439 = vpack.c.b16 %v2375, %v2375
          %v2440 = vpack.c.b16 %v2376, %v2376
          %v2441 = vpack.c.b16 %v2377, %v2377
          %v2442 = vpack.c.b16 %v2378, %v2378
          %v2443 = vpack.c.b16 %v2379, %v2379
          %v2444 = vpack.c.b16 %v2380, %v2380
          %v2445 = vpack.c.b16 %v2381, %v2381
          %v2446 = vpack.c.b16 %v2382, %v2382
          %v2447 = vpack.c.b16 %v2383, %v2383
          %v2448 = vpack.c.b16 %v2384, %v2384
          %v2449 = vpack.c.b16 %v2385, %v2385
          %v2450 = vpack.c.b16 %v2386, %v2386
          %v2451 = vpack.c.b16 %v2387, %v2387
          %v2452 = vpack.c.b16 %v2388, %v2388
          %v2453 = vpack.c.b16 %v2389, %v2389
          %v2454 = vpack.c.b16 %v2390, %v2390
          %v2455 = vpack.c.b16 %v2391, %v2391
          %v2456 = vpack.c.b16 %v2392, %v2392
          %v2457 = vpack.c.b16 %v2393, %v2393
          %v2458 = vpack.c.b16 %v2394, %v2394
          %v2459 = vpack.c.b16 %v2395, %v2395
          %v2460 = vpack.c.b16 %v2396, %v2396
          %v2461 = vpack.c.b16 %v2397, %v2397
          %v2462 = vpack.c.b16 %v2398, %v2398
          %v2463 = vpack.c.b16 %v2399, %v2399
          %v2464 = vpack.c.b16 %v2400, %v2400
          %v2465 = vpack.c.b16 %v2401, %v2401
          %v2466 = vpack.c.b16 %v2402, %v2402
          %v2467 = vpack.c.b16 %v2403, %v2403
          %v2468 = vpack.c.b16 %v2404, %v2404
          %v2469 = vpack.c.b16 %v2405, %v2405
          %v2470 = vpack.c.b16 %v2406, %v2406
          %v2471 = vpack.c.b16 %v2407, %v2407
          %v2472 = vpack.c.b16 %v2408, %v2408
          %v2473 = vpack.c.b16 %v2409, %v2409
          %v2474 = vpack.c.b16 %v2410, %v2410
          %v2475 = vpack.c.b16 %v2411, %v2411
          %v2476 = vpack.c.b16 %v2412, %v2412
          %v2477 = vpack.c.b16 %v2413, %v2413
          %v2478 = vpack.c.b16 %v2414, %v2414
          %v2479 = vpack.c.b16 %v2415, %v2415
          %v2480 = vpack.c.b16 %v2416, %v2416
          %v2481 = vpack.c.b16 %v2417, %v2417
          %v2482 = vpack.c.b16 %v2418, %v2418
          %v2483 = vpack.c.b16 %v2419, %v2419
          %v2484 = vpack.c.b16 %v2420, %v2420
          %v2485 = vpack.c.b16 %v2421, %v2421
          %v2486 = vpack.c.b16 %v2422, %v2422
          %2551 = vst [vmem:[%s557] sm:$0xf] %v2423
          %2552 = vst [vmem:[%s557 + $0x4] sm:$0xf] %v2424
          %2553 = vst [vmem:[%s557 + $0x8] sm:$0xf] %v2425
          %2554 = vst [vmem:[%s557 + $0xc] sm:$0xf] %v2426
          %2555 = vst [vmem:[%s557 + $0x10] sm:$0xf] %v2427
          %2556 = vst [vmem:[%s557 + $0x14] sm:$0xf] %v2428
          %2557 = vst [vmem:[%s557 + $0x18] sm:$0xf] %v2429
          %2558 = vst [vmem:[%s557 + $0x1c] sm:$0xf] %v2430
          %2559 = vst [vmem:[%s557 + $0x20] sm:$0xf] %v2431
          %2560 = vst [vmem:[%s557 + $0x24] sm:$0xf] %v2432
          %2561 = vst [vmem:[%s557 + $0x28] sm:$0xf] %v2433
          %2562 = vst [vmem:[%s557 + $0x2c] sm:$0xf] %v2434
          %2563 = vst [vmem:[%s557 + $0x30] sm:$0xf] %v2435
          %2564 = vst [vmem:[%s557 + $0x34] sm:$0xf] %v2436
          %2565 = vst [vmem:[%s557 + $0x38] sm:$0xf] %v2437
          %2566 = vst [vmem:[%s557 + $0x3c] sm:$0xf] %v2438
          %2567 = vst [vmem:[%s557 + $0x40] sm:$0xf] %v2439
          %2568 = vst [vmem:[%s557 + $0x44] sm:$0xf] %v2440
          %2569 = vst [vmem:[%s557 + $0x48] sm:$0xf] %v2441
          %2570 = vst [vmem:[%s557 + $0x4c] sm:$0xf] %v2442
          %2571 = vst [vmem:[%s557 + $0x50] sm:$0xf] %v2443
          %2572 = vst [vmem:[%s557 + $0x54] sm:$0xf] %v2444
          %2573 = vst [vmem:[%s557 + $0x58] sm:$0xf] %v2445
          %2574 = vst [vmem:[%s557 + $0x5c] sm:$0xf] %v2446
          %2575 = vst [vmem:[%s557 + $0x60] sm:$0xf] %v2447
          %2576 = vst [vmem:[%s557 + $0x64] sm:$0xf] %v2448
          %2577 = vst [vmem:[%s557 + $0x68] sm:$0xf] %v2449
          %2578 = vst [vmem:[%s557 + $0x6c] sm:$0xf] %v2450
          %2579 = vst [vmem:[%s557 + $0x70] sm:$0xf] %v2451
          %2580 = vst [vmem:[%s557 + $0x74] sm:$0xf] %v2452
          %2581 = vst [vmem:[%s557 + $0x78] sm:$0xf] %v2453
          %2582 = vst [vmem:[%s557 + $0x7c] sm:$0xf] %v2454
          %2583 = vst [vmem:[%s557 + $0x80] sm:$0xf] %v2455
          %2584 = vst [vmem:[%s557 + $0x84] sm:$0xf] %v2456
          %2585 = vst [vmem:[%s557 + $0x88] sm:$0xf] %v2457
          %2586 = vst [vmem:[%s557 + $0x8c] sm:$0xf] %v2458
          %2587 = vst [vmem:[%s557 + $0x90] sm:$0xf] %v2459
          %2588 = vst [vmem:[%s557 + $0x94] sm:$0xf] %v2460
          %2589 = vst [vmem:[%s557 + $0x98] sm:$0xf] %v2461
          %2590 = vst [vmem:[%s557 + $0x9c] sm:$0xf] %v2462
          %2591 = vst [vmem:[%s557 + $0xa0] sm:$0xf] %v2463
          %2592 = vst [vmem:[%s557 + $0xa4] sm:$0xf] %v2464
          %2593 = vst [vmem:[%s557 + $0xa8] sm:$0xf] %v2465
          %2594 = vst [vmem:[%s557 + $0xac] sm:$0xf] %v2466
          %2595 = vst [vmem:[%s557 + $0xb0] sm:$0xf] %v2467
          %2596 = vst [vmem:[%s557 + $0xb4] sm:$0xf] %v2468
          %2597 = vst [vmem:[%s557 + $0xb8] sm:$0xf] %v2469
          %2598 = vst [vmem:[%s557 + $0xbc] sm:$0xf] %v2470
          %2599 = vst [vmem:[%s557 + $0xc0] sm:$0xf] %v2471
          %2600 = vst [vmem:[%s557 + $0xc4] sm:$0xf] %v2472
          %2601 = vst [vmem:[%s557 + $0xc8] sm:$0xf] %v2473
          %2602 = vst [vmem:[%s557 + $0xcc] sm:$0xf] %v2474
          %2603 = vst [vmem:[%s557 + $0xd0] sm:$0xf] %v2475
          %2604 = vst [vmem:[%s557 + $0xd4] sm:$0xf] %v2476
          %2605 = vst [vmem:[%s557 + $0xd8] sm:$0xf] %v2477
          %2606 = vst [vmem:[%s557 + $0xdc] sm:$0xf] %v2478
          %2607 = vst [vmem:[%s557 + $0xe0] sm:$0xf] %v2479
          %2608 = vst [vmem:[%s557 + $0xe4] sm:$0xf] %v2480
          %2609 = vst [vmem:[%s557 + $0xe8] sm:$0xf] %v2481
          %2610 = vst [vmem:[%s557 + $0xec] sm:$0xf] %v2482
          %2611 = vst [vmem:[%s557 + $0xf0] sm:$0xf] %v2483
          %2612 = vst [vmem:[%s557 + $0xf4] sm:$0xf] %v2484
          %2613 = vst [vmem:[%s557 + $0xf8] sm:$0xf] %v2485
          %2614 = vst [vmem:[%s557 + $0xfc] sm:$0xf] %v2486
        $region82: #{discriminator_forward.5} parent=69 // pred_fallthru
          _
        %p2615 = scmp.lt.s32.totalorder %s19, 0
        %s2616 = scalar_select %p2615, %s19, 0
        %s2617 = smul.addr %s2616, 4
        %s2618 = scalar_lea.vmem %s4, %s2617
        // Predicated region
        $region83: #{discriminator_forward.5} parent=69 // pred_check
          %p2619 = pneg %p151
        $region84: #{discriminator_forward.5} parent=69 // pred_check_branch
          %2621 = sbr.rel (%p2619) target = $region86
        $region85: #{discriminator_forward.5} parent=69 // pred_region
          _
        $region86: #{discriminator_forward.5} parent=69 // pred_fallthru
          _
        // Predicated region
        $region87: #{discriminator_forward.5} parent=69 // pred_check
          %p2622 = pneg %p151
        $region88: #{discriminator_forward.5} parent=69 // pred_check_branch
          %2624 = sbr.rel (%p2622) target = $region90
        $region89: #{discriminator_forward.5} parent=69 // pred_region
          %p2625 = scmp.lt.s32.totalorder %s19, 0
          %s2626 = scalar_select %p2625, %s19, 0
          %s2627 = smul.addr %s2626, 4
          %s2628 = scalar_lea.vmem %s4, %s2627
        $region90: #{discriminator_forward.5} parent=69 // pred_fallthru
          _
      $region70: #{discriminator_forward.5} parent=5 // pred_fallthru
        _
      %p2629 = scmp.le.s32.totalorder 2, %s10
      // Predicated region
      $region91: #{discriminator_forward.5} parent=5 // pred_check
        %p2630 = pneg %p2629
      $region92: #{discriminator_forward.5} parent=5 // pred_check_branch
        %2632 = sbr.rel (%p2630) target = $region94
      $region93: #{discriminator_forward.5} parent=5 // pred_region
        %s2633 = ssub.s32 %s10, 2
      $region94: #{discriminator_forward.5} parent=5 // pred_fallthru
        _
    $region6: #{discriminator_forward.5} parent=1 // loop_footer
      %s14 = sadd.s32 1, %s10
    $region7: #{discriminator_forward.5} parent=1 // loop_footer_branch
      %9 = sbr.rel target = $region3
    $region8: #{discriminator_forward.5} parent=1 // loop_exit
      _

// kernel: discriminator_forward.6
$region0: #{discriminator_forward.6}
  #allocation0 [shape = 'u32[]', space=smem, size = 0x4, offset = 0x4, fixed_abs, tag = 'smem constant byte address 0x4 - core index']
  #allocation1 [shape = 'u32[144,128]{1,0:T(1,128)}', space=vmem, size = 0x12000, scoped, tag = 'internal scratch']
  #allocation2 [shape = 'f32[128,128]{1,0:T(8,128)}', space=vmem, size = 0x10000, scoped, tag = 'scratch operand']
  %s0 = inlined_call_operand.vmem [shape: bf16[128,2048], index: 0, kind: input, shape index: {}]
  %s1 = inlined_call_operand.vmem [shape: bf16[2048,256], index: 1, kind: input, shape index: {}]
  %s2 = inlined_call_operand.vmem [shape: f32[1,256], index: 2, kind: input, shape index: {}]
  %s3 = inlined_call_operand.vmem [shape: f32[1,256], index: 3, kind: input, shape index: {}]
  %s4 = inlined_call_operand.vmem [shape: bf16[128,256], index: 4, kind: output, shape index: {}]
  %s5 = sld [smem:[#allocation0]]
  $region173: #{discriminator_forward.6} parent=0
    _
  %s7 = ssub.s32 1, %s5
  %s8 = scalar_select 0, %s7, %s5
  $region1: #{discriminator_forward.6} parent=0
    #allocation3 [shape = 'u8[131072]{0}', space=vmem, size = 0x20000, scoped, tag = 'input window, operand 0']
    #allocation4 [shape = 'u8[131072]{0}', space=vmem, size = 0x20000, scoped, tag = 'input window, operand 1']
    #allocation5 [shape = 'u8[65536]{0}', space=vmem, size = 0x10000, scoped, tag = 'output window, operand 0']
    loop: start=0, step=1, limit=18
    $region2: #{discriminator_forward.6} parent=1 // loop_pre_header
      _
    $region3: #{discriminator_forward.6} parent=1 // loop_header
      %s10 = sphi 0, %s14
      %p11 = scmp.ge.s32.totalorder %s10, 18
      %s17 = sphi 0, %s29
      %s18 = sphi 0, %s25
      %s19 = sphi 0, %s17
      %s20 = sphi 0, %s18
      %s21 = sphi 0, %s19
      %s22 = sphi 0, %s20
      %s32 = sphi 0, %s34
      %s35 = sphi 0, %s32
      %s36 = sphi 0, %s35
      %s52 = sphi 0, %s36
      %s60 = sphi 0, %s62
      %s63 = sphi 0, %s60
      %s64 = sphi 0, %s63
      %s80 = sphi 0, %s64
      %s86 = sphi 0, %s88
      %s89 = sphi 0, %s86
      %s90 = sphi 0, %s89
      %s106 = sphi 0, %s90
      %s112 = sphi 0, %s114
      %s115 = sphi 0, %s112
      %s116 = sphi 0, %s115
      %s132 = sphi 0, %s116
      %s138 = sphi 0, %s140
      %s141 = sphi 0, %s138
      %s142 = sphi 0, %s141
      %s158 = sphi 0, %s142
    $region4: #{discriminator_forward.6} parent=1 // loop_header_branch
      %13 = sbr.rel (%p11) target = $region8
    $region5: #{discriminator_forward.6} parent=1 // loop_body
      %s15 = ssub.s32 %s10, 1
      %s16 = ssub.s32 %s10, 2
      %s23 = sadd.s32 1, %s18
      %p24 = scmp.ge.s32.totalorder %s23, 8
      %s25 = scalar_select %p24, 0, %s23
      %s26 = sadd.s32 1, %s17
      %s27 = scalar_select %p24, %s26, %s17
      %p28 = scmp.ge.s32.totalorder %s27, 2
      %s29 = scalar_select %p28, 0, %s27
      %s30 = ssub.s32 %s18, %s25
      %p31 = scmp.eq.s32.totalorder %s30, 0
      %s33 = sadd.s32 %s32, 1
      %s34 = scalar_select %p31, %s32, %s33
      %p37 = pneg %p31
      %p38 = scmp.eq.s32.totalorder %s10, 15
      %p39 = por %p37, %p38
      %p40 = scmp.ne.s32.totalorder %s32, %s35
      %p41 = scmp.eq.s32.totalorder %s10, 0
      %p42 = por %p40, %p41
      %p43 = scmp.ne.s32.totalorder %s32, %s35
      %p44 = scmp.eq.s32.totalorder %s15, 15
      %p45 = por %p43, %p44
      %p46 = scmp.ne.s32.totalorder %s35, %s36
      %p47 = scmp.eq.s32.totalorder %s15, 0
      %p48 = por %p46, %p47
      %p49 = scmp.ne.s32.totalorder %s35, %s36
      %p50 = scmp.eq.s32.totalorder %s16, 15
      %p51 = por %p49, %p50
      %p53 = scmp.ne.s32.totalorder %s36, %s52
      %p54 = scmp.eq.s32.totalorder %s16, 0
      %p55 = por %p53, %p54
      %s56 = ssub.s32 %s18, %s25
      %s57 = ssub.s32 %s17, %s29
      %s58 = sor.u32 %s56, %s57
      %p59 = scmp.eq.s32.totalorder %s58, 0
      %s61 = sadd.s32 %s60, 1
      %s62 = scalar_select %p59, %s60, %s61
      %p65 = pneg %p59
      %p66 = scmp.eq.s32.totalorder %s10, 15
      %p67 = por %p65, %p66
      %p68 = scmp.ne.s32.totalorder %s60, %s63
      %p69 = scmp.eq.s32.totalorder %s10, 0
      %p70 = por %p68, %p69
      %p71 = scmp.ne.s32.totalorder %s60, %s63
      %p72 = scmp.eq.s32.totalorder %s15, 15
      %p73 = por %p71, %p72
      %p74 = scmp.ne.s32.totalorder %s63, %s64
      %p75 = scmp.eq.s32.totalorder %s15, 0
      %p76 = por %p74, %p75
      %p77 = scmp.ne.s32.totalorder %s63, %s64
      %p78 = scmp.eq.s32.totalorder %s16, 15
      %p79 = por %p77, %p78
      %p81 = scmp.ne.s32.totalorder %s64, %s80
      %p82 = scmp.eq.s32.totalorder %s16, 0
      %p83 = por %p81, %p82
      %s84 = ssub.s32 %s17, %s29
      %p85 = scmp.eq.s32.totalorder %s84, 0
      %s87 = sadd.s32 %s86, 1
      %s88 = scalar_select %p85, %s86, %s87
      %p91 = pneg %p85
      %p92 = scmp.eq.s32.totalorder %s10, 15
      %p93 = por %p91, %p92
      %p94 = scmp.ne.s32.totalorder %s86, %s89
      %p95 = scmp.eq.s32.totalorder %s10, 0
      %p96 = por %p94, %p95
      %p97 = scmp.ne.s32.totalorder %s86, %s89
      %p98 = scmp.eq.s32.totalorder %s15, 15
      %p99 = por %p97, %p98
      %p100 = scmp.ne.s32.totalorder %s89, %s90
      %p101 = scmp.eq.s32.totalorder %s15, 0
      %p102 = por %p100, %p101
      %p103 = scmp.ne.s32.totalorder %s89, %s90
      %p104 = scmp.eq.s32.totalorder %s16, 15
      %p105 = por %p103, %p104
      %p107 = scmp.ne.s32.totalorder %s90, %s106
      %p108 = scmp.eq.s32.totalorder %s16, 0
      %p109 = por %p107, %p108
      %s110 = ssub.s32 %s17, %s29
      %p111 = scmp.eq.s32.totalorder %s110, 0
      %s113 = sadd.s32 %s112, 1
      %s114 = scalar_select %p111, %s112, %s113
      %p117 = pneg %p111
      %p118 = scmp.eq.s32.totalorder %s10, 15
      %p119 = por %p117, %p118
      %p120 = scmp.ne.s32.totalorder %s112, %s115
      %p121 = scmp.eq.s32.totalorder %s10, 0
      %p122 = por %p120, %p121
      %p123 = scmp.ne.s32.totalorder %s112, %s115
      %p124 = scmp.eq.s32.totalorder %s15, 15
      %p125 = por %p123, %p124
      %p126 = scmp.ne.s32.totalorder %s115, %s116
      %p127 = scmp.eq.s32.totalorder %s15, 0
      %p128 = por %p126, %p127
      %p129 = scmp.ne.s32.totalorder %s115, %s116
      %p130 = scmp.eq.s32.totalorder %s16, 15
      %p131 = por %p129, %p130
      %p133 = scmp.ne.s32.totalorder %s116, %s132
      %p134 = scmp.eq.s32.totalorder %s16, 0
      %p135 = por %p133, %p134
      %s136 = ssub.s32 %s17, %s29
      %p137 = scmp.eq.s32.totalorder %s136, 0
      %s139 = sadd.s32 %s138, 1
      %s140 = scalar_select %p137, %s138, %s139
      %p143 = pneg %p137
      %p144 = scmp.eq.s32.totalorder %s10, 15
      %p145 = por %p143, %p144
      %p146 = scmp.ne.s32.totalorder %s138, %s141
      %p147 = scmp.eq.s32.totalorder %s10, 0
      %p148 = por %p146, %p147
      %p149 = scmp.ne.s32.totalorder %s138, %s141
      %p150 = scmp.eq.s32.totalorder %s15, 15
      %p151 = por %p149, %p150
      %p152 = scmp.ne.s32.totalorder %s141, %s142
      %p153 = scmp.eq.s32.totalorder %s15, 0
      %p154 = por %p152, %p153
      %p155 = scmp.ne.s32.totalorder %s141, %s142
      %p156 = scmp.eq.s32.totalorder %s16, 15
      %p157 = por %p155, %p156
      %p159 = scmp.ne.s32.totalorder %s142, %s158
      %p160 = scmp.eq.s32.totalorder %s16, 0
      %p161 = por %p159, %p160
      %p162 = scmp.le.s32.totalorder 1, %s10
      %p163 = scmp.lt.s32.totalorder %s10, 17
      %p164 = pnand %p162, %p163
      %p165 = pneg %p164
      // Predicated region
      $region9: #{discriminator_forward.6} parent=5 // pred_check
        _
      $region10: #{discriminator_forward.6} parent=5 // pred_check_branch
        %167 = sbr.rel (%p164) target = $region12
      $region11: #{discriminator_forward.6} parent=5 // pred_region
        %s168 = ssub.s32 %s10, 1
      $region12: #{discriminator_forward.6} parent=5 // pred_fallthru
        _
      %p169 = scmp.lt.s32.totalorder %s10, 16
      // Predicated region
      $region13: #{discriminator_forward.6} parent=5 // pred_check
        %p170 = pneg %p169
      $region14: #{discriminator_forward.6} parent=5 // pred_check_branch
        %172 = sbr.rel (%p170) target = $region16
      $region15: #{discriminator_forward.6} parent=5 // pred_region
        // Predicated region
        $region17: #{discriminator_forward.6} parent=15 // pred_check
          %p173 = pneg %p42
        $region18: #{discriminator_forward.6} parent=15 // pred_check_branch
          %175 = sbr.rel (%p173) target = $region20
        $region19: #{discriminator_forward.6} parent=15 // pred_region
          %s176 = sand.u32 %s32, 1
          %s177 = sand.u32 %s32, 1
          %s178 = smul.addr %s177, 128
          %s179 = scalar_lea.vmem [#allocation3], %s178
          %s180 = smul.u32 2, %s18
          %s181 = smul.addr %s180, 4
          %s182 = scalar_lea.vmem %s0, %s181
          // Predicated region
          $region21: #{discriminator_forward.6} parent=19 // pred_check
            _
          $region22: #{discriminator_forward.6} parent=19 // pred_check_branch
            %184 = sbr.rel (0) target = $region24
          $region23: #{discriminator_forward.6} parent=19 // pred_region
            // Predicated region
            $region25: #{discriminator_forward.6} parent=23 // pred_check
              _
            $region26: #{discriminator_forward.6} parent=23 // pred_check_branch
              %186 = sbr.rel (0) target = $region28
            $region27: #{discriminator_forward.6} parent=23 // pred_region
              // Predicated region
              $region40: #{discriminator_forward.6} parent=27 // pred_check
                _
              $region41: #{discriminator_forward.6} parent=27 // pred_check_branch
                %232 = sbr.rel (0) target = $region43
              $region42: #{discriminator_forward.6} parent=27 // pred_region
                loop: start=0, step=1, limit=1
                $region44: #{discriminator_forward.6} parent=42 // loop_pre_header
                  _
                $region45: #{discriminator_forward.6} parent=42 // loop_header
                  %s234 = sphi 0, %s238
                  %p235 = scmp.ge.s32.totalorder %s234, 1
                  %s239 = sphi %s182, %s182
                  %s240 = sphi %s179, %s179
                $region46: #{discriminator_forward.6} parent=42 // loop_header_branch
                  %237 = sbr.rel (%p235) target = $region50
                $region47: #{discriminator_forward.6} parent=42 // loop_body
                  %v241 = vld [vmem:[%s239] sm:$0xff]
                  %242 = vst [vmem:[%s240] sm:$0xff] %v241
                  %v243 = vld [vmem:[%s239 + $0x40] sm:$0xff]
                  %244 = vst [vmem:[%s240 + $0x8] sm:$0xff] %v243
                  %v245 = vld [vmem:[%s239 + $0x80] sm:$0xff]
                  %246 = vst [vmem:[%s240 + $0x10] sm:$0xff] %v245
                  %v247 = vld [vmem:[%s239 + $0xc0] sm:$0xff]
                  %248 = vst [vmem:[%s240 + $0x18] sm:$0xff] %v247
                  %v249 = vld [vmem:[%s239 + $0x100] sm:$0xff]
                  %250 = vst [vmem:[%s240 + $0x20] sm:$0xff] %v249
                  %v251 = vld [vmem:[%s239 + $0x140] sm:$0xff]
                  %252 = vst [vmem:[%s240 + $0x28] sm:$0xff] %v251
                  %v253 = vld [vmem:[%s239 + $0x180] sm:$0xff]
                  %254 = vst [vmem:[%s240 + $0x30] sm:$0xff] %v253
                  %v255 = vld [vmem:[%s239 + $0x1c0] sm:$0xff]
                  %256 = vst [vmem:[%s240 + $0x38] sm:$0xff] %v255
                  %v257 = vld [vmem:[%s239 + $0x200] sm:$0xff]
                  %258 = vst [vmem:[%s240 + $0x40] sm:$0xff] %v257
                  %v259 = vld [vmem:[%s239 + $0x240] sm:$0xff]
                  %260 = vst [vmem:[%s240 + $0x48] sm:$0xff] %v259
                  %v261 = vld [vmem:[%s239 + $0x280] sm:$0xff]
                  %262 = vst [vmem:[%s240 + $0x50] sm:$0xff] %v261
                  %v263 = vld [vmem:[%s239 + $0x2c0] sm:$0xff]
                  %264 = vst [vmem:[%s240 + $0x58] sm:$0xff] %v263
                  %v265 = vld [vmem:[%s239 + $0x300] sm:$0xff]
                  %266 = vst [vmem:[%s240 + $0x60] sm:$0xff] %v265
                  %v267 = vld [vmem:[%s239 + $0x340] sm:$0xff]
                  %268 = vst [vmem:[%s240 + $0x68] sm:$0xff] %v267
                  %v269 = vld [vmem:[%s239 + $0x380] sm:$0xff]
                  %270 = vst [vmem:[%s240 + $0x70] sm:$0xff] %v269
                  %v271 = vld [vmem:[%s239 + $0x3c0] sm:$0xff]
                  %272 = vst [vmem:[%s240 + $0x78] sm:$0xff] %v271
                $region48: #{discriminator_forward.6} parent=42 // loop_footer
                  %s238 = sadd.s32 1, %s234
                $region49: #{discriminator_forward.6} parent=42 // loop_footer_branch
                  %233 = sbr.rel target = $region45
                $region50: #{discriminator_forward.6} parent=42 // loop_exit
                  _
              $region43: #{discriminator_forward.6} parent=27 // pred_fallthru
                _
              // Predicated region
              $region51: #{discriminator_forward.6} parent=27 // pred_check
                _
              $region52: #{discriminator_forward.6} parent=27 // pred_check_branch
                %274 = sbr.rel target = $region54
              $region53: #{discriminator_forward.6} parent=27 // pred_region
                _
              $region54: #{discriminator_forward.6} parent=27 // pred_fallthru
                _
            $region28: #{discriminator_forward.6} parent=23 // pred_fallthru
              _
            // Predicated region
            $region29: #{discriminator_forward.6} parent=23 // pred_check
              _
            $region30: #{discriminator_forward.6} parent=23 // pred_check_branch
              %188 = sbr.rel target = $region32
            $region31: #{discriminator_forward.6} parent=23 // pred_region
              %s190 = ssub.s32 256, 1
              loop: start=0, step=1, limit=1
              $region33: #{discriminator_forward.6} parent=31 // loop_pre_header
                _
              $region34: #{discriminator_forward.6} parent=31 // loop_header
                %s192 = sphi 0, %s196
                %p193 = scmp.ge.s32.totalorder %s192, 1
                %s197 = sphi %s182, %s182
                %s198 = sphi %s179, %s179
              $region35: #{discriminator_forward.6} parent=31 // loop_header_branch
                %195 = sbr.rel (%p193) target = $region39
              $region36: #{discriminator_forward.6} parent=31 // loop_body
                %v199 = vld [vmem:[%s197] sm:%s190]
                %200 = vst [vmem:[%s198] sm:%s190] %v199
                %v201 = vld [vmem:[%s197 + $0x40] sm:%s190]
                %202 = vst [vmem:[%s198 + $0x8] sm:%s190] %v201
                %v203 = vld [vmem:[%s197 + $0x80] sm:%s190]
                %204 = vst [vmem:[%s198 + $0x10] sm:%s190] %v203
                %v205 = vld [vmem:[%s197 + $0xc0] sm:%s190]
                %206 = vst [vmem:[%s198 + $0x18] sm:%s190] %v205
                %v207 = vld [vmem:[%s197 + $0x100] sm:%s190]
                %208 = vst [vmem:[%s198 + $0x20] sm:%s190] %v207
                %v209 = vld [vmem:[%s197 + $0x140] sm:%s190]
                %210 = vst [vmem:[%s198 + $0x28] sm:%s190] %v209
                %v211 = vld [vmem:[%s197 + $0x180] sm:%s190]
                %212 = vst [vmem:[%s198 + $0x30] sm:%s190] %v211
                %v213 = vld [vmem:[%s197 + $0x1c0] sm:%s190]
                %214 = vst [vmem:[%s198 + $0x38] sm:%s190] %v213
                %v215 = vld [vmem:[%s197 + $0x200] sm:%s190]
                %216 = vst [vmem:[%s198 + $0x40] sm:%s190] %v215
                %v217 = vld [vmem:[%s197 + $0x240] sm:%s190]
                %218 = vst [vmem:[%s198 + $0x48] sm:%s190] %v217
                %v219 = vld [vmem:[%s197 + $0x280] sm:%s190]
                %220 = vst [vmem:[%s198 + $0x50] sm:%s190] %v219
                %v221 = vld [vmem:[%s197 + $0x2c0] sm:%s190]
                %222 = vst [vmem:[%s198 + $0x58] sm:%s190] %v221
                %v223 = vld [vmem:[%s197 + $0x300] sm:%s190]
                %224 = vst [vmem:[%s198 + $0x60] sm:%s190] %v223
                %v225 = vld [vmem:[%s197 + $0x340] sm:%s190]
                %226 = vst [vmem:[%s198 + $0x68] sm:%s190] %v225
                %v227 = vld [vmem:[%s197 + $0x380] sm:%s190]
                %228 = vst [vmem:[%s198 + $0x70] sm:%s190] %v227
                %v229 = vld [vmem:[%s197 + $0x3c0] sm:%s190]
                %230 = vst [vmem:[%s198 + $0x78] sm:%s190] %v229
              $region37: #{discriminator_forward.6} parent=31 // loop_footer
                %s196 = sadd.s32 1, %s192
              $region38: #{discriminator_forward.6} parent=31 // loop_footer_branch
                %191 = sbr.rel target = $region34
              $region39: #{discriminator_forward.6} parent=31 // loop_exit
                _
            $region32: #{discriminator_forward.6} parent=23 // pred_fallthru
              _
          $region24: #{discriminator_forward.6} parent=19 // pred_fallthru
            _
          %275 = vnop
        $region20: #{discriminator_forward.6} parent=15 // pred_fallthru
          _
        // Predicated region
        $region55: #{discriminator_forward.6} parent=15 // pred_check
          %p276 = pneg %p70
        $region56: #{discriminator_forward.6} parent=15 // pred_check_branch
          %278 = sbr.rel (%p276) target = $region58
        $region57: #{discriminator_forward.6} parent=15 // pred_region
          %s279 = sand.u32 %s60, 1
          %s280 = sand.u32 %s60, 1
          %s281 = smul.addr %s280, 128
          %s282 = scalar_lea.vmem [#allocation4], %s281
          %s283 = smul.u32 32, %s18
          %s284 = smul.addr %s283, 2
          %s285 = sadd.s32 %s17, %s284
          %s286 = smul.addr %s285, 4
          %s287 = scalar_lea.vmem %s1, %s286
          // Predicated region
          $region59: #{discriminator_forward.6} parent=57 // pred_check
            _
          $region60: #{discriminator_forward.6} parent=57 // pred_check_branch
            %289 = sbr.rel (0) target = $region62
          $region61: #{discriminator_forward.6} parent=57 // pred_region
            // Predicated region
            $region63: #{discriminator_forward.6} parent=61 // pred_check
              _
            $region64: #{discriminator_forward.6} parent=61 // pred_check_branch
              %291 = sbr.rel target = $region66
            $region65: #{discriminator_forward.6} parent=61 // pred_region
              // Predicated region
              $region78: #{discriminator_forward.6} parent=65 // pred_check
                _
              $region79: #{discriminator_forward.6} parent=65 // pred_check_branch
                %369 = sbr.rel (0) target = $region81
              $region80: #{discriminator_forward.6} parent=65 // pred_region
                loop: start=0, step=1, limit=1
                $region82: #{discriminator_forward.6} parent=80 // loop_pre_header
                  _
                $region83: #{discriminator_forward.6} parent=80 // loop_header
                  %s371 = sphi 0, %s375
                  %p372 = scmp.ge.s32.totalorder %s371, 1
                  %s376 = sphi %s287, %s287
                  %s377 = sphi %s282, %s282
                $region84: #{discriminator_forward.6} parent=80 // loop_header_branch
                  %374 = sbr.rel (%p372) target = $region88
                $region85: #{discriminator_forward.6} parent=80 // loop_body
                  _
                $region86: #{discriminator_forward.6} parent=80 // loop_footer
                  %s375 = sadd.s32 1, %s371
                $region87: #{discriminator_forward.6} parent=80 // loop_footer_branch
                  %370 = sbr.rel target = $region83
                $region88: #{discriminator_forward.6} parent=80 // loop_exit
                  _
                %s379 = ssub.s32 16, 1
                loop: start=0, step=1, limit=1
                $region89: #{discriminator_forward.6} parent=80 // loop_pre_header
                  _
                $region90: #{discriminator_forward.6} parent=80 // loop_header
                  %s381 = sphi 0, %s385
                  %p382 = scmp.ge.s32.totalorder %s381, 1
                  %s386 = sphi %s287, %s287
                  %s387 = sphi %s282, %s282
                $region91: #{discriminator_forward.6} parent=80 // loop_header_branch
                  %384 = sbr.rel (%p382) target = $region95
                $region92: #{discriminator_forward.6} parent=80 // loop_body
                  %v388 = vld [vmem:[%s386] sm:%s379]
                  %389 = vst [vmem:[%s387] sm:%s379] %v388
                  %v390 = vld [vmem:[%s386 + $0x8] sm:%s379]
                  %391 = vst [vmem:[%s387 + $0x4] sm:%s379] %v390
                  %v392 = vld [vmem:[%s386 + $0x10] sm:%s379]
                  %393 = vst [vmem:[%s387 + $0x8] sm:%s379] %v392
                  %v394 = vld [vmem:[%s386 + $0x18] sm:%s379]
                  %395 = vst [vmem:[%s387 + $0xc] sm:%s379] %v394
                  %v396 = vld [vmem:[%s386 + $0x20] sm:%s379]
                  %397 = vst [vmem:[%s387 + $0x10] sm:%s379] %v396
                  %v398 = vld [vmem:[%s386 + $0x28] sm:%s379]
                  %399 = vst [vmem:[%s387 + $0x14] sm:%s379] %v398
                  %v400 = vld [vmem:[%s386 + $0x30] sm:%s379]
                  %401 = vst [vmem:[%s387 + $0x18] sm:%s379] %v400
                  %v402 = vld [vmem:[%s386 + $0x38] sm:%s379]
                  %403 = vst [vmem:[%s387 + $0x1c] sm:%s379] %v402
                  %v404 = vld [vmem:[%s386 + $0x40] sm:%s379]
                  %405 = vst [vmem:[%s387 + $0x20] sm:%s379] %v404
                  %v406 = vld [vmem:[%s386 + $0x48] sm:%s379]
                  %407 = vst [vmem:[%s387 + $0x24] sm:%s379] %v406
                  %v408 = vld [vmem:[%s386 + $0x50] sm:%s379]
                  %409 = vst [vmem:[%s387 + $0x28] sm:%s379] %v408
                  %v410 = vld [vmem:[%s386 + $0x58] sm:%s379]
                  %411 = vst [vmem:[%s387 + $0x2c] sm:%s379] %v410
                  %v412 = vld [vmem:[%s386 + $0x60] sm:%s379]
                  %413 = vst [vmem:[%s387 + $0x30] sm:%s379] %v412
                  %v414 = vld [vmem:[%s386 + $0x68] sm:%s379]
                  %415 = vst [vmem:[%s387 + $0x34] sm:%s379] %v414
                  %v416 = vld [vmem:[%s386 + $0x70] sm:%s379]
                  %417 = vst [vmem:[%s387 + $0x38] sm:%s379] %v416
                  %v418 = vld [vmem:[%s386 + $0x78] sm:%s379]
                  %419 = vst [vmem:[%s387 + $0x3c] sm:%s379] %v418
                  %v420 = vld [vmem:[%s386 + $0x80] sm:%s379]
                  %421 = vst [vmem:[%s387 + $0x40] sm:%s379] %v420
                  %v422 = vld [vmem:[%s386 + $0x88] sm:%s379]
                  %423 = vst [vmem:[%s387 + $0x44] sm:%s379] %v422
                  %v424 = vld [vmem:[%s386 + $0x90] sm:%s379]
                  %425 = vst [vmem:[%s387 + $0x48] sm:%s379] %v424
                  %v426 = vld [vmem:[%s386 + $0x98] sm:%s379]
                  %427 = vst [vmem:[%s387 + $0x4c] sm:%s379] %v426
                  %v428 = vld [vmem:[%s386 + $0xa0] sm:%s379]
                  %429 = vst [vmem:[%s387 + $0x50] sm:%s379] %v428
                  %v430 = vld [vmem:[%s386 + $0xa8] sm:%s379]
                  %431 = vst [vmem:[%s387 + $0x54] sm:%s379] %v430
                  %v432 = vld [vmem:[%s386 + $0xb0] sm:%s379]
                  %433 = vst [vmem:[%s387 + $0x58] sm:%s379] %v432
                  %v434 = vld [vmem:[%s386 + $0xb8] sm:%s379]
                  %435 = vst [vmem:[%s387 + $0x5c] sm:%s379] %v434
                  %v436 = vld [vmem:[%s386 + $0xc0] sm:%s379]
                  %437 = vst [vmem:[%s387 + $0x60] sm:%s379] %v436
                  %v438 = vld [vmem:[%s386 + $0xc8] sm:%s379]
                  %439 = vst [vmem:[%s387 + $0x64] sm:%s379] %v438
                  %v440 = vld [vmem:[%s386 + $0xd0] sm:%s379]
                  %441 = vst [vmem:[%s387 + $0x68] sm:%s379] %v440
                  %v442 = vld [vmem:[%s386 + $0xd8] sm:%s379]
                  %443 = vst [vmem:[%s387 + $0x6c] sm:%s379] %v442
                  %v444 = vld [vmem:[%s386 + $0xe0] sm:%s379]
                  %445 = vst [vmem:[%s387 + $0x70] sm:%s379] %v444
                  %v446 = vld [vmem:[%s386 + $0xe8] sm:%s379]
                  %447 = vst [vmem:[%s387 + $0x74] sm:%s379] %v446
                  %v448 = vld [vmem:[%s386 + $0xf0] sm:%s379]
                  %449 = vst [vmem:[%s387 + $0x78] sm:%s379] %v448
                  %v450 = vld [vmem:[%s386 + $0xf8] sm:%s379]
                  %451 = vst [vmem:[%s387 + $0x7c] sm:%s379] %v450
                $region93: #{discriminator_forward.6} parent=80 // loop_footer
                  %s385 = sadd.s32 1, %s381
                $region94: #{discriminator_forward.6} parent=80 // loop_footer_branch
                  %380 = sbr.rel target = $region90
                $region95: #{discriminator_forward.6} parent=80 // loop_exit
                  _
              $region81: #{discriminator_forward.6} parent=65 // pred_fallthru
                _
            $region66: #{discriminator_forward.6} parent=61 // pred_fallthru
              _
            // Predicated region
            $region67: #{discriminator_forward.6} parent=61 // pred_check
              _
            $region68: #{discriminator_forward.6} parent=61 // pred_check_branch
              %293 = sbr.rel (0) target = $region70
            $region69: #{discriminator_forward.6} parent=61 // pred_region
              %s295 = ssub.s32 16, 1
              loop: start=0, step=1, limit=1
              $region71: #{discriminator_forward.6} parent=69 // loop_pre_header
                _
              $region72: #{discriminator_forward.6} parent=69 // loop_header
                %s297 = sphi 0, %s301
                %p298 = scmp.ge.s32.totalorder %s297, 1
                %s302 = sphi %s287, %s287
                %s303 = sphi %s282, %s282
              $region73: #{discriminator_forward.6} parent=69 // loop_header_branch
                %300 = sbr.rel (%p298) target = $region77
              $region74: #{discriminator_forward.6} parent=69 // loop_body
                %v304 = vld [vmem:[%s302] sm:%s295]
                %305 = vst [vmem:[%s303] sm:%s295] %v304
                %v306 = vld [vmem:[%s302 + $0x8] sm:%s295]
                %307 = vst [vmem:[%s303 + $0x4] sm:%s295] %v306
                %v308 = vld [vmem:[%s302 + $0x10] sm:%s295]
                %309 = vst [vmem:[%s303 + $0x8] sm:%s295] %v308
                %v310 = vld [vmem:[%s302 + $0x18] sm:%s295]
                %311 = vst [vmem:[%s303 + $0xc] sm:%s295] %v310
                %v312 = vld [vmem:[%s302 + $0x20] sm:%s295]
                %313 = vst [vmem:[%s303 + $0x10] sm:%s295] %v312
                %v314 = vld [vmem:[%s302 + $0x28] sm:%s295]
                %315 = vst [vmem:[%s303 + $0x14] sm:%s295] %v314
                %v316 = vld [vmem:[%s302 + $0x30] sm:%s295]
                %317 = vst [vmem:[%s303 + $0x18] sm:%s295] %v316
                %v318 = vld [vmem:[%s302 + $0x38] sm:%s295]
                %319 = vst [vmem:[%s303 + $0x1c] sm:%s295] %v318
                %v320 = vld [vmem:[%s302 + $0x40] sm:%s295]
                %321 = vst [vmem:[%s303 + $0x20] sm:%s295] %v320
                %v322 = vld [vmem:[%s302 + $0x48] sm:%s295]
                %323 = vst [vmem:[%s303 + $0x24] sm:%s295] %v322
                %v324 = vld [vmem:[%s302 + $0x50] sm:%s295]
                %325 = vst [vmem:[%s303 + $0x28] sm:%s295] %v324
                %v326 = vld [vmem:[%s302 + $0x58] sm:%s295]
                %327 = vst [vmem:[%s303 + $0x2c] sm:%s295] %v326
                %v328 = vld [vmem:[%s302 + $0x60] sm:%s295]
                %329 = vst [vmem:[%s303 + $0x30] sm:%s295] %v328
                %v330 = vld [vmem:[%s302 + $0x68] sm:%s295]
                %331 = vst [vmem:[%s303 + $0x34] sm:%s295] %v330
                %v332 = vld [vmem:[%s302 + $0x70] sm:%s295]
                %333 = vst [vmem:[%s303 + $0x38] sm:%s295] %v332
                %v334 = vld [vmem:[%s302 + $0x78] sm:%s295]
                %335 = vst [vmem:[%s303 + $0x3c] sm:%s295] %v334
                %v336 = vld [vmem:[%s302 + $0x80] sm:%s295]
                %337 = vst [vmem:[%s303 + $0x40] sm:%s295] %v336
                %v338 = vld [vmem:[%s302 + $0x88] sm:%s295]
                %339 = vst [vmem:[%s303 + $0x44] sm:%s295] %v338
                %v340 = vld [vmem:[%s302 + $0x90] sm:%s295]
                %341 = vst [vmem:[%s303 + $0x48] sm:%s295] %v340
                %v342 = vld [vmem:[%s302 + $0x98] sm:%s295]
                %343 = vst [vmem:[%s303 + $0x4c] sm:%s295] %v342
                %v344 = vld [vmem:[%s302 + $0xa0] sm:%s295]
                %345 = vst [vmem:[%s303 + $0x50] sm:%s295] %v344
                %v346 = vld [vmem:[%s302 + $0xa8] sm:%s295]
                %347 = vst [vmem:[%s303 + $0x54] sm:%s295] %v346
                %v348 = vld [vmem:[%s302 + $0xb0] sm:%s295]
                %349 = vst [vmem:[%s303 + $0x58] sm:%s295] %v348
                %v350 = vld [vmem:[%s302 + $0xb8] sm:%s295]
                %351 = vst [vmem:[%s303 + $0x5c] sm:%s295] %v350
                %v352 = vld [vmem:[%s302 + $0xc0] sm:%s295]
                %353 = vst [vmem:[%s303 + $0x60] sm:%s295] %v352
                %v354 = vld [vmem:[%s302 + $0xc8] sm:%s295]
                %355 = vst [vmem:[%s303 + $0x64] sm:%s295] %v354
                %v356 = vld [vmem:[%s302 + $0xd0] sm:%s295]
                %357 = vst [vmem:[%s303 + $0x68] sm:%s295] %v356
                %v358 = vld [vmem:[%s302 + $0xd8] sm:%s295]
                %359 = vst [vmem:[%s303 + $0x6c] sm:%s295] %v358
                %v360 = vld [vmem:[%s302 + $0xe0] sm:%s295]
                %361 = vst [vmem:[%s303 + $0x70] sm:%s295] %v360
                %v362 = vld [vmem:[%s302 + $0xe8] sm:%s295]
                %363 = vst [vmem:[%s303 + $0x74] sm:%s295] %v362
                %v364 = vld [vmem:[%s302 + $0xf0] sm:%s295]
                %365 = vst [vmem:[%s303 + $0x78] sm:%s295] %v364
                %v366 = vld [vmem:[%s302 + $0xf8] sm:%s295]
                %367 = vst [vmem:[%s303 + $0x7c] sm:%s295] %v366
              $region75: #{discriminator_forward.6} parent=69 // loop_footer
                %s301 = sadd.s32 1, %s297
              $region76: #{discriminator_forward.6} parent=69 // loop_footer_branch
                %296 = sbr.rel target = $region72
              $region77: #{discriminator_forward.6} parent=69 // loop_exit
                _
            $region70: #{discriminator_forward.6} parent=61 // pred_fallthru
              _
          $region62: #{discriminator_forward.6} parent=57 // pred_fallthru
            _
          %452 = vnop
        $region58: #{discriminator_forward.6} parent=15 // pred_fallthru
          _
        // Predicated region
        $region96: #{discriminator_forward.6} parent=15 // pred_check
          %p453 = pneg %p96
        $region97: #{discriminator_forward.6} parent=15 // pred_check_branch
          %455 = sbr.rel (%p453) target = $region99
        $region98: #{discriminator_forward.6} parent=15 // pred_region
          %p456 = scmp.lt.s32.totalorder %s17, 1
          %s457 = scalar_select %p456, %s17, 1
          %s458 = scalar_lea.vmem %s2, %s457
        $region99: #{discriminator_forward.6} parent=15 // pred_fallthru
          _
        // Predicated region
        $region100: #{discriminator_forward.6} parent=15 // pred_check
          %p459 = pneg %p122
        $region101: #{discriminator_forward.6} parent=15 // pred_check_branch
          %461 = sbr.rel (%p459) target = $region103
        $region102: #{discriminator_forward.6} parent=15 // pred_region
          %p462 = scmp.lt.s32.totalorder %s17, 1
          %s463 = scalar_select %p462, %s17, 1
          %s464 = scalar_lea.vmem %s3, %s463
        $region103: #{discriminator_forward.6} parent=15 // pred_fallthru
          _
      $region16: #{discriminator_forward.6} parent=5 // pred_fallthru
        _
      %p465 = scmp.le.s32.totalorder 1, %s10
      %p466 = scmp.lt.s32.totalorder %s10, 17
      %p467 = pnand %p465, %p466
      %p468 = pneg %p467
      // Predicated region
      $region104: #{discriminator_forward.6} parent=5 // pred_check
        _
      $region105: #{discriminator_forward.6} parent=5 // pred_check_branch
        %470 = sbr.rel (%p467) target = $region107
      $region106: #{discriminator_forward.6} parent=5 // pred_region
        %s471 = ssub.s32 %s10, 1
        %s472 = sand.u32 %s35, 1
        %s473 = sand.u32 %s35, 1
        %s474 = smul.addr %s473, 128
        %s475 = scalar_lea.vmem [#allocation3], %s474
        // Predicated region
        $region108: #{discriminator_forward.6} parent=106 // pred_check
          %p476 = pneg %p48
        $region109: #{discriminator_forward.6} parent=106 // pred_check_branch
          %478 = sbr.rel (%p476) target = $region111
        $region110: #{discriminator_forward.6} parent=106 // pred_region
          _
        $region111: #{discriminator_forward.6} parent=106 // pred_fallthru
          _
        %s479 = sand.u32 %s63, 1
        %s480 = sand.u32 %s63, 1
        %s481 = smul.addr %s480, 128
        %s482 = scalar_lea.vmem [#allocation4], %s481
        // Predicated region
        $region112: #{discriminator_forward.6} parent=106 // pred_check
          %p483 = pneg %p76
        $region113: #{discriminator_forward.6} parent=106 // pred_check_branch
          %485 = sbr.rel (%p483) target = $region115
        $region114: #{discriminator_forward.6} parent=106 // pred_region
          _
        $region115: #{discriminator_forward.6} parent=106 // pred_fallthru
          _
        %s486 = sand.u32 %s35, 1
        %s487 = sand.u32 %s35, 1
        %s488 = smul.addr %s487, 128
        %s489 = scalar_lea.vmem [#allocation3], %s488
        %p490 = pneg %p48
        %p491 = pneg %p45
        %s492 = sand.u32 %s63, 1
        %s493 = sand.u32 %s63, 1
        %s494 = smul.addr %s493, 128
        %s495 = scalar_lea.vmem [#allocation4], %s494
        %p496 = pneg %p76
        %p497 = pneg %p73
        %p498 = scmp.lt.s32.totalorder %s19, 1
        %s499 = scalar_select %p498, %s19, 1
        %s500 = scalar_lea.vmem %s2, %s499
        %p501 = pneg %p102
        %p502 = pneg %p99
        %p503 = scmp.lt.s32.totalorder %s19, 1
        %s504 = scalar_select %p503, %s19, 1
        %s505 = scalar_lea.vmem %s3, %s504
        %p506 = pneg %p128
        %p507 = pneg %p125
        %p508 = pneg %p154
        %p509 = pneg %p151
        %s510 = sand.u32 %s141, 1
        %s511 = sand.u32 %s141, 1
        %s512 = smul.addr %s511, 64
        %s513 = scalar_lea.vmem [#allocation5], %s512
        %s514 = smul.u32 2, %s20
        %s515 = smul.u32 32, %s20
        %p516 = scmp.lt.s32.totalorder %s19, 1
        %s517 = scalar_select %p516, %s19, 1
        %s518 = scalar_lea.vmem %s2, %s517
        %p519 = scmp.lt.s32.totalorder %s19, 1
        %s520 = scalar_select %p519, %s19, 1
        %s521 = scalar_lea.vmem %s3, %s520
        %p523 = scmp.eq.s32.totalorder %s20, 0
        // Predicated region
        $region116: #{discriminator_forward.6} parent=106 // pred_check
          %p524 = pneg %p523
        $region117: #{discriminator_forward.6} parent=106 // pred_check_branch
          %526 = sbr.rel (%p524) target = $region119
        $region118: #{discriminator_forward.6} parent=106 // pred_region
          %527 = vst [vmem:[#allocation2] sm:$0xff] 0.0
          %528 = vst [vmem:[#allocation2 + $0x8] sm:$0xff] 0.0
          %529 = vst [vmem:[#allocation2 + $0x10] sm:$0xff] 0.0
          %530 = vst [vmem:[#allocation2 + $0x18] sm:$0xff] 0.0
          %531 = vst [vmem:[#allocation2 + $0x20] sm:$0xff] 0.0
          %532 = vst [vmem:[#allocation2 + $0x28] sm:$0xff] 0.0
          %533 = vst [vmem:[#allocation2 + $0x30] sm:$0xff] 0.0
          %534 = vst [vmem:[#allocation2 + $0x38] sm:$0xff] 0.0
          %535 = vst [vmem:[#allocation2 + $0x40] sm:$0xff] 0.0
          %536 = vst [vmem:[#allocation2 + $0x48] sm:$0xff] 0.0
          %537 = vst [vmem:[#allocation2 + $0x50] sm:$0xff] 0.0
          %538 = vst [vmem:[#allocation2 + $0x58] sm:$0xff] 0.0
          %539 = vst [vmem:[#allocation2 + $0x60] sm:$0xff] 0.0
          %540 = vst [vmem:[#allocation2 + $0x68] sm:$0xff] 0.0
          %541 = vst [vmem:[#allocation2 + $0x70] sm:$0xff] 0.0
          %542 = vst [vmem:[#allocation2 + $0x78] sm:$0xff] 0.0
        $region119: #{discriminator_forward.6} parent=106 // pred_fallthru
          _
        %v543 = vld [vmem:[#allocation2] sm:$0xff]
        %v544 = vld [vmem:[#allocation2 + $0x8] sm:$0xff]
        %v545 = vld [vmem:[#allocation2 + $0x10] sm:$0xff]
        %v546 = vld [vmem:[#allocation2 + $0x18] sm:$0xff]
        %v547 = vld [vmem:[#allocation2 + $0x20] sm:$0xff]
        %v548 = vld [vmem:[#allocation2 + $0x28] sm:$0xff]
        %v549 = vld [vmem:[#allocation2 + $0x30] sm:$0xff]
        %v550 = vld [vmem:[#allocation2 + $0x38] sm:$0xff]
        %v551 = vld [vmem:[#allocation2 + $0x40] sm:$0xff]
        %v552 = vld [vmem:[#allocation2 + $0x48] sm:$0xff]
        %v553 = vld [vmem:[#allocation2 + $0x50] sm:$0xff]
        %v554 = vld [vmem:[#allocation2 + $0x58] sm:$0xff]
        %v555 = vld [vmem:[#allocation2 + $0x60] sm:$0xff]
        %v556 = vld [vmem:[#allocation2 + $0x68] sm:$0xff]
        %v557 = vld [vmem:[#allocation2 + $0x70] sm:$0xff]
        %v558 = vld [vmem:[#allocation2 + $0x78] sm:$0xff]
        %v559 = vld [vmem:[%s475] sm:$0xff]
        %v560 = vld [vmem:[%s475 + $0x8] sm:$0xff]
        %v561 = vld [vmem:[%s475 + $0x10] sm:$0xff]
        %v562 = vld [vmem:[%s475 + $0x18] sm:$0xff]
        %v563 = vld [vmem:[%s475 + $0x20] sm:$0xff]
        %v564 = vld [vmem:[%s475 + $0x28] sm:$0xff]
        %v565 = vld [vmem:[%s475 + $0x30] sm:$0xff]
        %v566 = vld [vmem:[%s475 + $0x38] sm:$0xff]
        %v567 = vld [vmem:[%s475 + $0x40] sm:$0xff]
        %v568 = vld [vmem:[%s475 + $0x48] sm:$0xff]
        %v569 = vld [vmem:[%s475 + $0x50] sm:$0xff]
        %v570 = vld [vmem:[%s475 + $0x58] sm:$0xff]
        %v571 = vld [vmem:[%s475 + $0x60] sm:$0xff]
        %v572 = vld [vmem:[%s475 + $0x68] sm:$0xff]
        %v573 = vld [vmem:[%s475 + $0x70] sm:$0xff]
        %v574 = vld [vmem:[%s475 + $0x78] sm:$0xff]
        %v575 = vld [vmem:[%s482] sm:$0xf]
        %v576 = vld [vmem:[%s482 + $0x4] sm:$0xf]
        %v577 = vld [vmem:[%s482 + $0x8] sm:$0xf]
        %v578 = vld [vmem:[%s482 + $0xc] sm:$0xf]
        %v579 = vld [vmem:[%s482 + $0x10] sm:$0xf]
        %v580 = vld [vmem:[%s482 + $0x14] sm:$0xf]
        %v581 = vld [vmem:[%s482 + $0x18] sm:$0xf]
        %v582 = vld [vmem:[%s482 + $0x1c] sm:$0xf]
        %v583 = vld [vmem:[%s482 + $0x20] sm:$0xf]
        %v584 = vld [vmem:[%s482 + $0x24] sm:$0xf]
        %v585 = vld [vmem:[%s482 + $0x28] sm:$0xf]
        %v586 = vld [vmem:[%s482 + $0x2c] sm:$0xf]
        %v587 = vld [vmem:[%s482 + $0x30] sm:$0xf]
        %v588 = vld [vmem:[%s482 + $0x34] sm:$0xf]
        %v589 = vld [vmem:[%s482 + $0x38] sm:$0xf]
        %v590 = vld [vmem:[%s482 + $0x3c] sm:$0xf]
        %v591 = vld [vmem:[%s482 + $0x40] sm:$0xf]
        %v592 = vld [vmem:[%s482 + $0x44] sm:$0xf]
        %v593 = vld [vmem:[%s482 + $0x48] sm:$0xf]
        %v594 = vld [vmem:[%s482 + $0x4c] sm:$0xf]
        %v595 = vld [vmem:[%s482 + $0x50] sm:$0xf]
        %v596 = vld [vmem:[%s482 + $0x54] sm:$0xf]
        %v597 = vld [vmem:[%s482 + $0x58] sm:$0xf]
        %v598 = vld [vmem:[%s482 + $0x5c] sm:$0xf]
        %v599 = vld [vmem:[%s482 + $0x60] sm:$0xf]
        %v600 = vld [vmem:[%s482 + $0x64] sm:$0xf]
        %v601 = vld [vmem:[%s482 + $0x68] sm:$0xf]
        %v602 = vld [vmem:[%s482 + $0x6c] sm:$0xf]
        %v603 = vld [vmem:[%s482 + $0x70] sm:$0xf]
        %v604 = vld [vmem:[%s482 + $0x74] sm:$0xf]
        %v605 = vld [vmem:[%s482 + $0x78] sm:$0xf]
        %v606 = vld [vmem:[%s482 + $0x7c] sm:$0xf]
        %v623 = vunpack.c.l.b16 %v559
        %v624 = vunpack.c.h.b16 %v559
        %v625 = vunpack.c.l.b16 %v560
        %v626 = vunpack.c.h.b16 %v560
        %v627 = vunpack.c.l.b16 %v561
        %v628 = vunpack.c.h.b16 %v561
        %v629 = vunpack.c.l.b16 %v562
        %v630 = vunpack.c.h.b16 %v562
        %v631 = vunpack.c.l.b16 %v563
        %v632 = vunpack.c.h.b16 %v563
        %v633 = vunpack.c.l.b16 %v564
        %v634 = vunpack.c.h.b16 %v564
        %v635 = vunpack.c.l.b16 %v565
        %v636 = vunpack.c.h.b16 %v565
        %v637 = vunpack.c.l.b16 %v566
        %v638 = vunpack.c.h.b16 %v566
        %v639 = vunpack.c.l.b16 %v567
        %v640 = vunpack.c.h.b16 %v567
        %v641 = vunpack.c.l.b16 %v568
        %v642 = vunpack.c.h.b16 %v568
        %v643 = vunpack.c.l.b16 %v569
        %v644 = vunpack.c.h.b16 %v569
        %v645 = vunpack.c.l.b16 %v570
        %v646 = vunpack.c.h.b16 %v570
        %v647 = vunpack.c.l.b16 %v571
        %v648 = vunpack.c.h.b16 %v571
        %v649 = vunpack.c.l.b16 %v572
        %v650 = vunpack.c.h.b16 %v572
        %v651 = vunpack.c.l.b16 %v573
        %v652 = vunpack.c.h.b16 %v573
        %v653 = vunpack.c.l.b16 %v574
        %v654 = vunpack.c.h.b16 %v574
        %v655 = vpack.c.b16 %v625, %v623
        %v656 = vpack.c.b16 %v626, %v624
        %v657 = vpack.c.b16 %v629, %v627
        %v658 = vpack.c.b16 %v630, %v628
        %v659 = vpack.c.b16 %v633, %v631
        %v660 = vpack.c.b16 %v634, %v632
        %v661 = vpack.c.b16 %v637, %v635
        %v662 = vpack.c.b16 %v638, %v636
        %v663 = vpack.c.b16 %v641, %v639
        %v664 = vpack.c.b16 %v642, %v640
        %v665 = vpack.c.b16 %v645, %v643
        %v666 = vpack.c.b16 %v646, %v644
        %v667 = vpack.c.b16 %v649, %v647
        %v668 = vpack.c.b16 %v650, %v648
        %v669 = vpack.c.b16 %v653, %v651
        %v670 = vpack.c.b16 %v654, %v652
        %v719 = vunpack.c.l.b16 %v575
        %v720 = vunpack.c.l.b16 %v576
        %v721 = vunpack.c.l.b16 %v577
        %v722 = vunpack.c.l.b16 %v578
        %v723 = vunpack.c.l.b16 %v579
        %v724 = vunpack.c.l.b16 %v580
        %v725 = vunpack.c.l.b16 %v581
        %v726 = vunpack.c.l.b16 %v582
        %v727 = vunpack.c.l.b16 %v583
        %v728 = vunpack.c.l.b16 %v584
        %v729 = vunpack.c.l.b16 %v585
        %v730 = vunpack.c.l.b16 %v586
        %v731 = vunpack.c.l.b16 %v587
        %v732 = vunpack.c.l.b16 %v588
        %v733 = vunpack.c.l.b16 %v589
        %v734 = vunpack.c.l.b16 %v590
        %v735 = vunpack.c.l.b16 %v591
        %v736 = vunpack.c.l.b16 %v592
        %v737 = vunpack.c.l.b16 %v593
        %v738 = vunpack.c.l.b16 %v594
        %v739 = vunpack.c.l.b16 %v595
        %v740 = vunpack.c.l.b16 %v596
        %v741 = vunpack.c.l.b16 %v597
        %v742 = vunpack.c.l.b16 %v598
        %v743 = vunpack.c.l.b16 %v599
        %v744 = vunpack.c.l.b16 %v600
        %v745 = vunpack.c.l.b16 %v601
        %v746 = vunpack.c.l.b16 %v602
        %v747 = vunpack.c.l.b16 %v603
        %v748 = vunpack.c.l.b16 %v604
        %v749 = vunpack.c.l.b16 %v605
        %v750 = vunpack.c.l.b16 %v606
        %v751 = vpack.c.b16 %v720, %v719
        %v752 = vpack.c.b16 %v722, %v721
        %v753 = vpack.c.b16 %v724, %v723
        %v754 = vpack.c.b16 %v726, %v725
        %v755 = vpack.c.b16 %v728, %v727
        %v756 = vpack.c.b16 %v730, %v729
        %v757 = vpack.c.b16 %v732, %v731
        %v758 = vpack.c.b16 %v734, %v733
        %v759 = vpack.c.b16 %v736, %v735
        %v760 = vpack.c.b16 %v738, %v737
        %v761 = vpack.c.b16 %v740, %v739
        %v762 = vpack.c.b16 %v742, %v741
        %v763 = vpack.c.b16 %v744, %v743
        %v764 = vpack.c.b16 %v746, %v745
        %v765 = vpack.c.b16 %v748, %v747
        %v766 = vpack.c.b16 %v750, %v749
        %783 = vmatprep.subr.bf16.mxu0 0
        %784 = vmatpush1.bf16.msra.mxu0 %v758
        %785 = vmatprep.subr.bf16.mxu0 0
        %786 = vmatpush1.bf16.msra.mxu0 %v757
        %787 = vmatprep.subr.bf16.mxu0 0
        %788 = vmatpush1.bf16.msra.mxu0 %v756
        %789 = vmatprep.subr.bf16.mxu0 0
        %790 = vmatpush1.bf16.msra.mxu0 %v755
        %791 = vmatprep.subr.bf16.mxu0 0
        %792 = vmatpush1.bf16.msra.mxu0 %v754
        %793 = vmatprep.subr.bf16.mxu0 0
        %794 = vmatpush1.bf16.msra.mxu0 %v753
        %795 = vmatprep.subr.bf16.mxu0 0
        %796 = vmatpush1.bf16.msra.mxu0 %v752
        %797 = vmatprep.subr.bf16.mxu0 0
        %798 = vmatpush1.bf16.msra.mxu0 %v751
        %799 = vmatprep.subr.bf16.mxu0 0
        %800 = vmatpush2.bf16.msra.mxu0 %v766
        %801 = vmatprep.subr.bf16.mxu0 0
        %802 = vmatpush2.bf16.msra.mxu0 %v765
        %803 = vmatprep.subr.bf16.mxu0 0
        %804 = vmatpush2.bf16.msra.mxu0 %v764
        %805 = vmatprep.subr.bf16.mxu0 0
        %806 = vmatpush2.bf16.msra.mxu0 %v763
        %807 = vmatprep.subr.bf16.mxu0 0
        %808 = vmatpush2.bf16.msra.mxu0 %v762
        %809 = vmatprep.subr.bf16.mxu0 0
        %810 = vmatpush2.bf16.msra.mxu0 %v761
        %811 = vmatprep.subr.bf16.mxu0 0
        %812 = vmatpush2.bf16.msra.mxu0 %v760
        %813 = vmatprep.subr.bf16.mxu0 0
        %814 = vmatpush2.bf16.msra.mxu0 %v759
        %815 = vmatprep.mubr.bf16.mxu0 %v656
        %816 = vmatmul.mubr.bf16.gmra.mxu0 %v655
        %v817 = vpop.f32.mrf.mxu0
        %v818 = vadd.f32 0.0, %v817
        %v819 = vpop.f32.mrf.mxu0
        %v820 = vpop.f32.mrf.mxu0
        %v821 = vadd.f32 0.0, %v820
        %v822 = vpop.f32.mrf.mxu0
        %823 = vmatprep.mubr.bf16.mxu0 %v658
        %824 = vmatmul.mubr.bf16.gmra.mxu0 %v657
        %v825 = vpop.f32.mrf.mxu0
        %v826 = vadd.f32 0.0, %v825
        %v827 = vpop.f32.mrf.mxu0
        %v828 = vpop.f32.mrf.mxu0
        %v829 = vadd.f32 0.0, %v828
        %v830 = vpop.f32.mrf.mxu0
        %831 = vmatprep.mubr.bf16.mxu0 %v660
        %832 = vmatmul.mubr.bf16.gmra.mxu0 %v659
        %v833 = vpop.f32.mrf.mxu0
        %v834 = vadd.f32 0.0, %v833
        %v835 = vpop.f32.mrf.mxu0
        %v836 = vpop.f32.mrf.mxu0
        %v837 = vadd.f32 0.0, %v836
        %v838 = vpop.f32.mrf.mxu0
        %839 = vmatprep.mubr.bf16.mxu0 %v662
        %840 = vmatmul.mubr.bf16.gmra.mxu0 %v661
        %v841 = vpop.f32.mrf.mxu0
        %v842 = vadd.f32 0.0, %v841
        %v843 = vpop.f32.mrf.mxu0
        %v844 = vpop.f32.mrf.mxu0
        %v845 = vadd.f32 0.0, %v844
        %v846 = vpop.f32.mrf.mxu0
        %847 = vmatprep.mubr.bf16.mxu0 %v664
        %848 = vmatmul.mubr.bf16.gmra.mxu0 %v663
        %v849 = vpop.f32.mrf.mxu0
        %v850 = vadd.f32 0.0, %v849
        %v851 = vpop.f32.mrf.mxu0
        %v852 = vpop.f32.mrf.mxu0
        %v853 = vadd.f32 0.0, %v852
        %v854 = vpop.f32.mrf.mxu0
        %855 = vmatprep.mubr.bf16.mxu0 %v666
        %856 = vmatmul.mubr.bf16.gmra.mxu0 %v665
        %v857 = vpop.f32.mrf.mxu0
        %v858 = vadd.f32 0.0, %v857
        %v859 = vpop.f32.mrf.mxu0
        %v860 = vpop.f32.mrf.mxu0
        %v861 = vadd.f32 0.0, %v860
        %v862 = vpop.f32.mrf.mxu0
        %863 = vmatprep.mubr.bf16.mxu0 %v668
        %864 = vmatmul.mubr.bf16.gmra.mxu0 %v667
        %v865 = vpop.f32.mrf.mxu0
        %v866 = vadd.f32 0.0, %v865
        %v867 = vpop.f32.mrf.mxu0
        %v868 = vpop.f32.mrf.mxu0
        %v869 = vadd.f32 0.0, %v868
        %v870 = vpop.f32.mrf.mxu0
        %871 = vmatprep.mubr.bf16.mxu0 %v670
        %872 = vmatmul.mubr.bf16.gmra.mxu0 %v669
        %v873 = vpop.f32.mrf.mxu0
        %v874 = vadd.f32 0.0, %v873
        %v875 = vpop.f32.mrf.mxu0
        %v876 = vpop.f32.mrf.mxu0
        %v877 = vadd.f32 0.0, %v876
        %v878 = vpop.f32.mrf.mxu0
        %879 = vdwg.mxu0
        %v880 = vadd.f32 %v543, %v818
        %v881 = vadd.f32 %v544, %v821
        %v882 = vadd.f32 %v545, %v826
        %v883 = vadd.f32 %v546, %v829
        %v884 = vadd.f32 %v547, %v834
        %v885 = vadd.f32 %v548, %v837
        %v886 = vadd.f32 %v549, %v842
        %v887 = vadd.f32 %v550, %v845
        %v888 = vadd.f32 %v551, %v850
        %v889 = vadd.f32 %v552, %v853
        %v890 = vadd.f32 %v553, %v858
        %v891 = vadd.f32 %v554, %v861
        %v892 = vadd.f32 %v555, %v866
        %v893 = vadd.f32 %v556, %v869
        %v894 = vadd.f32 %v557, %v874
        %v895 = vadd.f32 %v558, %v877
        %896 = vst [vmem:[#allocation2] sm:$0xff] %v880
        %897 = vst [vmem:[#allocation2 + $0x8] sm:$0xff] %v881
        %898 = vst [vmem:[#allocation2 + $0x10] sm:$0xff] %v882
        %899 = vst [vmem:[#allocation2 + $0x18] sm:$0xff] %v883
        %900 = vst [vmem:[#allocation2 + $0x20] sm:$0xff] %v884
        %901 = vst [vmem:[#allocation2 + $0x28] sm:$0xff] %v885
        %902 = vst [vmem:[#allocation2 + $0x30] sm:$0xff] %v886
        %903 = vst [vmem:[#allocation2 + $0x38] sm:$0xff] %v887
        %904 = vst [vmem:[#allocation2 + $0x40] sm:$0xff] %v888
        %905 = vst [vmem:[#allocation2 + $0x48] sm:$0xff] %v889
        %906 = vst [vmem:[#allocation2 + $0x50] sm:$0xff] %v890
        %907 = vst [vmem:[#allocation2 + $0x58] sm:$0xff] %v891
        %908 = vst [vmem:[#allocation2 + $0x60] sm:$0xff] %v892
        %909 = vst [vmem:[#allocation2 + $0x68] sm:$0xff] %v893
        %910 = vst [vmem:[#allocation2 + $0x70] sm:$0xff] %v894
        %911 = vst [vmem:[#allocation2 + $0x78] sm:$0xff] %v895
        %p912 = scmp.eq.s32.totalorder %s20, 7
        // Predicated region
        $region120: #{discriminator_forward.6} parent=106 // pred_check
          %p913 = pneg %p912
        $region121: #{discriminator_forward.6} parent=106 // pred_check_branch
          %915 = sbr.rel (%p913) target = $region123
        $region122: #{discriminator_forward.6} parent=106 // pred_region
          %v916 = vld [vmem:[#allocation2] sm:$0xff]
          %v917 = vld [vmem:[#allocation2 + $0x8] sm:$0xff]
          %v918 = vld [vmem:[#allocation2 + $0x10] sm:$0xff]
          %v919 = vld [vmem:[#allocation2 + $0x18] sm:$0xff]
          %v920 = vld [vmem:[#allocation2 + $0x20] sm:$0xff]
          %v921 = vld [vmem:[#allocation2 + $0x28] sm:$0xff]
          %v922 = vld [vmem:[#allocation2 + $0x30] sm:$0xff]
          %v923 = vld [vmem:[#allocation2 + $0x38] sm:$0xff]
          %v924 = vld [vmem:[#allocation2 + $0x40] sm:$0xff]
          %v925 = vld [vmem:[#allocation2 + $0x48] sm:$0xff]
          %v926 = vld [vmem:[#allocation2 + $0x50] sm:$0xff]
          %v927 = vld [vmem:[#allocation2 + $0x58] sm:$0xff]
          %v928 = vld [vmem:[#allocation2 + $0x60] sm:$0xff]
          %v929 = vld [vmem:[#allocation2 + $0x68] sm:$0xff]
          %v930 = vld [vmem:[#allocation2 + $0x70] sm:$0xff]
          %v931 = vld [vmem:[#allocation2 + $0x78] sm:$0xff]
          %v932 = vadd.f32 %v916, %v917
          %v933 = vadd.f32 %v932, %v918
          %v934 = vadd.f32 %v933, %v919
          %v935 = vadd.f32 %v934, %v920
          %v936 = vadd.f32 %v935, %v921
          %v937 = vadd.f32 %v936, %v922
          %v938 = vadd.f32 %v937, %v923
          %v939 = vadd.f32 %v938, %v924
          %v940 = vadd.f32 %v939, %v925
          %v941 = vadd.f32 %v940, %v926
          %v942 = vadd.f32 %v941, %v927
          %v943 = vadd.f32 %v942, %v928
          %v944 = vadd.f32 %v943, %v929
          %v945 = vadd.f32 %v944, %v930
          %v946 = vadd.f32 %v945, %v931
          %v947 = vrot.slane %v946, 4
          %v948 = vadd.f32 %v946, %v947
          %v949 = vrot.slane %v948, 2
          %v950 = vadd.f32 %v948, %v949
          %v951 = vrot.slane %v950, 1
          %v952 = vadd.f32 %v950, %v951
          %v953 = vmul.f32 %v952, 0.0078125
          %v954 = vmul.f32 %v916, %v916
          %v955 = vmul.f32 %v917, %v917
          %v956 = vmul.f32 %v918, %v918
          %v957 = vmul.f32 %v919, %v919
          %v958 = vmul.f32 %v920, %v920
          %v959 = vmul.f32 %v921, %v921
          %v960 = vmul.f32 %v922, %v922
          %v961 = vmul.f32 %v923, %v923
          %v962 = vmul.f32 %v924, %v924
          %v963 = vmul.f32 %v925, %v925
          %v964 = vmul.f32 %v926, %v926
          %v965 = vmul.f32 %v927, %v927
          %v966 = vmul.f32 %v928, %v928
          %v967 = vmul.f32 %v929, %v929
          %v968 = vmul.f32 %v930, %v930
          %v969 = vmul.f32 %v931, %v931
          %v970 = vadd.f32 %v954, %v955
          %v971 = vadd.f32 %v970, %v956
          %v972 = vadd.f32 %v971, %v957
          %v973 = vadd.f32 %v972, %v958
          %v974 = vadd.f32 %v973, %v959
          %v975 = vadd.f32 %v974, %v960
          %v976 = vadd.f32 %v975, %v961
          %v977 = vadd.f32 %v976, %v962
          %v978 = vadd.f32 %v977, %v963
          %v979 = vadd.f32 %v978, %v964
          %v980 = vadd.f32 %v979, %v965
          %v981 = vadd.f32 %v980, %v966
          %v982 = vadd.f32 %v981, %v967
          %v983 = vadd.f32 %v982, %v968
          %v984 = vadd.f32 %v983, %v969
          %v985 = vrot.slane %v984, 4
          %v986 = vadd.f32 %v984, %v985
          %v987 = vrot.slane %v986, 2
          %v988 = vadd.f32 %v986, %v987
          %v989 = vrot.slane %v988, 1
          %v990 = vadd.f32 %v988, %v989
          %v991 = vmul.f32 %v990, 0.0078125
          %v992 = vmul.f32 %v953, %v953
          %v993 = vsub.f32 %v991, %v992
          %v994 = vmax.f32 %v993, 0.0
          %v995 = vsub.f32 %v916, %v953
          %v996 = vsub.f32 %v917, %v953
          %v997 = vsub.f32 %v918, %v953
          %v998 = vsub.f32 %v919, %v953
          %v999 = vsub.f32 %v920, %v953
          %v1000 = vsub.f32 %v921, %v953
          %v1001 = vsub.f32 %v922, %v953
          %v1002 = vsub.f32 %v923, %v953
          %v1003 = vsub.f32 %v924, %v953
          %v1004 = vsub.f32 %v925, %v953
          %v1005 = vsub.f32 %v926, %v953
          %v1006 = vsub.f32 %v927, %v953
          %v1007 = vsub.f32 %v928, %v953
          %v1008 = vsub.f32 %v929, %v953
          %v1009 = vsub.f32 %v930, %v953
          %v1010 = vsub.f32 %v931, %v953
          %v1011 = vadd.f32 %v994, 1e-05
          %v1012 = vrsqrt.pop %v1011
          %v1013 = vmul.f32 %v995, %v1012
          %v1014 = vmul.f32 %v996, %v1012
          %v1015 = vmul.f32 %v997, %v1012
          %v1016 = vmul.f32 %v998, %v1012
          %v1017 = vmul.f32 %v999, %v1012
          %v1018 = vmul.f32 %v1000, %v1012
          %v1019 = vmul.f32 %v1001, %v1012
          %v1020 = vmul.f32 %v1002, %v1012
          %v1021 = vmul.f32 %v1003, %v1012
          %v1022 = vmul.f32 %v1004, %v1012
          %v1023 = vmul.f32 %v1005, %v1012
          %v1024 = vmul.f32 %v1006, %v1012
          %v1025 = vmul.f32 %v1007, %v1012
          %v1026 = vmul.f32 %v1008, %v1012
          %v1027 = vmul.f32 %v1009, %v1012
          %v1028 = vmul.f32 %v1010, %v1012
          %v1029 = vld [vmem:[%s518] sm:$0x1]
          %v1031 = vlaneseq
          %v1032 = vshrl.u32 %v1031, 7
          %v1033 = vsub.s32 0, %v1032
          %v1034 = vrot.slane %v1029, %v1033
          %v1036 = vmul.f32 %v1013, %v1034
          %v1037 = vmul.f32 %v1014, %v1034
          %v1038 = vmul.f32 %v1015, %v1034
          %v1039 = vmul.f32 %v1016, %v1034
          %v1040 = vmul.f32 %v1017, %v1034
          %v1041 = vmul.f32 %v1018, %v1034
          %v1042 = vmul.f32 %v1019, %v1034
          %v1043 = vmul.f32 %v1020, %v1034
          %v1044 = vmul.f32 %v1021, %v1034
          %v1045 = vmul.f32 %v1022, %v1034
          %v1046 = vmul.f32 %v1023, %v1034
          %v1047 = vmul.f32 %v1024, %v1034
          %v1048 = vmul.f32 %v1025, %v1034
          %v1049 = vmul.f32 %v1026, %v1034
          %v1050 = vmul.f32 %v1027, %v1034
          %v1051 = vmul.f32 %v1028, %v1034
          %v1052 = vld [vmem:[%s521] sm:$0x1]
          %v1054 = vlaneseq
          %v1055 = vshrl.u32 %v1054, 7
          %v1056 = vsub.s32 0, %v1055
          %v1057 = vrot.slane %v1052, %v1056
          %v1059 = vadd.f32 %v1036, %v1057
          %v1060 = vadd.f32 %v1037, %v1057
          %v1061 = vadd.f32 %v1038, %v1057
          %v1062 = vadd.f32 %v1039, %v1057
          %v1063 = vadd.f32 %v1040, %v1057
          %v1064 = vadd.f32 %v1041, %v1057
          %v1065 = vadd.f32 %v1042, %v1057
          %v1066 = vadd.f32 %v1043, %v1057
          %v1067 = vadd.f32 %v1044, %v1057
          %v1068 = vadd.f32 %v1045, %v1057
          %v1069 = vadd.f32 %v1046, %v1057
          %v1070 = vadd.f32 %v1047, %v1057
          %v1071 = vadd.f32 %v1048, %v1057
          %v1072 = vadd.f32 %v1049, %v1057
          %v1073 = vadd.f32 %v1050, %v1057
          %v1074 = vadd.f32 %v1051, %v1057
          %v1075 = vmax.f32 %v1059, 0.0
          %v1076 = vmax.f32 %v1060, 0.0
          %v1077 = vmax.f32 %v1061, 0.0
          %v1078 = vmax.f32 %v1062, 0.0
          %v1079 = vmax.f32 %v1063, 0.0
          %v1080 = vmax.f32 %v1064, 0.0
          %v1081 = vmax.f32 %v1065, 0.0
          %v1082 = vmax.f32 %v1066, 0.0
          %v1083 = vmax.f32 %v1067, 0.0
          %v1084 = vmax.f32 %v1068, 0.0
          %v1085 = vmax.f32 %v1069, 0.0
          %v1086 = vmax.f32 %v1070, 0.0
          %v1087 = vmax.f32 %v1071, 0.0
          %v1088 = vmax.f32 %v1072, 0.0
          %v1089 = vmax.f32 %v1073, 0.0
          %v1090 = vmax.f32 %v1074, 0.0
          %v1091 = vmin.f32 %v1075, 6.0
          %v1092 = vmin.f32 %v1076, 6.0
          %v1093 = vmin.f32 %v1077, 6.0
          %v1094 = vmin.f32 %v1078, 6.0
          %v1095 = vmin.f32 %v1079, 6.0
          %v1096 = vmin.f32 %v1080, 6.0
          %v1097 = vmin.f32 %v1081, 6.0
          %v1098 = vmin.f32 %v1082, 6.0
          %v1099 = vmin.f32 %v1083, 6.0
          %v1100 = vmin.f32 %v1084, 6.0
          %v1101 = vmin.f32 %v1085, 6.0
          %v1102 = vmin.f32 %v1086, 6.0
          %v1103 = vmin.f32 %v1087, 6.0
          %v1104 = vmin.f32 %v1088, 6.0
          %v1105 = vmin.f32 %v1089, 6.0
          %v1106 = vmin.f32 %v1090, 6.0
          %v1107 = vpack.c.bf16 %v1092, %v1091
          %v1108 = vpack.c.bf16 %v1094, %v1093
          %v1109 = vpack.c.bf16 %v1096, %v1095
          %v1110 = vpack.c.bf16 %v1098, %v1097
          %v1111 = vpack.c.bf16 %v1100, %v1099
          %v1112 = vpack.c.bf16 %v1102, %v1101
          %v1113 = vpack.c.bf16 %v1104, %v1103
          %v1114 = vpack.c.bf16 %v1106, %v1105
          %v1123 = vunpack.c.l.b16 %v1107
          %v1124 = vunpack.c.h.b16 %v1107
          %v1125 = vunpack.c.l.b16 %v1108
          %v1126 = vunpack.c.h.b16 %v1108
          %v1127 = vunpack.c.l.b16 %v1109
          %v1128 = vunpack.c.h.b16 %v1109
          %v1129 = vunpack.c.l.b16 %v1110
          %v1130 = vunpack.c.h.b16 %v1110
          %v1131 = vunpack.c.l.b16 %v1111
          %v1132 = vunpack.c.h.b16 %v1111
          %v1133 = vunpack.c.l.b16 %v1112
          %v1134 = vunpack.c.h.b16 %v1112
          %v1135 = vunpack.c.l.b16 %v1113
          %v1136 = vunpack.c.h.b16 %v1113
          %v1137 = vunpack.c.l.b16 %v1114
          %v1138 = vunpack.c.h.b16 %v1114
          %v1139 = vpack.c.b16 %v1123, %v1123
          %v1140 = vpack.c.b16 %v1124, %v1124
          %v1141 = vpack.c.b16 %v1125, %v1125
          %v1142 = vpack.c.b16 %v1126, %v1126
          %v1143 = vpack.c.b16 %v1127, %v1127
          %v1144 = vpack.c.b16 %v1128, %v1128
          %v1145 = vpack.c.b16 %v1129, %v1129
          %v1146 = vpack.c.b16 %v1130, %v1130
          %v1147 = vpack.c.b16 %v1131, %v1131
          %v1148 = vpack.c.b16 %v1132, %v1132
          %v1149 = vpack.c.b16 %v1133, %v1133
          %v1150 = vpack.c.b16 %v1134, %v1134
          %v1151 = vpack.c.b16 %v1135, %v1135
          %v1152 = vpack.c.b16 %v1136, %v1136
          %v1153 = vpack.c.b16 %v1137, %v1137
          %v1154 = vpack.c.b16 %v1138, %v1138
          %1171 = vst [vmem:[%s513] sm:$0xf] %v1139
          %1172 = vst [vmem:[%s513 + $0x4] sm:$0xf] %v1140
          %1173 = vst [vmem:[%s513 + $0x8] sm:$0xf] %v1141
          %1174 = vst [vmem:[%s513 + $0xc] sm:$0xf] %v1142
          %1175 = vst [vmem:[%s513 + $0x10] sm:$0xf] %v1143
          %1176 = vst [vmem:[%s513 + $0x14] sm:$0xf] %v1144
          %1177 = vst [vmem:[%s513 + $0x18] sm:$0xf] %v1145
          %1178 = vst [vmem:[%s513 + $0x1c] sm:$0xf] %v1146
          %1179 = vst [vmem:[%s513 + $0x20] sm:$0xf] %v1147
          %1180 = vst [vmem:[%s513 + $0x24] sm:$0xf] %v1148
          %1181 = vst [vmem:[%s513 + $0x28] sm:$0xf] %v1149
          %1182 = vst [vmem:[%s513 + $0x2c] sm:$0xf] %v1150
          %1183 = vst [vmem:[%s513 + $0x30] sm:$0xf] %v1151
          %1184 = vst [vmem:[%s513 + $0x34] sm:$0xf] %v1152
          %1185 = vst [vmem:[%s513 + $0x38] sm:$0xf] %v1153
          %1186 = vst [vmem:[%s513 + $0x3c] sm:$0xf] %v1154
        $region123: #{discriminator_forward.6} parent=106 // pred_fallthru
          _
        %s1187 = sand.u32 %s141, 1
        %s1188 = sand.u32 %s141, 1
        %s1189 = smul.addr %s1188, 64
        %s1190 = scalar_lea.vmem [#allocation5], %s1189
        // Predicated region
        $region124: #{discriminator_forward.6} parent=106 // pred_check
          %p1191 = pneg %p151
        $region125: #{discriminator_forward.6} parent=106 // pred_check_branch
          %1193 = sbr.rel (%p1191) target = $region127
        $region126: #{discriminator_forward.6} parent=106 // pred_region
          %s1194 = smul.addr %s19, 4
          %s1195 = scalar_lea.vmem %s4, %s1194
          // Predicated region
          $region128: #{discriminator_forward.6} parent=126 // pred_check
            _
          $region129: #{discriminator_forward.6} parent=126 // pred_check_branch
            %1197 = sbr.rel (0) target = $region131
          $region130: #{discriminator_forward.6} parent=126 // pred_region
            // Predicated region
            $region132: #{discriminator_forward.6} parent=130 // pred_check
              _
            $region133: #{discriminator_forward.6} parent=130 // pred_check_branch
              %1199 = sbr.rel target = $region135
            $region134: #{discriminator_forward.6} parent=130 // pred_region
              // Predicated region
              $region147: #{discriminator_forward.6} parent=134 // pred_check
                _
              $region148: #{discriminator_forward.6} parent=134 // pred_check_branch
                %1245 = sbr.rel (0) target = $region150
              $region149: #{discriminator_forward.6} parent=134 // pred_region
                loop: start=0, step=1, limit=1
                $region151: #{discriminator_forward.6} parent=149 // loop_pre_header
                  _
                $region152: #{discriminator_forward.6} parent=149 // loop_header
                  %s1247 = sphi 0, %s1251
                  %p1248 = scmp.ge.s32.totalorder %s1247, 1
                  %s1252 = sphi %s1190, %s1190
                  %s1253 = sphi %s1195, %s1195
                $region153: #{discriminator_forward.6} parent=149 // loop_header_branch
                  %1250 = sbr.rel (%p1248) target = $region157
                $region154: #{discriminator_forward.6} parent=149 // loop_body
                  _
                $region155: #{discriminator_forward.6} parent=149 // loop_footer
                  %s1251 = sadd.s32 1, %s1247
                $region156: #{discriminator_forward.6} parent=149 // loop_footer_branch
                  %1246 = sbr.rel target = $region152
                $region157: #{discriminator_forward.6} parent=149 // loop_exit
                  _
                %s1255 = ssub.s32 16, 1
                loop: start=0, step=1, limit=1
                $region158: #{discriminator_forward.6} parent=149 // loop_pre_header
                  _
                $region159: #{discriminator_forward.6} parent=149 // loop_header
                  %s1257 = sphi 0, %s1261
                  %p1258 = scmp.ge.s32.totalorder %s1257, 1
                  %s1262 = sphi %s1190, %s1190
                  %s1263 = sphi %s1195, %s1195
                $region160: #{discriminator_forward.6} parent=149 // loop_header_branch
                  %1260 = sbr.rel (%p1258) target = $region164
                $region161: #{discriminator_forward.6} parent=149 // loop_body
                  %v1264 = vld [vmem:[%s1262] sm:%s1255]
                  %1265 = vst [vmem:[%s1263] sm:%s1255] %v1264
                  %v1266 = vld [vmem:[%s1262 + $0x4] sm:%s1255]
                  %1267 = vst [vmem:[%s1263 + $0x8] sm:%s1255] %v1266
                  %v1268 = vld [vmem:[%s1262 + $0x8] sm:%s1255]
                  %1269 = vst [vmem:[%s1263 + $0x10] sm:%s1255] %v1268
                  %v1270 = vld [vmem:[%s1262 + $0xc] sm:%s1255]
                  %1271 = vst [vmem:[%s1263 + $0x18] sm:%s1255] %v1270
                  %v1272 = vld [vmem:[%s1262 + $0x10] sm:%s1255]
                  %1273 = vst [vmem:[%s1263 + $0x20] sm:%s1255] %v1272
                  %v1274 = vld [vmem:[%s1262 + $0x14] sm:%s1255]
                  %1275 = vst [vmem:[%s1263 + $0x28] sm:%s1255] %v1274
                  %v1276 = vld [vmem:[%s1262 + $0x18] sm:%s1255]
                  %1277 = vst [vmem:[%s1263 + $0x30] sm:%s1255] %v1276
                  %v1278 = vld [vmem:[%s1262 + $0x1c] sm:%s1255]
                  %1279 = vst [vmem:[%s1263 + $0x38] sm:%s1255] %v1278
                  %v1280 = vld [vmem:[%s1262 + $0x20] sm:%s1255]
                  %1281 = vst [vmem:[%s1263 + $0x40] sm:%s1255] %v1280
                  %v1282 = vld [vmem:[%s1262 + $0x24] sm:%s1255]
                  %1283 = vst [vmem:[%s1263 + $0x48] sm:%s1255] %v1282
                  %v1284 = vld [vmem:[%s1262 + $0x28] sm:%s1255]
                  %1285 = vst [vmem:[%s1263 + $0x50] sm:%s1255] %v1284
                  %v1286 = vld [vmem:[%s1262 + $0x2c] sm:%s1255]
                  %1287 = vst [vmem:[%s1263 + $0x58] sm:%s1255] %v1286
                  %v1288 = vld [vmem:[%s1262 + $0x30] sm:%s1255]
                  %1289 = vst [vmem:[%s1263 + $0x60] sm:%s1255] %v1288
                  %v1290 = vld [vmem:[%s1262 + $0x34] sm:%s1255]
                  %1291 = vst [vmem:[%s1263 + $0x68] sm:%s1255] %v1290
                  %v1292 = vld [vmem:[%s1262 + $0x38] sm:%s1255]
                  %1293 = vst [vmem:[%s1263 + $0x70] sm:%s1255] %v1292
                  %v1294 = vld [vmem:[%s1262 + $0x3c] sm:%s1255]
                  %1295 = vst [vmem:[%s1263 + $0x78] sm:%s1255] %v1294
                $region162: #{discriminator_forward.6} parent=149 // loop_footer
                  %s1261 = sadd.s32 1, %s1257
                $region163: #{discriminator_forward.6} parent=149 // loop_footer_branch
                  %1256 = sbr.rel target = $region159
                $region164: #{discriminator_forward.6} parent=149 // loop_exit
                  _
              $region150: #{discriminator_forward.6} parent=134 // pred_fallthru
                _
            $region135: #{discriminator_forward.6} parent=130 // pred_fallthru
              _
            // Predicated region
            $region136: #{discriminator_forward.6} parent=130 // pred_check
              _
            $region137: #{discriminator_forward.6} parent=130 // pred_check_branch
              %1201 = sbr.rel (0) target = $region139
            $region138: #{discriminator_forward.6} parent=130 // pred_region
              %s1203 = ssub.s32 16, 1
              loop: start=0, step=1, limit=1
              $region140: #{discriminator_forward.6} parent=138 // loop_pre_header
                _
              $region141: #{discriminator_forward.6} parent=138 // loop_header
                %s1205 = sphi 0, %s1209
                %p1206 = scmp.ge.s32.totalorder %s1205, 1
                %s1210 = sphi %s1190, %s1190
                %s1211 = sphi %s1195, %s1195
              $region142: #{discriminator_forward.6} parent=138 // loop_header_branch
                %1208 = sbr.rel (%p1206) target = $region146
              $region143: #{discriminator_forward.6} parent=138 // loop_body
                %v1212 = vld [vmem:[%s1210] sm:%s1203]
                %1213 = vst [vmem:[%s1211] sm:%s1203] %v1212
                %v1214 = vld [vmem:[%s1210 + $0x4] sm:%s1203]
                %1215 = vst [vmem:[%s1211 + $0x8] sm:%s1203] %v1214
                %v1216 = vld [vmem:[%s1210 + $0x8] sm:%s1203]
                %1217 = vst [vmem:[%s1211 + $0x10] sm:%s1203] %v1216
                %v1218 = vld [vmem:[%s1210 + $0xc] sm:%s1203]
                %1219 = vst [vmem:[%s1211 + $0x18] sm:%s1203] %v1218
                %v1220 = vld [vmem:[%s1210 + $0x10] sm:%s1203]
                %1221 = vst [vmem:[%s1211 + $0x20] sm:%s1203] %v1220
                %v1222 = vld [vmem:[%s1210 + $0x14] sm:%s1203]
                %1223 = vst [vmem:[%s1211 + $0x28] sm:%s1203] %v1222
                %v1224 = vld [vmem:[%s1210 + $0x18] sm:%s1203]
                %1225 = vst [vmem:[%s1211 + $0x30] sm:%s1203] %v1224
                %v1226 = vld [vmem:[%s1210 + $0x1c] sm:%s1203]
                %1227 = vst [vmem:[%s1211 + $0x38] sm:%s1203] %v1226
                %v1228 = vld [vmem:[%s1210 + $0x20] sm:%s1203]
                %1229 = vst [vmem:[%s1211 + $0x40] sm:%s1203] %v1228
                %v1230 = vld [vmem:[%s1210 + $0x24] sm:%s1203]
                %1231 = vst [vmem:[%s1211 + $0x48] sm:%s1203] %v1230
                %v1232 = vld [vmem:[%s1210 + $0x28] sm:%s1203]
                %1233 = vst [vmem:[%s1211 + $0x50] sm:%s1203] %v1232
                %v1234 = vld [vmem:[%s1210 + $0x2c] sm:%s1203]
                %1235 = vst [vmem:[%s1211 + $0x58] sm:%s1203] %v1234
                %v1236 = vld [vmem:[%s1210 + $0x30] sm:%s1203]
                %1237 = vst [vmem:[%s1211 + $0x60] sm:%s1203] %v1236
                %v1238 = vld [vmem:[%s1210 + $0x34] sm:%s1203]
                %1239 = vst [vmem:[%s1211 + $0x68] sm:%s1203] %v1238
                %v1240 = vld [vmem:[%s1210 + $0x38] sm:%s1203]
                %1241 = vst [vmem:[%s1211 + $0x70] sm:%s1203] %v1240
                %v1242 = vld [vmem:[%s1210 + $0x3c] sm:%s1203]
                %1243 = vst [vmem:[%s1211 + $0x78] sm:%s1203] %v1242
              $region144: #{discriminator_forward.6} parent=138 // loop_footer
                %s1209 = sadd.s32 1, %s1205
              $region145: #{discriminator_forward.6} parent=138 // loop_footer_branch
                %1204 = sbr.rel target = $region141
              $region146: #{discriminator_forward.6} parent=138 // loop_exit
                _
            $region139: #{discriminator_forward.6} parent=130 // pred_fallthru
              _
          $region131: #{discriminator_forward.6} parent=126 // pred_fallthru
            _
          %1296 = vnop
        $region127: #{discriminator_forward.6} parent=106 // pred_fallthru
          _
      $region107: #{discriminator_forward.6} parent=5 // pred_fallthru
        _
      %p1297 = scmp.le.s32.totalorder 2, %s10
      // Predicated region
      $region165: #{discriminator_forward.6} parent=5 // pred_check
        %p1298 = pneg %p1297
      $region166: #{discriminator_forward.6} parent=5 // pred_check_branch
        %1300 = sbr.rel (%p1298) target = $region168
      $region167: #{discriminator_forward.6} parent=5 // pred_region
        %s1301 = ssub.s32 %s10, 2
        // Predicated region
        $region169: #{discriminator_forward.6} parent=167 // pred_check
          %p1302 = pneg %p157
        $region170: #{discriminator_forward.6} parent=167 // pred_check_branch
          %1304 = sbr.rel (%p1302) target = $region172
        $region171: #{discriminator_forward.6} parent=167 // pred_region
          %s1305 = sand.u32 %s142, 1
          %s1306 = sand.u32 %s142, 1
          %s1307 = smul.addr %s1306, 64
          %s1308 = scalar_lea.vmem [#allocation5], %s1307
        $region172: #{discriminator_forward.6} parent=167 // pred_fallthru
          _
      $region168: #{discriminator_forward.6} parent=5 // pred_fallthru
        _
    $region6: #{discriminator_forward.6} parent=1 // loop_footer
      %s14 = sadd.s32 1, %s10
    $region7: #{discriminator_forward.6} parent=1 // loop_footer_branch
      %9 = sbr.rel target = $region3
    $region8: #{discriminator_forward.6} parent=1 // loop_exit
      _

// kernel: discriminator_forward.7
$region0: #{discriminator_forward.7}
  #allocation0 [shape = 'u32[]', space=smem, size = 0x4, offset = 0x4, fixed_abs, tag = 'smem constant byte address 0x4 - core index']
  #allocation1 [shape = 'u32[144,128]{1,0:T(1,128)}', space=vmem, size = 0x12000, scoped, tag = 'internal scratch']
  #allocation2 [shape = 'f32[16,512]{1,0:T(8,128)}', space=vmem, size = 0x8000, scoped, tag = 'scratch operand']
  %s0 = inlined_call_operand.vmem [shape: bf16[32,4096], index: 0, kind: input, shape index: {}]
  %s1 = inlined_call_operand.vmem [shape: bf16[4096,512], index: 1, kind: input, shape index: {}]
  %s2 = inlined_call_operand.vmem [shape: f32[16,512], index: 2, kind: input, shape index: {}]
  %s3 = inlined_call_operand.vmem [shape: f32[16,128], index: 3, kind: output, shape index: {}]
  %s4 = sld [smem:[#allocation0]]
  $region76: #{discriminator_forward.7} parent=0
    _
  %s6 = ssub.s32 1, %s4
  %s7 = scalar_select 0, %s6, %s4
  $region1: #{discriminator_forward.7} parent=0
    #allocation3 [shape = 'u8[65536]{0}', space=vmem, size = 0x10000, scoped, tag = 'input window, operand 0']
    loop: start=0, step=1, limit=10
    $region2: #{discriminator_forward.7} parent=1 // loop_pre_header
      _
    $region3: #{discriminator_forward.7} parent=1 // loop_header
      %s9 = sphi 0, %s13
      %p10 = scmp.ge.s32.totalorder %s9, 10
      %s16 = sphi 0, %s28
      %s17 = sphi 0, %s24
      %s18 = sphi 0, %s16
      %s19 = sphi 0, %s17
      %s20 = sphi 0, %s18
      %s21 = sphi 0, %s19
      %s33 = sphi 0, %s35
      %s36 = sphi 0, %s33
      %s37 = sphi 0, %s36
      %s53 = sphi 0, %s37
      %s59 = sphi 0, %s61
      %s62 = sphi 0, %s59
      %s63 = sphi 0, %s62
      %s79 = sphi 0, %s63
      %s83 = sphi 0, %s83
      %s85 = sphi 0, %s83
      %s86 = sphi 0, %s85
      %s100 = sphi 0, %s86
      %s106 = sphi 0, %s108
      %s109 = sphi 0, %s106
      %s110 = sphi 0, %s109
      %s126 = sphi 0, %s110
    $region4: #{discriminator_forward.7} parent=1 // loop_header_branch
      %12 = sbr.rel (%p10) target = $region8
    $region5: #{discriminator_forward.7} parent=1 // loop_body
      %s14 = ssub.s32 %s9, 1
      %s15 = ssub.s32 %s9, 2
      %s22 = sadd.s32 1, %s17
      %p23 = scmp.ge.s32.totalorder %s22, 4
      %s24 = scalar_select %p23, 0, %s22
      %s25 = sadd.s32 1, %s16
      %s26 = scalar_select %p23, %s25, %s16
      %p27 = scmp.ge.s32.totalorder %s26, 2
      %s28 = scalar_select %p27, 0, %s26
      %s29 = ssub.s32 %s16, %s28
      %s30 = ssub.s32 %s17, %s24
      %s31 = sor.u32 %s29, %s30
      %p32 = scmp.eq.s32.totalorder %s31, 0
      %s34 = sadd.s32 %s33, 1
      %s35 = scalar_select %p32, %s33, %s34
      %p38 = pneg %p32
      %p39 = scmp.eq.s32.totalorder %s9, 7
      %p40 = por %p38, %p39
      %p41 = scmp.ne.s32.totalorder %s33, %s36
      %p42 = scmp.eq.s32.totalorder %s9, 0
      %p43 = por %p41, %p42
      %p44 = scmp.ne.s32.totalorder %s33, %s36
      %p45 = scmp.eq.s32.totalorder %s14, 7
      %p46 = por %p44, %p45
      %p47 = scmp.ne.s32.totalorder %s36, %s37
      %p48 = scmp.eq.s32.totalorder %s14, 0
      %p49 = por %p47, %p48
      %p50 = scmp.ne.s32.totalorder %s36, %s37
      %p51 = scmp.eq.s32.totalorder %s15, 7
      %p52 = por %p50, %p51
      %p54 = scmp.ne.s32.totalorder %s37, %s53
      %p55 = scmp.eq.s32.totalorder %s15, 0
      %p56 = por %p54, %p55
      %s57 = ssub.s32 %s17, %s24
      %p58 = scmp.eq.s32.totalorder %s57, 0
      %s60 = sadd.s32 %s59, 1
      %s61 = scalar_select %p58, %s59, %s60
      %p64 = pneg %p58
      %p65 = scmp.eq.s32.totalorder %s9, 7
      %p66 = por %p64, %p65
      %p67 = scmp.ne.s32.totalorder %s59, %s62
      %p68 = scmp.eq.s32.totalorder %s9, 0
      %p69 = por %p67, %p68
      %p70 = scmp.ne.s32.totalorder %s59, %s62
      %p71 = scmp.eq.s32.totalorder %s14, 7
      %p72 = por %p70, %p71
      %p73 = scmp.ne.s32.totalorder %s62, %s63
      %p74 = scmp.eq.s32.totalorder %s14, 0
      %p75 = por %p73, %p74
      %p76 = scmp.ne.s32.totalorder %s62, %s63
      %p77 = scmp.eq.s32.totalorder %s15, 7
      %p78 = por %p76, %p77
      %p80 = scmp.ne.s32.totalorder %s63, %s79
      %p81 = scmp.eq.s32.totalorder %s15, 0
      %p82 = por %p80, %p81
      %s84 = sadd.s32 %s83, 1
      %p87 = scmp.eq.s32.totalorder %s9, 7
      %p88 = scmp.ne.s32.totalorder %s83, %s85
      %p89 = scmp.eq.s32.totalorder %s9, 0
      %p90 = por %p88, %p89
      %p91 = scmp.ne.s32.totalorder %s83, %s85
      %p92 = scmp.eq.s32.totalorder %s14, 7
      %p93 = por %p91, %p92
      %p94 = scmp.ne.s32.totalorder %s85, %s86
      %p95 = scmp.eq.s32.totalorder %s14, 0
      %p96 = por %p94, %p95
      %p97 = scmp.ne.s32.totalorder %s85, %s86
      %p98 = scmp.eq.s32.totalorder %s15, 7
      %p99 = por %p97, %p98
      %p101 = scmp.ne.s32.totalorder %s86, %s100
      %p102 = scmp.eq.s32.totalorder %s15, 0
      %p103 = por %p101, %p102
      %s104 = ssub.s32 %s16, %s28
      %p105 = scmp.eq.s32.totalorder %s104, 0
      %s107 = sadd.s32 %s106, 1
      %s108 = scalar_select %p105, %s106, %s107
      %p111 = pneg %p105
      %p112 = scmp.eq.s32.totalorder %s9, 7
      %p113 = por %p111, %p112
      %p114 = scmp.ne.s32.totalorder %s106, %s109
      %p115 = scmp.eq.s32.totalorder %s9, 0
      %p116 = por %p114, %p115
      %p117 = scmp.ne.s32.totalorder %s106, %s109
      %p118 = scmp.eq.s32.totalorder %s14, 7
      %p119 = por %p117, %p118
      %p120 = scmp.ne.s32.totalorder %s109, %s110
      %p121 = scmp.eq.s32.totalorder %s14, 0
      %p122 = por %p120, %p121
      %p123 = scmp.ne.s32.totalorder %s109, %s110
      %p124 = scmp.eq.s32.totalorder %s15, 7
      %p125 = por %p123, %p124
      %p127 = scmp.ne.s32.totalorder %s110, %s126
      %p128 = scmp.eq.s32.totalorder %s15, 0
      %p129 = por %p127, %p128
      %p130 = scmp.le.s32.totalorder 1, %s9
      %p131 = scmp.lt.s32.totalorder %s9, 9
      %p132 = pnand %p130, %p131
      %p133 = pneg %p132
      // Predicated region
      $region9: #{discriminator_forward.7} parent=5 // pred_check
        _
      $region10: #{discriminator_forward.7} parent=5 // pred_check_branch
        %135 = sbr.rel (%p132) target = $region12
      $region11: #{discriminator_forward.7} parent=5 // pred_region
        %s136 = ssub.s32 %s9, 1
        // Predicated region
        $region13: #{discriminator_forward.7} parent=11 // pred_check
          %p137 = pneg %p96
        $region14: #{discriminator_forward.7} parent=11 // pred_check_branch
          %139 = sbr.rel (%p137) target = $region16
        $region15: #{discriminator_forward.7} parent=11 // pred_region
          _
        $region16: #{discriminator_forward.7} parent=11 // pred_fallthru
          _
      $region12: #{discriminator_forward.7} parent=5 // pred_fallthru
        _
      %p140 = scmp.lt.s32.totalorder %s9, 8
      // Predicated region
      $region17: #{discriminator_forward.7} parent=5 // pred_check
        %p141 = pneg %p140
      $region18: #{discriminator_forward.7} parent=5 // pred_check_branch
        %143 = sbr.rel (%p141) target = $region20
      $region19: #{discriminator_forward.7} parent=5 // pred_region
        // Predicated region
        $region21: #{discriminator_forward.7} parent=19 // pred_check
          %p144 = pneg %p43
        $region22: #{discriminator_forward.7} parent=19 // pred_check_branch
          %146 = sbr.rel (%p144) target = $region24
        $region23: #{discriminator_forward.7} parent=19 // pred_region
          %s147 = sand.u32 %s33, 1
          %s148 = sand.u32 %s33, 1
          %s149 = smul.addr %s148, 64
          %s150 = scalar_lea.vmem [#allocation3], %s149
          %s151 = smul.u32 2, %s16
          %s152 = smul.u32 8, %s17
          %s153 = smul.addr %s151, 32
          %s154 = sadd.s32 %s152, %s153
          %s155 = smul.addr %s154, 4
          %s156 = scalar_lea.vmem %s0, %s155
          // Predicated region
          $region25: #{discriminator_forward.7} parent=23 // pred_check
            _
          $region26: #{discriminator_forward.7} parent=23 // pred_check_branch
            %158 = sbr.rel (0) target = $region28
          $region27: #{discriminator_forward.7} parent=23 // pred_region
            // Predicated region
            $region29: #{discriminator_forward.7} parent=27 // pred_check
              _
            $region30: #{discriminator_forward.7} parent=27 // pred_check_branch
              %160 = sbr.rel (0) target = $region32
            $region31: #{discriminator_forward.7} parent=27 // pred_region
              loop: start=0, step=1, limit=1
              $region33: #{discriminator_forward.7} parent=31 // loop_pre_header
                _
              $region34: #{discriminator_forward.7} parent=31 // loop_header
                %s162 = sphi 0, %s166
                %p163 = scmp.ge.s32.totalorder %s162, 1
                %s167 = sphi %s156, %s156
                %s168 = sphi %s150, %s150
              $region35: #{discriminator_forward.7} parent=31 // loop_header_branch
                %165 = sbr.rel (%p163) target = $region39
              $region36: #{discriminator_forward.7} parent=31 // loop_body
                %v169 = vld [vmem:[%s167] sm:$0xff]
                %170 = vst [vmem:[%s168] sm:$0xff] %v169
                %v171 = vld [vmem:[%s167 + $0x8] sm:$0xff]
                %172 = vst [vmem:[%s168 + $0x8] sm:$0xff] %v171
                %v173 = vld [vmem:[%s167 + $0x10] sm:$0xff]
                %174 = vst [vmem:[%s168 + $0x10] sm:$0xff] %v173
                %v175 = vld [vmem:[%s167 + $0x18] sm:$0xff]
                %176 = vst [vmem:[%s168 + $0x18] sm:$0xff] %v175
                %v177 = vld [vmem:[%s167 + $0x80] sm:$0xff]
                %178 = vst [vmem:[%s168 + $0x20] sm:$0xff] %v177
                %v179 = vld [vmem:[%s167 + $0x88] sm:$0xff]
                %180 = vst [vmem:[%s168 + $0x28] sm:$0xff] %v179
                %v181 = vld [vmem:[%s167 + $0x90] sm:$0xff]
                %182 = vst [vmem:[%s168 + $0x30] sm:$0xff] %v181
                %v183 = vld [vmem:[%s167 + $0x98] sm:$0xff]
                %184 = vst [vmem:[%s168 + $0x38] sm:$0xff] %v183
              $region37: #{discriminator_forward.7} parent=31 // loop_footer
                %s166 = sadd.s32 1, %s162
              $region38: #{discriminator_forward.7} parent=31 // loop_footer_branch
                %161 = sbr.rel target = $region34
              $region39: #{discriminator_forward.7} parent=31 // loop_exit
                _
            $region32: #{discriminator_forward.7} parent=27 // pred_fallthru
              _
            // Predicated region
            $region40: #{discriminator_forward.7} parent=27 // pred_check
              _
            $region41: #{discriminator_forward.7} parent=27 // pred_check_branch
              %186 = sbr.rel target = $region43
            $region42: #{discriminator_forward.7} parent=27 // pred_region
              _
            $region43: #{discriminator_forward.7} parent=27 // pred_fallthru
              _
          $region28: #{discriminator_forward.7} parent=23 // pred_fallthru
            _
          %187 = vnop
        $region24: #{discriminator_forward.7} parent=19 // pred_fallthru
          _
        // Predicated region
        $region44: #{discriminator_forward.7} parent=19 // pred_check
          %p188 = pneg %p69
        $region45: #{discriminator_forward.7} parent=19 // pred_check_branch
          %190 = sbr.rel (%p188) target = $region47
        $region46: #{discriminator_forward.7} parent=19 // pred_region
          %s191 = smul.u32 128, %s17
          %p192 = scmp.lt.s32.totalorder %s191, 511
          %s193 = scalar_select %p192, %s191, 511
          %s194 = smul.addr %s193, 4
          %s195 = smul.addr %s194, 4
          %s196 = scalar_lea.vmem %s1, %s195
          %s197 = smul.u32 128, %s17
        $region47: #{discriminator_forward.7} parent=19 // pred_fallthru
          _
      $region20: #{discriminator_forward.7} parent=5 // pred_fallthru
        _
      %p198 = scmp.le.s32.totalorder 1, %s9
      %p199 = scmp.lt.s32.totalorder %s9, 9
      %p200 = pnand %p198, %p199
      %p201 = pneg %p200
      // Predicated region
      $region48: #{discriminator_forward.7} parent=5 // pred_check
        _
      $region49: #{discriminator_forward.7} parent=5 // pred_check_branch
        %203 = sbr.rel (%p200) target = $region51
      $region50: #{discriminator_forward.7} parent=5 // pred_region
        %s204 = ssub.s32 %s9, 1
        %s205 = sand.u32 %s36, 1
        %s206 = sand.u32 %s36, 1
        %s207 = smul.addr %s206, 64
        %s208 = scalar_lea.vmem [#allocation3], %s207
        // Predicated region
        $region52: #{discriminator_forward.7} parent=50 // pred_check
          %p209 = pneg %p49
        $region53: #{discriminator_forward.7} parent=50 // pred_check_branch
          %211 = sbr.rel (%p209) target = $region55
        $region54: #{discriminator_forward.7} parent=50 // pred_region
          _
        $region55: #{discriminator_forward.7} parent=50 // pred_fallthru
          _
        %s212 = sand.u32 %s36, 1
        %s213 = sand.u32 %s36, 1
        %s214 = smul.addr %s213, 64
        %s215 = scalar_lea.vmem [#allocation3], %s214
        %p216 = pneg %p49
        %p217 = pneg %p46
        %s218 = smul.u32 128, %s19
        %p219 = scmp.lt.s32.totalorder %s218, 511
        %s220 = scalar_select %p219, %s218, 511
        %s221 = smul.addr %s220, 4
        %s222 = smul.addr %s221, 4
        %s223 = scalar_lea.vmem %s1, %s222
        %p224 = pneg %p75
        %p225 = pneg %p72
        %p226 = pneg %p96
        %p227 = pneg %p93
        %p228 = pneg %p122
        %p229 = pneg %p119
        %p230 = scmp.lt.s32.totalorder %s18, 1
        %s231 = scalar_select %p230, %s18, 1
        %s232 = smul.addr %s231, 8
        %s233 = scalar_lea.vmem %s3, %s232
        %s234 = smul.u32 2, %s18
        %s235 = smul.u32 8, %s19
        %s236 = smul.u32 128, %s19
        %p237 = scmp.lt.s32.totalorder %s236, 511
        %s238 = scalar_select %p237, %s236, 511
        %s239 = smul.addr %s238, 4
        %s240 = smul.addr %s239, 4
        %s241 = scalar_lea.vmem %s1, %s240
        %s242 = smul.u32 128, %s19
        %p243 = scmp.lt.s32.totalorder %s18, 1
        %s244 = scalar_select %p243, %s18, 1
        %s245 = smul.addr %s244, 8
        %s246 = scalar_lea.vmem %s3, %s245
        %p247 = scmp.eq.s32.totalorder %s19, 0
        // Predicated region
        $region56: #{discriminator_forward.7} parent=50 // pred_check
          %p248 = pneg %p247
        $region57: #{discriminator_forward.7} parent=50 // pred_check_branch
          %250 = sbr.rel (%p248) target = $region59
        $region58: #{discriminator_forward.7} parent=50 // pred_region
          %251 = vst [vmem:[#allocation2] sm:$0xff] 0.0
          %252 = vst [vmem:[#allocation2 + $0x8] sm:$0xff] 0.0
          %253 = vst [vmem:[#allocation2 + $0x10] sm:$0xff] 0.0
          %254 = vst [vmem:[#allocation2 + $0x18] sm:$0xff] 0.0
          %255 = vst [vmem:[#allocation2 + $0x20] sm:$0xff] 0.0
          %256 = vst [vmem:[#allocation2 + $0x28] sm:$0xff] 0.0
          %257 = vst [vmem:[#allocation2 + $0x30] sm:$0xff] 0.0
          %258 = vst [vmem:[#allocation2 + $0x38] sm:$0xff] 0.0
        $region59: #{discriminator_forward.7} parent=50 // pred_fallthru
          _
        %v259 = vld [vmem:[#allocation2] sm:$0xff]
        %v260 = vld [vmem:[#allocation2 + $0x8] sm:$0xff]
        %v261 = vld [vmem:[#allocation2 + $0x10] sm:$0xff]
        %v262 = vld [vmem:[#allocation2 + $0x18] sm:$0xff]
        %v263 = vld [vmem:[#allocation2 + $0x20] sm:$0xff]
        %v264 = vld [vmem:[#allocation2 + $0x28] sm:$0xff]
        %v265 = vld [vmem:[#allocation2 + $0x30] sm:$0xff]
        %v266 = vld [vmem:[#allocation2 + $0x38] sm:$0xff]
        %v267 = vld [vmem:[%s208] sm:$0xff]
        %v268 = vld [vmem:[%s208 + $0x8] sm:$0xff]
        %v269 = vld [vmem:[%s208 + $0x10] sm:$0xff]
        %v270 = vld [vmem:[%s208 + $0x18] sm:$0xff]
        %v271 = vld [vmem:[%s208 + $0x20] sm:$0xff]
        %v272 = vld [vmem:[%s208 + $0x28] sm:$0xff]
        %v273 = vld [vmem:[%s208 + $0x30] sm:$0xff]
        %v274 = vld [vmem:[%s208 + $0x38] sm:$0xff]
        %v275 = vld [vmem:[%s241] sm:$0xff]
        %v276 = vld [vmem:[%s241 + $0x8] sm:$0xff]
        %v277 = vld [vmem:[%s241 + $0x10] sm:$0xff]
        %v278 = vld [vmem:[%s241 + $0x18] sm:$0xff]
        %v279 = vld [vmem:[%s241 + $0x20] sm:$0xff]
        %v280 = vld [vmem:[%s241 + $0x28] sm:$0xff]
        %v281 = vld [vmem:[%s241 + $0x30] sm:$0xff]
        %v282 = vld [vmem:[%s241 + $0x38] sm:$0xff]
        %v283 = vld [vmem:[%s241 + $0x40] sm:$0xff]
        %v284 = vld [vmem:[%s241 + $0x48] sm:$0xff]
        %v285 = vld [vmem:[%s241 + $0x50] sm:$0xff]
        %v286 = vld [vmem:[%s241 + $0x58] sm:$0xff]
        %v287 = vld [vmem:[%s241 + $0x60] sm:$0xff]
        %v288 = vld [vmem:[%s241 + $0x68] sm:$0xff]
        %v289 = vld [vmem:[%s241 + $0x70] sm:$0xff]
        %v290 = vld [vmem:[%s241 + $0x78] sm:$0xff]
        %v291 = vld [vmem:[%s241 + $0x80] sm:$0xff]
        %v292 = vld [vmem:[%s241 + $0x88] sm:$0xff]
        %v293 = vld [vmem:[%s241 + $0x90] sm:$0xff]
        %v294 = vld [vmem:[%s241 + $0x98] sm:$0xff]
        %v295 = vld [vmem:[%s241 + $0xa0] sm:$0xff]
        %v296 = vld [vmem:[%s241 + $0xa8] sm:$0xff]
        %v297 = vld [vmem:[%s241 + $0xb0] sm:$0xff]
        %v298 = vld [vmem:[%s241 + $0xb8] sm:$0xff]
        %v299 = vld [vmem:[%s241 + $0xc0] sm:$0xff]
        %v300 = vld [vmem:[%s241 + $0xc8] sm:$0xff]
        %v301 = vld [vmem:[%s241 + $0xd0] sm:$0xff]
        %v302 = vld [vmem:[%s241 + $0xd8] sm:$0xff]
        %v303 = vld [vmem:[%s241 + $0xe0] sm:$0xff]
        %v304 = vld [vmem:[%s241 + $0xe8] sm:$0xff]
        %v305 = vld [vmem:[%s241 + $0xf0] sm:$0xff]
        %v306 = vld [vmem:[%s241 + $0xf8] sm:$0xff]
        %v307 = vld [vmem:[%s241 + $0x100] sm:$0xff]
        %v308 = vld [vmem:[%s241 + $0x108] sm:$0xff]
        %v309 = vld [vmem:[%s241 + $0x110] sm:$0xff]
        %v310 = vld [vmem:[%s241 + $0x118] sm:$0xff]
        %v311 = vld [vmem:[%s241 + $0x120] sm:$0xff]
        %v312 = vld [vmem:[%s241 + $0x128] sm:$0xff]
        %v313 = vld [vmem:[%s241 + $0x130] sm:$0xff]
        %v314 = vld [vmem:[%s241 + $0x138] sm:$0xff]
        %v315 = vld [vmem:[%s241 + $0x140] sm:$0xff]
        %v316 = vld [vmem:[%s241 + $0x148] sm:$0xff]
        %v317 = vld [vmem:[%s241 + $0x150] sm:$0xff]
        %v318 = vld [vmem:[%s241 + $0x158] sm:$0xff]
        %v319 = vld [vmem:[%s241 + $0x160] sm:$0xff]
        %v320 = vld [vmem:[%s241 + $0x168] sm:$0xff]
        %v321 = vld [vmem:[%s241 + $0x170] sm:$0xff]
        %v322 = vld [vmem:[%s241 + $0x178] sm:$0xff]
        %v323 = vld [vmem:[%s241 + $0x180] sm:$0xff]
        %v324 = vld [vmem:[%s241 + $0x188] sm:$0xff]
        %v325 = vld [vmem:[%s241 + $0x190] sm:$0xff]
        %v326 = vld [vmem:[%s241 + $0x198] sm:$0xff]
        %v327 = vld [vmem:[%s241 + $0x1a0] sm:$0xff]
        %v328 = vld [vmem:[%s241 + $0x1a8] sm:$0xff]
        %v329 = vld [vmem:[%s241 + $0x1b0] sm:$0xff]
        %v330 = vld [vmem:[%s241 + $0x1b8] sm:$0xff]
        %v331 = vld [vmem:[%s241 + $0x1c0] sm:$0xff]
        %v332 = vld [vmem:[%s241 + $0x1c8] sm:$0xff]
        %v333 = vld [vmem:[%s241 + $0x1d0] sm:$0xff]
        %v334 = vld [vmem:[%s241 + $0x1d8] sm:$0xff]
        %v335 = vld [vmem:[%s241 + $0x1e0] sm:$0xff]
        %v336 = vld [vmem:[%s241 + $0x1e8] sm:$0xff]
        %v337 = vld [vmem:[%s241 + $0x1f0] sm:$0xff]
        %v338 = vld [vmem:[%s241 + $0x1f8] sm:$0xff]
        %v339 = vld [vmem:[%s241 + $0x200] sm:$0xff]
        %v340 = vld [vmem:[%s241 + $0x208] sm:$0xff]
        %v341 = vld [vmem:[%s241 + $0x210] sm:$0xff]
        %v342 = vld [vmem:[%s241 + $0x218] sm:$0xff]
        %v343 = vld [vmem:[%s241 + $0x220] sm:$0xff]
        %v344 = vld [vmem:[%s241 + $0x228] sm:$0xff]
        %v345 = vld [vmem:[%s241 + $0x230] sm:$0xff]
        %v346 = vld [vmem:[%s241 + $0x238] sm:$0xff]
        %v347 = vld [vmem:[%s241 + $0x240] sm:$0xff]
        %v348 = vld [vmem:[%s241 + $0x248] sm:$0xff]
        %v349 = vld [vmem:[%s241 + $0x250] sm:$0xff]
        %v350 = vld [vmem:[%s241 + $0x258] sm:$0xff]
        %v351 = vld [vmem:[%s241 + $0x260] sm:$0xff]
        %v352 = vld [vmem:[%s241 + $0x268] sm:$0xff]
        %v353 = vld [vmem:[%s241 + $0x270] sm:$0xff]
        %v354 = vld [vmem:[%s241 + $0x278] sm:$0xff]
        %v355 = vld [vmem:[%s241 + $0x280] sm:$0xff]
        %v356 = vld [vmem:[%s241 + $0x288] sm:$0xff]
        %v357 = vld [vmem:[%s241 + $0x290] sm:$0xff]
        %v358 = vld [vmem:[%s241 + $0x298] sm:$0xff]
        %v359 = vld [vmem:[%s241 + $0x2a0] sm:$0xff]
        %v360 = vld [vmem:[%s241 + $0x2a8] sm:$0xff]
        %v361 = vld [vmem:[%s241 + $0x2b0] sm:$0xff]
        %v362 = vld [vmem:[%s241 + $0x2b8] sm:$0xff]
        %v363 = vld [vmem:[%s241 + $0x2c0] sm:$0xff]
        %v364 = vld [vmem:[%s241 + $0x2c8] sm:$0xff]
        %v365 = vld [vmem:[%s241 + $0x2d0] sm:$0xff]
        %v366 = vld [vmem:[%s241 + $0x2d8] sm:$0xff]
        %v367 = vld [vmem:[%s241 + $0x2e0] sm:$0xff]
        %v368 = vld [vmem:[%s241 + $0x2e8] sm:$0xff]
        %v369 = vld [vmem:[%s241 + $0x2f0] sm:$0xff]
        %v370 = vld [vmem:[%s241 + $0x2f8] sm:$0xff]
        %v371 = vld [vmem:[%s241 + $0x300] sm:$0xff]
        %v372 = vld [vmem:[%s241 + $0x308] sm:$0xff]
        %v373 = vld [vmem:[%s241 + $0x310] sm:$0xff]
        %v374 = vld [vmem:[%s241 + $0x318] sm:$0xff]
        %v375 = vld [vmem:[%s241 + $0x320] sm:$0xff]
        %v376 = vld [vmem:[%s241 + $0x328] sm:$0xff]
        %v377 = vld [vmem:[%s241 + $0x330] sm:$0xff]
        %v378 = vld [vmem:[%s241 + $0x338] sm:$0xff]
        %v379 = vld [vmem:[%s241 + $0x340] sm:$0xff]
        %v380 = vld [vmem:[%s241 + $0x348] sm:$0xff]
        %v381 = vld [vmem:[%s241 + $0x350] sm:$0xff]
        %v382 = vld [vmem:[%s241 + $0x358] sm:$0xff]
        %v383 = vld [vmem:[%s241 + $0x360] sm:$0xff]
        %v384 = vld [vmem:[%s241 + $0x368] sm:$0xff]
        %v385 = vld [vmem:[%s241 + $0x370] sm:$0xff]
        %v386 = vld [vmem:[%s241 + $0x378] sm:$0xff]
        %v387 = vld [vmem:[%s241 + $0x380] sm:$0xff]
        %v388 = vld [vmem:[%s241 + $0x388] sm:$0xff]
        %v389 = vld [vmem:[%s241 + $0x390] sm:$0xff]
        %v390 = vld [vmem:[%s241 + $0x398] sm:$0xff]
        %v391 = vld [vmem:[%s241 + $0x3a0] sm:$0xff]
        %v392 = vld [vmem:[%s241 + $0x3a8] sm:$0xff]
        %v393 = vld [vmem:[%s241 + $0x3b0] sm:$0xff]
        %v394 = vld [vmem:[%s241 + $0x3b8] sm:$0xff]
        %v395 = vld [vmem:[%s241 + $0x3c0] sm:$0xff]
        %v396 = vld [vmem:[%s241 + $0x3c8] sm:$0xff]
        %v397 = vld [vmem:[%s241 + $0x3d0] sm:$0xff]
        %v398 = vld [vmem:[%s241 + $0x3d8] sm:$0xff]
        %v399 = vld [vmem:[%s241 + $0x3e0] sm:$0xff]
        %v400 = vld [vmem:[%s241 + $0x3e8] sm:$0xff]
        %v401 = vld [vmem:[%s241 + $0x3f0] sm:$0xff]
        %v402 = vld [vmem:[%s241 + $0x3f8] sm:$0xff]
        %v403 = vld [vmem:[%s241 + $0x400] sm:$0xff]
        %v404 = vld [vmem:[%s241 + $0x408] sm:$0xff]
        %v405 = vld [vmem:[%s241 + $0x410] sm:$0xff]
        %v406 = vld [vmem:[%s241 + $0x418] sm:$0xff]
        %v407 = vld [vmem:[%s241 + $0x420] sm:$0xff]
        %v408 = vld [vmem:[%s241 + $0x428] sm:$0xff]
        %v409 = vld [vmem:[%s241 + $0x430] sm:$0xff]
        %v410 = vld [vmem:[%s241 + $0x438] sm:$0xff]
        %v411 = vld [vmem:[%s241 + $0x440] sm:$0xff]
        %v412 = vld [vmem:[%s241 + $0x448] sm:$0xff]
        %v413 = vld [vmem:[%s241 + $0x450] sm:$0xff]
        %v414 = vld [vmem:[%s241 + $0x458] sm:$0xff]
        %v415 = vld [vmem:[%s241 + $0x460] sm:$0xff]
        %v416 = vld [vmem:[%s241 + $0x468] sm:$0xff]
        %v417 = vld [vmem:[%s241 + $0x470] sm:$0xff]
        %v418 = vld [vmem:[%s241 + $0x478] sm:$0xff]
        %v419 = vld [vmem:[%s241 + $0x480] sm:$0xff]
        %v420 = vld [vmem:[%s241 + $0x488] sm:$0xff]
        %v421 = vld [vmem:[%s241 + $0x490] sm:$0xff]
        %v422 = vld [vmem:[%s241 + $0x498] sm:$0xff]
        %v423 = vld [vmem:[%s241 + $0x4a0] sm:$0xff]
        %v424 = vld [vmem:[%s241 + $0x4a8] sm:$0xff]
        %v425 = vld [vmem:[%s241 + $0x4b0] sm:$0xff]
        %v426 = vld [vmem:[%s241 + $0x4b8] sm:$0xff]
        %v427 = vld [vmem:[%s241 + $0x4c0] sm:$0xff]
        %v428 = vld [vmem:[%s241 + $0x4c8] sm:$0xff]
        %v429 = vld [vmem:[%s241 + $0x4d0] sm:$0xff]
        %v430 = vld [vmem:[%s241 + $0x4d8] sm:$0xff]
        %v431 = vld [vmem:[%s241 + $0x4e0] sm:$0xff]
        %v432 = vld [vmem:[%s241 + $0x4e8] sm:$0xff]
        %v433 = vld [vmem:[%s241 + $0x4f0] sm:$0xff]
        %v434 = vld [vmem:[%s241 + $0x4f8] sm:$0xff]
        %v435 = vld [vmem:[%s241 + $0x500] sm:$0xff]
        %v436 = vld [vmem:[%s241 + $0x508] sm:$0xff]
        %v437 = vld [vmem:[%s241 + $0x510] sm:$0xff]
        %v438 = vld [vmem:[%s241 + $0x518] sm:$0xff]
        %v439 = vld [vmem:[%s241 + $0x520] sm:$0xff]
        %v440 = vld [vmem:[%s241 + $0x528] sm:$0xff]
        %v441 = vld [vmem:[%s241 + $0x530] sm:$0xff]
        %v442 = vld [vmem:[%s241 + $0x538] sm:$0xff]
        %v443 = vld [vmem:[%s241 + $0x540] sm:$0xff]
        %v444 = vld [vmem:[%s241 + $0x548] sm:$0xff]
        %v445 = vld [vmem:[%s241 + $0x550] sm:$0xff]
        %v446 = vld [vmem:[%s241 + $0x558] sm:$0xff]
        %v447 = vld [vmem:[%s241 + $0x560] sm:$0xff]
        %v448 = vld [vmem:[%s241 + $0x568] sm:$0xff]
        %v449 = vld [vmem:[%s241 + $0x570] sm:$0xff]
        %v450 = vld [vmem:[%s241 + $0x578] sm:$0xff]
        %v451 = vld [vmem:[%s241 + $0x580] sm:$0xff]
        %v452 = vld [vmem:[%s241 + $0x588] sm:$0xff]
        %v453 = vld [vmem:[%s241 + $0x590] sm:$0xff]
        %v454 = vld [vmem:[%s241 + $0x598] sm:$0xff]
        %v455 = vld [vmem:[%s241 + $0x5a0] sm:$0xff]
        %v456 = vld [vmem:[%s241 + $0x5a8] sm:$0xff]
        %v457 = vld [vmem:[%s241 + $0x5b0] sm:$0xff]
        %v458 = vld [vmem:[%s241 + $0x5b8] sm:$0xff]
        %v459 = vld [vmem:[%s241 + $0x5c0] sm:$0xff]
        %v460 = vld [vmem:[%s241 + $0x5c8] sm:$0xff]
        %v461 = vld [vmem:[%s241 + $0x5d0] sm:$0xff]
        %v462 = vld [vmem:[%s241 + $0x5d8] sm:$0xff]
        %v463 = vld [vmem:[%s241 + $0x5e0] sm:$0xff]
        %v464 = vld [vmem:[%s241 + $0x5e8] sm:$0xff]
        %v465 = vld [vmem:[%s241 + $0x5f0] sm:$0xff]
        %v466 = vld [vmem:[%s241 + $0x5f8] sm:$0xff]
        %v467 = vld [vmem:[%s241 + $0x600] sm:$0xff]
        %v468 = vld [vmem:[%s241 + $0x608] sm:$0xff]
        %v469 = vld [vmem:[%s241 + $0x610] sm:$0xff]
        %v470 = vld [vmem:[%s241 + $0x618] sm:$0xff]
        %v471 = vld [vmem:[%s241 + $0x620] sm:$0xff]
        %v472 = vld [vmem:[%s241 + $0x628] sm:$0xff]
        %v473 = vld [vmem:[%s241 + $0x630] sm:$0xff]
        %v474 = vld [vmem:[%s241 + $0x638] sm:$0xff]
        %v475 = vld [vmem:[%s241 + $0x640] sm:$0xff]
        %v476 = vld [vmem:[%s241 + $0x648] sm:$0xff]
        %v477 = vld [vmem:[%s241 + $0x650] sm:$0xff]
        %v478 = vld [vmem:[%s241 + $0x658] sm:$0xff]
        %v479 = vld [vmem:[%s241 + $0x660] sm:$0xff]
        %v480 = vld [vmem:[%s241 + $0x668] sm:$0xff]
        %v481 = vld [vmem:[%s241 + $0x670] sm:$0xff]
        %v482 = vld [vmem:[%s241 + $0x678] sm:$0xff]
        %v483 = vld [vmem:[%s241 + $0x680] sm:$0xff]
        %v484 = vld [vmem:[%s241 + $0x688] sm:$0xff]
        %v485 = vld [vmem:[%s241 + $0x690] sm:$0xff]
        %v486 = vld [vmem:[%s241 + $0x698] sm:$0xff]
        %v487 = vld [vmem:[%s241 + $0x6a0] sm:$0xff]
        %v488 = vld [vmem:[%s241 + $0x6a8] sm:$0xff]
        %v489 = vld [vmem:[%s241 + $0x6b0] sm:$0xff]
        %v490 = vld [vmem:[%s241 + $0x6b8] sm:$0xff]
        %v491 = vld [vmem:[%s241 + $0x6c0] sm:$0xff]
        %v492 = vld [vmem:[%s241 + $0x6c8] sm:$0xff]
        %v493 = vld [vmem:[%s241 + $0x6d0] sm:$0xff]
        %v494 = vld [vmem:[%s241 + $0x6d8] sm:$0xff]
        %v495 = vld [vmem:[%s241 + $0x6e0] sm:$0xff]
        %v496 = vld [vmem:[%s241 + $0x6e8] sm:$0xff]
        %v497 = vld [vmem:[%s241 + $0x6f0] sm:$0xff]
        %v498 = vld [vmem:[%s241 + $0x6f8] sm:$0xff]
        %v499 = vld [vmem:[%s241 + $0x700] sm:$0xff]
        %v500 = vld [vmem:[%s241 + $0x708] sm:$0xff]
        %v501 = vld [vmem:[%s241 + $0x710] sm:$0xff]
        %v502 = vld [vmem:[%s241 + $0x718] sm:$0xff]
        %v503 = vld [vmem:[%s241 + $0x720] sm:$0xff]
        %v504 = vld [vmem:[%s241 + $0x728] sm:$0xff]
        %v505 = vld [vmem:[%s241 + $0x730] sm:$0xff]
        %v506 = vld [vmem:[%s241 + $0x738] sm:$0xff]
        %v507 = vld [vmem:[%s241 + $0x740] sm:$0xff]
        %v508 = vld [vmem:[%s241 + $0x748] sm:$0xff]
        %v509 = vld [vmem:[%s241 + $0x750] sm:$0xff]
        %v510 = vld [vmem:[%s241 + $0x758] sm:$0xff]
        %v511 = vld [vmem:[%s241 + $0x760] sm:$0xff]
        %v512 = vld [vmem:[%s241 + $0x768] sm:$0xff]
        %v513 = vld [vmem:[%s241 + $0x770] sm:$0xff]
        %v514 = vld [vmem:[%s241 + $0x778] sm:$0xff]
        %v515 = vld [vmem:[%s241 + $0x780] sm:$0xff]
        %v516 = vld [vmem:[%s241 + $0x788] sm:$0xff]
        %v517 = vld [vmem:[%s241 + $0x790] sm:$0xff]
        %v518 = vld [vmem:[%s241 + $0x798] sm:$0xff]
        %v519 = vld [vmem:[%s241 + $0x7a0] sm:$0xff]
        %v520 = vld [vmem:[%s241 + $0x7a8] sm:$0xff]
        %v521 = vld [vmem:[%s241 + $0x7b0] sm:$0xff]
        %v522 = vld [vmem:[%s241 + $0x7b8] sm:$0xff]
        %v523 = vld [vmem:[%s241 + $0x7c0] sm:$0xff]
        %v524 = vld [vmem:[%s241 + $0x7c8] sm:$0xff]
        %v525 = vld [vmem:[%s241 + $0x7d0] sm:$0xff]
        %v526 = vld [vmem:[%s241 + $0x7d8] sm:$0xff]
        %v527 = vld [vmem:[%s241 + $0x7e0] sm:$0xff]
        %v528 = vld [vmem:[%s241 + $0x7e8] sm:$0xff]
        %v529 = vld [vmem:[%s241 + $0x7f0] sm:$0xff]
        %v530 = vld [vmem:[%s241 + $0x7f8] sm:$0xff]
        %v539 = vunpack.c.l.b16 %v267
        %v540 = vunpack.c.h.b16 %v267
        %v541 = vunpack.c.l.b16 %v268
        %v542 = vunpack.c.h.b16 %v268
        %v543 = vunpack.c.l.b16 %v269
        %v544 = vunpack.c.h.b16 %v269
        %v545 = vunpack.c.l.b16 %v270
        %v546 = vunpack.c.h.b16 %v270
        %v547 = vunpack.c.l.b16 %v271
        %v548 = vunpack.c.h.b16 %v271
        %v549 = vunpack.c.l.b16 %v272
        %v550 = vunpack.c.h.b16 %v272
        %v551 = vunpack.c.l.b16 %v273
        %v552 = vunpack.c.h.b16 %v273
        %v553 = vunpack.c.l.b16 %v274
        %v554 = vunpack.c.h.b16 %v274
        %v555 = vpack.c.b16 %v547, %v539
        %v556 = vpack.c.b16 %v548, %v540
        %v557 = vpack.c.b16 %v549, %v541
        %v558 = vpack.c.b16 %v550, %v542
        %v559 = vpack.c.b16 %v551, %v543
        %v560 = vpack.c.b16 %v552, %v544
        %v561 = vpack.c.b16 %v553, %v545
        %v562 = vpack.c.b16 %v554, %v546
        %v827 = vunpack.c.l.b16 %v275
        %v828 = vunpack.c.h.b16 %v275
        %v829 = vunpack.c.l.b16 %v276
        %v830 = vunpack.c.h.b16 %v276
        %v831 = vunpack.c.l.b16 %v277
        %v832 = vunpack.c.h.b16 %v277
        %v833 = vunpack.c.l.b16 %v278
        %v834 = vunpack.c.h.b16 %v278
        %v835 = vunpack.c.l.b16 %v279
        %v836 = vunpack.c.h.b16 %v279
        %v837 = vunpack.c.l.b16 %v280
        %v838 = vunpack.c.h.b16 %v280
        %v839 = vunpack.c.l.b16 %v281
        %v840 = vunpack.c.h.b16 %v281
        %v841 = vunpack.c.l.b16 %v282
        %v842 = vunpack.c.h.b16 %v282
        %v843 = vunpack.c.l.b16 %v283
        %v844 = vunpack.c.h.b16 %v283
        %v845 = vunpack.c.l.b16 %v284
        %v846 = vunpack.c.h.b16 %v284
        %v847 = vunpack.c.l.b16 %v285
        %v848 = vunpack.c.h.b16 %v285
        %v849 = vunpack.c.l.b16 %v286
        %v850 = vunpack.c.h.b16 %v286
        %v851 = vunpack.c.l.b16 %v287
        %v852 = vunpack.c.h.b16 %v287
        %v853 = vunpack.c.l.b16 %v288
        %v854 = vunpack.c.h.b16 %v288
        %v855 = vunpack.c.l.b16 %v289
        %v856 = vunpack.c.h.b16 %v289
        %v857 = vunpack.c.l.b16 %v290
        %v858 = vunpack.c.h.b16 %v290
        %v859 = vunpack.c.l.b16 %v291
        %v860 = vunpack.c.h.b16 %v291
        %v861 = vunpack.c.l.b16 %v292
        %v862 = vunpack.c.h.b16 %v292
        %v863 = vunpack.c.l.b16 %v293
        %v864 = vunpack.c.h.b16 %v293
        %v865 = vunpack.c.l.b16 %v294
        %v866 = vunpack.c.h.b16 %v294
        %v867 = vunpack.c.l.b16 %v295
        %v868 = vunpack.c.h.b16 %v295
        %v869 = vunpack.c.l.b16 %v296
        %v870 = vunpack.c.h.b16 %v296
        %v871 = vunpack.c.l.b16 %v297
        %v872 = vunpack.c.h.b16 %v297
        %v873 = vunpack.c.l.b16 %v298
        %v874 = vunpack.c.h.b16 %v298
        %v875 = vunpack.c.l.b16 %v299
        %v876 = vunpack.c.h.b16 %v299
        %v877 = vunpack.c.l.b16 %v300
        %v878 = vunpack.c.h.b16 %v300
        %v879 = vunpack.c.l.b16 %v301
        %v880 = vunpack.c.h.b16 %v301
        %v881 = vunpack.c.l.b16 %v302
        %v882 = vunpack.c.h.b16 %v302
        %v883 = vunpack.c.l.b16 %v303
        %v884 = vunpack.c.h.b16 %v303
        %v885 = vunpack.c.l.b16 %v304
        %v886 = vunpack.c.h.b16 %v304
        %v887 = vunpack.c.l.b16 %v305
        %v888 = vunpack.c.h.b16 %v305
        %v889 = vunpack.c.l.b16 %v306
        %v890 = vunpack.c.h.b16 %v306
        %v891 = vunpack.c.l.b16 %v307
        %v892 = vunpack.c.h.b16 %v307
        %v893 = vunpack.c.l.b16 %v308
        %v894 = vunpack.c.h.b16 %v308
        %v895 = vunpack.c.l.b16 %v309
        %v896 = vunpack.c.h.b16 %v309
        %v897 = vunpack.c.l.b16 %v310
        %v898 = vunpack.c.h.b16 %v310
        %v899 = vunpack.c.l.b16 %v311
        %v900 = vunpack.c.h.b16 %v311
        %v901 = vunpack.c.l.b16 %v312
        %v902 = vunpack.c.h.b16 %v312
        %v903 = vunpack.c.l.b16 %v313
        %v904 = vunpack.c.h.b16 %v313
        %v905 = vunpack.c.l.b16 %v314
        %v906 = vunpack.c.h.b16 %v314
        %v907 = vunpack.c.l.b16 %v315
        %v908 = vunpack.c.h.b16 %v315
        %v909 = vunpack.c.l.b16 %v316
        %v910 = vunpack.c.h.b16 %v316
        %v911 = vunpack.c.l.b16 %v317
        %v912 = vunpack.c.h.b16 %v317
        %v913 = vunpack.c.l.b16 %v318
        %v914 = vunpack.c.h.b16 %v318
        %v915 = vunpack.c.l.b16 %v319
        %v916 = vunpack.c.h.b16 %v319
        %v917 = vunpack.c.l.b16 %v320
        %v918 = vunpack.c.h.b16 %v320
        %v919 = vunpack.c.l.b16 %v321
        %v920 = vunpack.c.h.b16 %v321
        %v921 = vunpack.c.l.b16 %v322
        %v922 = vunpack.c.h.b16 %v322
        %v923 = vunpack.c.l.b16 %v323
        %v924 = vunpack.c.h.b16 %v323
        %v925 = vunpack.c.l.b16 %v324
        %v926 = vunpack.c.h.b16 %v324
        %v927 = vunpack.c.l.b16 %v325
        %v928 = vunpack.c.h.b16 %v325
        %v929 = vunpack.c.l.b16 %v326
        %v930 = vunpack.c.h.b16 %v326
        %v931 = vunpack.c.l.b16 %v327
        %v932 = vunpack.c.h.b16 %v327
        %v933 = vunpack.c.l.b16 %v328
        %v934 = vunpack.c.h.b16 %v328
        %v935 = vunpack.c.l.b16 %v329
        %v936 = vunpack.c.h.b16 %v329
        %v937 = vunpack.c.l.b16 %v330
        %v938 = vunpack.c.h.b16 %v330
        %v939 = vunpack.c.l.b16 %v331
        %v940 = vunpack.c.h.b16 %v331
        %v941 = vunpack.c.l.b16 %v332
        %v942 = vunpack.c.h.b16 %v332
        %v943 = vunpack.c.l.b16 %v333
        %v944 = vunpack.c.h.b16 %v333
        %v945 = vunpack.c.l.b16 %v334
        %v946 = vunpack.c.h.b16 %v334
        %v947 = vunpack.c.l.b16 %v335
        %v948 = vunpack.c.h.b16 %v335
        %v949 = vunpack.c.l.b16 %v336
        %v950 = vunpack.c.h.b16 %v336
        %v951 = vunpack.c.l.b16 %v337
        %v952 = vunpack.c.h.b16 %v337
        %v953 = vunpack.c.l.b16 %v338
        %v954 = vunpack.c.h.b16 %v338
        %v955 = vunpack.c.l.b16 %v339
        %v956 = vunpack.c.h.b16 %v339
        %v957 = vunpack.c.l.b16 %v340
        %v958 = vunpack.c.h.b16 %v340
        %v959 = vunpack.c.l.b16 %v341
        %v960 = vunpack.c.h.b16 %v341
        %v961 = vunpack.c.l.b16 %v342
        %v962 = vunpack.c.h.b16 %v342
        %v963 = vunpack.c.l.b16 %v343
        %v964 = vunpack.c.h.b16 %v343
        %v965 = vunpack.c.l.b16 %v344
        %v966 = vunpack.c.h.b16 %v344
        %v967 = vunpack.c.l.b16 %v345
        %v968 = vunpack.c.h.b16 %v345
        %v969 = vunpack.c.l.b16 %v346
        %v970 = vunpack.c.h.b16 %v346
        %v971 = vunpack.c.l.b16 %v347
        %v972 = vunpack.c.h.b16 %v347
        %v973 = vunpack.c.l.b16 %v348
        %v974 = vunpack.c.h.b16 %v348
        %v975 = vunpack.c.l.b16 %v349
        %v976 = vunpack.c.h.b16 %v349
        %v977 = vunpack.c.l.b16 %v350
        %v978 = vunpack.c.h.b16 %v350
        %v979 = vunpack.c.l.b16 %v351
        %v980 = vunpack.c.h.b16 %v351
        %v981 = vunpack.c.l.b16 %v352
        %v982 = vunpack.c.h.b16 %v352
        %v983 = vunpack.c.l.b16 %v353
        %v984 = vunpack.c.h.b16 %v353
        %v985 = vunpack.c.l.b16 %v354
        %v986 = vunpack.c.h.b16 %v354
        %v987 = vunpack.c.l.b16 %v355
        %v988 = vunpack.c.h.b16 %v355
        %v989 = vunpack.c.l.b16 %v356
        %v990 = vunpack.c.h.b16 %v356
        %v991 = vunpack.c.l.b16 %v357
        %v992 = vunpack.c.h.b16 %v357
        %v993 = vunpack.c.l.b16 %v358
        %v994 = vunpack.c.h.b16 %v358
        %v995 = vunpack.c.l.b16 %v359
        %v996 = vunpack.c.h.b16 %v359
        %v997 = vunpack.c.l.b16 %v360
        %v998 = vunpack.c.h.b16 %v360
        %v999 = vunpack.c.l.b16 %v361
        %v1000 = vunpack.c.h.b16 %v361
        %v1001 = vunpack.c.l.b16 %v362
        %v1002 = vunpack.c.h.b16 %v362
        %v1003 = vunpack.c.l.b16 %v363
        %v1004 = vunpack.c.h.b16 %v363
        %v1005 = vunpack.c.l.b16 %v364
        %v1006 = vunpack.c.h.b16 %v364
        %v1007 = vunpack.c.l.b16 %v365
        %v1008 = vunpack.c.h.b16 %v365
        %v1009 = vunpack.c.l.b16 %v366
        %v1010 = vunpack.c.h.b16 %v366
        %v1011 = vunpack.c.l.b16 %v367
        %v1012 = vunpack.c.h.b16 %v367
        %v1013 = vunpack.c.l.b16 %v368
        %v1014 = vunpack.c.h.b16 %v368
        %v1015 = vunpack.c.l.b16 %v369
        %v1016 = vunpack.c.h.b16 %v369
        %v1017 = vunpack.c.l.b16 %v370
        %v1018 = vunpack.c.h.b16 %v370
        %v1019 = vunpack.c.l.b16 %v371
        %v1020 = vunpack.c.h.b16 %v371
        %v1021 = vunpack.c.l.b16 %v372
        %v1022 = vunpack.c.h.b16 %v372
        %v1023 = vunpack.c.l.b16 %v373
        %v1024 = vunpack.c.h.b16 %v373
        %v1025 = vunpack.c.l.b16 %v374
        %v1026 = vunpack.c.h.b16 %v374
        %v1027 = vunpack.c.l.b16 %v375
        %v1028 = vunpack.c.h.b16 %v375
        %v1029 = vunpack.c.l.b16 %v376
        %v1030 = vunpack.c.h.b16 %v376
        %v1031 = vunpack.c.l.b16 %v377
        %v1032 = vunpack.c.h.b16 %v377
        %v1033 = vunpack.c.l.b16 %v378
        %v1034 = vunpack.c.h.b16 %v378
        %v1035 = vunpack.c.l.b16 %v379
        %v1036 = vunpack.c.h.b16 %v379
        %v1037 = vunpack.c.l.b16 %v380
        %v1038 = vunpack.c.h.b16 %v380
        %v1039 = vunpack.c.l.b16 %v381
        %v1040 = vunpack.c.h.b16 %v381
        %v1041 = vunpack.c.l.b16 %v382
        %v1042 = vunpack.c.h.b16 %v382
        %v1043 = vunpack.c.l.b16 %v383
        %v1044 = vunpack.c.h.b16 %v383
        %v1045 = vunpack.c.l.b16 %v384
        %v1046 = vunpack.c.h.b16 %v384
        %v1047 = vunpack.c.l.b16 %v385
        %v1048 = vunpack.c.h.b16 %v385
        %v1049 = vunpack.c.l.b16 %v386
        %v1050 = vunpack.c.h.b16 %v386
        %v1051 = vunpack.c.l.b16 %v387
        %v1052 = vunpack.c.h.b16 %v387
        %v1053 = vunpack.c.l.b16 %v388
        %v1054 = vunpack.c.h.b16 %v388
        %v1055 = vunpack.c.l.b16 %v389
        %v1056 = vunpack.c.h.b16 %v389
        %v1057 = vunpack.c.l.b16 %v390
        %v1058 = vunpack.c.h.b16 %v390
        %v1059 = vunpack.c.l.b16 %v391
        %v1060 = vunpack.c.h.b16 %v391
        %v1061 = vunpack.c.l.b16 %v392
        %v1062 = vunpack.c.h.b16 %v392
        %v1063 = vunpack.c.l.b16 %v393
        %v1064 = vunpack.c.h.b16 %v393
        %v1065 = vunpack.c.l.b16 %v394
        %v1066 = vunpack.c.h.b16 %v394
        %v1067 = vunpack.c.l.b16 %v395
        %v1068 = vunpack.c.h.b16 %v395
        %v1069 = vunpack.c.l.b16 %v396
        %v1070 = vunpack.c.h.b16 %v396
        %v1071 = vunpack.c.l.b16 %v397
        %v1072 = vunpack.c.h.b16 %v397
        %v1073 = vunpack.c.l.b16 %v398
        %v1074 = vunpack.c.h.b16 %v398
        %v1075 = vunpack.c.l.b16 %v399
        %v1076 = vunpack.c.h.b16 %v399
        %v1077 = vunpack.c.l.b16 %v400
        %v1078 = vunpack.c.h.b16 %v400
        %v1079 = vunpack.c.l.b16 %v401
        %v1080 = vunpack.c.h.b16 %v401
        %v1081 = vunpack.c.l.b16 %v402
        %v1082 = vunpack.c.h.b16 %v402
        %v1083 = vunpack.c.l.b16 %v403
        %v1084 = vunpack.c.h.b16 %v403
        %v1085 = vunpack.c.l.b16 %v404
        %v1086 = vunpack.c.h.b16 %v404
        %v1087 = vunpack.c.l.b16 %v405
        %v1088 = vunpack.c.h.b16 %v405
        %v1089 = vunpack.c.l.b16 %v406
        %v1090 = vunpack.c.h.b16 %v406
        %v1091 = vunpack.c.l.b16 %v407
        %v1092 = vunpack.c.h.b16 %v407
        %v1093 = vunpack.c.l.b16 %v408
        %v1094 = vunpack.c.h.b16 %v408
        %v1095 = vunpack.c.l.b16 %v409
        %v1096 = vunpack.c.h.b16 %v409
        %v1097 = vunpack.c.l.b16 %v410
        %v1098 = vunpack.c.h.b16 %v410
        %v1099 = vunpack.c.l.b16 %v411
        %v1100 = vunpack.c.h.b16 %v411
        %v1101 = vunpack.c.l.b16 %v412
        %v1102 = vunpack.c.h.b16 %v412
        %v1103 = vunpack.c.l.b16 %v413
        %v1104 = vunpack.c.h.b16 %v413
        %v1105 = vunpack.c.l.b16 %v414
        %v1106 = vunpack.c.h.b16 %v414
        %v1107 = vunpack.c.l.b16 %v415
        %v1108 = vunpack.c.h.b16 %v415
        %v1109 = vunpack.c.l.b16 %v416
        %v1110 = vunpack.c.h.b16 %v416
        %v1111 = vunpack.c.l.b16 %v417
        %v1112 = vunpack.c.h.b16 %v417
        %v1113 = vunpack.c.l.b16 %v418
        %v1114 = vunpack.c.h.b16 %v418
        %v1115 = vunpack.c.l.b16 %v419
        %v1116 = vunpack.c.h.b16 %v419
        %v1117 = vunpack.c.l.b16 %v420
        %v1118 = vunpack.c.h.b16 %v420
        %v1119 = vunpack.c.l.b16 %v421
        %v1120 = vunpack.c.h.b16 %v421
        %v1121 = vunpack.c.l.b16 %v422
        %v1122 = vunpack.c.h.b16 %v422
        %v1123 = vunpack.c.l.b16 %v423
        %v1124 = vunpack.c.h.b16 %v423
        %v1125 = vunpack.c.l.b16 %v424
        %v1126 = vunpack.c.h.b16 %v424
        %v1127 = vunpack.c.l.b16 %v425
        %v1128 = vunpack.c.h.b16 %v425
        %v1129 = vunpack.c.l.b16 %v426
        %v1130 = vunpack.c.h.b16 %v426
        %v1131 = vunpack.c.l.b16 %v427
        %v1132 = vunpack.c.h.b16 %v427
        %v1133 = vunpack.c.l.b16 %v428
        %v1134 = vunpack.c.h.b16 %v428
        %v1135 = vunpack.c.l.b16 %v429
        %v1136 = vunpack.c.h.b16 %v429
        %v1137 = vunpack.c.l.b16 %v430
        %v1138 = vunpack.c.h.b16 %v430
        %v1139 = vunpack.c.l.b16 %v431
        %v1140 = vunpack.c.h.b16 %v431
        %v1141 = vunpack.c.l.b16 %v432
        %v1142 = vunpack.c.h.b16 %v432
        %v1143 = vunpack.c.l.b16 %v433
        %v1144 = vunpack.c.h.b16 %v433
        %v1145 = vunpack.c.l.b16 %v434
        %v1146 = vunpack.c.h.b16 %v434
        %v1147 = vunpack.c.l.b16 %v435
        %v1148 = vunpack.c.h.b16 %v435
        %v1149 = vunpack.c.l.b16 %v436
        %v1150 = vunpack.c.h.b16 %v436
        %v1151 = vunpack.c.l.b16 %v437
        %v1152 = vunpack.c.h.b16 %v437
        %v1153 = vunpack.c.l.b16 %v438
        %v1154 = vunpack.c.h.b16 %v438
        %v1155 = vunpack.c.l.b16 %v439
        %v1156 = vunpack.c.h.b16 %v439
        %v1157 = vunpack.c.l.b16 %v440
        %v1158 = vunpack.c.h.b16 %v440
        %v1159 = vunpack.c.l.b16 %v441
        %v1160 = vunpack.c.h.b16 %v441
        %v1161 = vunpack.c.l.b16 %v442
        %v1162 = vunpack.c.h.b16 %v442
        %v1163 = vunpack.c.l.b16 %v443
        %v1164 = vunpack.c.h.b16 %v443
        %v1165 = vunpack.c.l.b16 %v444
        %v1166 = vunpack.c.h.b16 %v444
        %v1167 = vunpack.c.l.b16 %v445
        %v1168 = vunpack.c.h.b16 %v445
        %v1169 = vunpack.c.l.b16 %v446
        %v1170 = vunpack.c.h.b16 %v446
        %v1171 = vunpack.c.l.b16 %v447
        %v1172 = vunpack.c.h.b16 %v447
        %v1173 = vunpack.c.l.b16 %v448
        %v1174 = vunpack.c.h.b16 %v448
        %v1175 = vunpack.c.l.b16 %v449
        %v1176 = vunpack.c.h.b16 %v449
        %v1177 = vunpack.c.l.b16 %v450
        %v1178 = vunpack.c.h.b16 %v450
        %v1179 = vunpack.c.l.b16 %v451
        %v1180 = vunpack.c.h.b16 %v451
        %v1181 = vunpack.c.l.b16 %v452
        %v1182 = vunpack.c.h.b16 %v452
        %v1183 = vunpack.c.l.b16 %v453
        %v1184 = vunpack.c.h.b16 %v453
        %v1185 = vunpack.c.l.b16 %v454
        %v1186 = vunpack.c.h.b16 %v454
        %v1187 = vunpack.c.l.b16 %v455
        %v1188 = vunpack.c.h.b16 %v455
        %v1189 = vunpack.c.l.b16 %v456
        %v1190 = vunpack.c.h.b16 %v456
        %v1191 = vunpack.c.l.b16 %v457
        %v1192 = vunpack.c.h.b16 %v457
        %v1193 = vunpack.c.l.b16 %v458
        %v1194 = vunpack.c.h.b16 %v458
        %v1195 = vunpack.c.l.b16 %v459
        %v1196 = vunpack.c.h.b16 %v459
        %v1197 = vunpack.c.l.b16 %v460
        %v1198 = vunpack.c.h.b16 %v460
        %v1199 = vunpack.c.l.b16 %v461
        %v1200 = vunpack.c.h.b16 %v461
        %v1201 = vunpack.c.l.b16 %v462
        %v1202 = vunpack.c.h.b16 %v462
        %v1203 = vunpack.c.l.b16 %v463
        %v1204 = vunpack.c.h.b16 %v463
        %v1205 = vunpack.c.l.b16 %v464
        %v1206 = vunpack.c.h.b16 %v464
        %v1207 = vunpack.c.l.b16 %v465
        %v1208 = vunpack.c.h.b16 %v465
        %v1209 = vunpack.c.l.b16 %v466
        %v1210 = vunpack.c.h.b16 %v466
        %v1211 = vunpack.c.l.b16 %v467
        %v1212 = vunpack.c.h.b16 %v467
        %v1213 = vunpack.c.l.b16 %v468
        %v1214 = vunpack.c.h.b16 %v468
        %v1215 = vunpack.c.l.b16 %v469
        %v1216 = vunpack.c.h.b16 %v469
        %v1217 = vunpack.c.l.b16 %v470
        %v1218 = vunpack.c.h.b16 %v470
        %v1219 = vunpack.c.l.b16 %v471
        %v1220 = vunpack.c.h.b16 %v471
        %v1221 = vunpack.c.l.b16 %v472
        %v1222 = vunpack.c.h.b16 %v472
        %v1223 = vunpack.c.l.b16 %v473
        %v1224 = vunpack.c.h.b16 %v473
        %v1225 = vunpack.c.l.b16 %v474
        %v1226 = vunpack.c.h.b16 %v474
        %v1227 = vunpack.c.l.b16 %v475
        %v1228 = vunpack.c.h.b16 %v475
        %v1229 = vunpack.c.l.b16 %v476
        %v1230 = vunpack.c.h.b16 %v476
        %v1231 = vunpack.c.l.b16 %v477
        %v1232 = vunpack.c.h.b16 %v477
        %v1233 = vunpack.c.l.b16 %v478
        %v1234 = vunpack.c.h.b16 %v478
        %v1235 = vunpack.c.l.b16 %v479
        %v1236 = vunpack.c.h.b16 %v479
        %v1237 = vunpack.c.l.b16 %v480
        %v1238 = vunpack.c.h.b16 %v480
        %v1239 = vunpack.c.l.b16 %v481
        %v1240 = vunpack.c.h.b16 %v481
        %v1241 = vunpack.c.l.b16 %v482
        %v1242 = vunpack.c.h.b16 %v482
        %v1243 = vunpack.c.l.b16 %v483
        %v1244 = vunpack.c.h.b16 %v483
        %v1245 = vunpack.c.l.b16 %v484
        %v1246 = vunpack.c.h.b16 %v484
        %v1247 = vunpack.c.l.b16 %v485
        %v1248 = vunpack.c.h.b16 %v485
        %v1249 = vunpack.c.l.b16 %v486
        %v1250 = vunpack.c.h.b16 %v486
        %v1251 = vunpack.c.l.b16 %v487
        %v1252 = vunpack.c.h.b16 %v487
        %v1253 = vunpack.c.l.b16 %v488
        %v1254 = vunpack.c.h.b16 %v488
        %v1255 = vunpack.c.l.b16 %v489
        %v1256 = vunpack.c.h.b16 %v489
        %v1257 = vunpack.c.l.b16 %v490
        %v1258 = vunpack.c.h.b16 %v490
        %v1259 = vunpack.c.l.b16 %v491
        %v1260 = vunpack.c.h.b16 %v491
        %v1261 = vunpack.c.l.b16 %v492
        %v1262 = vunpack.c.h.b16 %v492
        %v1263 = vunpack.c.l.b16 %v493
        %v1264 = vunpack.c.h.b16 %v493
        %v1265 = vunpack.c.l.b16 %v494
        %v1266 = vunpack.c.h.b16 %v494
        %v1267 = vunpack.c.l.b16 %v495
        %v1268 = vunpack.c.h.b16 %v495
        %v1269 = vunpack.c.l.b16 %v496
        %v1270 = vunpack.c.h.b16 %v496
        %v1271 = vunpack.c.l.b16 %v497
        %v1272 = vunpack.c.h.b16 %v497
        %v1273 = vunpack.c.l.b16 %v498
        %v1274 = vunpack.c.h.b16 %v498
        %v1275 = vunpack.c.l.b16 %v499
        %v1276 = vunpack.c.h.b16 %v499
        %v1277 = vunpack.c.l.b16 %v500
        %v1278 = vunpack.c.h.b16 %v500
        %v1279 = vunpack.c.l.b16 %v501
        %v1280 = vunpack.c.h.b16 %v501
        %v1281 = vunpack.c.l.b16 %v502
        %v1282 = vunpack.c.h.b16 %v502
        %v1283 = vunpack.c.l.b16 %v503
        %v1284 = vunpack.c.h.b16 %v503
        %v1285 = vunpack.c.l.b16 %v504
        %v1286 = vunpack.c.h.b16 %v504
        %v1287 = vunpack.c.l.b16 %v505
        %v1288 = vunpack.c.h.b16 %v505
        %v1289 = vunpack.c.l.b16 %v506
        %v1290 = vunpack.c.h.b16 %v506
        %v1291 = vunpack.c.l.b16 %v507
        %v1292 = vunpack.c.h.b16 %v507
        %v1293 = vunpack.c.l.b16 %v508
        %v1294 = vunpack.c.h.b16 %v508
        %v1295 = vunpack.c.l.b16 %v509
        %v1296 = vunpack.c.h.b16 %v509
        %v1297 = vunpack.c.l.b16 %v510
        %v1298 = vunpack.c.h.b16 %v510
        %v1299 = vunpack.c.l.b16 %v511
        %v1300 = vunpack.c.h.b16 %v511
        %v1301 = vunpack.c.l.b16 %v512
        %v1302 = vunpack.c.h.b16 %v512
        %v1303 = vunpack.c.l.b16 %v513
        %v1304 = vunpack.c.h.b16 %v513
        %v1305 = vunpack.c.l.b16 %v514
        %v1306 = vunpack.c.h.b16 %v514
        %v1307 = vunpack.c.l.b16 %v515
        %v1308 = vunpack.c.h.b16 %v515
        %v1309 = vunpack.c.l.b16 %v516
        %v1310 = vunpack.c.h.b16 %v516
        %v1311 = vunpack.c.l.b16 %v517
        %v1312 = vunpack.c.h.b16 %v517
        %v1313 = vunpack.c.l.b16 %v518
        %v1314 = vunpack.c.h.b16 %v518
        %v1315 = vunpack.c.l.b16 %v519
        %v1316 = vunpack.c.h.b16 %v519
        %v1317 = vunpack.c.l.b16 %v520
        %v1318 = vunpack.c.h.b16 %v520
        %v1319 = vunpack.c.l.b16 %v521
        %v1320 = vunpack.c.h.b16 %v521
        %v1321 = vunpack.c.l.b16 %v522
        %v1322 = vunpack.c.h.b16 %v522
        %v1323 = vunpack.c.l.b16 %v523
        %v1324 = vunpack.c.h.b16 %v523
        %v1325 = vunpack.c.l.b16 %v524
        %v1326 = vunpack.c.h.b16 %v524
        %v1327 = vunpack.c.l.b16 %v525
        %v1328 = vunpack.c.h.b16 %v525
        %v1329 = vunpack.c.l.b16 %v526
        %v1330 = vunpack.c.h.b16 %v526
        %v1331 = vunpack.c.l.b16 %v527
        %v1332 = vunpack.c.h.b16 %v527
        %v1333 = vunpack.c.l.b16 %v528
        %v1334 = vunpack.c.h.b16 %v528
        %v1335 = vunpack.c.l.b16 %v529
        %v1336 = vunpack.c.h.b16 %v529
        %v1337 = vunpack.c.l.b16 %v530
        %v1338 = vunpack.c.h.b16 %v530
        %v1339 = vpack.c.b16 %v831, %v827
        %v1340 = vpack.c.b16 %v832, %v828
        %v1341 = vpack.c.b16 %v833, %v829
        %v1342 = vpack.c.b16 %v834, %v830
        %v1343 = vpack.c.b16 %v839, %v835
        %v1344 = vpack.c.b16 %v840, %v836
        %v1345 = vpack.c.b16 %v841, %v837
        %v1346 = vpack.c.b16 %v842, %v838
        %v1347 = vpack.c.b16 %v847, %v843
        %v1348 = vpack.c.b16 %v848, %v844
        %v1349 = vpack.c.b16 %v849, %v845
        %v1350 = vpack.c.b16 %v850, %v846
        %v1351 = vpack.c.b16 %v855, %v851
        %v1352 = vpack.c.b16 %v856, %v852
        %v1353 = vpack.c.b16 %v857, %v853
        %v1354 = vpack.c.b16 %v858, %v854
        %v1355 = vpack.c.b16 %v863, %v859
        %v1356 = vpack.c.b16 %v864, %v860
        %v1357 = vpack.c.b16 %v865, %v861
        %v1358 = vpack.c.b16 %v866, %v862
        %v1359 = vpack.c.b16 %v871, %v867
        %v1360 = vpack.c.b16 %v872, %v868
        %v1361 = vpack.c.b16 %v873, %v869
        %v1362 = vpack.c.b16 %v874, %v870
        %v1363 = vpack.c.b16 %v879, %v875
        %v1364 = vpack.c.b16 %v880, %v876
        %v1365 = vpack.c.b16 %v881, %v877
        %v1366 = vpack.c.b16 %v882, %v878
        %v1367 = vpack.c.b16 %v887, %v883
        %v1368 = vpack.c.b16 %v888, %v884
        %v1369 = vpack.c.b16 %v889, %v885
        %v1370 = vpack.c.b16 %v890, %v886
        %v1371 = vpack.c.b16 %v895, %v891
        %v1372 = vpack.c.b16 %v896, %v892
        %v1373 = vpack.c.b16 %v897, %v893
        %v1374 = vpack.c.b16 %v898, %v894
        %v1375 = vpack.c.b16 %v903, %v899
        %v1376 = vpack.c.b16 %v904, %v900
        %v1377 = vpack.c.b16 %v905, %v901
        %v1378 = vpack.c.b16 %v906, %v902
        %v1379 = vpack.c.b16 %v911, %v907
        %v1380 = vpack.c.b16 %v912, %v908
        %v1381 = vpack.c.b16 %v913, %v909
        %v1382 = vpack.c.b16 %v914, %v910
        %v1383 = vpack.c.b16 %v919, %v915
        %v1384 = vpack.c.b16 %v920, %v916
        %v1385 = vpack.c.b16 %v921, %v917
        %v1386 = vpack.c.b16 %v922, %v918
        %v1387 = vpack.c.b16 %v927, %v923
        %v1388 = vpack.c.b16 %v928, %v924
        %v1389 = vpack.c.b16 %v929, %v925
        %v1390 = vpack.c.b16 %v930, %v926
        %v1391 = vpack.c.b16 %v935, %v931
        %v1392 = vpack.c.b16 %v936, %v932
        %v1393 = vpack.c.b16 %v937, %v933
        %v1394 = vpack.c.b16 %v938, %v934
        %v1395 = vpack.c.b16 %v943, %v939
        %v1396 = vpack.c.b16 %v944, %v940
        %v1397 = vpack.c.b16 %v945, %v941
        %v1398 = vpack.c.b16 %v946, %v942
        %v1399 = vpack.c.b16 %v951, %v947
        %v1400 = vpack.c.b16 %v952, %v948
        %v1401 = vpack.c.b16 %v953, %v949
        %v1402 = vpack.c.b16 %v954, %v950
        %v1403 = vpack.c.b16 %v959, %v955
        %v1404 = vpack.c.b16 %v960, %v956
        %v1405 = vpack.c.b16 %v961, %v957
        %v1406 = vpack.c.b16 %v962, %v958
        %v1407 = vpack.c.b16 %v967, %v963
        %v1408 = vpack.c.b16 %v968, %v964
        %v1409 = vpack.c.b16 %v969, %v965
        %v1410 = vpack.c.b16 %v970, %v966
        %v1411 = vpack.c.b16 %v975, %v971
        %v1412 = vpack.c.b16 %v976, %v972
        %v1413 = vpack.c.b16 %v977, %v973
        %v1414 = vpack.c.b16 %v978, %v974
        %v1415 = vpack.c.b16 %v983, %v979
        %v1416 = vpack.c.b16 %v984, %v980
        %v1417 = vpack.c.b16 %v985, %v981
        %v1418 = vpack.c.b16 %v986, %v982
        %v1419 = vpack.c.b16 %v991, %v987
        %v1420 = vpack.c.b16 %v992, %v988
        %v1421 = vpack.c.b16 %v993, %v989
        %v1422 = vpack.c.b16 %v994, %v990
        %v1423 = vpack.c.b16 %v999, %v995
        %v1424 = vpack.c.b16 %v1000, %v996
        %v1425 = vpack.c.b16 %v1001, %v997
        %v1426 = vpack.c.b16 %v1002, %v998
        %v1427 = vpack.c.b16 %v1007, %v1003
        %v1428 = vpack.c.b16 %v1008, %v1004
        %v1429 = vpack.c.b16 %v1009, %v1005
        %v1430 = vpack.c.b16 %v1010, %v1006
        %v1431 = vpack.c.b16 %v1015, %v1011
        %v1432 = vpack.c.b16 %v1016, %v1012
        %v1433 = vpack.c.b16 %v1017, %v1013
        %v1434 = vpack.c.b16 %v1018, %v1014
        %v1435 = vpack.c.b16 %v1023, %v1019
        %v1436 = vpack.c.b16 %v1024, %v1020
        %v1437 = vpack.c.b16 %v1025, %v1021
        %v1438 = vpack.c.b16 %v1026, %v1022
        %v1439 = vpack.c.b16 %v1031, %v1027
        %v1440 = vpack.c.b16 %v1032, %v1028
        %v1441 = vpack.c.b16 %v1033, %v1029
        %v1442 = vpack.c.b16 %v1034, %v1030
        %v1443 = vpack.c.b16 %v1039, %v1035
        %v1444 = vpack.c.b16 %v1040, %v1036
        %v1445 = vpack.c.b16 %v1041, %v1037
        %v1446 = vpack.c.b16 %v1042, %v1038
        %v1447 = vpack.c.b16 %v1047, %v1043
        %v1448 = vpack.c.b16 %v1048, %v1044
        %v1449 = vpack.c.b16 %v1049, %v1045
        %v1450 = vpack.c.b16 %v1050, %v1046
        %v1451 = vpack.c.b16 %v1055, %v1051
        %v1452 = vpack.c.b16 %v1056, %v1052
        %v1453 = vpack.c.b16 %v1057, %v1053
        %v1454 = vpack.c.b16 %v1058, %v1054
        %v1455 = vpack.c.b16 %v1063, %v1059
        %v1456 = vpack.c.b16 %v1064, %v1060
        %v1457 = vpack.c.b16 %v1065, %v1061
        %v1458 = vpack.c.b16 %v1066, %v1062
        %v1459 = vpack.c.b16 %v1071, %v1067
        %v1460 = vpack.c.b16 %v1072, %v1068
        %v1461 = vpack.c.b16 %v1073, %v1069
        %v1462 = vpack.c.b16 %v1074, %v1070
        %v1463 = vpack.c.b16 %v1079, %v1075
        %v1464 = vpack.c.b16 %v1080, %v1076
        %v1465 = vpack.c.b16 %v1081, %v1077
        %v1466 = vpack.c.b16 %v1082, %v1078
        %v1467 = vpack.c.b16 %v1087, %v1083
        %v1468 = vpack.c.b16 %v1088, %v1084
        %v1469 = vpack.c.b16 %v1089, %v1085
        %v1470 = vpack.c.b16 %v1090, %v1086
        %v1471 = vpack.c.b16 %v1095, %v1091
        %v1472 = vpack.c.b16 %v1096, %v1092
        %v1473 = vpack.c.b16 %v1097, %v1093
        %v1474 = vpack.c.b16 %v1098, %v1094
        %v1475 = vpack.c.b16 %v1103, %v1099
        %v1476 = vpack.c.b16 %v1104, %v1100
        %v1477 = vpack.c.b16 %v1105, %v1101
        %v1478 = vpack.c.b16 %v1106, %v1102
        %v1479 = vpack.c.b16 %v1111, %v1107
        %v1480 = vpack.c.b16 %v1112, %v1108
        %v1481 = vpack.c.b16 %v1113, %v1109
        %v1482 = vpack.c.b16 %v1114, %v1110
        %v1483 = vpack.c.b16 %v1119, %v1115
        %v1484 = vpack.c.b16 %v1120, %v1116
        %v1485 = vpack.c.b16 %v1121, %v1117
        %v1486 = vpack.c.b16 %v1122, %v1118
        %v1487 = vpack.c.b16 %v1127, %v1123
        %v1488 = vpack.c.b16 %v1128, %v1124
        %v1489 = vpack.c.b16 %v1129, %v1125
        %v1490 = vpack.c.b16 %v1130, %v1126
        %v1491 = vpack.c.b16 %v1135, %v1131
        %v1492 = vpack.c.b16 %v1136, %v1132
        %v1493 = vpack.c.b16 %v1137, %v1133
        %v1494 = vpack.c.b16 %v1138, %v1134
        %v1495 = vpack.c.b16 %v1143, %v1139
        %v1496 = vpack.c.b16 %v1144, %v1140
        %v1497 = vpack.c.b16 %v1145, %v1141
        %v1498 = vpack.c.b16 %v1146, %v1142
        %v1499 = vpack.c.b16 %v1151, %v1147
        %v1500 = vpack.c.b16 %v1152, %v1148
        %v1501 = vpack.c.b16 %v1153, %v1149
        %v1502 = vpack.c.b16 %v1154, %v1150
        %v1503 = vpack.c.b16 %v1159, %v1155
        %v1504 = vpack.c.b16 %v1160, %v1156
        %v1505 = vpack.c.b16 %v1161, %v1157
        %v1506 = vpack.c.b16 %v1162, %v1158
        %v1507 = vpack.c.b16 %v1167, %v1163
        %v1508 = vpack.c.b16 %v1168, %v1164
        %v1509 = vpack.c.b16 %v1169, %v1165
        %v1510 = vpack.c.b16 %v1170, %v1166
        %v1511 = vpack.c.b16 %v1175, %v1171
        %v1512 = vpack.c.b16 %v1176, %v1172
        %v1513 = vpack.c.b16 %v1177, %v1173
        %v1514 = vpack.c.b16 %v1178, %v1174
        %v1515 = vpack.c.b16 %v1183, %v1179
        %v1516 = vpack.c.b16 %v1184, %v1180
        %v1517 = vpack.c.b16 %v1185, %v1181
        %v1518 = vpack.c.b16 %v1186, %v1182
        %v1519 = vpack.c.b16 %v1191, %v1187
        %v1520 = vpack.c.b16 %v1192, %v1188
        %v1521 = vpack.c.b16 %v1193, %v1189
        %v1522 = vpack.c.b16 %v1194, %v1190
        %v1523 = vpack.c.b16 %v1199, %v1195
        %v1524 = vpack.c.b16 %v1200, %v1196
        %v1525 = vpack.c.b16 %v1201, %v1197
        %v1526 = vpack.c.b16 %v1202, %v1198
        %v1527 = vpack.c.b16 %v1207, %v1203
        %v1528 = vpack.c.b16 %v1208, %v1204
        %v1529 = vpack.c.b16 %v1209, %v1205
        %v1530 = vpack.c.b16 %v1210, %v1206
        %v1531 = vpack.c.b16 %v1215, %v1211
        %v1532 = vpack.c.b16 %v1216, %v1212
        %v1533 = vpack.c.b16 %v1217, %v1213
        %v1534 = vpack.c.b16 %v1218, %v1214
        %v1535 = vpack.c.b16 %v1223, %v1219
        %v1536 = vpack.c.b16 %v1224, %v1220
        %v1537 = vpack.c.b16 %v1225, %v1221
        %v1538 = vpack.c.b16 %v1226, %v1222
        %v1539 = vpack.c.b16 %v1231, %v1227
        %v1540 = vpack.c.b16 %v1232, %v1228
        %v1541 = vpack.c.b16 %v1233, %v1229
        %v1542 = vpack.c.b16 %v1234, %v1230
        %v1543 = vpack.c.b16 %v1239, %v1235
        %v1544 = vpack.c.b16 %v1240, %v1236
        %v1545 = vpack.c.b16 %v1241, %v1237
        %v1546 = vpack.c.b16 %v1242, %v1238
        %v1547 = vpack.c.b16 %v1247, %v1243
        %v1548 = vpack.c.b16 %v1248, %v1244
        %v1549 = vpack.c.b16 %v1249, %v1245
        %v1550 = vpack.c.b16 %v1250, %v1246
        %v1551 = vpack.c.b16 %v1255, %v1251
        %v1552 = vpack.c.b16 %v1256, %v1252
        %v1553 = vpack.c.b16 %v1257, %v1253
        %v1554 = vpack.c.b16 %v1258, %v1254
        %v1555 = vpack.c.b16 %v1263, %v1259
        %v1556 = vpack.c.b16 %v1264, %v1260
        %v1557 = vpack.c.b16 %v1265, %v1261
        %v1558 = vpack.c.b16 %v1266, %v1262
        %v1559 = vpack.c.b16 %v1271, %v1267
        %v1560 = vpack.c.b16 %v1272, %v1268
        %v1561 = vpack.c.b16 %v1273, %v1269
        %v1562 = vpack.c.b16 %v1274, %v1270
        %v1563 = vpack.c.b16 %v1279, %v1275
        %v1564 = vpack.c.b16 %v1280, %v1276
        %v1565 = vpack.c.b16 %v1281, %v1277
        %v1566 = vpack.c.b16 %v1282, %v1278
        %v1567 = vpack.c.b16 %v1287, %v1283
        %v1568 = vpack.c.b16 %v1288, %v1284
        %v1569 = vpack.c.b16 %v1289, %v1285
        %v1570 = vpack.c.b16 %v1290, %v1286
        %v1571 = vpack.c.b16 %v1295, %v1291
        %v1572 = vpack.c.b16 %v1296, %v1292
        %v1573 = vpack.c.b16 %v1297, %v1293
        %v1574 = vpack.c.b16 %v1298, %v1294
        %v1575 = vpack.c.b16 %v1303, %v1299
        %v1576 = vpack.c.b16 %v1304, %v1300
        %v1577 = vpack.c.b16 %v1305, %v1301
        %v1578 = vpack.c.b16 %v1306, %v1302
        %v1579 = vpack.c.b16 %v1311, %v1307
        %v1580 = vpack.c.b16 %v1312, %v1308
        %v1581 = vpack.c.b16 %v1313, %v1309
        %v1582 = vpack.c.b16 %v1314, %v1310
        %v1583 = vpack.c.b16 %v1319, %v1315
        %v1584 = vpack.c.b16 %v1320, %v1316
        %v1585 = vpack.c.b16 %v1321, %v1317
        %v1586 = vpack.c.b16 %v1322, %v1318
        %v1587 = vpack.c.b16 %v1327, %v1323
        %v1588 = vpack.c.b16 %v1328, %v1324
        %v1589 = vpack.c.b16 %v1329, %v1325
        %v1590 = vpack.c.b16 %v1330, %v1326
        %v1591 = vpack.c.b16 %v1335, %v1331
        %v1592 = vpack.c.b16 %v1336, %v1332
        %v1593 = vpack.c.b16 %v1337, %v1333
        %v1594 = vpack.c.b16 %v1338, %v1334
        %1851 = vmatprep.subr.bf16.mxu0 %v1368
        %1852 = vmatpush1.bf16.msra.mxu0 %v1367
        %1853 = vmatprep.subr.bf16.mxu0 %v1364
        %1854 = vmatpush1.bf16.msra.mxu0 %v1363
        %1855 = vmatprep.subr.bf16.mxu0 %v1360
        %1856 = vmatpush1.bf16.msra.mxu0 %v1359
        %1857 = vmatprep.subr.bf16.mxu0 %v1356
        %1858 = vmatpush1.bf16.msra.mxu0 %v1355
        %1859 = vmatprep.subr.bf16.mxu0 %v1352
        %1860 = vmatpush1.bf16.msra.mxu0 %v1351
        %1861 = vmatprep.subr.bf16.mxu0 %v1348
        %1862 = vmatpush1.bf16.msra.mxu0 %v1347
        %1863 = vmatprep.subr.bf16.mxu0 %v1344
        %1864 = vmatpush1.bf16.msra.mxu0 %v1343
        %1865 = vmatprep.subr.bf16.mxu0 %v1340
        %1866 = vmatpush1.bf16.msra.mxu0 %v1339
        %1867 = vmatprep.subr.bf16.mxu0 %v1400
        %1868 = vmatpush2.bf16.msra.mxu0 %v1399
        %1869 = vmatprep.subr.bf16.mxu0 %v1396
        %1870 = vmatpush2.bf16.msra.mxu0 %v1395
        %1871 = vmatprep.subr.bf16.mxu0 %v1392
        %1872 = vmatpush2.bf16.msra.mxu0 %v1391
        %1873 = vmatprep.subr.bf16.mxu0 %v1388
        %1874 = vmatpush2.bf16.msra.mxu0 %v1387
        %1875 = vmatprep.subr.bf16.mxu0 %v1384
        %1876 = vmatpush2.bf16.msra.mxu0 %v1383
        %1877 = vmatprep.subr.bf16.mxu0 %v1380
        %1878 = vmatpush2.bf16.msra.mxu0 %v1379
        %1879 = vmatprep.subr.bf16.mxu0 %v1376
        %1880 = vmatpush2.bf16.msra.mxu0 %v1375
        %1881 = vmatprep.subr.bf16.mxu0 %v1372
        %1882 = vmatpush2.bf16.msra.mxu0 %v1371
        %1883 = vmatprep.mubr.bf16.mxu0 %v556
        %1884 = vmatmul.mubr.bf16.gmra.mxu0 %v555
        %v1885 = vpop.f32.mrf.mxu0
        %v1886 = vadd.f32 0.0, %v1885
        %v1887 = vpop.f32.mrf.mxu0
        %v1888 = vadd.f32 0.0, %v1887
        %v1889 = vpop.f32.mrf.mxu0
        %v1890 = vadd.f32 0.0, %v1889
        %v1891 = vpop.f32.mrf.mxu0
        %v1892 = vadd.f32 0.0, %v1891
        %1893 = vdwg.mxu0
        %1894 = vmatprep.subr.bf16.mxu0 %v1432
        %1895 = vmatpush1.bf16.msra.mxu0 %v1431
        %1896 = vmatprep.subr.bf16.mxu0 %v1428
        %1897 = vmatpush1.bf16.msra.mxu0 %v1427
        %1898 = vmatprep.subr.bf16.mxu0 %v1424
        %1899 = vmatpush1.bf16.msra.mxu0 %v1423
        %1900 = vmatprep.subr.bf16.mxu0 %v1420
        %1901 = vmatpush1.bf16.msra.mxu0 %v1419
        %1902 = vmatprep.subr.bf16.mxu0 %v1416
        %1903 = vmatpush1.bf16.msra.mxu0 %v1415
        %1904 = vmatprep.subr.bf16.mxu0 %v1412
        %1905 = vmatpush1.bf16.msra.mxu0 %v1411
        %1906 = vmatprep.subr.bf16.mxu0 %v1408
        %1907 = vmatpush1.bf16.msra.mxu0 %v1407
        %1908 = vmatprep.subr.bf16.mxu0 %v1404
        %1909 = vmatpush1.bf16.msra.mxu0 %v1403
        %1910 = vmatprep.subr.bf16.mxu0 %v1464
        %1911 = vmatpush2.bf16.msra.mxu0 %v1463
        %1912 = vmatprep.subr.bf16.mxu0 %v1460
        %1913 = vmatpush2.bf16.msra.mxu0 %v1459
        %1914 = vmatprep.subr.bf16.mxu0 %v1456
        %1915 = vmatpush2.bf16.msra.mxu0 %v1455
        %1916 = vmatprep.subr.bf16.mxu0 %v1452
        %1917 = vmatpush2.bf16.msra.mxu0 %v1451
        %1918 = vmatprep.subr.bf16.mxu0 %v1448
        %1919 = vmatpush2.bf16.msra.mxu0 %v1447
        %1920 = vmatprep.subr.bf16.mxu0 %v1444
        %1921 = vmatpush2.bf16.msra.mxu0 %v1443
        %1922 = vmatprep.subr.bf16.mxu0 %v1440
        %1923 = vmatpush2.bf16.msra.mxu0 %v1439
        %1924 = vmatprep.subr.bf16.mxu0 %v1436
        %1925 = vmatpush2.bf16.msra.mxu0 %v1435
        %1926 = vmatprep.mubr.bf16.mxu0 %v558
        %1927 = vmatmul.mubr.bf16.gmra.mxu0 %v557
        %v1928 = vpop.f32.mrf.mxu0
        %v1929 = vadd.f32 %v1886, %v1928
        %v1930 = vpop.f32.mrf.mxu0
        %v1931 = vadd.f32 %v1888, %v1930
        %v1932 = vpop.f32.mrf.mxu0
        %v1933 = vadd.f32 %v1890, %v1932
        %v1934 = vpop.f32.mrf.mxu0
        %v1935 = vadd.f32 %v1892, %v1934
        %1936 = vdwg.mxu0
        %1937 = vmatprep.subr.bf16.mxu0 %v1496
        %1938 = vmatpush1.bf16.msra.mxu0 %v1495
        %1939 = vmatprep.subr.bf16.mxu0 %v1492
        %1940 = vmatpush1.bf16.msra.mxu0 %v1491
        %1941 = vmatprep.subr.bf16.mxu0 %v1488
        %1942 = vmatpush1.bf16.msra.mxu0 %v1487
        %1943 = vmatprep.subr.bf16.mxu0 %v1484
        %1944 = vmatpush1.bf16.msra.mxu0 %v1483
        %1945 = vmatprep.subr.bf16.mxu0 %v1480
        %1946 = vmatpush1.bf16.msra.mxu0 %v1479
        %1947 = vmatprep.subr.bf16.mxu0 %v1476
        %1948 = vmatpush1.bf16.msra.mxu0 %v1475
        %1949 = vmatprep.subr.bf16.mxu0 %v1472
        %1950 = vmatpush1.bf16.msra.mxu0 %v1471
        %1951 = vmatprep.subr.bf16.mxu0 %v1468
        %1952 = vmatpush1.bf16.msra.mxu0 %v1467
        %1953 = vmatprep.subr.bf16.mxu0 %v1528
        %1954 = vmatpush2.bf16.msra.mxu0 %v1527
        %1955 = vmatprep.subr.bf16.mxu0 %v1524
        %1956 = vmatpush2.bf16.msra.mxu0 %v1523
        %1957 = vmatprep.subr.bf16.mxu0 %v1520
        %1958 = vmatpush2.bf16.msra.mxu0 %v1519
        %1959 = vmatprep.subr.bf16.mxu0 %v1516
        %1960 = vmatpush2.bf16.msra.mxu0 %v1515
        %1961 = vmatprep.subr.bf16.mxu0 %v1512
        %1962 = vmatpush2.bf16.msra.mxu0 %v1511
        %1963 = vmatprep.subr.bf16.mxu0 %v1508
        %1964 = vmatpush2.bf16.msra.mxu0 %v1507
        %1965 = vmatprep.subr.bf16.mxu0 %v1504
        %1966 = vmatpush2.bf16.msra.mxu0 %v1503
        %1967 = vmatprep.subr.bf16.mxu0 %v1500
        %1968 = vmatpush2.bf16.msra.mxu0 %v1499
        %1969 = vmatprep.mubr.bf16.mxu0 %v560
        %1970 = vmatmul.mubr.bf16.gmra.mxu0 %v559
        %v1971 = vpop.f32.mrf.mxu0
        %v1972 = vadd.f32 %v1929, %v1971
        %v1973 = vpop.f32.mrf.mxu0
        %v1974 = vadd.f32 %v1931, %v1973
        %v1975 = vpop.f32.mrf.mxu0
        %v1976 = vadd.f32 %v1933, %v1975
        %v1977 = vpop.f32.mrf.mxu0
        %v1978 = vadd.f32 %v1935, %v1977
        %1979 = vdwg.mxu0
        %1980 = vmatprep.subr.bf16.mxu0 %v1560
        %1981 = vmatpush1.bf16.msra.mxu0 %v1559
        %1982 = vmatprep.subr.bf16.mxu0 %v1556
        %1983 = vmatpush1.bf16.msra.mxu0 %v1555
        %1984 = vmatprep.subr.bf16.mxu0 %v1552
        %1985 = vmatpush1.bf16.msra.mxu0 %v1551
        %1986 = vmatprep.subr.bf16.mxu0 %v1548
        %1987 = vmatpush1.bf16.msra.mxu0 %v1547
        %1988 = vmatprep.subr.bf16.mxu0 %v1544
        %1989 = vmatpush1.bf16.msra.mxu0 %v1543
        %1990 = vmatprep.subr.bf16.mxu0 %v1540
        %1991 = vmatpush1.bf16.msra.mxu0 %v1539
        %1992 = vmatprep.subr.bf16.mxu0 %v1536
        %1993 = vmatpush1.bf16.msra.mxu0 %v1535
        %1994 = vmatprep.subr.bf16.mxu0 %v1532
        %1995 = vmatpush1.bf16.msra.mxu0 %v1531
        %1996 = vmatprep.subr.bf16.mxu0 %v1592
        %1997 = vmatpush2.bf16.msra.mxu0 %v1591
        %1998 = vmatprep.subr.bf16.mxu0 %v1588
        %1999 = vmatpush2.bf16.msra.mxu0 %v1587
        %2000 = vmatprep.subr.bf16.mxu0 %v1584
        %2001 = vmatpush2.bf16.msra.mxu0 %v1583
        %2002 = vmatprep.subr.bf16.mxu0 %v1580
        %2003 = vmatpush2.bf16.msra.mxu0 %v1579
        %2004 = vmatprep.subr.bf16.mxu0 %v1576
        %2005 = vmatpush2.bf16.msra.mxu0 %v1575
        %2006 = vmatprep.subr.bf16.mxu0 %v1572
        %2007 = vmatpush2.bf16.msra.mxu0 %v1571
        %2008 = vmatprep.subr.bf16.mxu0 %v1568
        %2009 = vmatpush2.bf16.msra.mxu0 %v1567
        %2010 = vmatprep.subr.bf16.mxu0 %v1564
        %2011 = vmatpush2.bf16.msra.mxu0 %v1563
        %2012 = vmatprep.mubr.bf16.mxu0 %v562
        %2013 = vmatmul.mubr.bf16.gmra.mxu0 %v561
        %v2014 = vpop.f32.mrf.mxu0
        %v2015 = vadd.f32 %v1972, %v2014
        %v2016 = vpop.f32.mrf.mxu0
        %v2017 = vadd.f32 %v1974, %v2016
        %v2018 = vpop.f32.mrf.mxu0
        %v2019 = vadd.f32 %v1976, %v2018
        %v2020 = vpop.f32.mrf.mxu0
        %v2021 = vadd.f32 %v1978, %v2020
        %2022 = vdwg.mxu0
        %2023 = vmatprep.subr.bf16.mxu0 %v1370
        %2024 = vmatpush1.bf16.msra.mxu0 %v1369
        %2025 = vmatprep.subr.bf16.mxu0 %v1366
        %2026 = vmatpush1.bf16.msra.mxu0 %v1365
        %2027 = vmatprep.subr.bf16.mxu0 %v1362
        %2028 = vmatpush1.bf16.msra.mxu0 %v1361
        %2029 = vmatprep.subr.bf16.mxu0 %v1358
        %2030 = vmatpush1.bf16.msra.mxu0 %v1357
        %2031 = vmatprep.subr.bf16.mxu0 %v1354
        %2032 = vmatpush1.bf16.msra.mxu0 %v1353
        %2033 = vmatprep.subr.bf16.mxu0 %v1350
        %2034 = vmatpush1.bf16.msra.mxu0 %v1349
        %2035 = vmatprep.subr.bf16.mxu0 %v1346
        %2036 = vmatpush1.bf16.msra.mxu0 %v1345
        %2037 = vmatprep.subr.bf16.mxu0 %v1342
        %2038 = vmatpush1.bf16.msra.mxu0 %v1341
        %2039 = vmatprep.subr.bf16.mxu0 %v1402
        %2040 = vmatpush2.bf16.msra.mxu0 %v1401
        %2041 = vmatprep.subr.bf16.mxu0 %v1398
        %2042 = vmatpush2.bf16.msra.mxu0 %v1397
        %2043 = vmatprep.subr.bf16.mxu0 %v1394
        %2044 = vmatpush2.bf16.msra.mxu0 %v1393
        %2045 = vmatprep.subr.bf16.mxu0 %v1390
        %2046 = vmatpush2.bf16.msra.mxu0 %v1389
        %2047 = vmatprep.subr.bf16.mxu0 %v1386
        %2048 = vmatpush2.bf16.msra.mxu0 %v1385
        %2049 = vmatprep.subr.bf16.mxu0 %v1382
        %2050 = vmatpush2.bf16.msra.mxu0 %v1381
        %2051 = vmatprep.subr.bf16.mxu0 %v1378
        %2052 = vmatpush2.bf16.msra.mxu0 %v1377
        %2053 = vmatprep.subr.bf16.mxu0 %v1374
        %2054 = vmatpush2.bf16.msra.mxu0 %v1373
        %2055 = vmatprep.mubr.bf16.mxu0 %v556
        %2056 = vmatmul.mubr.bf16.gmra.mxu0 %v555
        %v2057 = vpop.f32.mrf.mxu0
        %v2058 = vadd.f32 0.0, %v2057
        %v2059 = vpop.f32.mrf.mxu0
        %v2060 = vadd.f32 0.0, %v2059
        %v2061 = vpop.f32.mrf.mxu0
        %v2062 = vadd.f32 0.0, %v2061
        %v2063 = vpop.f32.mrf.mxu0
        %v2064 = vadd.f32 0.0, %v2063
        %2065 = vdwg.mxu0
        %2066 = vmatprep.subr.bf16.mxu0 %v1434
        %2067 = vmatpush1.bf16.msra.mxu0 %v1433
        %2068 = vmatprep.subr.bf16.mxu0 %v1430
        %2069 = vmatpush1.bf16.msra.mxu0 %v1429
        %2070 = vmatprep.subr.bf16.mxu0 %v1426
        %2071 = vmatpush1.bf16.msra.mxu0 %v1425
        %2072 = vmatprep.subr.bf16.mxu0 %v1422
        %2073 = vmatpush1.bf16.msra.mxu0 %v1421
        %2074 = vmatprep.subr.bf16.mxu0 %v1418
        %2075 = vmatpush1.bf16.msra.mxu0 %v1417
        %2076 = vmatprep.subr.bf16.mxu0 %v1414
        %2077 = vmatpush1.bf16.msra.mxu0 %v1413
        %2078 = vmatprep.subr.bf16.mxu0 %v1410
        %2079 = vmatpush1.bf16.msra.mxu0 %v1409
        %2080 = vmatprep.subr.bf16.mxu0 %v1406
        %2081 = vmatpush1.bf16.msra.mxu0 %v1405
        %2082 = vmatprep.subr.bf16.mxu0 %v1466
        %2083 = vmatpush2.bf16.msra.mxu0 %v1465
        %2084 = vmatprep.subr.bf16.mxu0 %v1462
        %2085 = vmatpush2.bf16.msra.mxu0 %v1461
        %2086 = vmatprep.subr.bf16.mxu0 %v1458
        %2087 = vmatpush2.bf16.msra.mxu0 %v1457
        %2088 = vmatprep.subr.bf16.mxu0 %v1454
        %2089 = vmatpush2.bf16.msra.mxu0 %v1453
        %2090 = vmatprep.subr.bf16.mxu0 %v1450
        %2091 = vmatpush2.bf16.msra.mxu0 %v1449
        %2092 = vmatprep.subr.bf16.mxu0 %v1446
        %2093 = vmatpush2.bf16.msra.mxu0 %v1445
        %2094 = vmatprep.subr.bf16.mxu0 %v1442
        %2095 = vmatpush2.bf16.msra.mxu0 %v1441
        %2096 = vmatprep.subr.bf16.mxu0 %v1438
        %2097 = vmatpush2.bf16.msra.mxu0 %v1437
        %2098 = vmatprep.mubr.bf16.mxu0 %v558
        %2099 = vmatmul.mubr.bf16.gmra.mxu0 %v557
        %v2100 = vpop.f32.mrf.mxu0
        %v2101 = vadd.f32 %v2058, %v2100
        %v2102 = vpop.f32.mrf.mxu0
        %v2103 = vadd.f32 %v2060, %v2102
        %v2104 = vpop.f32.mrf.mxu0
        %v2105 = vadd.f32 %v2062, %v2104
        %v2106 = vpop.f32.mrf.mxu0
        %v2107 = vadd.f32 %v2064, %v2106
        %2108 = vdwg.mxu0
        %2109 = vmatprep.subr.bf16.mxu0 %v1498
        %2110 = vmatpush1.bf16.msra.mxu0 %v1497
        %2111 = vmatprep.subr.bf16.mxu0 %v1494
        %2112 = vmatpush1.bf16.msra.mxu0 %v1493
        %2113 = vmatprep.subr.bf16.mxu0 %v1490
        %2114 = vmatpush1.bf16.msra.mxu0 %v1489
        %2115 = vmatprep.subr.bf16.mxu0 %v1486
        %2116 = vmatpush1.bf16.msra.mxu0 %v1485
        %2117 = vmatprep.subr.bf16.mxu0 %v1482
        %2118 = vmatpush1.bf16.msra.mxu0 %v1481
        %2119 = vmatprep.subr.bf16.mxu0 %v1478
        %2120 = vmatpush1.bf16.msra.mxu0 %v1477
        %2121 = vmatprep.subr.bf16.mxu0 %v1474
        %2122 = vmatpush1.bf16.msra.mxu0 %v1473
        %2123 = vmatprep.subr.bf16.mxu0 %v1470
        %2124 = vmatpush1.bf16.msra.mxu0 %v1469
        %2125 = vmatprep.subr.bf16.mxu0 %v1530
        %2126 = vmatpush2.bf16.msra.mxu0 %v1529
        %2127 = vmatprep.subr.bf16.mxu0 %v1526
        %2128 = vmatpush2.bf16.msra.mxu0 %v1525
        %2129 = vmatprep.subr.bf16.mxu0 %v1522
        %2130 = vmatpush2.bf16.msra.mxu0 %v1521
        %2131 = vmatprep.subr.bf16.mxu0 %v1518
        %2132 = vmatpush2.bf16.msra.mxu0 %v1517
        %2133 = vmatprep.subr.bf16.mxu0 %v1514
        %2134 = vmatpush2.bf16.msra.mxu0 %v1513
        %2135 = vmatprep.subr.bf16.mxu0 %v1510
        %2136 = vmatpush2.bf16.msra.mxu0 %v1509
        %2137 = vmatprep.subr.bf16.mxu0 %v1506
        %2138 = vmatpush2.bf16.msra.mxu0 %v1505
        %2139 = vmatprep.subr.bf16.mxu0 %v1502
        %2140 = vmatpush2.bf16.msra.mxu0 %v1501
        %2141 = vmatprep.mubr.bf16.mxu0 %v560
        %2142 = vmatmul.mubr.bf16.gmra.mxu0 %v559
        %v2143 = vpop.f32.mrf.mxu0
        %v2144 = vadd.f32 %v2101, %v2143
        %v2145 = vpop.f32.mrf.mxu0
        %v2146 = vadd.f32 %v2103, %v2145
        %v2147 = vpop.f32.mrf.mxu0
        %v2148 = vadd.f32 %v2105, %v2147
        %v2149 = vpop.f32.mrf.mxu0
        %v2150 = vadd.f32 %v2107, %v2149
        %2151 = vdwg.mxu0
        %2152 = vmatprep.subr.bf16.mxu0 %v1562
        %2153 = vmatpush1.bf16.msra.mxu0 %v1561
        %2154 = vmatprep.subr.bf16.mxu0 %v1558
        %2155 = vmatpush1.bf16.msra.mxu0 %v1557
        %2156 = vmatprep.subr.bf16.mxu0 %v1554
        %2157 = vmatpush1.bf16.msra.mxu0 %v1553
        %2158 = vmatprep.subr.bf16.mxu0 %v1550
        %2159 = vmatpush1.bf16.msra.mxu0 %v1549
        %2160 = vmatprep.subr.bf16.mxu0 %v1546
        %2161 = vmatpush1.bf16.msra.mxu0 %v1545
        %2162 = vmatprep.subr.bf16.mxu0 %v1542
        %2163 = vmatpush1.bf16.msra.mxu0 %v1541
        %2164 = vmatprep.subr.bf16.mxu0 %v1538
        %2165 = vmatpush1.bf16.msra.mxu0 %v1537
        %2166 = vmatprep.subr.bf16.mxu0 %v1534
        %2167 = vmatpush1.bf16.msra.mxu0 %v1533
        %2168 = vmatprep.subr.bf16.mxu0 %v1594
        %2169 = vmatpush2.bf16.msra.mxu0 %v1593
        %2170 = vmatprep.subr.bf16.mxu0 %v1590
        %2171 = vmatpush2.bf16.msra.mxu0 %v1589
        %2172 = vmatprep.subr.bf16.mxu0 %v1586
        %2173 = vmatpush2.bf16.msra.mxu0 %v1585
        %2174 = vmatprep.subr.bf16.mxu0 %v1582
        %2175 = vmatpush2.bf16.msra.mxu0 %v1581
        %2176 = vmatprep.subr.bf16.mxu0 %v1578
        %2177 = vmatpush2.bf16.msra.mxu0 %v1577
        %2178 = vmatprep.subr.bf16.mxu0 %v1574
        %2179 = vmatpush2.bf16.msra.mxu0 %v1573
        %2180 = vmatprep.subr.bf16.mxu0 %v1570
        %2181 = vmatpush2.bf16.msra.mxu0 %v1569
        %2182 = vmatprep.subr.bf16.mxu0 %v1566
        %2183 = vmatpush2.bf16.msra.mxu0 %v1565
        %2184 = vmatprep.mubr.bf16.mxu0 %v562
        %2185 = vmatmul.mubr.bf16.gmra.mxu0 %v561
        %v2186 = vpop.f32.mrf.mxu0
        %v2187 = vadd.f32 %v2144, %v2186
        %v2188 = vpop.f32.mrf.mxu0
        %v2189 = vadd.f32 %v2146, %v2188
        %v2190 = vpop.f32.mrf.mxu0
        %v2191 = vadd.f32 %v2148, %v2190
        %v2192 = vpop.f32.mrf.mxu0
        %v2193 = vadd.f32 %v2150, %v2192
        %2194 = vdwg.mxu0
        %v2195 = vadd.f32 %v259, %v2015
        %v2196 = vadd.f32 %v260, %v2017
        %v2197 = vadd.f32 %v261, %v2187
        %v2198 = vadd.f32 %v262, %v2189
        %v2199 = vadd.f32 %v263, %v2019
        %v2200 = vadd.f32 %v264, %v2021
        %v2201 = vadd.f32 %v265, %v2191
        %v2202 = vadd.f32 %v266, %v2193
        %2203 = vst [vmem:[#allocation2] sm:$0xff] %v2195
        %2204 = vst [vmem:[#allocation2 + $0x8] sm:$0xff] %v2196
        %2205 = vst [vmem:[#allocation2 + $0x10] sm:$0xff] %v2197
        %2206 = vst [vmem:[#allocation2 + $0x18] sm:$0xff] %v2198
        %2207 = vst [vmem:[#allocation2 + $0x20] sm:$0xff] %v2199
        %2208 = vst [vmem:[#allocation2 + $0x28] sm:$0xff] %v2200
        %2209 = vst [vmem:[#allocation2 + $0x30] sm:$0xff] %v2201
        %2210 = vst [vmem:[#allocation2 + $0x38] sm:$0xff] %v2202
        %p2211 = scmp.eq.s32.totalorder %s19, 3
        // Predicated region
        $region60: #{discriminator_forward.7} parent=50 // pred_check
          %p2212 = pneg %p2211
        $region61: #{discriminator_forward.7} parent=50 // pred_check_branch
          %2214 = sbr.rel (%p2212) target = $region63
        $region62: #{discriminator_forward.7} parent=50 // pred_region
          %v2215 = vld [vmem:[#allocation2] sm:$0xff]
          %v2216 = vld [vmem:[#allocation2 + $0x8] sm:$0xff]
          %v2217 = vld [vmem:[#allocation2 + $0x10] sm:$0xff]
          %v2218 = vld [vmem:[#allocation2 + $0x18] sm:$0xff]
          %v2219 = vld [vmem:[#allocation2 + $0x20] sm:$0xff]
          %v2220 = vld [vmem:[#allocation2 + $0x28] sm:$0xff]
          %v2221 = vld [vmem:[#allocation2 + $0x30] sm:$0xff]
          %v2222 = vld [vmem:[#allocation2 + $0x38] sm:$0xff]
          %v2223 = vmax.f32 %v2215, 0.0
          %v2224 = vmax.f32 %v2216, 0.0
          %v2225 = vmax.f32 %v2217, 0.0
          %v2226 = vmax.f32 %v2218, 0.0
          %v2227 = vmax.f32 %v2219, 0.0
          %v2228 = vmax.f32 %v2220, 0.0
          %v2229 = vmax.f32 %v2221, 0.0
          %v2230 = vmax.f32 %v2222, 0.0
          %v2231 = vmin.f32 %v2223, 6.0
          %v2232 = vmin.f32 %v2224, 6.0
          %v2233 = vmin.f32 %v2225, 6.0
          %v2234 = vmin.f32 %v2226, 6.0
          %v2235 = vmin.f32 %v2227, 6.0
          %v2236 = vmin.f32 %v2228, 6.0
          %v2237 = vmin.f32 %v2229, 6.0
          %v2238 = vmin.f32 %v2230, 6.0
          %v2239 = vld [vmem:[%s2] sm:$0xff]
          %v2240 = vld [vmem:[%s2 + $0x8] sm:$0xff]
          %v2241 = vld [vmem:[%s2 + $0x10] sm:$0xff]
          %v2242 = vld [vmem:[%s2 + $0x18] sm:$0xff]
          %v2243 = vld [vmem:[%s2 + $0x20] sm:$0xff]
          %v2244 = vld [vmem:[%s2 + $0x28] sm:$0xff]
          %v2245 = vld [vmem:[%s2 + $0x30] sm:$0xff]
          %v2246 = vld [vmem:[%s2 + $0x38] sm:$0xff]
          %v2247 = vmul.f32 %v2231, %v2239
          %v2248 = vmul.f32 %v2232, %v2240
          %v2249 = vmul.f32 %v2233, %v2241
          %v2250 = vmul.f32 %v2234, %v2242
          %v2251 = vmul.f32 %v2235, %v2243
          %v2252 = vmul.f32 %v2236, %v2244
          %v2253 = vmul.f32 %v2237, %v2245
          %v2254 = vmul.f32 %v2238, %v2246
          %v2255 = vadd.f32 %v2247, %v2248
          %v2256 = vadd.f32 %v2255, %v2249
          %v2257 = vadd.f32 %v2256, %v2250
          %2258 = vadd.xlane.f32.xlu0 %v2257
          %v2259 = vpop.xlane.xlu0 %2258
          %v2260 = vadd.f32 %v2251, %v2252
          %v2261 = vadd.f32 %v2260, %v2253
          %v2262 = vadd.f32 %v2261, %v2254
          %2263 = vadd.xlane.f32.xlu0 %v2262
          %v2264 = vpop.xlane.xlu0 %2263
          %v2265 = vadd.f32 %v2259, %v2264
          %v2266 = vrot.slane %v2265, 4
          %v2267 = vadd.f32 %v2265, %v2266
          %v2268 = vrot.slane %v2267, 2
          %v2269 = vadd.f32 %v2267, %v2268
          %v2270 = vrot.slane %v2269, 1
          %v2271 = vadd.f32 %v2269, %v2270
          %v2272 = vxor.u32 %v2271, 2147483648
          %v2273 = vmul.f32 %v2272, 1.442695
          %v2274 = vpow.pop %v2273
          %v2275 = vadd.f32 %v2274, 1.0
          %v2276 = vrcp.pop %v2275
          %v2277 = vmul.f32 1.0, %v2276
          %2278 = vst [vmem:[%s246] sm:$0xff] %v2277
        $region63: #{discriminator_forward.7} parent=50 // pred_fallthru
          _
        %p2279 = scmp.lt.s32.totalorder %s18, 1
        %s2280 = scalar_select %p2279, %s18, 1
        %s2281 = smul.addr %s2280, 8
        %s2282 = scalar_lea.vmem %s3, %s2281
        // Predicated region
        $region64: #{discriminator_forward.7} parent=50 // pred_check
          %p2283 = pneg %p119
        $region65: #{discriminator_forward.7} parent=50 // pred_check_branch
          %2285 = sbr.rel (%p2283) target = $region67
        $region66: #{discriminator_forward.7} parent=50 // pred_region
          _
        $region67: #{discriminator_forward.7} parent=50 // pred_fallthru
          _
      $region51: #{discriminator_forward.7} parent=5 // pred_fallthru
        _
      %p2286 = scmp.le.s32.totalorder 2, %s9
      // Predicated region
      $region68: #{discriminator_forward.7} parent=5 // pred_check
        %p2287 = pneg %p2286
      $region69: #{discriminator_forward.7} parent=5 // pred_check_branch
        %2289 = sbr.rel (%p2287) target = $region71
      $region70: #{discriminator_forward.7} parent=5 // pred_region
        %s2290 = ssub.s32 %s9, 2
        // Predicated region
        $region72: #{discriminator_forward.7} parent=70 // pred_check
          %p2291 = pneg %p125
        $region73: #{discriminator_forward.7} parent=70 // pred_check_branch
          %2293 = sbr.rel (%p2291) target = $region75
        $region74: #{discriminator_forward.7} parent=70 // pred_region
          %p2294 = scmp.lt.s32.totalorder %s20, 1
          %s2295 = scalar_select %p2294, %s20, 1
          %s2296 = smul.addr %s2295, 8
          %s2297 = scalar_lea.vmem %s3, %s2296
        $region75: #{discriminator_forward.7} parent=70 // pred_fallthru
          _
      $region71: #{discriminator_forward.7} parent=5 // pred_fallthru
        _
    $region6: #{discriminator_forward.7} parent=1 // loop_footer
      %s13 = sadd.s32 1, %s9
    $region7: #{discriminator_forward.7} parent=1 // loop_footer_branch
      %8 = sbr.rel target = $region3
    $region8: #{discriminator_forward.7} parent=1 // loop_exit
      _

</llo_original>
